<compile_context>
chip_gen: v7x
topology: tpu7x:2x2x1
jax: 0.10.0
libtpu: 0.0.40
codegen_flags: <defaults>
</compile_context>

<pallas_src>
import functools

import jax
import jax.numpy as jnp
from jax import lax
from jax.experimental import pallas as pl
from jax.experimental.pallas import tpu as pltpu


# ----------------------------------------------------------------------------
# In-kernel helper: write an activation into a VMEM scratch with circular halo
# ----------------------------------------------------------------------------
def _store_circular_padded(dst_ref, y, pad, H, W):
    """dst_ref: (B, H+2p, W+2p, C) VMEM scratch; y: (B, H, W, C) value.

    After this call dst_ref[b, i, j, :] == y[b, (i - pad) % H, (j - pad) % W, :],
    i.e. the circularly padded activation, so every conv tap (kh, kw) is the
    contiguous window dst_ref[:, kh:kh+H, kw:kw+W, :].
    """
    dst_ref[:, pad:pad + H, pad:pad + W, :] = y
    if pad:
        # wrap rows (top halo = last rows, bottom halo = first rows)
        dst_ref[:, 0:pad, pad:pad + W, :] = y[:, H - pad:H]
        dst_ref[:, pad + H:H + 2 * pad, pad:pad + W, :] = y[:, 0:pad]
        # wrap columns (corners covered because all rows are filled above)
        dst_ref[:, :, 0:pad, :] = dst_ref[:, :, W:W + pad, :]
        dst_ref[:, :, W + pad:W + 2 * pad, :] = dst_ref[:, :, pad:2 * pad, :]


# ----------------------------------------------------------------------------
# Fused SRCNNBlock kernel: conv1+relu -> conv2+relu -> conv3, all in VMEM
# ----------------------------------------------------------------------------
def _srcnn_fused_kernel(p1_ref, w1_ref, b1_ref, w2_ref, b2_ref, w3_ref, b3_ref,
                        o_ref, y1p_ref, y2p_ref, *, B, H, W, k2, k3):
    # p1_ref : (1, B*M, K1)       im2col patches for conv1 (K1 = k1*k1*Cin)
    # w1_ref : (K1, C1)           b1_ref : (1, C1)
    # w2_ref : (k2*k2, C1, C2)    b2_ref : (1, C2)
    # w3_ref : (Cout, k3*k3*C2)   b3_ref : (Cout, 1)
    # o_ref  : (1, Cout, B*M)     lane-dense, already channel-first (NCHW)
    # y1p_ref: (B, H+2p2, W+2p2, C1)  VMEM scratch (circularly padded conv1 out)
    # y2p_ref: (B, H+2p3, W+2p3, C2)  VMEM scratch (circularly padded conv2 out)
    M = H * W
    BM = B * M
    C1 = w1_ref.shape[-1]
    C2 = w2_ref.shape[-1]
    p2 = (k2 - 1) // 2
    p3 = (k3 - 1) // 2

    # ---- conv1: one shallow-K MXU matmul + bias + ReLU ------------------------
    y1 = jnp.dot(p1_ref[0], w1_ref[...], preferred_element_type=jnp.float32)
    y1 = jnp.maximum(y1 + b1_ref[...], 0.0)                        # (BM, C1)
    _store_circular_padded(y1p_ref, y1.reshape(B, H, W, C1), p2, H, W)

    # ---- conv2: per-tap K=C1 MXU matmuls; kw window hoisted out of kh loop ----
    # (K=C1=128 already fills the v5e MXU; building a K=k2*k2*C1 im2col slab
    #  would only help v6e/v7x at the cost of an extra slab assembly.)
    acc2 = jnp.broadcast_to(b2_ref[...], (BM, C2))                 # bias-init
    for kw in range(k2):
        col = y1p_ref[:, :, kw:kw + W, :]          # one sublane window copy / kw
        for kh in range(k2):
            tap = col[:, kh:kh + H].reshape(BM, C1)    # leading-dim slice: cheap
            acc2 = acc2 + jnp.dot(tap, w2_ref[kh * k2 + kw],
                                  preferred_element_type=jnp.float32)
    y2 = jnp.maximum(acc2, 0.0)                                    # (BM, C2)
    _store_circular_padded(y2p_ref, y2.reshape(B, H, W, C2), p3, H, W)

    # ---- conv3 (Cout tiny): all taps fused into ONE K=k3*k3*C2 matmul ---------
    taps = []
    for kw in range(k3):
        col = y2p_ref[:, :, kw:kw + W, :]          # one sublane window copy / kw
        for kh in range(k3):
            taps.append(col[:, kh:kh + H].reshape(BM, C2))
    slab = jnp.concatenate(taps, axis=-1)                          # (BM, k3*k3*C2)
    y3 = lax.dot_general(w3_ref[...], slab,
                         dimension_numbers=(((1,), (1,)), ((), ())),
                         preferred_element_type=jnp.float32)       # (Cout, BM)
    o_ref[0] = (y3 + b3_ref[...]).astype(o_ref.dtype)


# ----------------------------------------------------------------------------
# Wrapper helpers
# ----------------------------------------------------------------------------
def _circular_pad_nhwc(x, kernel_size, stride):
    """Exact CircularPadding formula from SRCNNBlock, NHWC layout."""
    N, H, W, C = x.shape
    kht, kwd = kernel_size
    sht, swd = stride
    assert (kwd % 2 != 0 and kht % 2 != 0 and (W - kwd) % swd == 0
            and (H - kht) % sht == 0), (
        'kernel_size should be odd, (dim-kernel_size) should be divisible by stride')
    pwd = int((W - 1 - (W - kwd) / swd) // 2)
    pht = int((H - 1 - (H - kht) / sht) // 2)
    return jnp.pad(x, ((0, 0), (pht, pht), (pwd, pwd), (0, 0)), mode='wrap')


def _auto_images_per_step(N, M, row_target=512, max_rows=2048):
    """Largest divisor B of N with B*M <= max_rows.  Once B*M >= row_target we
    stop growing rather than collapse to a single grid step, so multi-core
    (v7x) parts still see >=2 parallel steps when N allows it."""
    best = 1
    for b in range(1, N + 1):
        if N % b:
            continue
        if b * M > max_rows:
            break
        if best * M >= row_target and N // b < 2:
            break
        best = b
    return best


def srcnn_block_forward(x_nchw, params, kernel_sizes, strides, images_per_step=None):
    N, Cin, H, W = x_nchw.shape
    (w1, b1), (w2, b2), (w3, b3) = params          # PyTorch OIHW weights

    for (kh_, kw_), (sh_, sw_) in zip(kernel_sizes, strides):
        assert kh_ == kw_ and kh_ % 2 == 1, "square odd kernels expected"
        # TODO(synk): stride > 1 (smaller output maps) is not implemented in the
        # fused kernel; the reference config of SRCNNBlock uses stride 1.
        assert sh_ == 1 and sw_ == 1, "fused kernel supports stride 1 only"

    k1 = kernel_sizes[0][0]
    k2 = kernel_sizes[1][0]
    k3 = kernel_sizes[2][0]
    C1 = w1.shape[0]          # dw_channel
    C2 = w2.shape[0]          # dw_channel // 2
    Cout = w3.shape[0]        # c
    M = H * W
    K1 = k1 * k1 * Cin

    B = images_per_step or _auto_images_per_step(N, M)
    assert N % B == 0, "images_per_step must divide the batch"
    G = N // B
    BM = B * M

    # --- kernel-friendly parameter layouts (dense 2-D / 3-D slabs) -------------
    w1k = jnp.transpose(w1, (2, 3, 1, 0)).reshape(K1, C1)             # (kh,kw,cin) x C1
    b1k = b1.reshape(1, C1)
    w2k = jnp.transpose(w2, (2, 3, 1, 0)).reshape(k2 * k2, C1, C2)    # per-tap slabs
    b2k = b2.reshape(1, C2)
    # conv3 fused: contraction order (kw, kh, c2) to match the in-kernel tap order
    w3k = jnp.transpose(w3, (0, 3, 2, 1)).reshape(Cout, k3 * k3 * C2)
    b3k = b3.reshape(Cout, 1)

    # --- layer-1 im2col patches (tiny), B images grouped per grid step ---------
    x_nhwc = jnp.transpose(x_nchw, (0, 2, 3, 1))
    xp = _circular_pad_nhwc(x_nhwc, kernel_sizes[0], strides[0])
    cols = [xp[:, kh:kh + H, kw:kw + W, :]
            for kh in range(k1) for kw in range(k1)]                  # (N,H,W,Cin) each
    patches1 = jnp.concatenate(cols, axis=-1).reshape(G, BM, K1)      # (G, B*M, K1)

    p2 = (k2 - 1) // 2
    p3 = (k3 - 1) // 2
    kernel = functools.partial(_srcnn_fused_kernel, B=B, H=H, W=W, k2=k2, k3=k3)

    # --- VMEM footprint estimate -> explicit scoped-VMEM limit (opt for v5e) ---
    f32 = 4
    scratch_bytes = (B * (H + 2 * p2) * (W + 2 * p2) * C1
                     + B * (H + 2 * p3) * (W + 2 * p3) * C2) * f32
    io_bytes = 2 * (BM * max(K1, 128) + Cout * BM) * f32              # double-buffered
    weight_bytes = 2 * (K1 * C1 + k2 * k2 * C1 * C2 + Cout * k3 * k3 * C2
                        + 2 * (C1 + C2 + Cout)) * f32
    temp_bytes = (BM * (2 * C1 + 2 * C2 + k3 * k3 * C2)
                  + B * (H + 2 * p2) * W * C1) * f32
    vmem_limit = int(min(64 * 1024 * 1024,
                         max(32 * 1024 * 1024,
                             1.5 * (scratch_bytes + io_bytes
                                    + weight_bytes + temp_bytes))))

    out = pl.pallas_call(
        kernel,
        grid=(G,),
        in_specs=[
            pl.BlockSpec((1, BM, K1), lambda g: (g, 0, 0)),
            pl.BlockSpec((K1, C1), lambda g: (0, 0)),
            pl.BlockSpec((1, C1), lambda g: (0, 0)),
            pl.BlockSpec((k2 * k2, C1, C2), lambda g: (0, 0, 0)),
            pl.BlockSpec((1, C2), lambda g: (0, 0)),
            pl.BlockSpec((Cout, k3 * k3 * C2), lambda g: (0, 0)),
            pl.BlockSpec((Cout, 1), lambda g: (0, 0)),
        ],
        out_specs=pl.BlockSpec((1, Cout, BM), lambda g: (g, 0, 0)),
        out_shape=jax.ShapeDtypeStruct((G, Cout, BM), jnp.float32),
        scratch_shapes=[
            pltpu.VMEM((B, H + 2 * p2, W + 2 * p2, C1), jnp.float32),
            pltpu.VMEM((B, H + 2 * p3, W + 2 * p3, C2), jnp.float32),
        ],
        compiler_params=pltpu.CompilerParams(
            dimension_semantics=("parallel",),
            vmem_limit_bytes=vmem_limit,
        ),
    )(patches1, w1k, b1k, w2k, b2k, w3k, b3k)

    # (G, Cout, B*M) is channel-first per image; ungroup B and split spatial dims.
    return out.reshape(G, Cout, B, M).transpose(0, 2, 1, 3).reshape(N, Cout, H, W)


# ----------------------------------------------------------------------------
# Parameters (PyTorch Conv2d layout: (Cout, Cin, KH, KW)) and a pure-JAX reference
# ----------------------------------------------------------------------------
def init_srcnn_params(key, c, c_expand, kernel_sizes):
    dw = c * c_expand
    dims = [(c, dw), (dw, dw // 2), (dw // 2, c)]
    params = []
    for i, (cin, cout) in enumerate(dims):
        kh, kw = kernel_sizes[i]
        key, wkey, bkey = jax.random.split(key, 3)
        w = jax.random.normal(wkey, (cout, cin, kh, kw), jnp.float32) * 0.05
        b = jax.random.normal(bkey, (cout,), jnp.float32) * 0.01
        params.append((w, b))
    return params


def _reference_forward(x_nchw, params, kernel_sizes, strides):
    """Plain-XLA reference identical to the PyTorch module (for self-check)."""
    x = x_nchw
    for i, (w, b) in enumerate(params):
        _, _, H, W = x.shape
        kht, kwd = kernel_sizes[i]
        sht, swd = strides[i]
        pwd = int((W - 1 - (W - kwd) / swd) // 2)
        pht = int((H - 1 - (H - kht) / sht) // 2)
        xp = jnp.pad(x, ((0, 0), (0, 0), (pht, pht), (pwd, pwd)), mode='wrap')
        y = lax.conv_general_dilated(
            xp, w, window_strides=(sht, swd), padding='VALID',
            dimension_numbers=('NCHW', 'OIHW', 'NCHW'),
            precision=lax.Precision.HIGHEST)
        y = y + b.reshape(1, -1, 1, 1)
        if i < len(params) - 1:
            y = jnp.maximum(y, 0.0)
        x = y
    return x


if __name__ == "__main__":
    c = 4
    c_expand = 32                       # dw_channel = 128, dw_channel // 2 = 64
    kernel_sizes = [(3, 3), (3, 3), (3, 3)]
    strides = [(1, 1), (1, 1), (1, 1)]

    key = jax.random.PRNGKey(0)
    key, xk = jax.random.split(key)
    x = jax.random.normal(xk, (2, c, 16, 16), jnp.float32)   # NCHW, like PyTorch

    params = init_srcnn_params(key, c, c_expand, kernel_sizes)

    fwd = jax.jit(functools.partial(
        srcnn_block_forward, kernel_sizes=kernel_sizes, strides=strides))
    out = jax.block_until_ready(fwd(x, params))

    assert out.shape == (2, c, 16, 16), out.shape
    assert out.dtype == jnp.float32

    ref = jax.block_until_ready(
        _reference_forward(x, params, kernel_sizes, strides))
    # fp32 accumulation everywhere; 2e-3 is well above accumulation-order noise
    # but far below any layout/ordering bug (which shows up at O(0.1)).
    max_err = float(jnp.max(jnp.abs(out - ref)))
    assert max_err < 2e-3, f"max |pallas - reference| = {max_err}"

    print("KERNEL_OK")
</pallas_src>

<mosaic_0001>
module attributes {stable_mosaic.version = 11 : i64} {
  func.func @_srcnn_fused_kernel(%arg0: i32, %arg1: memref<1x512x36xf32, #tpu.memory_space<vmem>>, %arg2: memref<36x128xf32, #tpu.memory_space<vmem>>, %arg3: memref<1x128xf32, #tpu.memory_space<vmem>>, %arg4: memref<9x128x64xf32, #tpu.memory_space<vmem>>, %arg5: memref<1x64xf32, #tpu.memory_space<vmem>>, %arg6: memref<4x576xf32, #tpu.memory_space<vmem>>, %arg7: memref<4x1xf32, #tpu.memory_space<vmem>>, %arg8: memref<1x4x512xf32, #tpu.memory_space<vmem>>, %arg9: memref<2x18x18x128xf32, #tpu.memory_space<vmem>>, %arg10: memref<2x18x18x64xf32, #tpu.memory_space<vmem>>) attributes {dimension_semantics = [#tpu.dimension_semantics<parallel>], iteration_bounds = array<i64: 1>, scalar_prefetch = 0 : i64, scratch_operands = 2 : i64, tpu.core_type = #tpu.core_type<tc>, window_params = [{transform_indices = @transform_0, window_bounds = array<i64: 1, 512, 36>}, {pipeline_mode = #tpu.pipeline_mode<synchronous>, transform_indices = @transform_1, window_bounds = array<i64: 36, 128>}, {pipeline_mode = #tpu.pipeline_mode<synchronous>, transform_indices = @transform_2, window_bounds = array<i64: 1, 128>}, {pipeline_mode = #tpu.pipeline_mode<synchronous>, transform_indices = @transform_3, window_bounds = array<i64: 9, 128, 64>}, {pipeline_mode = #tpu.pipeline_mode<synchronous>, transform_indices = @transform_4, window_bounds = array<i64: 1, 64>}, {pipeline_mode = #tpu.pipeline_mode<synchronous>, transform_indices = @transform_5, window_bounds = array<i64: 4, 576>}, {pipeline_mode = #tpu.pipeline_mode<synchronous>, transform_indices = @transform_6, window_bounds = array<i64: 4, 1>}, {transform_indices = @transform_7, window_bounds = array<i64: 1, 4, 512>}]} {
    %c0 = arith.constant 0 : index
    %c0_0 = arith.constant 0 : index
    %c0_1 = arith.constant 0 : index
    %0 = vector.load %arg1[%c0, %c0_0, %c0_1] : memref<1x512x36xf32, #tpu.memory_space<vmem>>, vector<1x512x36xf32>
    %1 = vector.shape_cast %0 : vector<1x512x36xf32> to vector<512x36xf32>
    %c0_2 = arith.constant 0 : index
    %c0_3 = arith.constant 0 : index
    %2 = vector.load %arg2[%c0_2, %c0_3] : memref<36x128xf32, #tpu.memory_space<vmem>>, vector<36x128xf32>
    %cst = arith.constant dense<0.000000e+00> : vector<512x128xf32>
    %3 = tpu.matmul %1, %2, %cst {dimension_numbers = #tpu.dot_dimension_numbers<[1], [0], [0], [1], [0, 0, 1, 1], [], []>} : vector<512x36xf32>, vector<36x128xf32>, vector<512x128xf32> -> vector<512x128xf32>
    %c0_4 = arith.constant 0 : index
    %c0_5 = arith.constant 0 : index
    %4 = vector.load %arg3[%c0_4, %c0_5] : memref<1x128xf32, #tpu.memory_space<vmem>>, vector<1x128xf32>
    %5 = vector.broadcast %4 : vector<1x128xf32> to vector<512x128xf32>
    %6 = arith.addf %3, %5 : vector<512x128xf32>
    %cst_6 = arith.constant 0.000000e+00 : f32
    %7 = vector.broadcast %cst_6 : f32 to vector<512x128xf32>
    %8 = arith.maximumf %6, %7 : vector<512x128xf32>
    %9 = vector.shape_cast %8 : vector<512x128xf32> to vector<2x16x16x128xf32>
    %c0_7 = arith.constant 0 : index
    %c1 = arith.constant 1 : index
    %c1_8 = arith.constant 1 : index
    %c0_9 = arith.constant 0 : index
    %10 = vector.load %arg9[%c0_7, %c1, %c1_8, %c0_9] : memref<2x18x18x128xf32, #tpu.memory_space<vmem>>, vector<2x16x16x128xf32>
    tpu.vector_store %arg9[%c0_7, %c1, %c1_8, %c0_9], %9 {strides = array<i32>} : memref<2x18x18x128xf32, #tpu.memory_space<vmem>>, vector<2x16x16x128xf32>,
    %11 = vector.extract_strided_slice %9 {offsets = [0, 15, 0, 0], sizes = [2, 1, 16, 128], strides = [1, 1, 1, 1]} : vector<2x16x16x128xf32> to vector<2x1x16x128xf32>
    %c0_10 = arith.constant 0 : index
    %c0_11 = arith.constant 0 : index
    %c1_12 = arith.constant 1 : index
    %c0_13 = arith.constant 0 : index
    %12 = vector.load %arg9[%c0_10, %c0_11, %c1_12, %c0_13] : memref<2x18x18x128xf32, #tpu.memory_space<vmem>>, vector<2x1x16x128xf32>
    tpu.vector_store %arg9[%c0_10, %c0_11, %c1_12, %c0_13], %11 {strides = array<i32>} : memref<2x18x18x128xf32, #tpu.memory_space<vmem>>, vector<2x1x16x128xf32>,
    %13 = vector.extract_strided_slice %9 {offsets = [0, 0, 0, 0], sizes = [2, 1, 16, 128], strides = [1, 1, 1, 1]} : vector<2x16x16x128xf32> to vector<2x1x16x128xf32>
    %c0_14 = arith.constant 0 : index
    %c17 = arith.constant 17 : index
    %c1_15 = arith.constant 1 : index
    %c0_16 = arith.constant 0 : index
    %14 = vector.load %arg9[%c0_14, %c17, %c1_15, %c0_16] : memref<2x18x18x128xf32, #tpu.memory_space<vmem>>, vector<2x1x16x128xf32>
    tpu.vector_store %arg9[%c0_14, %c17, %c1_15, %c0_16], %13 {strides = array<i32>} : memref<2x18x18x128xf32, #tpu.memory_space<vmem>>, vector<2x1x16x128xf32>,
    %c0_17 = arith.constant 0 : index
    %c0_18 = arith.constant 0 : index
    %c16 = arith.constant 16 : index
    %c0_19 = arith.constant 0 : index
    %15 = vector.load %arg9[%c0_17, %c0_18, %c16, %c0_19] : memref<2x18x18x128xf32, #tpu.memory_space<vmem>>, vector<2x18x1x128xf32>
    %c0_20 = arith.constant 0 : index
    %c0_21 = arith.constant 0 : index
    %c0_22 = arith.constant 0 : index
    %c0_23 = arith.constant 0 : index
    %16 = vector.load %arg9[%c0_20, %c0_21, %c0_22, %c0_23] : memref<2x18x18x128xf32, #tpu.memory_space<vmem>>, vector<2x18x1x128xf32>
    tpu.vector_store %arg9[%c0_20, %c0_21, %c0_22, %c0_23], %15 {strides = array<i32>} : memref<2x18x18x128xf32, #tpu.memory_space<vmem>>, vector<2x18x1x128xf32>,
    %c0_24 = arith.constant 0 : index
    %c0_25 = arith.constant 0 : index
    %c1_26 = arith.constant 1 : index
    %c0_27 = arith.constant 0 : index
    %17 = vector.load %arg9[%c0_24, %c0_25, %c1_26, %c0_27] : memref<2x18x18x128xf32, #tpu.memory_space<vmem>>, vector<2x18x1x128xf32>
    %c0_28 = arith.constant 0 : index
    %c0_29 = arith.constant 0 : index
    %c17_30 = arith.constant 17 : index
    %c0_31 = arith.constant 0 : index
    %18 = vector.load %arg9[%c0_28, %c0_29, %c17_30, %c0_31] : memref<2x18x18x128xf32, #tpu.memory_space<vmem>>, vector<2x18x1x128xf32>
    tpu.vector_store %arg9[%c0_28, %c0_29, %c17_30, %c0_31], %17 {strides = array<i32>} : memref<2x18x18x128xf32, #tpu.memory_space<vmem>>, vector<2x18x1x128xf32>,
    %c0_32 = arith.constant 0 : index
    %c0_33 = arith.constant 0 : index
    %19 = vector.load %arg5[%c0_32, %c0_33] : memref<1x64xf32, #tpu.memory_space<vmem>>, vector<1x64xf32>
    %20 = vector.shape_cast %19 : vector<1x64xf32> to vector<1x64xf32>
    %21 = vector.broadcast %20 : vector<1x64xf32> to vector<512x64xf32>
    %c0_34 = arith.constant 0 : index
    %c0_35 = arith.constant 0 : index
    %c0_36 = arith.constant 0 : index
    %c0_37 = arith.constant 0 : index
    %22 = vector.load %arg9[%c0_34, %c0_35, %c0_36, %c0_37] : memref<2x18x18x128xf32, #tpu.memory_space<vmem>>, vector<2x18x16x128xf32>
    %23 = vector.extract_strided_slice %22 {offsets = [0, 0, 0, 0], sizes = [2, 16, 16, 128], strides = [1, 1, 1, 1]} : vector<2x18x16x128xf32> to vector<2x16x16x128xf32>
    %24 = vector.shape_cast %23 : vector<2x16x16x128xf32> to vector<512x128xf32>
    %c0_38 = arith.constant 0 : index
    %c0_39 = arith.constant 0 : index
    %c0_40 = arith.constant 0 : index
    %25 = vector.load %arg4[%c0_38, %c0_39, %c0_40] : memref<9x128x64xf32, #tpu.memory_space<vmem>>, vector<1x128x64xf32>
    %26 = vector.shape_cast %25 : vector<1x128x64xf32> to vector<128x64xf32>
    %cst_41 = arith.constant dense<0.000000e+00> : vector<512x64xf32>
    %27 = tpu.matmul %24, %26, %cst_41 {dimension_numbers = #tpu.dot_dimension_numbers<[1], [0], [0], [1], [0, 0, 1, 1], [], []>} : vector<512x128xf32>, vector<128x64xf32>, vector<512x64xf32> -> vector<512x64xf32>
    %28 = arith.addf %21, %27 : vector<512x64xf32>
    %29 = vector.extract_strided_slice %22 {offsets = [0, 1, 0, 0], sizes = [2, 16, 16, 128], strides = [1, 1, 1, 1]} : vector<2x18x16x128xf32> to vector<2x16x16x128xf32>
    %30 = vector.shape_cast %29 : vector<2x16x16x128xf32> to vector<512x128xf32>
    %c3 = arith.constant 3 : index
    %c0_42 = arith.constant 0 : index
    %c0_43 = arith.constant 0 : index
    %31 = vector.load %arg4[%c3, %c0_42, %c0_43] : memref<9x128x64xf32, #tpu.memory_space<vmem>>, vector<1x128x64xf32>
    %32 = vector.shape_cast %31 : vector<1x128x64xf32> to vector<128x64xf32>
    %cst_44 = arith.constant dense<0.000000e+00> : vector<512x64xf32>
    %33 = tpu.matmul %30, %32, %cst_44 {dimension_numbers = #tpu.dot_dimension_numbers<[1], [0], [0], [1], [0, 0, 1, 1], [], []>} : vector<512x128xf32>, vector<128x64xf32>, vector<512x64xf32> -> vector<512x64xf32>
    %34 = arith.addf %28, %33 : vector<512x64xf32>
    %35 = vector.extract_strided_slice %22 {offsets = [0, 2, 0, 0], sizes = [2, 16, 16, 128], strides = [1, 1, 1, 1]} : vector<2x18x16x128xf32> to vector<2x16x16x128xf32>
    %36 = vector.shape_cast %35 : vector<2x16x16x128xf32> to vector<512x128xf32>
    %c6 = arith.constant 6 : index
    %c0_45 = arith.constant 0 : index
    %c0_46 = arith.constant 0 : index
    %37 = vector.load %arg4[%c6, %c0_45, %c0_46] : memref<9x128x64xf32, #tpu.memory_space<vmem>>, vector<1x128x64xf32>
    %38 = vector.shape_cast %37 : vector<1x128x64xf32> to vector<128x64xf32>
    %cst_47 = arith.constant dense<0.000000e+00> : vector<512x64xf32>
    %39 = tpu.matmul %36, %38, %cst_47 {dimension_numbers = #tpu.dot_dimension_numbers<[1], [0], [0], [1], [0, 0, 1, 1], [], []>} : vector<512x128xf32>, vector<128x64xf32>, vector<512x64xf32> -> vector<512x64xf32>
    %40 = arith.addf %34, %39 : vector<512x64xf32>
    %c0_48 = arith.constant 0 : index
    %c0_49 = arith.constant 0 : index
    %c1_50 = arith.constant 1 : index
    %c0_51 = arith.constant 0 : index
    %41 = vector.load %arg9[%c0_48, %c0_49, %c1_50, %c0_51] : memref<2x18x18x128xf32, #tpu.memory_space<vmem>>, vector<2x18x16x128xf32>
    %42 = vector.extract_strided_slice %41 {offsets = [0, 0, 0, 0], sizes = [2, 16, 16, 128], strides = [1, 1, 1, 1]} : vector<2x18x16x128xf32> to vector<2x16x16x128xf32>
    %43 = vector.shape_cast %42 : vector<2x16x16x128xf32> to vector<512x128xf32>
    %c1_52 = arith.constant 1 : index
    %c0_53 = arith.constant 0 : index
    %c0_54 = arith.constant 0 : index
    %44 = vector.load %arg4[%c1_52, %c0_53, %c0_54] : memref<9x128x64xf32, #tpu.memory_space<vmem>>, vector<1x128x64xf32>
    %45 = vector.shape_cast %44 : vector<1x128x64xf32> to vector<128x64xf32>
    %cst_55 = arith.constant dense<0.000000e+00> : vector<512x64xf32>
    %46 = tpu.matmul %43, %45, %cst_55 {dimension_numbers = #tpu.dot_dimension_numbers<[1], [0], [0], [1], [0, 0, 1, 1], [], []>} : vector<512x128xf32>, vector<128x64xf32>, vector<512x64xf32> -> vector<512x64xf32>
    %47 = arith.addf %40, %46 : vector<512x64xf32>
    %48 = vector.extract_strided_slice %41 {offsets = [0, 1, 0, 0], sizes = [2, 16, 16, 128], strides = [1, 1, 1, 1]} : vector<2x18x16x128xf32> to vector<2x16x16x128xf32>
    %49 = vector.shape_cast %48 : vector<2x16x16x128xf32> to vector<512x128xf32>
    %c4 = arith.constant 4 : index
    %c0_56 = arith.constant 0 : index
    %c0_57 = arith.constant 0 : index
    %50 = vector.load %arg4[%c4, %c0_56, %c0_57] : memref<9x128x64xf32, #tpu.memory_space<vmem>>, vector<1x128x64xf32>
    %51 = vector.shape_cast %50 : vector<1x128x64xf32> to vector<128x64xf32>
    %cst_58 = arith.constant dense<0.000000e+00> : vector<512x64xf32>
    %52 = tpu.matmul %49, %51, %cst_58 {dimension_numbers = #tpu.dot_dimension_numbers<[1], [0], [0], [1], [0, 0, 1, 1], [], []>} : vector<512x128xf32>, vector<128x64xf32>, vector<512x64xf32> -> vector<512x64xf32>
    %53 = arith.addf %47, %52 : vector<512x64xf32>
    %54 = vector.extract_strided_slice %41 {offsets = [0, 2, 0, 0], sizes = [2, 16, 16, 128], strides = [1, 1, 1, 1]} : vector<2x18x16x128xf32> to vector<2x16x16x128xf32>
    %55 = vector.shape_cast %54 : vector<2x16x16x128xf32> to vector<512x128xf32>
    %c7 = arith.constant 7 : index
    %c0_59 = arith.constant 0 : index
    %c0_60 = arith.constant 0 : index
    %56 = vector.load %arg4[%c7, %c0_59, %c0_60] : memref<9x128x64xf32, #tpu.memory_space<vmem>>, vector<1x128x64xf32>
    %57 = vector.shape_cast %56 : vector<1x128x64xf32> to vector<128x64xf32>
    %cst_61 = arith.constant dense<0.000000e+00> : vector<512x64xf32>
    %58 = tpu.matmul %55, %57, %cst_61 {dimension_numbers = #tpu.dot_dimension_numbers<[1], [0], [0], [1], [0, 0, 1, 1], [], []>} : vector<512x128xf32>, vector<128x64xf32>, vector<512x64xf32> -> vector<512x64xf32>
    %59 = arith.addf %53, %58 : vector<512x64xf32>
    %c0_62 = arith.constant 0 : index
    %c0_63 = arith.constant 0 : index
    %c2 = arith.constant 2 : index
    %c0_64 = arith.constant 0 : index
    %60 = vector.load %arg9[%c0_62, %c0_63, %c2, %c0_64] : memref<2x18x18x128xf32, #tpu.memory_space<vmem>>, vector<2x18x16x128xf32>
    %61 = vector.extract_strided_slice %60 {offsets = [0, 0, 0, 0], sizes = [2, 16, 16, 128], strides = [1, 1, 1, 1]} : vector<2x18x16x128xf32> to vector<2x16x16x128xf32>
    %62 = vector.shape_cast %61 : vector<2x16x16x128xf32> to vector<512x128xf32>
    %c2_65 = arith.constant 2 : index
    %c0_66 = arith.constant 0 : index
    %c0_67 = arith.constant 0 : index
    %63 = vector.load %arg4[%c2_65, %c0_66, %c0_67] : memref<9x128x64xf32, #tpu.memory_space<vmem>>, vector<1x128x64xf32>
    %64 = vector.shape_cast %63 : vector<1x128x64xf32> to vector<128x64xf32>
    %cst_68 = arith.constant dense<0.000000e+00> : vector<512x64xf32>
    %65 = tpu.matmul %62, %64, %cst_68 {dimension_numbers = #tpu.dot_dimension_numbers<[1], [0], [0], [1], [0, 0, 1, 1], [], []>} : vector<512x128xf32>, vector<128x64xf32>, vector<512x64xf32> -> vector<512x64xf32>
    %66 = arith.addf %59, %65 : vector<512x64xf32>
    %67 = vector.extract_strided_slice %60 {offsets = [0, 1, 0, 0], sizes = [2, 16, 16, 128], strides = [1, 1, 1, 1]} : vector<2x18x16x128xf32> to vector<2x16x16x128xf32>
    %68 = vector.shape_cast %67 : vector<2x16x16x128xf32> to vector<512x128xf32>
    %c5 = arith.constant 5 : index
    %c0_69 = arith.constant 0 : index
    %c0_70 = arith.constant 0 : index
    %69 = vector.load %arg4[%c5, %c0_69, %c0_70] : memref<9x128x64xf32, #tpu.memory_space<vmem>>, vector<1x128x64xf32>
    %70 = vector.shape_cast %69 : vector<1x128x64xf32> to vector<128x64xf32>
    %cst_71 = arith.constant dense<0.000000e+00> : vector<512x64xf32>
    %71 = tpu.matmul %68, %70, %cst_71 {dimension_numbers = #tpu.dot_dimension_numbers<[1], [0], [0], [1], [0, 0, 1, 1], [], []>} : vector<512x128xf32>, vector<128x64xf32>, vector<512x64xf32> -> vector<512x64xf32>
    %72 = arith.addf %66, %71 : vector<512x64xf32>
    %73 = vector.extract_strided_slice %60 {offsets = [0, 2, 0, 0], sizes = [2, 16, 16, 128], strides = [1, 1, 1, 1]} : vector<2x18x16x128xf32> to vector<2x16x16x128xf32>
    %74 = vector.shape_cast %73 : vector<2x16x16x128xf32> to vector<512x128xf32>
    %c8 = arith.constant 8 : index
    %c0_72 = arith.constant 0 : index
    %c0_73 = arith.constant 0 : index
    %75 = vector.load %arg4[%c8, %c0_72, %c0_73] : memref<9x128x64xf32, #tpu.memory_space<vmem>>, vector<1x128x64xf32>
    %76 = vector.shape_cast %75 : vector<1x128x64xf32> to vector<128x64xf32>
    %cst_74 = arith.constant dense<0.000000e+00> : vector<512x64xf32>
    %77 = tpu.matmul %74, %76, %cst_74 {dimension_numbers = #tpu.dot_dimension_numbers<[1], [0], [0], [1], [0, 0, 1, 1], [], []>} : vector<512x128xf32>, vector<128x64xf32>, vector<512x64xf32> -> vector<512x64xf32>
    %78 = arith.addf %72, %77 : vector<512x64xf32>
    %cst_75 = arith.constant 0.000000e+00 : f32
    %79 = vector.broadcast %cst_75 : f32 to vector<512x64xf32>
    %80 = arith.maximumf %78, %79 : vector<512x64xf32>
    %81 = vector.shape_cast %80 : vector<512x64xf32> to vector<2x16x16x64xf32>
    %c0_76 = arith.constant 0 : index
    %c1_77 = arith.constant 1 : index
    %c1_78 = arith.constant 1 : index
    %c0_79 = arith.constant 0 : index
    %82 = vector.load %arg10[%c0_76, %c1_77, %c1_78, %c0_79] : memref<2x18x18x64xf32, #tpu.memory_space<vmem>>, vector<2x16x16x64xf32>
    tpu.vector_store %arg10[%c0_76, %c1_77, %c1_78, %c0_79], %81 {strides = array<i32>} : memref<2x18x18x64xf32, #tpu.memory_space<vmem>>, vector<2x16x16x64xf32>,
    %83 = vector.extract_strided_slice %81 {offsets = [0, 15, 0, 0], sizes = [2, 1, 16, 64], strides = [1, 1, 1, 1]} : vector<2x16x16x64xf32> to vector<2x1x16x64xf32>
    %c0_80 = arith.constant 0 : index
    %c0_81 = arith.constant 0 : index
    %c1_82 = arith.constant 1 : index
    %c0_83 = arith.constant 0 : index
    %84 = vector.load %arg10[%c0_80, %c0_81, %c1_82, %c0_83] : memref<2x18x18x64xf32, #tpu.memory_space<vmem>>, vector<2x1x16x64xf32>
    tpu.vector_store %arg10[%c0_80, %c0_81, %c1_82, %c0_83], %83 {strides = array<i32>} : memref<2x18x18x64xf32, #tpu.memory_space<vmem>>, vector<2x1x16x64xf32>,
    %85 = vector.extract_strided_slice %81 {offsets = [0, 0, 0, 0], sizes = [2, 1, 16, 64], strides = [1, 1, 1, 1]} : vector<2x16x16x64xf32> to vector<2x1x16x64xf32>
    %c0_84 = arith.constant 0 : index
    %c17_85 = arith.constant 17 : index
    %c1_86 = arith.constant 1 : index
    %c0_87 = arith.constant 0 : index
    %86 = vector.load %arg10[%c0_84, %c17_85, %c1_86, %c0_87] : memref<2x18x18x64xf32, #tpu.memory_space<vmem>>, vector<2x1x16x64xf32>
    tpu.vector_store %arg10[%c0_84, %c17_85, %c1_86, %c0_87], %85 {strides = array<i32>} : memref<2x18x18x64xf32, #tpu.memory_space<vmem>>, vector<2x1x16x64xf32>,
    %c0_88 = arith.constant 0 : index
    %c0_89 = arith.constant 0 : index
    %c16_90 = arith.constant 16 : index
    %c0_91 = arith.constant 0 : index
    %87 = vector.load %arg10[%c0_88, %c0_89, %c16_90, %c0_91] : memref<2x18x18x64xf32, #tpu.memory_space<vmem>>, vector<2x18x1x64xf32>
    %c0_92 = arith.constant 0 : index
    %c0_93 = arith.constant 0 : index
    %c0_94 = arith.constant 0 : index
    %c0_95 = arith.constant 0 : index
    %88 = vector.load %arg10[%c0_92, %c0_93, %c0_94, %c0_95] : memref<2x18x18x64xf32, #tpu.memory_space<vmem>>, vector<2x18x1x64xf32>
    tpu.vector_store %arg10[%c0_92, %c0_93, %c0_94, %c0_95], %87 {strides = array<i32>} : memref<2x18x18x64xf32, #tpu.memory_space<vmem>>, vector<2x18x1x64xf32>,
    %c0_96 = arith.constant 0 : index
    %c0_97 = arith.constant 0 : index
    %c1_98 = arith.constant 1 : index
    %c0_99 = arith.constant 0 : index
    %89 = vector.load %arg10[%c0_96, %c0_97, %c1_98, %c0_99] : memref<2x18x18x64xf32, #tpu.memory_space<vmem>>, vector<2x18x1x64xf32>
    %c0_100 = arith.constant 0 : index
    %c0_101 = arith.constant 0 : index
    %c17_102 = arith.constant 17 : index
    %c0_103 = arith.constant 0 : index
    %90 = vector.load %arg10[%c0_100, %c0_101, %c17_102, %c0_103] : memref<2x18x18x64xf32, #tpu.memory_space<vmem>>, vector<2x18x1x64xf32>
    tpu.vector_store %arg10[%c0_100, %c0_101, %c17_102, %c0_103], %89 {strides = array<i32>} : memref<2x18x18x64xf32, #tpu.memory_space<vmem>>, vector<2x18x1x64xf32>,
    %c0_104 = arith.constant 0 : index
    %c0_105 = arith.constant 0 : index
    %c0_106 = arith.constant 0 : index
    %c0_107 = arith.constant 0 : index
    %91 = vector.load %arg10[%c0_104, %c0_105, %c0_106, %c0_107] : memref<2x18x18x64xf32, #tpu.memory_space<vmem>>, vector<2x18x16x64xf32>
    %92 = vector.extract_strided_slice %91 {offsets = [0, 0, 0, 0], sizes = [2, 16, 16, 64], strides = [1, 1, 1, 1]} : vector<2x18x16x64xf32> to vector<2x16x16x64xf32>
    %93 = vector.shape_cast %92 : vector<2x16x16x64xf32> to vector<512x64xf32>
    %94 = vector.extract_strided_slice %91 {offsets = [0, 1, 0, 0], sizes = [2, 16, 16, 64], strides = [1, 1, 1, 1]} : vector<2x18x16x64xf32> to vector<2x16x16x64xf32>
    %95 = vector.shape_cast %94 : vector<2x16x16x64xf32> to vector<512x64xf32>
    %96 = vector.extract_strided_slice %91 {offsets = [0, 2, 0, 0], sizes = [2, 16, 16, 64], strides = [1, 1, 1, 1]} : vector<2x18x16x64xf32> to vector<2x16x16x64xf32>
    %97 = vector.shape_cast %96 : vector<2x16x16x64xf32> to vector<512x64xf32>
    %c0_108 = arith.constant 0 : index
    %c0_109 = arith.constant 0 : index
    %c1_110 = arith.constant 1 : index
    %c0_111 = arith.constant 0 : index
    %98 = vector.load %arg10[%c0_108, %c0_109, %c1_110, %c0_111] : memref<2x18x18x64xf32, #tpu.memory_space<vmem>>, vector<2x18x16x64xf32>
    %99 = vector.extract_strided_slice %98 {offsets = [0, 0, 0, 0], sizes = [2, 16, 16, 64], strides = [1, 1, 1, 1]} : vector<2x18x16x64xf32> to vector<2x16x16x64xf32>
    %100 = vector.shape_cast %99 : vector<2x16x16x64xf32> to vector<512x64xf32>
    %101 = vector.extract_strided_slice %98 {offsets = [0, 1, 0, 0], sizes = [2, 16, 16, 64], strides = [1, 1, 1, 1]} : vector<2x18x16x64xf32> to vector<2x16x16x64xf32>
    %102 = vector.shape_cast %101 : vector<2x16x16x64xf32> to vector<512x64xf32>
    %103 = vector.extract_strided_slice %98 {offsets = [0, 2, 0, 0], sizes = [2, 16, 16, 64], strides = [1, 1, 1, 1]} : vector<2x18x16x64xf32> to vector<2x16x16x64xf32>
    %104 = vector.shape_cast %103 : vector<2x16x16x64xf32> to vector<512x64xf32>
    %c0_112 = arith.constant 0 : index
    %c0_113 = arith.constant 0 : index
    %c2_114 = arith.constant 2 : index
    %c0_115 = arith.constant 0 : index
    %105 = vector.load %arg10[%c0_112, %c0_113, %c2_114, %c0_115] : memref<2x18x18x64xf32, #tpu.memory_space<vmem>>, vector<2x18x16x64xf32>
    %106 = vector.extract_strided_slice %105 {offsets = [0, 0, 0, 0], sizes = [2, 16, 16, 64], strides = [1, 1, 1, 1]} : vector<2x18x16x64xf32> to vector<2x16x16x64xf32>
    %107 = vector.shape_cast %106 : vector<2x16x16x64xf32> to vector<512x64xf32>
    %108 = vector.extract_strided_slice %105 {offsets = [0, 1, 0, 0], sizes = [2, 16, 16, 64], strides = [1, 1, 1, 1]} : vector<2x18x16x64xf32> to vector<2x16x16x64xf32>
    %109 = vector.shape_cast %108 : vector<2x16x16x64xf32> to vector<512x64xf32>
    %110 = vector.extract_strided_slice %105 {offsets = [0, 2, 0, 0], sizes = [2, 16, 16, 64], strides = [1, 1, 1, 1]} : vector<2x18x16x64xf32> to vector<2x16x16x64xf32>
    %111 = vector.shape_cast %110 : vector<2x16x16x64xf32> to vector<512x64xf32>
    %112 = tpu.concatenate %93, %95, %97, %100, %102, %104, %107, %109, %111 in 1 : vector<512x64xf32>, vector<512x64xf32>, vector<512x64xf32>, vector<512x64xf32>, vector<512x64xf32>, vector<512x64xf32>, vector<512x64xf32>, vector<512x64xf32>, vector<512x64xf32> -> vector<512x576xf32>
    %c0_116 = arith.constant 0 : index
    %c0_117 = arith.constant 0 : index
    %113 = vector.load %arg6[%c0_116, %c0_117] : memref<4x576xf32, #tpu.memory_space<vmem>>, vector<4x576xf32>
    %cst_118 = arith.constant dense<0.000000e+00> : vector<4x512xf32>
    %114 = tpu.matmul %113, %112, %cst_118 {dimension_numbers = #tpu.dot_dimension_numbers<[1], [1], [0], [0], [0, 0, 1, 0], [], []>} : vector<4x576xf32>, vector<512x576xf32>, vector<4x512xf32> -> vector<4x512xf32>
    %c0_119 = arith.constant 0 : index
    %c0_120 = arith.constant 0 : index
    %115 = vector.load %arg7[%c0_119, %c0_120] : memref<4x1xf32, #tpu.memory_space<vmem>>, vector<4x1xf32>
    %116 = vector.broadcast %115 : vector<4x1xf32> to vector<4x512xf32>
    %117 = arith.addf %114, %116 : vector<4x512xf32>
    %c0_121 = arith.constant 0 : index
    %c0_122 = arith.constant 0 : index
    %c0_123 = arith.constant 0 : index
    %118 = vector.load %arg8[%c0_121, %c0_122, %c0_123] : memref<1x4x512xf32, #tpu.memory_space<vmem>>, vector<1x4x512xf32>
    %119 = vector.shape_cast %118 : vector<1x4x512xf32> to vector<4x512xf32>
    %120 = vector.shape_cast %117 : vector<4x512xf32> to vector<1x4x512xf32>
    tpu.vector_store %arg8[%c0_121, %c0_122, %c0_123], %120 {strides = array<i32>} : memref<1x4x512xf32, #tpu.memory_space<vmem>>, vector<1x4x512xf32>,
    return
  }
  func.func @transform_0(%arg0: i32) -> (i32, i32, i32) {
    %c0_i32 = arith.constant 0 : i32
    %c0_i32_0 = arith.constant 0 : i32
    %c0_i32_1 = arith.constant 0 : i32
    return %arg0, %c0_i32, %c0_i32_0 : i32, i32, i32
  }
  func.func @transform_1(%arg0: i32) -> (i32, i32) {
    %c0_i32 = arith.constant 0 : i32
    %c0_i32_0 = arith.constant 0 : i32
    %c0_i32_1 = arith.constant 0 : i32
    return %c0_i32, %c0_i32_0 : i32, i32
  }
  func.func @transform_2(%arg0: i32) -> (i32, i32) {
    %c0_i32 = arith.constant 0 : i32
    %c0_i32_0 = arith.constant 0 : i32
    %c0_i32_1 = arith.constant 0 : i32
    return %c0_i32, %c0_i32_0 : i32, i32
  }
  func.func @transform_3(%arg0: i32) -> (i32, i32, i32) {
    %c0_i32 = arith.constant 0 : i32
    %c0_i32_0 = arith.constant 0 : i32
    %c0_i32_1 = arith.constant 0 : i32
    %c0_i32_2 = arith.constant 0 : i32
    return %c0_i32, %c0_i32_0, %c0_i32_1 : i32, i32, i32
  }
  func.func @transform_4(%arg0: i32) -> (i32, i32) {
    %c0_i32 = arith.constant 0 : i32
    %c0_i32_0 = arith.constant 0 : i32
    %c0_i32_1 = arith.constant 0 : i32
    return %c0_i32, %c0_i32_0 : i32, i32
  }
  func.func @transform_5(%arg0: i32) -> (i32, i32) {
    %c0_i32 = arith.constant 0 : i32
    %c0_i32_0 = arith.constant 0 : i32
    %c0_i32_1 = arith.constant 0 : i32
    return %c0_i32, %c0_i32_0 : i32, i32
  }
  func.func @transform_6(%arg0: i32) -> (i32, i32) {
    %c0_i32 = arith.constant 0 : i32
    %c0_i32_0 = arith.constant 0 : i32
    %c0_i32_1 = arith.constant 0 : i32
    return %c0_i32, %c0_i32_0 : i32, i32
  }
  func.func @transform_7(%arg0: i32) -> (i32, i32, i32) {
    %c0_i32 = arith.constant 0 : i32
    %c0_i32_0 = arith.constant 0 : i32
    %c0_i32_1 = arith.constant 0 : i32
    return %arg0, %c0_i32, %c0_i32_0 : i32, i32, i32
  }
}

</mosaic_0001>

<llo_original>
// kernel: srcnn_block_forward.1
$region0: #{srcnn_block_forward.1}
  #allocation0 [shape = 'u32[]', space=smem, size = 0x4, offset = 0x4, fixed_abs, tag = 'smem constant byte address 0x4 - core index']
  #allocation1 [shape = 'u32[144,128]{1,0:T(1,128)}', space=vmem, size = 0x12000, scoped, tag = 'internal scratch']
  #allocation2 [shape = 'f32[2,18,18,128]{3,2,1,0:T(8,128)}', space=vmem, size = 0x6c000, scoped, tag = 'scratch operand']
  #allocation3 [shape = 'f32[2,18,18,64]{3,2,1,0:T(8,128)}', space=vmem, size = 0x6c000, scoped, tag = 'scratch operand']
  %s0 = inlined_call_operand.vmem [shape: f32[1,512,36], index: 0, kind: input, shape index: {}]
  %s1 = inlined_call_operand.vmem [shape: f32[36,128], index: 1, kind: input, shape index: {}]
  %s2 = inlined_call_operand.vmem [shape: f32[1,128], index: 2, kind: input, shape index: {}]
  %s3 = inlined_call_operand.vmem [shape: f32[9,128,64], index: 3, kind: input, shape index: {}]
  %s4 = inlined_call_operand.vmem [shape: f32[1,64], index: 4, kind: input, shape index: {}]
  %s5 = inlined_call_operand.vmem [shape: f32[4,576], index: 5, kind: input, shape index: {}]
  %s6 = inlined_call_operand.vmem [shape: f32[4,1], index: 6, kind: input, shape index: {}]
  %s7 = inlined_call_operand.vmem [shape: f32[1,4,512], index: 7, kind: output, shape index: {}]
  %s8 = sld [smem:[#allocation0]]
  $region38: #{srcnn_block_forward.1} parent=0
    _
  %s10 = ssub.s32 1, %s8
  %s11 = scalar_select 0, %s10, %s8
  // Predicated region
  $region2: #{srcnn_block_forward.1} parent=0 // pred_check
    _
  $region3: #{srcnn_block_forward.1} parent=0 // pred_check_branch
    %13 = sbr.rel (0) target = $region5
  $region4: #{srcnn_block_forward.1} parent=0 // pred_region
    _
  $region5: #{srcnn_block_forward.1} parent=0 // pred_fallthru
    _
  // Predicated region
  $region6: #{srcnn_block_forward.1} parent=0 // pred_check
    _
  $region7: #{srcnn_block_forward.1} parent=0 // pred_check_branch
    %15 = sbr.rel (0) target = $region9
  $region8: #{srcnn_block_forward.1} parent=0 // pred_region
    _
  $region9: #{srcnn_block_forward.1} parent=0 // pred_fallthru
    _
  // Predicated region
  $region10: #{srcnn_block_forward.1} parent=0 // pred_check
    _
  $region11: #{srcnn_block_forward.1} parent=0 // pred_check_branch
    %17 = sbr.rel (0) target = $region13
  $region12: #{srcnn_block_forward.1} parent=0 // pred_region
    _
  $region13: #{srcnn_block_forward.1} parent=0 // pred_fallthru
    _
  // Predicated region
  $region14: #{srcnn_block_forward.1} parent=0 // pred_check
    _
  $region15: #{srcnn_block_forward.1} parent=0 // pred_check_branch
    %19 = sbr.rel (0) target = $region17
  $region16: #{srcnn_block_forward.1} parent=0 // pred_region
    _
  $region17: #{srcnn_block_forward.1} parent=0 // pred_fallthru
    _
  // Predicated region
  $region18: #{srcnn_block_forward.1} parent=0 // pred_check
    _
  $region19: #{srcnn_block_forward.1} parent=0 // pred_check_branch
    %21 = sbr.rel (0) target = $region21
  $region20: #{srcnn_block_forward.1} parent=0 // pred_region
    _
  $region21: #{srcnn_block_forward.1} parent=0 // pred_fallthru
    _
  // Predicated region
  $region22: #{srcnn_block_forward.1} parent=0 // pred_check
    _
  $region23: #{srcnn_block_forward.1} parent=0 // pred_check_branch
    %23 = sbr.rel (0) target = $region25
  $region24: #{srcnn_block_forward.1} parent=0 // pred_region
    _
  $region25: #{srcnn_block_forward.1} parent=0 // pred_fallthru
    _
  // Predicated region
  $region26: #{srcnn_block_forward.1} parent=0 // pred_check
    _
  $region27: #{srcnn_block_forward.1} parent=0 // pred_check_branch
    %25 = sbr.rel (0) target = $region29
  $region28: #{srcnn_block_forward.1} parent=0 // pred_region
    _
  $region29: #{srcnn_block_forward.1} parent=0 // pred_fallthru
    _
  %v26 = vld [vmem:[%s0] sm:$0xff]
  %v27 = vld [vmem:[%s0 + $0x8] sm:$0xff]
  %v28 = vld [vmem:[%s0 + $0x10] sm:$0xff]
  %v29 = vld [vmem:[%s0 + $0x18] sm:$0xff]
  %v30 = vld [vmem:[%s0 + $0x20] sm:$0xff]
  %v31 = vld [vmem:[%s0 + $0x28] sm:$0xff]
  %v32 = vld [vmem:[%s0 + $0x30] sm:$0xff]
  %v33 = vld [vmem:[%s0 + $0x38] sm:$0xff]
  %v34 = vld [vmem:[%s0 + $0x40] sm:$0xff]
  %v35 = vld [vmem:[%s0 + $0x48] sm:$0xff]
  %v36 = vld [vmem:[%s0 + $0x50] sm:$0xff]
  %v37 = vld [vmem:[%s0 + $0x58] sm:$0xff]
  %v38 = vld [vmem:[%s0 + $0x60] sm:$0xff]
  %v39 = vld [vmem:[%s0 + $0x68] sm:$0xff]
  %v40 = vld [vmem:[%s0 + $0x70] sm:$0xff]
  %v41 = vld [vmem:[%s0 + $0x78] sm:$0xff]
  %v42 = vld [vmem:[%s0 + $0x80] sm:$0xff]
  %v43 = vld [vmem:[%s0 + $0x88] sm:$0xff]
  %v44 = vld [vmem:[%s0 + $0x90] sm:$0xff]
  %v45 = vld [vmem:[%s0 + $0x98] sm:$0xff]
  %v46 = vld [vmem:[%s0 + $0xa0] sm:$0xff]
  %v47 = vld [vmem:[%s0 + $0xa8] sm:$0xff]
  %v48 = vld [vmem:[%s0 + $0xb0] sm:$0xff]
  %v49 = vld [vmem:[%s0 + $0xb8] sm:$0xff]
  %v50 = vld [vmem:[%s0 + $0xc0] sm:$0xff]
  %v51 = vld [vmem:[%s0 + $0xc8] sm:$0xff]
  %v52 = vld [vmem:[%s0 + $0xd0] sm:$0xff]
  %v53 = vld [vmem:[%s0 + $0xd8] sm:$0xff]
  %v54 = vld [vmem:[%s0 + $0xe0] sm:$0xff]
  %v55 = vld [vmem:[%s0 + $0xe8] sm:$0xff]
  %v56 = vld [vmem:[%s0 + $0xf0] sm:$0xff]
  %v57 = vld [vmem:[%s0 + $0xf8] sm:$0xff]
  %v58 = vld [vmem:[%s0 + $0x100] sm:$0xff]
  %v59 = vld [vmem:[%s0 + $0x108] sm:$0xff]
  %v60 = vld [vmem:[%s0 + $0x110] sm:$0xff]
  %v61 = vld [vmem:[%s0 + $0x118] sm:$0xff]
  %v62 = vld [vmem:[%s0 + $0x120] sm:$0xff]
  %v63 = vld [vmem:[%s0 + $0x128] sm:$0xff]
  %v64 = vld [vmem:[%s0 + $0x130] sm:$0xff]
  %v65 = vld [vmem:[%s0 + $0x138] sm:$0xff]
  %v66 = vld [vmem:[%s0 + $0x140] sm:$0xff]
  %v67 = vld [vmem:[%s0 + $0x148] sm:$0xff]
  %v68 = vld [vmem:[%s0 + $0x150] sm:$0xff]
  %v69 = vld [vmem:[%s0 + $0x158] sm:$0xff]
  %v70 = vld [vmem:[%s0 + $0x160] sm:$0xff]
  %v71 = vld [vmem:[%s0 + $0x168] sm:$0xff]
  %v72 = vld [vmem:[%s0 + $0x170] sm:$0xff]
  %v73 = vld [vmem:[%s0 + $0x178] sm:$0xff]
  %v74 = vld [vmem:[%s0 + $0x180] sm:$0xff]
  %v75 = vld [vmem:[%s0 + $0x188] sm:$0xff]
  %v76 = vld [vmem:[%s0 + $0x190] sm:$0xff]
  %v77 = vld [vmem:[%s0 + $0x198] sm:$0xff]
  %v78 = vld [vmem:[%s0 + $0x1a0] sm:$0xff]
  %v79 = vld [vmem:[%s0 + $0x1a8] sm:$0xff]
  %v80 = vld [vmem:[%s0 + $0x1b0] sm:$0xff]
  %v81 = vld [vmem:[%s0 + $0x1b8] sm:$0xff]
  %v82 = vld [vmem:[%s0 + $0x1c0] sm:$0xff]
  %v83 = vld [vmem:[%s0 + $0x1c8] sm:$0xff]
  %v84 = vld [vmem:[%s0 + $0x1d0] sm:$0xff]
  %v85 = vld [vmem:[%s0 + $0x1d8] sm:$0xff]
  %v86 = vld [vmem:[%s0 + $0x1e0] sm:$0xff]
  %v87 = vld [vmem:[%s0 + $0x1e8] sm:$0xff]
  %v88 = vld [vmem:[%s0 + $0x1f0] sm:$0xff]
  %v89 = vld [vmem:[%s0 + $0x1f8] sm:$0xff]
  %v90 = vld [vmem:[%s1] sm:$0xff]
  %v91 = vld [vmem:[%s1 + $0x8] sm:$0xff]
  %v92 = vld [vmem:[%s1 + $0x10] sm:$0xff]
  %v93 = vld [vmem:[%s1 + $0x18] sm:$0xff]
  %v94 = vld [vmem:[%s1 + $0x20] sm:$0xf]
  %v95 = vld [vmem:[%s2] sm:$0x1]
  %v97 = vlaneseq
  %v98 = vshrl.u32 %v97, 7
  %v99 = vsub.s32 0, %v98
  %v100 = vrot.slane %v95, %v99
  %vm102 = vcmask 293888
  %v104 = vsel %vm102, %v26, 0
  %v107 = vsel %vm102, %v27, 0
  %v110 = vsel %vm102, %v28, 0
  %v113 = vsel %vm102, %v29, 0
  %v116 = vsel %vm102, %v30, 0
  %v119 = vsel %vm102, %v31, 0
  %v122 = vsel %vm102, %v32, 0
  %v125 = vsel %vm102, %v33, 0
  %v128 = vsel %vm102, %v34, 0
  %v131 = vsel %vm102, %v35, 0
  %v134 = vsel %vm102, %v36, 0
  %v137 = vsel %vm102, %v37, 0
  %v140 = vsel %vm102, %v38, 0
  %v143 = vsel %vm102, %v39, 0
  %v146 = vsel %vm102, %v40, 0
  %v149 = vsel %vm102, %v41, 0
  %v152 = vsel %vm102, %v42, 0
  %v155 = vsel %vm102, %v43, 0
  %v158 = vsel %vm102, %v44, 0
  %v161 = vsel %vm102, %v45, 0
  %v164 = vsel %vm102, %v46, 0
  %v167 = vsel %vm102, %v47, 0
  %v170 = vsel %vm102, %v48, 0
  %v173 = vsel %vm102, %v49, 0
  %v176 = vsel %vm102, %v50, 0
  %v179 = vsel %vm102, %v51, 0
  %v182 = vsel %vm102, %v52, 0
  %v185 = vsel %vm102, %v53, 0
  %v188 = vsel %vm102, %v54, 0
  %v191 = vsel %vm102, %v55, 0
  %v194 = vsel %vm102, %v56, 0
  %v197 = vsel %vm102, %v57, 0
  %v200 = vsel %vm102, %v58, 0
  %v203 = vsel %vm102, %v59, 0
  %v206 = vsel %vm102, %v60, 0
  %v209 = vsel %vm102, %v61, 0
  %v212 = vsel %vm102, %v62, 0
  %v215 = vsel %vm102, %v63, 0
  %v218 = vsel %vm102, %v64, 0
  %v221 = vsel %vm102, %v65, 0
  %v224 = vsel %vm102, %v66, 0
  %v227 = vsel %vm102, %v67, 0
  %v230 = vsel %vm102, %v68, 0
  %v233 = vsel %vm102, %v69, 0
  %v236 = vsel %vm102, %v70, 0
  %v239 = vsel %vm102, %v71, 0
  %v242 = vsel %vm102, %v72, 0
  %v245 = vsel %vm102, %v73, 0
  %v248 = vsel %vm102, %v74, 0
  %v251 = vsel %vm102, %v75, 0
  %v254 = vsel %vm102, %v76, 0
  %v257 = vsel %vm102, %v77, 0
  %v260 = vsel %vm102, %v78, 0
  %v263 = vsel %vm102, %v79, 0
  %v266 = vsel %vm102, %v80, 0
  %v269 = vsel %vm102, %v81, 0
  %v272 = vsel %vm102, %v82, 0
  %v275 = vsel %vm102, %v83, 0
  %v278 = vsel %vm102, %v84, 0
  %v281 = vsel %vm102, %v85, 0
  %v284 = vsel %vm102, %v86, 0
  %v287 = vsel %vm102, %v87, 0
  %v290 = vsel %vm102, %v88, 0
  %v293 = vsel %vm102, %v89, 0
  %vm295 = vcmask 1043456
  %v297 = vsel %vm295, %v94, 0
  %299 = vmatprep.subr.mxu0 0.0
  %300 = vmatpush1.msra.mxu0 %v90
  %301 = vmatprep.subr.mxu0 0.0
  %302 = vmatpush1.msra.mxu0 %v91
  %303 = vmatprep.subr.mxu0 0.0
  %304 = vmatpush1.msra.mxu0 %v92
  %305 = vmatprep.subr.mxu0 0.0
  %306 = vmatpush1.msra.mxu0 %v93
  %307 = vmatprep.subr.mxu0 0.0
  %308 = vmatpush1.msra.mxu0 %v297
  %309 = vmatprep.subr.mxu0 0.0
  %310 = vmatpush1.msra.mxu0 0.0
  %311 = vmatprep.subr.mxu0 0.0
  %312 = vmatpush1.msra.mxu0 0.0
  %313 = vmatprep.subr.mxu0 0.0
  %314 = vmatpush1.msra.mxu0 0.0
  %315 = vmatprep.subr.mxu0 0.0
  %316 = vmatpush1.msra.mxu0 0.0
  %317 = vmatprep.subr.mxu0 0.0
  %318 = vmatpush1.msra.mxu0 0.0
  %319 = vmatprep.subr.mxu0 0.0
  %320 = vmatpush1.msra.mxu0 0.0
  %321 = vmatprep.subr.mxu0 0.0
  %322 = vmatpush1.msra.mxu0 0.0
  %323 = vmatprep.subr.mxu0 0.0
  %324 = vmatpush1.msra.mxu0 0.0
  %325 = vmatprep.subr.mxu0 0.0
  %326 = vmatpush1.msra.mxu0 0.0
  %327 = vmatprep.subr.mxu0 0.0
  %328 = vmatpush1.msra.mxu0 0.0
  %329 = vmatprep.subr.mxu0 0.0
  %330 = vmatpush1.msra.mxu0 0.0
  %331 = vmatprep.subr.mxu0 0.0
  %332 = vmatpush1.msra.mxu0 0.0
  %333 = vmatprep.subr.mxu0 0.0
  %334 = vmatpush1.msra.mxu0 0.0
  %335 = vmatprep.subr.mxu0 0.0
  %336 = vmatpush1.msra.mxu0 0.0
  %337 = vmatprep.subr.mxu0 0.0
  %338 = vmatpush1.msra.mxu0 0.0
  %339 = vmatprep.subr.mxu0 0.0
  %340 = vmatpush1.msra.mxu0 0.0
  %341 = vmatprep.subr.mxu0 0.0
  %342 = vmatpush1.msra.mxu0 0.0
  %343 = vmatprep.subr.mxu0 0.0
  %344 = vmatpush1.msra.mxu0 0.0
  %345 = vmatprep.subr.mxu0 0.0
  %346 = vmatpush1.msra.mxu0 0.0
  %347 = vmatprep.subr.mxu0 0.0
  %348 = vmatpush1.msra.mxu0 0.0
  %349 = vmatprep.subr.mxu0 0.0
  %350 = vmatpush1.msra.mxu0 0.0
  %351 = vmatprep.subr.mxu0 0.0
  %352 = vmatpush1.msra.mxu0 0.0
  %353 = vmatprep.subr.mxu0 0.0
  %354 = vmatpush1.msra.mxu0 0.0
  %355 = vmatprep.subr.mxu0 0.0
  %356 = vmatpush1.msra.mxu0 0.0
  %357 = vmatprep.subr.mxu0 0.0
  %358 = vmatpush1.msra.mxu0 0.0
  %359 = vmatprep.subr.mxu0 0.0
  %360 = vmatpush1.msra.mxu0 0.0
  %361 = vmatprep.subr.mxu0 0.0
  %362 = vmatpush1.msra.mxu0 0.0
  %363 = vmatprep.mubr.f32.mxu0 0.0
  %364 = vmatmul.mubr.f32.gmra.mrb[0].mxu0 %v104
  %v365 = vpop.f32.mrb[0].mxu0
  %v366 = vadd.f32 %v100, %v365
  %v367 = vpop.f32.mrb[0].mxu0
  %368 = vmatprep.mubr.f32.mxu0 0.0
  %369 = vmatmul.mubr.f32.gmra.mrb[0].mxu0 %v107
  %v370 = vpop.f32.mrb[0].mxu0
  %v371 = vadd.f32 %v100, %v370
  %v372 = vpop.f32.mrb[0].mxu0
  %373 = vmatprep.mubr.f32.mxu0 0.0
  %374 = vmatmul.mubr.f32.gmra.mrb[0].mxu0 %v110
  %v375 = vpop.f32.mrb[0].mxu0
  %v376 = vadd.f32 %v100, %v375
  %v377 = vpop.f32.mrb[0].mxu0
  %378 = vmatprep.mubr.f32.mxu0 0.0
  %379 = vmatmul.mubr.f32.gmra.mrb[0].mxu0 %v113
  %v380 = vpop.f32.mrb[0].mxu0
  %v381 = vadd.f32 %v100, %v380
  %v382 = vpop.f32.mrb[0].mxu0
  %383 = vmatprep.mubr.f32.mxu0 0.0
  %384 = vmatmul.mubr.f32.gmra.mrb[0].mxu0 %v116
  %v385 = vpop.f32.mrb[0].mxu0
  %v386 = vadd.f32 %v100, %v385
  %v387 = vpop.f32.mrb[0].mxu0
  %388 = vmatprep.mubr.f32.mxu0 0.0
  %389 = vmatmul.mubr.f32.gmra.mrb[0].mxu0 %v119
  %v390 = vpop.f32.mrb[0].mxu0
  %v391 = vadd.f32 %v100, %v390
  %v392 = vpop.f32.mrb[0].mxu0
  %393 = vmatprep.mubr.f32.mxu0 0.0
  %394 = vmatmul.mubr.f32.gmra.mrb[0].mxu0 %v122
  %v395 = vpop.f32.mrb[0].mxu0
  %v396 = vadd.f32 %v100, %v395
  %v397 = vpop.f32.mrb[0].mxu0
  %398 = vmatprep.mubr.f32.mxu0 0.0
  %399 = vmatmul.mubr.f32.gmra.mrb[0].mxu0 %v125
  %v400 = vpop.f32.mrb[0].mxu0
  %v401 = vadd.f32 %v100, %v400
  %v402 = vpop.f32.mrb[0].mxu0
  %403 = vmatprep.mubr.f32.mxu0 0.0
  %404 = vmatmul.mubr.f32.gmra.mrb[0].mxu0 %v128
  %v405 = vpop.f32.mrb[0].mxu0
  %v406 = vadd.f32 %v100, %v405
  %v407 = vpop.f32.mrb[0].mxu0
  %408 = vmatprep.mubr.f32.mxu0 0.0
  %409 = vmatmul.mubr.f32.gmra.mrb[0].mxu0 %v131
  %v410 = vpop.f32.mrb[0].mxu0
  %v411 = vadd.f32 %v100, %v410
  %v412 = vpop.f32.mrb[0].mxu0
  %413 = vmatprep.mubr.f32.mxu0 0.0
  %414 = vmatmul.mubr.f32.gmra.mrb[0].mxu0 %v134
  %v415 = vpop.f32.mrb[0].mxu0
  %v416 = vadd.f32 %v100, %v415
  %v417 = vpop.f32.mrb[0].mxu0
  %418 = vmatprep.mubr.f32.mxu0 0.0
  %419 = vmatmul.mubr.f32.gmra.mrb[0].mxu0 %v137
  %v420 = vpop.f32.mrb[0].mxu0
  %v421 = vadd.f32 %v100, %v420
  %v422 = vpop.f32.mrb[0].mxu0
  %423 = vmatprep.mubr.f32.mxu0 0.0
  %424 = vmatmul.mubr.f32.gmra.mrb[0].mxu0 %v140
  %v425 = vpop.f32.mrb[0].mxu0
  %v426 = vadd.f32 %v100, %v425
  %v427 = vpop.f32.mrb[0].mxu0
  %428 = vmatprep.mubr.f32.mxu0 0.0
  %429 = vmatmul.mubr.f32.gmra.mrb[0].mxu0 %v143
  %v430 = vpop.f32.mrb[0].mxu0
  %v431 = vadd.f32 %v100, %v430
  %v432 = vpop.f32.mrb[0].mxu0
  %433 = vmatprep.mubr.f32.mxu0 0.0
  %434 = vmatmul.mubr.f32.gmra.mrb[0].mxu0 %v146
  %v435 = vpop.f32.mrb[0].mxu0
  %v436 = vadd.f32 %v100, %v435
  %v437 = vpop.f32.mrb[0].mxu0
  %438 = vmatprep.mubr.f32.mxu0 0.0
  %439 = vmatmul.mubr.f32.gmra.mrb[0].mxu0 %v149
  %v440 = vpop.f32.mrb[0].mxu0
  %v441 = vadd.f32 %v100, %v440
  %v442 = vpop.f32.mrb[0].mxu0
  %443 = vmatprep.mubr.f32.mxu0 0.0
  %444 = vmatmul.mubr.f32.gmra.mrb[0].mxu0 %v152
  %v445 = vpop.f32.mrb[0].mxu0
  %v446 = vadd.f32 %v100, %v445
  %v447 = vpop.f32.mrb[0].mxu0
  %448 = vmatprep.mubr.f32.mxu0 0.0
  %449 = vmatmul.mubr.f32.gmra.mrb[0].mxu0 %v155
  %v450 = vpop.f32.mrb[0].mxu0
  %v451 = vadd.f32 %v100, %v450
  %v452 = vpop.f32.mrb[0].mxu0
  %453 = vmatprep.mubr.f32.mxu0 0.0
  %454 = vmatmul.mubr.f32.gmra.mrb[0].mxu0 %v158
  %v455 = vpop.f32.mrb[0].mxu0
  %v456 = vadd.f32 %v100, %v455
  %v457 = vpop.f32.mrb[0].mxu0
  %458 = vmatprep.mubr.f32.mxu0 0.0
  %459 = vmatmul.mubr.f32.gmra.mrb[0].mxu0 %v161
  %v460 = vpop.f32.mrb[0].mxu0
  %v461 = vadd.f32 %v100, %v460
  %v462 = vpop.f32.mrb[0].mxu0
  %463 = vmatprep.mubr.f32.mxu0 0.0
  %464 = vmatmul.mubr.f32.gmra.mrb[0].mxu0 %v164
  %v465 = vpop.f32.mrb[0].mxu0
  %v466 = vadd.f32 %v100, %v465
  %v467 = vpop.f32.mrb[0].mxu0
  %468 = vmatprep.mubr.f32.mxu0 0.0
  %469 = vmatmul.mubr.f32.gmra.mrb[0].mxu0 %v167
  %v470 = vpop.f32.mrb[0].mxu0
  %v471 = vadd.f32 %v100, %v470
  %v472 = vpop.f32.mrb[0].mxu0
  %473 = vmatprep.mubr.f32.mxu0 0.0
  %474 = vmatmul.mubr.f32.gmra.mrb[0].mxu0 %v170
  %v475 = vpop.f32.mrb[0].mxu0
  %v476 = vadd.f32 %v100, %v475
  %v477 = vpop.f32.mrb[0].mxu0
  %478 = vmatprep.mubr.f32.mxu0 0.0
  %479 = vmatmul.mubr.f32.gmra.mrb[0].mxu0 %v173
  %v480 = vpop.f32.mrb[0].mxu0
  %v481 = vadd.f32 %v100, %v480
  %v482 = vpop.f32.mrb[0].mxu0
  %483 = vmatprep.mubr.f32.mxu0 0.0
  %484 = vmatmul.mubr.f32.gmra.mrb[0].mxu0 %v176
  %v485 = vpop.f32.mrb[0].mxu0
  %v486 = vadd.f32 %v100, %v485
  %v487 = vpop.f32.mrb[0].mxu0
  %488 = vmatprep.mubr.f32.mxu0 0.0
  %489 = vmatmul.mubr.f32.gmra.mrb[0].mxu0 %v179
  %v490 = vpop.f32.mrb[0].mxu0
  %v491 = vadd.f32 %v100, %v490
  %v492 = vpop.f32.mrb[0].mxu0
  %493 = vmatprep.mubr.f32.mxu0 0.0
  %494 = vmatmul.mubr.f32.gmra.mrb[0].mxu0 %v182
  %v495 = vpop.f32.mrb[0].mxu0
  %v496 = vadd.f32 %v100, %v495
  %v497 = vpop.f32.mrb[0].mxu0
  %498 = vmatprep.mubr.f32.mxu0 0.0
  %499 = vmatmul.mubr.f32.gmra.mrb[0].mxu0 %v185
  %v500 = vpop.f32.mrb[0].mxu0
  %v501 = vadd.f32 %v100, %v500
  %v502 = vpop.f32.mrb[0].mxu0
  %503 = vmatprep.mubr.f32.mxu0 0.0
  %504 = vmatmul.mubr.f32.gmra.mrb[0].mxu0 %v188
  %v505 = vpop.f32.mrb[0].mxu0
  %v506 = vadd.f32 %v100, %v505
  %v507 = vpop.f32.mrb[0].mxu0
  %508 = vmatprep.mubr.f32.mxu0 0.0
  %509 = vmatmul.mubr.f32.gmra.mrb[0].mxu0 %v191
  %v510 = vpop.f32.mrb[0].mxu0
  %v511 = vadd.f32 %v100, %v510
  %v512 = vpop.f32.mrb[0].mxu0
  %513 = vmatprep.mubr.f32.mxu0 0.0
  %514 = vmatmul.mubr.f32.gmra.mrb[0].mxu0 %v194
  %v515 = vpop.f32.mrb[0].mxu0
  %v516 = vadd.f32 %v100, %v515
  %v517 = vpop.f32.mrb[0].mxu0
  %518 = vmatprep.mubr.f32.mxu0 0.0
  %519 = vmatmul.mubr.f32.gmra.mrb[0].mxu0 %v197
  %v520 = vpop.f32.mrb[0].mxu0
  %v521 = vadd.f32 %v100, %v520
  %v522 = vpop.f32.mrb[0].mxu0
  %523 = vmatprep.mubr.f32.mxu0 0.0
  %524 = vmatmul.mubr.f32.gmra.mrb[0].mxu0 %v200
  %v525 = vpop.f32.mrb[0].mxu0
  %v526 = vadd.f32 %v100, %v525
  %v527 = vpop.f32.mrb[0].mxu0
  %528 = vmatprep.mubr.f32.mxu0 0.0
  %529 = vmatmul.mubr.f32.gmra.mrb[0].mxu0 %v203
  %v530 = vpop.f32.mrb[0].mxu0
  %v531 = vadd.f32 %v100, %v530
  %v532 = vpop.f32.mrb[0].mxu0
  %533 = vmatprep.mubr.f32.mxu0 0.0
  %534 = vmatmul.mubr.f32.gmra.mrb[0].mxu0 %v206
  %v535 = vpop.f32.mrb[0].mxu0
  %v536 = vadd.f32 %v100, %v535
  %v537 = vpop.f32.mrb[0].mxu0
  %538 = vmatprep.mubr.f32.mxu0 0.0
  %539 = vmatmul.mubr.f32.gmra.mrb[0].mxu0 %v209
  %v540 = vpop.f32.mrb[0].mxu0
  %v541 = vadd.f32 %v100, %v540
  %v542 = vpop.f32.mrb[0].mxu0
  %543 = vmatprep.mubr.f32.mxu0 0.0
  %544 = vmatmul.mubr.f32.gmra.mrb[0].mxu0 %v212
  %v545 = vpop.f32.mrb[0].mxu0
  %v546 = vadd.f32 %v100, %v545
  %v547 = vpop.f32.mrb[0].mxu0
  %548 = vmatprep.mubr.f32.mxu0 0.0
  %549 = vmatmul.mubr.f32.gmra.mrb[0].mxu0 %v215
  %v550 = vpop.f32.mrb[0].mxu0
  %v551 = vadd.f32 %v100, %v550
  %v552 = vpop.f32.mrb[0].mxu0
  %553 = vmatprep.mubr.f32.mxu0 0.0
  %554 = vmatmul.mubr.f32.gmra.mrb[0].mxu0 %v218
  %v555 = vpop.f32.mrb[0].mxu0
  %v556 = vadd.f32 %v100, %v555
  %v557 = vpop.f32.mrb[0].mxu0
  %558 = vmatprep.mubr.f32.mxu0 0.0
  %559 = vmatmul.mubr.f32.gmra.mrb[0].mxu0 %v221
  %v560 = vpop.f32.mrb[0].mxu0
  %v561 = vadd.f32 %v100, %v560
  %v562 = vpop.f32.mrb[0].mxu0
  %563 = vmatprep.mubr.f32.mxu0 0.0
  %564 = vmatmul.mubr.f32.gmra.mrb[0].mxu0 %v224
  %v565 = vpop.f32.mrb[0].mxu0
  %v566 = vadd.f32 %v100, %v565
  %v567 = vpop.f32.mrb[0].mxu0
  %568 = vmatprep.mubr.f32.mxu0 0.0
  %569 = vmatmul.mubr.f32.gmra.mrb[0].mxu0 %v227
  %v570 = vpop.f32.mrb[0].mxu0
  %v571 = vadd.f32 %v100, %v570
  %v572 = vpop.f32.mrb[0].mxu0
  %573 = vmatprep.mubr.f32.mxu0 0.0
  %574 = vmatmul.mubr.f32.gmra.mrb[0].mxu0 %v230
  %v575 = vpop.f32.mrb[0].mxu0
  %v576 = vadd.f32 %v100, %v575
  %v577 = vpop.f32.mrb[0].mxu0
  %578 = vmatprep.mubr.f32.mxu0 0.0
  %579 = vmatmul.mubr.f32.gmra.mrb[0].mxu0 %v233
  %v580 = vpop.f32.mrb[0].mxu0
  %v581 = vadd.f32 %v100, %v580
  %v582 = vpop.f32.mrb[0].mxu0
  %583 = vmatprep.mubr.f32.mxu0 0.0
  %584 = vmatmul.mubr.f32.gmra.mrb[0].mxu0 %v236
  %v585 = vpop.f32.mrb[0].mxu0
  %v586 = vadd.f32 %v100, %v585
  %v587 = vpop.f32.mrb[0].mxu0
  %588 = vmatprep.mubr.f32.mxu0 0.0
  %589 = vmatmul.mubr.f32.gmra.mrb[0].mxu0 %v239
  %v590 = vpop.f32.mrb[0].mxu0
  %v591 = vadd.f32 %v100, %v590
  %v592 = vpop.f32.mrb[0].mxu0
  %593 = vmatprep.mubr.f32.mxu0 0.0
  %594 = vmatmul.mubr.f32.gmra.mrb[0].mxu0 %v242
  %v595 = vpop.f32.mrb[0].mxu0
  %v596 = vadd.f32 %v100, %v595
  %v597 = vpop.f32.mrb[0].mxu0
  %598 = vmatprep.mubr.f32.mxu0 0.0
  %599 = vmatmul.mubr.f32.gmra.mrb[0].mxu0 %v245
  %v600 = vpop.f32.mrb[0].mxu0
  %v601 = vadd.f32 %v100, %v600
  %v602 = vpop.f32.mrb[0].mxu0
  %603 = vmatprep.mubr.f32.mxu0 0.0
  %604 = vmatmul.mubr.f32.gmra.mrb[0].mxu0 %v248
  %v605 = vpop.f32.mrb[0].mxu0
  %v606 = vadd.f32 %v100, %v605
  %v607 = vpop.f32.mrb[0].mxu0
  %608 = vmatprep.mubr.f32.mxu0 0.0
  %609 = vmatmul.mubr.f32.gmra.mrb[0].mxu0 %v251
  %v610 = vpop.f32.mrb[0].mxu0
  %v611 = vadd.f32 %v100, %v610
  %v612 = vpop.f32.mrb[0].mxu0
  %613 = vmatprep.mubr.f32.mxu0 0.0
  %614 = vmatmul.mubr.f32.gmra.mrb[0].mxu0 %v254
  %v615 = vpop.f32.mrb[0].mxu0
  %v616 = vadd.f32 %v100, %v615
  %v617 = vpop.f32.mrb[0].mxu0
  %618 = vmatprep.mubr.f32.mxu0 0.0
  %619 = vmatmul.mubr.f32.gmra.mrb[0].mxu0 %v257
  %v620 = vpop.f32.mrb[0].mxu0
  %v621 = vadd.f32 %v100, %v620
  %v622 = vpop.f32.mrb[0].mxu0
  %623 = vmatprep.mubr.f32.mxu0 0.0
  %624 = vmatmul.mubr.f32.gmra.mrb[0].mxu0 %v260
  %v625 = vpop.f32.mrb[0].mxu0
  %v626 = vadd.f32 %v100, %v625
  %v627 = vpop.f32.mrb[0].mxu0
  %628 = vmatprep.mubr.f32.mxu0 0.0
  %629 = vmatmul.mubr.f32.gmra.mrb[0].mxu0 %v263
  %v630 = vpop.f32.mrb[0].mxu0
  %v631 = vadd.f32 %v100, %v630
  %v632 = vpop.f32.mrb[0].mxu0
  %633 = vmatprep.mubr.f32.mxu0 0.0
  %634 = vmatmul.mubr.f32.gmra.mrb[0].mxu0 %v266
  %v635 = vpop.f32.mrb[0].mxu0
  %v636 = vadd.f32 %v100, %v635
  %v637 = vpop.f32.mrb[0].mxu0
  %638 = vmatprep.mubr.f32.mxu0 0.0
  %639 = vmatmul.mubr.f32.gmra.mrb[0].mxu0 %v269
  %v640 = vpop.f32.mrb[0].mxu0
  %v641 = vadd.f32 %v100, %v640
  %v642 = vpop.f32.mrb[0].mxu0
  %643 = vmatprep.mubr.f32.mxu0 0.0
  %644 = vmatmul.mubr.f32.gmra.mrb[0].mxu0 %v272
  %v645 = vpop.f32.mrb[0].mxu0
  %v646 = vadd.f32 %v100, %v645
  %v647 = vpop.f32.mrb[0].mxu0
  %648 = vmatprep.mubr.f32.mxu0 0.0
  %649 = vmatmul.mubr.f32.gmra.mrb[0].mxu0 %v275
  %v650 = vpop.f32.mrb[0].mxu0
  %v651 = vadd.f32 %v100, %v650
  %v652 = vpop.f32.mrb[0].mxu0
  %653 = vmatprep.mubr.f32.mxu0 0.0
  %654 = vmatmul.mubr.f32.gmra.mrb[0].mxu0 %v278
  %v655 = vpop.f32.mrb[0].mxu0
  %v656 = vadd.f32 %v100, %v655
  %v657 = vpop.f32.mrb[0].mxu0
  %658 = vmatprep.mubr.f32.mxu0 0.0
  %659 = vmatmul.mubr.f32.gmra.mrb[0].mxu0 %v281
  %v660 = vpop.f32.mrb[0].mxu0
  %v661 = vadd.f32 %v100, %v660
  %v662 = vpop.f32.mrb[0].mxu0
  %663 = vmatprep.mubr.f32.mxu0 0.0
  %664 = vmatmul.mubr.f32.gmra.mrb[0].mxu0 %v284
  %v665 = vpop.f32.mrb[0].mxu0
  %v666 = vadd.f32 %v100, %v665
  %v667 = vpop.f32.mrb[0].mxu0
  %668 = vmatprep.mubr.f32.mxu0 0.0
  %669 = vmatmul.mubr.f32.gmra.mrb[0].mxu0 %v287
  %v670 = vpop.f32.mrb[0].mxu0
  %v671 = vadd.f32 %v100, %v670
  %v672 = vpop.f32.mrb[0].mxu0
  %673 = vmatprep.mubr.f32.mxu0 0.0
  %674 = vmatmul.mubr.f32.gmra.mrb[0].mxu0 %v290
  %v675 = vpop.f32.mrb[0].mxu0
  %v676 = vadd.f32 %v100, %v675
  %v677 = vpop.f32.mrb[0].mxu0
  %678 = vmatprep.mubr.f32.mxu0 0.0
  %679 = vmatmul.mubr.f32.gmra.mrb[0].mxu0 %v293
  %v680 = vpop.f32.mrb[0].mxu0
  %v681 = vadd.f32 %v100, %v680
  %v682 = vpop.f32.mrb[0].mxu0
  %683 = vdwg.mxu0
  %v684 = vmax.f32 %v366, 0.0
  %v685 = vmax.f32 %v371, 0.0
  %v686 = vmax.f32 %v376, 0.0
  %v687 = vmax.f32 %v381, 0.0
  %v688 = vmax.f32 %v386, 0.0
  %v689 = vmax.f32 %v391, 0.0
  %v690 = vmax.f32 %v396, 0.0
  %v691 = vmax.f32 %v401, 0.0
  %v692 = vmax.f32 %v406, 0.0
  %v693 = vmax.f32 %v411, 0.0
  %v694 = vmax.f32 %v416, 0.0
  %v695 = vmax.f32 %v421, 0.0
  %v696 = vmax.f32 %v426, 0.0
  %v697 = vmax.f32 %v431, 0.0
  %v698 = vmax.f32 %v436, 0.0
  %v699 = vmax.f32 %v441, 0.0
  %v700 = vmax.f32 %v446, 0.0
  %v701 = vmax.f32 %v451, 0.0
  %v702 = vmax.f32 %v456, 0.0
  %v703 = vmax.f32 %v461, 0.0
  %v704 = vmax.f32 %v466, 0.0
  %v705 = vmax.f32 %v471, 0.0
  %v706 = vmax.f32 %v476, 0.0
  %v707 = vmax.f32 %v481, 0.0
  %v708 = vmax.f32 %v486, 0.0
  %v709 = vmax.f32 %v491, 0.0
  %v710 = vmax.f32 %v496, 0.0
  %v711 = vmax.f32 %v501, 0.0
  %v712 = vmax.f32 %v506, 0.0
  %v713 = vmax.f32 %v511, 0.0
  %v714 = vmax.f32 %v516, 0.0
  %v715 = vmax.f32 %v521, 0.0
  %v716 = vmax.f32 %v526, 0.0
  %v717 = vmax.f32 %v531, 0.0
  %v718 = vmax.f32 %v536, 0.0
  %v719 = vmax.f32 %v541, 0.0
  %v720 = vmax.f32 %v546, 0.0
  %v721 = vmax.f32 %v551, 0.0
  %v722 = vmax.f32 %v556, 0.0
  %v723 = vmax.f32 %v561, 0.0
  %v724 = vmax.f32 %v566, 0.0
  %v725 = vmax.f32 %v571, 0.0
  %v726 = vmax.f32 %v576, 0.0
  %v727 = vmax.f32 %v581, 0.0
  %v728 = vmax.f32 %v586, 0.0
  %v729 = vmax.f32 %v591, 0.0
  %v730 = vmax.f32 %v596, 0.0
  %v731 = vmax.f32 %v601, 0.0
  %v732 = vmax.f32 %v606, 0.0
  %v733 = vmax.f32 %v611, 0.0
  %v734 = vmax.f32 %v616, 0.0
  %v735 = vmax.f32 %v621, 0.0
  %v736 = vmax.f32 %v626, 0.0
  %v737 = vmax.f32 %v631, 0.0
  %v738 = vmax.f32 %v636, 0.0
  %v739 = vmax.f32 %v641, 0.0
  %v740 = vmax.f32 %v646, 0.0
  %v741 = vmax.f32 %v651, 0.0
  %v742 = vmax.f32 %v656, 0.0
  %v743 = vmax.f32 %v661, 0.0
  %v744 = vmax.f32 %v666, 0.0
  %v745 = vmax.f32 %v671, 0.0
  %v746 = vmax.f32 %v676, 0.0
  %v747 = vmax.f32 %v681, 0.0
  %s748 = scalar_lea.vmem [#allocation2], 24
  %749 = vst [vmem:[%s748 + $0x1] sm:$0xff] %v684
  %750 = vst [vmem:[%s748 + $0x9] sm:$0xff] %v685
  %751 = vst [vmem:[%s748 + $0x19] sm:$0xff] %v686
  %752 = vst [vmem:[%s748 + $0x21] sm:$0xff] %v687
  %753 = vst [vmem:[%s748 + $0x31] sm:$0xff] %v688
  %754 = vst [vmem:[%s748 + $0x39] sm:$0xff] %v689
  %755 = vst [vmem:[%s748 + $0x49] sm:$0xff] %v690
  %756 = vst [vmem:[%s748 + $0x51] sm:$0xff] %v691
  %757 = vst [vmem:[%s748 + $0x61] sm:$0xff] %v692
  %758 = vst [vmem:[%s748 + $0x69] sm:$0xff] %v693
  %759 = vst [vmem:[%s748 + $0x79] sm:$0xff] %v694
  %760 = vst [vmem:[%s748 + $0x81] sm:$0xff] %v695
  %761 = vst [vmem:[%s748 + $0x91] sm:$0xff] %v696
  %762 = vst [vmem:[%s748 + $0x99] sm:$0xff] %v697
  %763 = vst [vmem:[%s748 + $0xa9] sm:$0xff] %v698
  %764 = vst [vmem:[%s748 + $0xb1] sm:$0xff] %v699
  %765 = vst [vmem:[%s748 + $0xc1] sm:$0xff] %v700
  %766 = vst [vmem:[%s748 + $0xc9] sm:$0xff] %v701
  %767 = vst [vmem:[%s748 + $0xd9] sm:$0xff] %v702
  %768 = vst [vmem:[%s748 + $0xe1] sm:$0xff] %v703
  %769 = vst [vmem:[%s748 + $0xf1] sm:$0xff] %v704
  %770 = vst [vmem:[%s748 + $0xf9] sm:$0xff] %v705
  %771 = vst [vmem:[%s748 + $0x109] sm:$0xff] %v706
  %772 = vst [vmem:[%s748 + $0x111] sm:$0xff] %v707
  %773 = vst [vmem:[%s748 + $0x121] sm:$0xff] %v708
  %774 = vst [vmem:[%s748 + $0x129] sm:$0xff] %v709
  %775 = vst [vmem:[%s748 + $0x139] sm:$0xff] %v710
  %776 = vst [vmem:[%s748 + $0x141] sm:$0xff] %v711
  %777 = vst [vmem:[%s748 + $0x151] sm:$0xff] %v712
  %778 = vst [vmem:[%s748 + $0x159] sm:$0xff] %v713
  %779 = vst [vmem:[%s748 + $0x169] sm:$0xff] %v714
  %780 = vst [vmem:[%s748 + $0x171] sm:$0xff] %v715
  %781 = vst [vmem:[%s748 + $0x1b1] sm:$0xff] %v716
  %782 = vst [vmem:[%s748 + $0x1b9] sm:$0xff] %v717
  %783 = vst [vmem:[%s748 + $0x1c9] sm:$0xff] %v718
  %784 = vst [vmem:[%s748 + $0x1d1] sm:$0xff] %v719
  %785 = vst [vmem:[%s748 + $0x1e1] sm:$0xff] %v720
  %786 = vst [vmem:[%s748 + $0x1e9] sm:$0xff] %v721
  %787 = vst [vmem:[%s748 + $0x1f9] sm:$0xff] %v722
  %788 = vst [vmem:[%s748 + $0x201] sm:$0xff] %v723
  %789 = vst [vmem:[%s748 + $0x211] sm:$0xff] %v724
  %790 = vst [vmem:[%s748 + $0x219] sm:$0xff] %v725
  %791 = vst [vmem:[%s748 + $0x229] sm:$0xff] %v726
  %792 = vst [vmem:[%s748 + $0x231] sm:$0xff] %v727
  %793 = vst [vmem:[%s748 + $0x241] sm:$0xff] %v728
  %794 = vst [vmem:[%s748 + $0x249] sm:$0xff] %v729
  %795 = vst [vmem:[%s748 + $0x259] sm:$0xff] %v730
  %796 = vst [vmem:[%s748 + $0x261] sm:$0xff] %v731
  %797 = vst [vmem:[%s748 + $0x271] sm:$0xff] %v732
  %798 = vst [vmem:[%s748 + $0x279] sm:$0xff] %v733
  %799 = vst [vmem:[%s748 + $0x289] sm:$0xff] %v734
  %800 = vst [vmem:[%s748 + $0x291] sm:$0xff] %v735
  %801 = vst [vmem:[%s748 + $0x2a1] sm:$0xff] %v736
  %802 = vst [vmem:[%s748 + $0x2a9] sm:$0xff] %v737
  %803 = vst [vmem:[%s748 + $0x2b9] sm:$0xff] %v738
  %804 = vst [vmem:[%s748 + $0x2c1] sm:$0xff] %v739
  %805 = vst [vmem:[%s748 + $0x2d1] sm:$0xff] %v740
  %806 = vst [vmem:[%s748 + $0x2d9] sm:$0xff] %v741
  %807 = vst [vmem:[%s748 + $0x2e9] sm:$0xff] %v742
  %808 = vst [vmem:[%s748 + $0x2f1] sm:$0xff] %v743
  %809 = vst [vmem:[%s748 + $0x301] sm:$0xff] %v744
  %810 = vst [vmem:[%s748 + $0x309] sm:$0xff] %v745
  %811 = vst [vmem:[%s748 + $0x319] sm:$0xff] %v746
  %812 = vst [vmem:[%s748 + $0x321] sm:$0xff] %v747
  %813 = vst [vmem:[#allocation2 + $0x1] sm:$0xff] %v714
  %814 = vst [vmem:[#allocation2 + $0x9] sm:$0xff] %v715
  %815 = vst [vmem:[#allocation2 + $0x1b1] sm:$0xff] %v746
  %816 = vst [vmem:[#allocation2 + $0x1b9] sm:$0xff] %v747
  %s817 = scalar_lea.vmem [#allocation2], 408
  %818 = vst [vmem:[%s817 + $0x1] sm:$0xff] %v684
  %819 = vst [vmem:[%s817 + $0x9] sm:$0xff] %v685
  %820 = vst [vmem:[%s817 + $0x1b1] sm:$0xff] %v716
  %821 = vst [vmem:[%s817 + $0x1b9] sm:$0xff] %v717
  %v822 = vld [vmem:[#allocation2 + $0x10] sm:$0x1]
  %v823 = vld [vmem:[#allocation2 + $0x28] sm:$0x1]
  %v824 = vld [vmem:[#allocation2 + $0x40] sm:$0x1]
  %v825 = vld [vmem:[#allocation2 + $0x58] sm:$0x1]
  %v826 = vld [vmem:[#allocation2 + $0x70] sm:$0x1]
  %v827 = vld [vmem:[#allocation2 + $0x88] sm:$0x1]
  %v828 = vld [vmem:[#allocation2 + $0xa0] sm:$0x1]
  %v829 = vld [vmem:[#allocation2 + $0xb8] sm:$0x1]
  %v830 = vld [vmem:[#allocation2 + $0xd0] sm:$0x1]
  %v831 = vld [vmem:[#allocation2 + $0xe8] sm:$0x1]
  %v832 = vld [vmem:[#allocation2 + $0x100] sm:$0x1]
  %v833 = vld [vmem:[#allocation2 + $0x118] sm:$0x1]
  %v834 = vld [vmem:[#allocation2 + $0x130] sm:$0x1]
  %v835 = vld [vmem:[#allocation2 + $0x148] sm:$0x1]
  %v836 = vld [vmem:[#allocation2 + $0x160] sm:$0x1]
  %v837 = vld [vmem:[#allocation2 + $0x178] sm:$0x1]
  %v838 = vld [vmem:[#allocation2 + $0x190] sm:$0x1]
  %v839 = vld [vmem:[#allocation2 + $0x1a8] sm:$0x1]
  %v840 = vld [vmem:[#allocation2 + $0x1c0] sm:$0x1]
  %v841 = vld [vmem:[#allocation2 + $0x1d8] sm:$0x1]
  %v842 = vld [vmem:[#allocation2 + $0x1f0] sm:$0x1]
  %v843 = vld [vmem:[#allocation2 + $0x208] sm:$0x1]
  %v844 = vld [vmem:[#allocation2 + $0x220] sm:$0x1]
  %v845 = vld [vmem:[#allocation2 + $0x238] sm:$0x1]
  %v846 = vld [vmem:[#allocation2 + $0x250] sm:$0x1]
  %v847 = vld [vmem:[#allocation2 + $0x268] sm:$0x1]
  %v848 = vld [vmem:[#allocation2 + $0x280] sm:$0x1]
  %v849 = vld [vmem:[#allocation2 + $0x298] sm:$0x1]
  %v850 = vld [vmem:[#allocation2 + $0x2b0] sm:$0x1]
  %v851 = vld [vmem:[#allocation2 + $0x2c8] sm:$0x1]
  %v852 = vld [vmem:[#allocation2 + $0x2e0] sm:$0x1]
  %v853 = vld [vmem:[#allocation2 + $0x2f8] sm:$0x1]
  %v854 = vld [vmem:[#allocation2 + $0x310] sm:$0x1]
  %v855 = vld [vmem:[#allocation2 + $0x328] sm:$0x1]
  %v856 = vld [vmem:[#allocation2 + $0x340] sm:$0x1]
  %v857 = vld [vmem:[#allocation2 + $0x358] sm:$0x1]
  %858 = vst [vmem:[#allocation2] sm:$0x1] %v822
  %859 = vst [vmem:[#allocation2 + $0x18] sm:$0x1] %v823
  %860 = vst [vmem:[#allocation2 + $0x30] sm:$0x1] %v824
  %861 = vst [vmem:[#allocation2 + $0x48] sm:$0x1] %v825
  %862 = vst [vmem:[#allocation2 + $0x60] sm:$0x1] %v826
  %863 = vst [vmem:[#allocation2 + $0x78] sm:$0x1] %v827
  %864 = vst [vmem:[#allocation2 + $0x90] sm:$0x1] %v828
  %865 = vst [vmem:[#allocation2 + $0xa8] sm:$0x1] %v829
  %866 = vst [vmem:[#allocation2 + $0xc0] sm:$0x1] %v830
  %867 = vst [vmem:[#allocation2 + $0xd8] sm:$0x1] %v831
  %868 = vst [vmem:[#allocation2 + $0xf0] sm:$0x1] %v832
  %869 = vst [vmem:[#allocation2 + $0x108] sm:$0x1] %v833
  %870 = vst [vmem:[#allocation2 + $0x120] sm:$0x1] %v834
  %871 = vst [vmem:[#allocation2 + $0x138] sm:$0x1] %v835
  %872 = vst [vmem:[#allocation2 + $0x150] sm:$0x1] %v836
  %873 = vst [vmem:[#allocation2 + $0x168] sm:$0x1] %v837
  %874 = vst [vmem:[#allocation2 + $0x180] sm:$0x1] %v838
  %875 = vst [vmem:[#allocation2 + $0x198] sm:$0x1] %v839
  %876 = vst [vmem:[#allocation2 + $0x1b0] sm:$0x1] %v840
  %877 = vst [vmem:[#allocation2 + $0x1c8] sm:$0x1] %v841
  %878 = vst [vmem:[#allocation2 + $0x1e0] sm:$0x1] %v842
  %879 = vst [vmem:[#allocation2 + $0x1f8] sm:$0x1] %v843
  %880 = vst [vmem:[#allocation2 + $0x210] sm:$0x1] %v844
  %881 = vst [vmem:[#allocation2 + $0x228] sm:$0x1] %v845
  %882 = vst [vmem:[#allocation2 + $0x240] sm:$0x1] %v846
  %883 = vst [vmem:[#allocation2 + $0x258] sm:$0x1] %v847
  %884 = vst [vmem:[#allocation2 + $0x270] sm:$0x1] %v848
  %885 = vst [vmem:[#allocation2 + $0x288] sm:$0x1] %v849
  %886 = vst [vmem:[#allocation2 + $0x2a0] sm:$0x1] %v850
  %887 = vst [vmem:[#allocation2 + $0x2b8] sm:$0x1] %v851
  %888 = vst [vmem:[#allocation2 + $0x2d0] sm:$0x1] %v852
  %889 = vst [vmem:[#allocation2 + $0x2e8] sm:$0x1] %v853
  %890 = vst [vmem:[#allocation2 + $0x300] sm:$0x1] %v854
  %891 = vst [vmem:[#allocation2 + $0x318] sm:$0x1] %v855
  %892 = vst [vmem:[#allocation2 + $0x330] sm:$0x1] %v856
  %893 = vst [vmem:[#allocation2 + $0x348] sm:$0x1] %v857
  %v894 = vld [vmem:[#allocation2 + $0x1] sm:$0x1]
  %v895 = vld [vmem:[#allocation2 + $0x19] sm:$0x1]
  %v896 = vld [vmem:[#allocation2 + $0x31] sm:$0x1]
  %v897 = vld [vmem:[#allocation2 + $0x49] sm:$0x1]
  %v898 = vld [vmem:[#allocation2 + $0x61] sm:$0x1]
  %v899 = vld [vmem:[#allocation2 + $0x79] sm:$0x1]
  %v900 = vld [vmem:[#allocation2 + $0x91] sm:$0x1]
  %v901 = vld [vmem:[#allocation2 + $0xa9] sm:$0x1]
  %v902 = vld [vmem:[#allocation2 + $0xc1] sm:$0x1]
  %v903 = vld [vmem:[#allocation2 + $0xd9] sm:$0x1]
  %v904 = vld [vmem:[#allocation2 + $0xf1] sm:$0x1]
  %v905 = vld [vmem:[#allocation2 + $0x109] sm:$0x1]
  %v906 = vld [vmem:[#allocation2 + $0x121] sm:$0x1]
  %v907 = vld [vmem:[#allocation2 + $0x139] sm:$0x1]
  %v908 = vld [vmem:[#allocation2 + $0x151] sm:$0x1]
  %v909 = vld [vmem:[#allocation2 + $0x169] sm:$0x1]
  %v910 = vld [vmem:[#allocation2 + $0x181] sm:$0x1]
  %v911 = vld [vmem:[#allocation2 + $0x199] sm:$0x1]
  %v912 = vld [vmem:[#allocation2 + $0x1b1] sm:$0x1]
  %v913 = vld [vmem:[#allocation2 + $0x1c9] sm:$0x1]
  %v914 = vld [vmem:[#allocation2 + $0x1e1] sm:$0x1]
  %v915 = vld [vmem:[#allocation2 + $0x1f9] sm:$0x1]
  %v916 = vld [vmem:[#allocation2 + $0x211] sm:$0x1]
  %v917 = vld [vmem:[#allocation2 + $0x229] sm:$0x1]
  %v918 = vld [vmem:[#allocation2 + $0x241] sm:$0x1]
  %v919 = vld [vmem:[#allocation2 + $0x259] sm:$0x1]
  %v920 = vld [vmem:[#allocation2 + $0x271] sm:$0x1]
  %v921 = vld [vmem:[#allocation2 + $0x289] sm:$0x1]
  %v922 = vld [vmem:[#allocation2 + $0x2a1] sm:$0x1]
  %v923 = vld [vmem:[#allocation2 + $0x2b9] sm:$0x1]
  %v924 = vld [vmem:[#allocation2 + $0x2d1] sm:$0x1]
  %v925 = vld [vmem:[#allocation2 + $0x2e9] sm:$0x1]
  %v926 = vld [vmem:[#allocation2 + $0x301] sm:$0x1]
  %v927 = vld [vmem:[#allocation2 + $0x319] sm:$0x1]
  %v928 = vld [vmem:[#allocation2 + $0x331] sm:$0x1]
  %v929 = vld [vmem:[#allocation2 + $0x349] sm:$0x1]
  %930 = vst [vmem:[#allocation2 + $0x11] sm:$0x1] %v894
  %931 = vst [vmem:[#allocation2 + $0x29] sm:$0x1] %v895
  %932 = vst [vmem:[#allocation2 + $0x41] sm:$0x1] %v896
  %933 = vst [vmem:[#allocation2 + $0x59] sm:$0x1] %v897
  %934 = vst [vmem:[#allocation2 + $0x71] sm:$0x1] %v898
  %935 = vst [vmem:[#allocation2 + $0x89] sm:$0x1] %v899
  %936 = vst [vmem:[#allocation2 + $0xa1] sm:$0x1] %v900
  %937 = vst [vmem:[#allocation2 + $0xb9] sm:$0x1] %v901
  %938 = vst [vmem:[#allocation2 + $0xd1] sm:$0x1] %v902
  %939 = vst [vmem:[#allocation2 + $0xe9] sm:$0x1] %v903
  %940 = vst [vmem:[#allocation2 + $0x101] sm:$0x1] %v904
  %941 = vst [vmem:[#allocation2 + $0x119] sm:$0x1] %v905
  %942 = vst [vmem:[#allocation2 + $0x131] sm:$0x1] %v906
  %943 = vst [vmem:[#allocation2 + $0x149] sm:$0x1] %v907
  %944 = vst [vmem:[#allocation2 + $0x161] sm:$0x1] %v908
  %945 = vst [vmem:[#allocation2 + $0x179] sm:$0x1] %v909
  %946 = vst [vmem:[#allocation2 + $0x191] sm:$0x1] %v910
  %947 = vst [vmem:[#allocation2 + $0x1a9] sm:$0x1] %v911
  %948 = vst [vmem:[#allocation2 + $0x1c1] sm:$0x1] %v912
  %949 = vst [vmem:[#allocation2 + $0x1d9] sm:$0x1] %v913
  %950 = vst [vmem:[#allocation2 + $0x1f1] sm:$0x1] %v914
  %951 = vst [vmem:[#allocation2 + $0x209] sm:$0x1] %v915
  %952 = vst [vmem:[#allocation2 + $0x221] sm:$0x1] %v916
  %953 = vst [vmem:[#allocation2 + $0x239] sm:$0x1] %v917
  %954 = vst [vmem:[#allocation2 + $0x251] sm:$0x1] %v918
  %955 = vst [vmem:[#allocation2 + $0x269] sm:$0x1] %v919
  %956 = vst [vmem:[#allocation2 + $0x281] sm:$0x1] %v920
  %957 = vst [vmem:[#allocation2 + $0x299] sm:$0x1] %v921
  %958 = vst [vmem:[#allocation2 + $0x2b1] sm:$0x1] %v922
  %959 = vst [vmem:[#allocation2 + $0x2c9] sm:$0x1] %v923
  %960 = vst [vmem:[#allocation2 + $0x2e1] sm:$0x1] %v924
  %961 = vst [vmem:[#allocation2 + $0x2f9] sm:$0x1] %v925
  %962 = vst [vmem:[#allocation2 + $0x311] sm:$0x1] %v926
  %963 = vst [vmem:[#allocation2 + $0x329] sm:$0x1] %v927
  %964 = vst [vmem:[#allocation2 + $0x341] sm:$0x1] %v928
  %965 = vst [vmem:[#allocation2 + $0x359] sm:$0x1] %v929
  %v966 = vld [vmem:[%s4] sm:$0x1]
  %v968 = vlaneseq
  %v969 = vshrl.u32 %v968, 7
  %v970 = vsub.s32 0, %v969
  %v971 = vrot.slane %v966, %v970
  %v973 = vld [vmem:[#allocation2] sm:$0xff]
  %v974 = vld [vmem:[#allocation2 + $0x8] sm:$0xff]
  %v975 = vld [vmem:[#allocation2 + $0x18] sm:$0xff]
  %v976 = vld [vmem:[#allocation2 + $0x20] sm:$0xff]
  %v977 = vld [vmem:[#allocation2 + $0x30] sm:$0xff]
  %v978 = vld [vmem:[#allocation2 + $0x38] sm:$0xff]
  %v979 = vld [vmem:[#allocation2 + $0x48] sm:$0xff]
  %v980 = vld [vmem:[#allocation2 + $0x50] sm:$0xff]
  %v981 = vld [vmem:[#allocation2 + $0x60] sm:$0xff]
  %v982 = vld [vmem:[#allocation2 + $0x68] sm:$0xff]
  %v983 = vld [vmem:[#allocation2 + $0x78] sm:$0xff]
  %v984 = vld [vmem:[#allocation2 + $0x80] sm:$0xff]
  %v985 = vld [vmem:[#allocation2 + $0x90] sm:$0xff]
  %v986 = vld [vmem:[#allocation2 + $0x98] sm:$0xff]
  %v987 = vld [vmem:[#allocation2 + $0xa8] sm:$0xff]
  %v988 = vld [vmem:[#allocation2 + $0xb0] sm:$0xff]
  %v989 = vld [vmem:[#allocation2 + $0xc0] sm:$0xff]
  %v990 = vld [vmem:[#allocation2 + $0xc8] sm:$0xff]
  %v991 = vld [vmem:[#allocation2 + $0xd8] sm:$0xff]
  %v992 = vld [vmem:[#allocation2 + $0xe0] sm:$0xff]
  %v993 = vld [vmem:[#allocation2 + $0xf0] sm:$0xff]
  %v994 = vld [vmem:[#allocation2 + $0xf8] sm:$0xff]
  %v995 = vld [vmem:[#allocation2 + $0x108] sm:$0xff]
  %v996 = vld [vmem:[#allocation2 + $0x110] sm:$0xff]
  %v997 = vld [vmem:[#allocation2 + $0x120] sm:$0xff]
  %v998 = vld [vmem:[#allocation2 + $0x128] sm:$0xff]
  %v999 = vld [vmem:[#allocation2 + $0x138] sm:$0xff]
  %v1000 = vld [vmem:[#allocation2 + $0x140] sm:$0xff]
  %v1001 = vld [vmem:[#allocation2 + $0x150] sm:$0xff]
  %v1002 = vld [vmem:[#allocation2 + $0x158] sm:$0xff]
  %v1003 = vld [vmem:[#allocation2 + $0x168] sm:$0xff]
  %v1004 = vld [vmem:[#allocation2 + $0x170] sm:$0xff]
  %v1005 = vld [vmem:[#allocation2 + $0x180] sm:$0xff]
  %v1006 = vld [vmem:[#allocation2 + $0x188] sm:$0xff]
  %v1007 = vld [vmem:[#allocation2 + $0x198] sm:$0xff]
  %v1008 = vld [vmem:[#allocation2 + $0x1a0] sm:$0xff]
  %v1009 = vld [vmem:[#allocation2 + $0x1b0] sm:$0xff]
  %v1010 = vld [vmem:[#allocation2 + $0x1b8] sm:$0xff]
  %v1011 = vld [vmem:[#allocation2 + $0x1c8] sm:$0xff]
  %v1012 = vld [vmem:[#allocation2 + $0x1d0] sm:$0xff]
  %v1013 = vld [vmem:[#allocation2 + $0x1e0] sm:$0xff]
  %v1014 = vld [vmem:[#allocation2 + $0x1e8] sm:$0xff]
  %v1015 = vld [vmem:[#allocation2 + $0x1f8] sm:$0xff]
  %v1016 = vld [vmem:[#allocation2 + $0x200] sm:$0xff]
  %v1017 = vld [vmem:[#allocation2 + $0x210] sm:$0xff]
  %v1018 = vld [vmem:[#allocation2 + $0x218] sm:$0xff]
  %v1019 = vld [vmem:[#allocation2 + $0x228] sm:$0xff]
  %v1020 = vld [vmem:[#allocation2 + $0x230] sm:$0xff]
  %v1021 = vld [vmem:[#allocation2 + $0x240] sm:$0xff]
  %v1022 = vld [vmem:[#allocation2 + $0x248] sm:$0xff]
  %v1023 = vld [vmem:[#allocation2 + $0x258] sm:$0xff]
  %v1024 = vld [vmem:[#allocation2 + $0x260] sm:$0xff]
  %v1025 = vld [vmem:[#allocation2 + $0x270] sm:$0xff]
  %v1026 = vld [vmem:[#allocation2 + $0x278] sm:$0xff]
  %v1027 = vld [vmem:[#allocation2 + $0x288] sm:$0xff]
  %v1028 = vld [vmem:[#allocation2 + $0x290] sm:$0xff]
  %v1029 = vld [vmem:[#allocation2 + $0x2a0] sm:$0xff]
  %v1030 = vld [vmem:[#allocation2 + $0x2a8] sm:$0xff]
  %v1031 = vld [vmem:[#allocation2 + $0x2b8] sm:$0xff]
  %v1032 = vld [vmem:[#allocation2 + $0x2c0] sm:$0xff]
  %v1033 = vld [vmem:[#allocation2 + $0x2d0] sm:$0xff]
  %v1034 = vld [vmem:[#allocation2 + $0x2d8] sm:$0xff]
  %v1035 = vld [vmem:[#allocation2 + $0x2e8] sm:$0xff]
  %v1036 = vld [vmem:[#allocation2 + $0x2f0] sm:$0xff]
  %v1037 = vld [vmem:[#allocation2 + $0x300] sm:$0xff]
  %v1038 = vld [vmem:[#allocation2 + $0x308] sm:$0xff]
  %v1039 = vld [vmem:[#allocation2 + $0x318] sm:$0xff]
  %v1040 = vld [vmem:[#allocation2 + $0x320] sm:$0xff]
  %v1041 = vld [vmem:[#allocation2 + $0x330] sm:$0xff]
  %v1042 = vld [vmem:[#allocation2 + $0x338] sm:$0xff]
  %v1043 = vld [vmem:[#allocation2 + $0x348] sm:$0xff]
  %v1044 = vld [vmem:[#allocation2 + $0x350] sm:$0xff]
  %v1045 = vld [vmem:[%s3] sm:$0xff]
  %v1046 = vld [vmem:[%s3 + $0x8] sm:$0xff]
  %v1047 = vld [vmem:[%s3 + $0x10] sm:$0xff]
  %v1048 = vld [vmem:[%s3 + $0x18] sm:$0xff]
  %v1049 = vld [vmem:[%s3 + $0x20] sm:$0xff]
  %v1050 = vld [vmem:[%s3 + $0x28] sm:$0xff]
  %v1051 = vld [vmem:[%s3 + $0x30] sm:$0xff]
  %v1052 = vld [vmem:[%s3 + $0x38] sm:$0xff]
  %v1053 = vld [vmem:[%s3 + $0x40] sm:$0xff]
  %v1054 = vld [vmem:[%s3 + $0x48] sm:$0xff]
  %v1055 = vld [vmem:[%s3 + $0x50] sm:$0xff]
  %v1056 = vld [vmem:[%s3 + $0x58] sm:$0xff]
  %v1057 = vld [vmem:[%s3 + $0x60] sm:$0xff]
  %v1058 = vld [vmem:[%s3 + $0x68] sm:$0xff]
  %v1059 = vld [vmem:[%s3 + $0x70] sm:$0xff]
  %v1060 = vld [vmem:[%s3 + $0x78] sm:$0xff]
  %1061 = vmatprep.subr.mxu0 0.0
  %1062 = vmatpush1.msra.mxu0 %v1045
  %1063 = vmatprep.subr.mxu0 0.0
  %1064 = vmatpush1.msra.mxu0 %v1046
  %1065 = vmatprep.subr.mxu0 0.0
  %1066 = vmatpush1.msra.mxu0 %v1047
  %1067 = vmatprep.subr.mxu0 0.0
  %1068 = vmatpush1.msra.mxu0 %v1048
  %1069 = vmatprep.subr.mxu0 0.0
  %1070 = vmatpush1.msra.mxu0 %v1049
  %1071 = vmatprep.subr.mxu0 0.0
  %1072 = vmatpush1.msra.mxu0 %v1050
  %1073 = vmatprep.subr.mxu0 0.0
  %1074 = vmatpush1.msra.mxu0 %v1051
  %1075 = vmatprep.subr.mxu0 0.0
  %1076 = vmatpush1.msra.mxu0 %v1052
  %1077 = vmatprep.subr.mxu0 0.0
  %1078 = vmatpush1.msra.mxu0 %v1053
  %1079 = vmatprep.subr.mxu0 0.0
  %1080 = vmatpush1.msra.mxu0 %v1054
  %1081 = vmatprep.subr.mxu0 0.0
  %1082 = vmatpush1.msra.mxu0 %v1055
  %1083 = vmatprep.subr.mxu0 0.0
  %1084 = vmatpush1.msra.mxu0 %v1056
  %1085 = vmatprep.subr.mxu0 0.0
  %1086 = vmatpush1.msra.mxu0 %v1057
  %1087 = vmatprep.subr.mxu0 0.0
  %1088 = vmatpush1.msra.mxu0 %v1058
  %1089 = vmatprep.subr.mxu0 0.0
  %1090 = vmatpush1.msra.mxu0 %v1059
  %1091 = vmatprep.subr.mxu0 0.0
  %1092 = vmatpush1.msra.mxu0 %v1060
  %1093 = vmatprep.subr.mxu0 0.0
  %1094 = vmatpush1.msra.mxu0 0.0
  %1095 = vmatprep.subr.mxu0 0.0
  %1096 = vmatpush1.msra.mxu0 0.0
  %1097 = vmatprep.subr.mxu0 0.0
  %1098 = vmatpush1.msra.mxu0 0.0
  %1099 = vmatprep.subr.mxu0 0.0
  %1100 = vmatpush1.msra.mxu0 0.0
  %1101 = vmatprep.subr.mxu0 0.0
  %1102 = vmatpush1.msra.mxu0 0.0
  %1103 = vmatprep.subr.mxu0 0.0
  %1104 = vmatpush1.msra.mxu0 0.0
  %1105 = vmatprep.subr.mxu0 0.0
  %1106 = vmatpush1.msra.mxu0 0.0
  %1107 = vmatprep.subr.mxu0 0.0
  %1108 = vmatpush1.msra.mxu0 0.0
  %1109 = vmatprep.subr.mxu0 0.0
  %1110 = vmatpush1.msra.mxu0 0.0
  %1111 = vmatprep.subr.mxu0 0.0
  %1112 = vmatpush1.msra.mxu0 0.0
  %1113 = vmatprep.subr.mxu0 0.0
  %1114 = vmatpush1.msra.mxu0 0.0
  %1115 = vmatprep.subr.mxu0 0.0
  %1116 = vmatpush1.msra.mxu0 0.0
  %1117 = vmatprep.subr.mxu0 0.0
  %1118 = vmatpush1.msra.mxu0 0.0
  %1119 = vmatprep.subr.mxu0 0.0
  %1120 = vmatpush1.msra.mxu0 0.0
  %1121 = vmatprep.subr.mxu0 0.0
  %1122 = vmatpush1.msra.mxu0 0.0
  %1123 = vmatprep.subr.mxu0 0.0
  %1124 = vmatpush1.msra.mxu0 0.0
  %1125 = vmatprep.mubr.f32.mxu0 0.0
  %1126 = vmatmul.mubr.f32.gmra.mrb[0].mxu0 %v973
  %v1127 = vpop.f32.mrb[0].mxu0
  %v1128 = vadd.f32 0.0, %v1127
  %v1129 = vpop.f32.mrb[0].mxu0
  %1130 = vmatprep.mubr.f32.mxu0 0.0
  %1131 = vmatmul.mubr.f32.gmra.mrb[0].mxu0 %v974
  %v1132 = vpop.f32.mrb[0].mxu0
  %v1133 = vadd.f32 0.0, %v1132
  %v1134 = vpop.f32.mrb[0].mxu0
  %1135 = vmatprep.mubr.f32.mxu0 0.0
  %1136 = vmatmul.mubr.f32.gmra.mrb[0].mxu0 %v975
  %v1137 = vpop.f32.mrb[0].mxu0
  %v1138 = vadd.f32 0.0, %v1137
  %v1139 = vpop.f32.mrb[0].mxu0
  %1140 = vmatprep.mubr.f32.mxu0 0.0
  %1141 = vmatmul.mubr.f32.gmra.mrb[0].mxu0 %v976
  %v1142 = vpop.f32.mrb[0].mxu0
  %v1143 = vadd.f32 0.0, %v1142
  %v1144 = vpop.f32.mrb[0].mxu0
  %1145 = vmatprep.mubr.f32.mxu0 0.0
  %1146 = vmatmul.mubr.f32.gmra.mrb[0].mxu0 %v977
  %v1147 = vpop.f32.mrb[0].mxu0
  %v1148 = vadd.f32 0.0, %v1147
  %v1149 = vpop.f32.mrb[0].mxu0
  %1150 = vmatprep.mubr.f32.mxu0 0.0
  %1151 = vmatmul.mubr.f32.gmra.mrb[0].mxu0 %v978
  %v1152 = vpop.f32.mrb[0].mxu0
  %v1153 = vadd.f32 0.0, %v1152
  %v1154 = vpop.f32.mrb[0].mxu0
  %1155 = vmatprep.mubr.f32.mxu0 0.0
  %1156 = vmatmul.mubr.f32.gmra.mrb[0].mxu0 %v979
  %v1157 = vpop.f32.mrb[0].mxu0
  %v1158 = vadd.f32 0.0, %v1157
  %v1159 = vpop.f32.mrb[0].mxu0
  %1160 = vmatprep.mubr.f32.mxu0 0.0
  %1161 = vmatmul.mubr.f32.gmra.mrb[0].mxu0 %v980
  %v1162 = vpop.f32.mrb[0].mxu0
  %v1163 = vadd.f32 0.0, %v1162
  %v1164 = vpop.f32.mrb[0].mxu0
  %1165 = vmatprep.mubr.f32.mxu0 0.0
  %1166 = vmatmul.mubr.f32.gmra.mrb[0].mxu0 %v981
  %v1167 = vpop.f32.mrb[0].mxu0
  %v1168 = vadd.f32 0.0, %v1167
  %v1169 = vpop.f32.mrb[0].mxu0
  %1170 = vmatprep.mubr.f32.mxu0 0.0
  %1171 = vmatmul.mubr.f32.gmra.mrb[0].mxu0 %v982
  %v1172 = vpop.f32.mrb[0].mxu0
  %v1173 = vadd.f32 0.0, %v1172
  %v1174 = vpop.f32.mrb[0].mxu0
  %1175 = vmatprep.mubr.f32.mxu0 0.0
  %1176 = vmatmul.mubr.f32.gmra.mrb[0].mxu0 %v983
  %v1177 = vpop.f32.mrb[0].mxu0
  %v1178 = vadd.f32 0.0, %v1177
  %v1179 = vpop.f32.mrb[0].mxu0
  %1180 = vmatprep.mubr.f32.mxu0 0.0
  %1181 = vmatmul.mubr.f32.gmra.mrb[0].mxu0 %v984
  %v1182 = vpop.f32.mrb[0].mxu0
  %v1183 = vadd.f32 0.0, %v1182
  %v1184 = vpop.f32.mrb[0].mxu0
  %1185 = vmatprep.mubr.f32.mxu0 0.0
  %1186 = vmatmul.mubr.f32.gmra.mrb[0].mxu0 %v985
  %v1187 = vpop.f32.mrb[0].mxu0
  %v1188 = vadd.f32 0.0, %v1187
  %v1189 = vpop.f32.mrb[0].mxu0
  %1190 = vmatprep.mubr.f32.mxu0 0.0
  %1191 = vmatmul.mubr.f32.gmra.mrb[0].mxu0 %v986
  %v1192 = vpop.f32.mrb[0].mxu0
  %v1193 = vadd.f32 0.0, %v1192
  %v1194 = vpop.f32.mrb[0].mxu0
  %1195 = vmatprep.mubr.f32.mxu0 0.0
  %1196 = vmatmul.mubr.f32.gmra.mrb[0].mxu0 %v987
  %v1197 = vpop.f32.mrb[0].mxu0
  %v1198 = vadd.f32 0.0, %v1197
  %v1199 = vpop.f32.mrb[0].mxu0
  %1200 = vmatprep.mubr.f32.mxu0 0.0
  %1201 = vmatmul.mubr.f32.gmra.mrb[0].mxu0 %v988
  %v1202 = vpop.f32.mrb[0].mxu0
  %v1203 = vadd.f32 0.0, %v1202
  %v1204 = vpop.f32.mrb[0].mxu0
  %1205 = vmatprep.mubr.f32.mxu0 0.0
  %1206 = vmatmul.mubr.f32.gmra.mrb[0].mxu0 %v989
  %v1207 = vpop.f32.mrb[0].mxu0
  %v1208 = vadd.f32 0.0, %v1207
  %v1209 = vpop.f32.mrb[0].mxu0
  %1210 = vmatprep.mubr.f32.mxu0 0.0
  %1211 = vmatmul.mubr.f32.gmra.mrb[0].mxu0 %v990
  %v1212 = vpop.f32.mrb[0].mxu0
  %v1213 = vadd.f32 0.0, %v1212
  %v1214 = vpop.f32.mrb[0].mxu0
  %1215 = vmatprep.mubr.f32.mxu0 0.0
  %1216 = vmatmul.mubr.f32.gmra.mrb[0].mxu0 %v991
  %v1217 = vpop.f32.mrb[0].mxu0
  %v1218 = vadd.f32 0.0, %v1217
  %v1219 = vpop.f32.mrb[0].mxu0
  %1220 = vmatprep.mubr.f32.mxu0 0.0
  %1221 = vmatmul.mubr.f32.gmra.mrb[0].mxu0 %v992
  %v1222 = vpop.f32.mrb[0].mxu0
  %v1223 = vadd.f32 0.0, %v1222
  %v1224 = vpop.f32.mrb[0].mxu0
  %1225 = vmatprep.mubr.f32.mxu0 0.0
  %1226 = vmatmul.mubr.f32.gmra.mrb[0].mxu0 %v993
  %v1227 = vpop.f32.mrb[0].mxu0
  %v1228 = vadd.f32 0.0, %v1227
  %v1229 = vpop.f32.mrb[0].mxu0
  %1230 = vmatprep.mubr.f32.mxu0 0.0
  %1231 = vmatmul.mubr.f32.gmra.mrb[0].mxu0 %v994
  %v1232 = vpop.f32.mrb[0].mxu0
  %v1233 = vadd.f32 0.0, %v1232
  %v1234 = vpop.f32.mrb[0].mxu0
  %1235 = vmatprep.mubr.f32.mxu0 0.0
  %1236 = vmatmul.mubr.f32.gmra.mrb[0].mxu0 %v995
  %v1237 = vpop.f32.mrb[0].mxu0
  %v1238 = vadd.f32 0.0, %v1237
  %v1239 = vpop.f32.mrb[0].mxu0
  %1240 = vmatprep.mubr.f32.mxu0 0.0
  %1241 = vmatmul.mubr.f32.gmra.mrb[0].mxu0 %v996
  %v1242 = vpop.f32.mrb[0].mxu0
  %v1243 = vadd.f32 0.0, %v1242
  %v1244 = vpop.f32.mrb[0].mxu0
  %1245 = vmatprep.mubr.f32.mxu0 0.0
  %1246 = vmatmul.mubr.f32.gmra.mrb[0].mxu0 %v997
  %v1247 = vpop.f32.mrb[0].mxu0
  %v1248 = vadd.f32 0.0, %v1247
  %v1249 = vpop.f32.mrb[0].mxu0
  %1250 = vmatprep.mubr.f32.mxu0 0.0
  %1251 = vmatmul.mubr.f32.gmra.mrb[0].mxu0 %v998
  %v1252 = vpop.f32.mrb[0].mxu0
  %v1253 = vadd.f32 0.0, %v1252
  %v1254 = vpop.f32.mrb[0].mxu0
  %1255 = vmatprep.mubr.f32.mxu0 0.0
  %1256 = vmatmul.mubr.f32.gmra.mrb[0].mxu0 %v999
  %v1257 = vpop.f32.mrb[0].mxu0
  %v1258 = vadd.f32 0.0, %v1257
  %v1259 = vpop.f32.mrb[0].mxu0
  %1260 = vmatprep.mubr.f32.mxu0 0.0
  %1261 = vmatmul.mubr.f32.gmra.mrb[0].mxu0 %v1000
  %v1262 = vpop.f32.mrb[0].mxu0
  %v1263 = vadd.f32 0.0, %v1262
  %v1264 = vpop.f32.mrb[0].mxu0
  %1265 = vmatprep.mubr.f32.mxu0 0.0
  %1266 = vmatmul.mubr.f32.gmra.mrb[0].mxu0 %v1001
  %v1267 = vpop.f32.mrb[0].mxu0
  %v1268 = vadd.f32 0.0, %v1267
  %v1269 = vpop.f32.mrb[0].mxu0
  %1270 = vmatprep.mubr.f32.mxu0 0.0
  %1271 = vmatmul.mubr.f32.gmra.mrb[0].mxu0 %v1002
  %v1272 = vpop.f32.mrb[0].mxu0
  %v1273 = vadd.f32 0.0, %v1272
  %v1274 = vpop.f32.mrb[0].mxu0
  %1275 = vmatprep.mubr.f32.mxu0 0.0
  %1276 = vmatmul.mubr.f32.gmra.mrb[0].mxu0 %v1003
  %v1277 = vpop.f32.mrb[0].mxu0
  %v1278 = vadd.f32 0.0, %v1277
  %v1279 = vpop.f32.mrb[0].mxu0
  %1280 = vmatprep.mubr.f32.mxu0 0.0
  %1281 = vmatmul.mubr.f32.gmra.mrb[0].mxu0 %v1004
  %v1282 = vpop.f32.mrb[0].mxu0
  %v1283 = vadd.f32 0.0, %v1282
  %v1284 = vpop.f32.mrb[0].mxu0
  %1285 = vmatprep.mubr.f32.mxu0 0.0
  %1286 = vmatmul.mubr.f32.gmra.mrb[0].mxu0 %v1009
  %v1287 = vpop.f32.mrb[0].mxu0
  %v1288 = vadd.f32 0.0, %v1287
  %v1289 = vpop.f32.mrb[0].mxu0
  %1290 = vmatprep.mubr.f32.mxu0 0.0
  %1291 = vmatmul.mubr.f32.gmra.mrb[0].mxu0 %v1010
  %v1292 = vpop.f32.mrb[0].mxu0
  %v1293 = vadd.f32 0.0, %v1292
  %v1294 = vpop.f32.mrb[0].mxu0
  %1295 = vmatprep.mubr.f32.mxu0 0.0
  %1296 = vmatmul.mubr.f32.gmra.mrb[0].mxu0 %v1011
  %v1297 = vpop.f32.mrb[0].mxu0
  %v1298 = vadd.f32 0.0, %v1297
  %v1299 = vpop.f32.mrb[0].mxu0
  %1300 = vmatprep.mubr.f32.mxu0 0.0
  %1301 = vmatmul.mubr.f32.gmra.mrb[0].mxu0 %v1012
  %v1302 = vpop.f32.mrb[0].mxu0
  %v1303 = vadd.f32 0.0, %v1302
  %v1304 = vpop.f32.mrb[0].mxu0
  %1305 = vmatprep.mubr.f32.mxu0 0.0
  %1306 = vmatmul.mubr.f32.gmra.mrb[0].mxu0 %v1013
  %v1307 = vpop.f32.mrb[0].mxu0
  %v1308 = vadd.f32 0.0, %v1307
  %v1309 = vpop.f32.mrb[0].mxu0
  %1310 = vmatprep.mubr.f32.mxu0 0.0
  %1311 = vmatmul.mubr.f32.gmra.mrb[0].mxu0 %v1014
  %v1312 = vpop.f32.mrb[0].mxu0
  %v1313 = vadd.f32 0.0, %v1312
  %v1314 = vpop.f32.mrb[0].mxu0
  %1315 = vmatprep.mubr.f32.mxu0 0.0
  %1316 = vmatmul.mubr.f32.gmra.mrb[0].mxu0 %v1015
  %v1317 = vpop.f32.mrb[0].mxu0
  %v1318 = vadd.f32 0.0, %v1317
  %v1319 = vpop.f32.mrb[0].mxu0
  %1320 = vmatprep.mubr.f32.mxu0 0.0
  %1321 = vmatmul.mubr.f32.gmra.mrb[0].mxu0 %v1016
  %v1322 = vpop.f32.mrb[0].mxu0
  %v1323 = vadd.f32 0.0, %v1322
  %v1324 = vpop.f32.mrb[0].mxu0
  %1325 = vmatprep.mubr.f32.mxu0 0.0
  %1326 = vmatmul.mubr.f32.gmra.mrb[0].mxu0 %v1017
  %v1327 = vpop.f32.mrb[0].mxu0
  %v1328 = vadd.f32 0.0, %v1327
  %v1329 = vpop.f32.mrb[0].mxu0
  %1330 = vmatprep.mubr.f32.mxu0 0.0
  %1331 = vmatmul.mubr.f32.gmra.mrb[0].mxu0 %v1018
  %v1332 = vpop.f32.mrb[0].mxu0
  %v1333 = vadd.f32 0.0, %v1332
  %v1334 = vpop.f32.mrb[0].mxu0
  %1335 = vmatprep.mubr.f32.mxu0 0.0
  %1336 = vmatmul.mubr.f32.gmra.mrb[0].mxu0 %v1019
  %v1337 = vpop.f32.mrb[0].mxu0
  %v1338 = vadd.f32 0.0, %v1337
  %v1339 = vpop.f32.mrb[0].mxu0
  %1340 = vmatprep.mubr.f32.mxu0 0.0
  %1341 = vmatmul.mubr.f32.gmra.mrb[0].mxu0 %v1020
  %v1342 = vpop.f32.mrb[0].mxu0
  %v1343 = vadd.f32 0.0, %v1342
  %v1344 = vpop.f32.mrb[0].mxu0
  %1345 = vmatprep.mubr.f32.mxu0 0.0
  %1346 = vmatmul.mubr.f32.gmra.mrb[0].mxu0 %v1021
  %v1347 = vpop.f32.mrb[0].mxu0
  %v1348 = vadd.f32 0.0, %v1347
  %v1349 = vpop.f32.mrb[0].mxu0
  %1350 = vmatprep.mubr.f32.mxu0 0.0
  %1351 = vmatmul.mubr.f32.gmra.mrb[0].mxu0 %v1022
  %v1352 = vpop.f32.mrb[0].mxu0
  %v1353 = vadd.f32 0.0, %v1352
  %v1354 = vpop.f32.mrb[0].mxu0
  %1355 = vmatprep.mubr.f32.mxu0 0.0
  %1356 = vmatmul.mubr.f32.gmra.mrb[0].mxu0 %v1023
  %v1357 = vpop.f32.mrb[0].mxu0
  %v1358 = vadd.f32 0.0, %v1357
  %v1359 = vpop.f32.mrb[0].mxu0
  %1360 = vmatprep.mubr.f32.mxu0 0.0
  %1361 = vmatmul.mubr.f32.gmra.mrb[0].mxu0 %v1024
  %v1362 = vpop.f32.mrb[0].mxu0
  %v1363 = vadd.f32 0.0, %v1362
  %v1364 = vpop.f32.mrb[0].mxu0
  %1365 = vmatprep.mubr.f32.mxu0 0.0
  %1366 = vmatmul.mubr.f32.gmra.mrb[0].mxu0 %v1025
  %v1367 = vpop.f32.mrb[0].mxu0
  %v1368 = vadd.f32 0.0, %v1367
  %v1369 = vpop.f32.mrb[0].mxu0
  %1370 = vmatprep.mubr.f32.mxu0 0.0
  %1371 = vmatmul.mubr.f32.gmra.mrb[0].mxu0 %v1026
  %v1372 = vpop.f32.mrb[0].mxu0
  %v1373 = vadd.f32 0.0, %v1372
  %v1374 = vpop.f32.mrb[0].mxu0
  %1375 = vmatprep.mubr.f32.mxu0 0.0
  %1376 = vmatmul.mubr.f32.gmra.mrb[0].mxu0 %v1027
  %v1377 = vpop.f32.mrb[0].mxu0
  %v1378 = vadd.f32 0.0, %v1377
  %v1379 = vpop.f32.mrb[0].mxu0
  %1380 = vmatprep.mubr.f32.mxu0 0.0
  %1381 = vmatmul.mubr.f32.gmra.mrb[0].mxu0 %v1028
  %v1382 = vpop.f32.mrb[0].mxu0
  %v1383 = vadd.f32 0.0, %v1382
  %v1384 = vpop.f32.mrb[0].mxu0
  %1385 = vmatprep.mubr.f32.mxu0 0.0
  %1386 = vmatmul.mubr.f32.gmra.mrb[0].mxu0 %v1029
  %v1387 = vpop.f32.mrb[0].mxu0
  %v1388 = vadd.f32 0.0, %v1387
  %v1389 = vpop.f32.mrb[0].mxu0
  %1390 = vmatprep.mubr.f32.mxu0 0.0
  %1391 = vmatmul.mubr.f32.gmra.mrb[0].mxu0 %v1030
  %v1392 = vpop.f32.mrb[0].mxu0
  %v1393 = vadd.f32 0.0, %v1392
  %v1394 = vpop.f32.mrb[0].mxu0
  %1395 = vmatprep.mubr.f32.mxu0 0.0
  %1396 = vmatmul.mubr.f32.gmra.mrb[0].mxu0 %v1031
  %v1397 = vpop.f32.mrb[0].mxu0
  %v1398 = vadd.f32 0.0, %v1397
  %v1399 = vpop.f32.mrb[0].mxu0
  %1400 = vmatprep.mubr.f32.mxu0 0.0
  %1401 = vmatmul.mubr.f32.gmra.mrb[0].mxu0 %v1032
  %v1402 = vpop.f32.mrb[0].mxu0
  %v1403 = vadd.f32 0.0, %v1402
  %v1404 = vpop.f32.mrb[0].mxu0
  %1405 = vmatprep.mubr.f32.mxu0 0.0
  %1406 = vmatmul.mubr.f32.gmra.mrb[0].mxu0 %v1033
  %v1407 = vpop.f32.mrb[0].mxu0
  %v1408 = vadd.f32 0.0, %v1407
  %v1409 = vpop.f32.mrb[0].mxu0
  %1410 = vmatprep.mubr.f32.mxu0 0.0
  %1411 = vmatmul.mubr.f32.gmra.mrb[0].mxu0 %v1034
  %v1412 = vpop.f32.mrb[0].mxu0
  %v1413 = vadd.f32 0.0, %v1412
  %v1414 = vpop.f32.mrb[0].mxu0
  %1415 = vmatprep.mubr.f32.mxu0 0.0
  %1416 = vmatmul.mubr.f32.gmra.mrb[0].mxu0 %v1035
  %v1417 = vpop.f32.mrb[0].mxu0
  %v1418 = vadd.f32 0.0, %v1417
  %v1419 = vpop.f32.mrb[0].mxu0
  %1420 = vmatprep.mubr.f32.mxu0 0.0
  %1421 = vmatmul.mubr.f32.gmra.mrb[0].mxu0 %v1036
  %v1422 = vpop.f32.mrb[0].mxu0
  %v1423 = vadd.f32 0.0, %v1422
  %v1424 = vpop.f32.mrb[0].mxu0
  %1425 = vmatprep.mubr.f32.mxu0 0.0
  %1426 = vmatmul.mubr.f32.gmra.mrb[0].mxu0 %v1037
  %v1427 = vpop.f32.mrb[0].mxu0
  %v1428 = vadd.f32 0.0, %v1427
  %v1429 = vpop.f32.mrb[0].mxu0
  %1430 = vmatprep.mubr.f32.mxu0 0.0
  %1431 = vmatmul.mubr.f32.gmra.mrb[0].mxu0 %v1038
  %v1432 = vpop.f32.mrb[0].mxu0
  %v1433 = vadd.f32 0.0, %v1432
  %v1434 = vpop.f32.mrb[0].mxu0
  %1435 = vmatprep.mubr.f32.mxu0 0.0
  %1436 = vmatmul.mubr.f32.gmra.mrb[0].mxu0 %v1039
  %v1437 = vpop.f32.mrb[0].mxu0
  %v1438 = vadd.f32 0.0, %v1437
  %v1439 = vpop.f32.mrb[0].mxu0
  %1440 = vmatprep.mubr.f32.mxu0 0.0
  %1441 = vmatmul.mubr.f32.gmra.mrb[0].mxu0 %v1040
  %v1442 = vpop.f32.mrb[0].mxu0
  %v1443 = vadd.f32 0.0, %v1442
  %v1444 = vpop.f32.mrb[0].mxu0
  %1445 = vdwg.mxu0
  %v1446 = vadd.f32 %v971, %v1128
  %v1447 = vadd.f32 %v971, %v1133
  %v1448 = vadd.f32 %v971, %v1138
  %v1449 = vadd.f32 %v971, %v1143
  %v1450 = vadd.f32 %v971, %v1148
  %v1451 = vadd.f32 %v971, %v1153
  %v1452 = vadd.f32 %v971, %v1158
  %v1453 = vadd.f32 %v971, %v1163
  %v1454 = vadd.f32 %v971, %v1168
  %v1455 = vadd.f32 %v971, %v1173
  %v1456 = vadd.f32 %v971, %v1178
  %v1457 = vadd.f32 %v971, %v1183
  %v1458 = vadd.f32 %v971, %v1188
  %v1459 = vadd.f32 %v971, %v1193
  %v1460 = vadd.f32 %v971, %v1198
  %v1461 = vadd.f32 %v971, %v1203
  %v1462 = vadd.f32 %v971, %v1208
  %v1463 = vadd.f32 %v971, %v1213
  %v1464 = vadd.f32 %v971, %v1218
  %v1465 = vadd.f32 %v971, %v1223
  %v1466 = vadd.f32 %v971, %v1228
  %v1467 = vadd.f32 %v971, %v1233
  %v1468 = vadd.f32 %v971, %v1238
  %v1469 = vadd.f32 %v971, %v1243
  %v1470 = vadd.f32 %v971, %v1248
  %v1471 = vadd.f32 %v971, %v1253
  %v1472 = vadd.f32 %v971, %v1258
  %v1473 = vadd.f32 %v971, %v1263
  %v1474 = vadd.f32 %v971, %v1268
  %v1475 = vadd.f32 %v971, %v1273
  %v1476 = vadd.f32 %v971, %v1278
  %v1477 = vadd.f32 %v971, %v1283
  %v1478 = vadd.f32 %v971, %v1288
  %v1479 = vadd.f32 %v971, %v1293
  %v1480 = vadd.f32 %v971, %v1298
  %v1481 = vadd.f32 %v971, %v1303
  %v1482 = vadd.f32 %v971, %v1308
  %v1483 = vadd.f32 %v971, %v1313
  %v1484 = vadd.f32 %v971, %v1318
  %v1485 = vadd.f32 %v971, %v1323
  %v1486 = vadd.f32 %v971, %v1328
  %v1487 = vadd.f32 %v971, %v1333
  %v1488 = vadd.f32 %v971, %v1338
  %v1489 = vadd.f32 %v971, %v1343
  %v1490 = vadd.f32 %v971, %v1348
  %v1491 = vadd.f32 %v971, %v1353
  %v1492 = vadd.f32 %v971, %v1358
  %v1493 = vadd.f32 %v971, %v1363
  %v1494 = vadd.f32 %v971, %v1368
  %v1495 = vadd.f32 %v971, %v1373
  %v1496 = vadd.f32 %v971, %v1378
  %v1497 = vadd.f32 %v971, %v1383
  %v1498 = vadd.f32 %v971, %v1388
  %v1499 = vadd.f32 %v971, %v1393
  %v1500 = vadd.f32 %v971, %v1398
  %v1501 = vadd.f32 %v971, %v1403
  %v1502 = vadd.f32 %v971, %v1408
  %v1503 = vadd.f32 %v971, %v1413
  %v1504 = vadd.f32 %v971, %v1418
  %v1505 = vadd.f32 %v971, %v1423
  %v1506 = vadd.f32 %v971, %v1428
  %v1507 = vadd.f32 %v971, %v1433
  %v1508 = vadd.f32 %v971, %v1438
  %v1509 = vadd.f32 %v971, %v1443
  %s1510 = scalar_lea.vmem %s3, 384
  %v1511 = vld [vmem:[%s1510] sm:$0xff]
  %v1512 = vld [vmem:[%s1510 + $0x8] sm:$0xff]
  %v1513 = vld [vmem:[%s1510 + $0x10] sm:$0xff]
  %v1514 = vld [vmem:[%s1510 + $0x18] sm:$0xff]
  %v1515 = vld [vmem:[%s1510 + $0x20] sm:$0xff]
  %v1516 = vld [vmem:[%s1510 + $0x28] sm:$0xff]
  %v1517 = vld [vmem:[%s1510 + $0x30] sm:$0xff]
  %v1518 = vld [vmem:[%s1510 + $0x38] sm:$0xff]
  %v1519 = vld [vmem:[%s1510 + $0x40] sm:$0xff]
  %v1520 = vld [vmem:[%s1510 + $0x48] sm:$0xff]
  %v1521 = vld [vmem:[%s1510 + $0x50] sm:$0xff]
  %v1522 = vld [vmem:[%s1510 + $0x58] sm:$0xff]
  %v1523 = vld [vmem:[%s1510 + $0x60] sm:$0xff]
  %v1524 = vld [vmem:[%s1510 + $0x68] sm:$0xff]
  %v1525 = vld [vmem:[%s1510 + $0x70] sm:$0xff]
  %v1526 = vld [vmem:[%s1510 + $0x78] sm:$0xff]
  %1527 = vmatprep.subr.mxu0 0.0
  %1528 = vmatpush1.msra.mxu0 %v1511
  %1529 = vmatprep.subr.mxu0 0.0
  %1530 = vmatpush1.msra.mxu0 %v1512
  %1531 = vmatprep.subr.mxu0 0.0
  %1532 = vmatpush1.msra.mxu0 %v1513
  %1533 = vmatprep.subr.mxu0 0.0
  %1534 = vmatpush1.msra.mxu0 %v1514
  %1535 = vmatprep.subr.mxu0 0.0
  %1536 = vmatpush1.msra.mxu0 %v1515
  %1537 = vmatprep.subr.mxu0 0.0
  %1538 = vmatpush1.msra.mxu0 %v1516
  %1539 = vmatprep.subr.mxu0 0.0
  %1540 = vmatpush1.msra.mxu0 %v1517
  %1541 = vmatprep.subr.mxu0 0.0
  %1542 = vmatpush1.msra.mxu0 %v1518
  %1543 = vmatprep.subr.mxu0 0.0
  %1544 = vmatpush1.msra.mxu0 %v1519
  %1545 = vmatprep.subr.mxu0 0.0
  %1546 = vmatpush1.msra.mxu0 %v1520
  %1547 = vmatprep.subr.mxu0 0.0
  %1548 = vmatpush1.msra.mxu0 %v1521
  %1549 = vmatprep.subr.mxu0 0.0
  %1550 = vmatpush1.msra.mxu0 %v1522
  %1551 = vmatprep.subr.mxu0 0.0
  %1552 = vmatpush1.msra.mxu0 %v1523
  %1553 = vmatprep.subr.mxu0 0.0
  %1554 = vmatpush1.msra.mxu0 %v1524
  %1555 = vmatprep.subr.mxu0 0.0
  %1556 = vmatpush1.msra.mxu0 %v1525
  %1557 = vmatprep.subr.mxu0 0.0
  %1558 = vmatpush1.msra.mxu0 %v1526
  %1559 = vmatprep.subr.mxu0 0.0
  %1560 = vmatpush1.msra.mxu0 0.0
  %1561 = vmatprep.subr.mxu0 0.0
  %1562 = vmatpush1.msra.mxu0 0.0
  %1563 = vmatprep.subr.mxu0 0.0
  %1564 = vmatpush1.msra.mxu0 0.0
  %1565 = vmatprep.subr.mxu0 0.0
  %1566 = vmatpush1.msra.mxu0 0.0
  %1567 = vmatprep.subr.mxu0 0.0
  %1568 = vmatpush1.msra.mxu0 0.0
  %1569 = vmatprep.subr.mxu0 0.0
  %1570 = vmatpush1.msra.mxu0 0.0
  %1571 = vmatprep.subr.mxu0 0.0
  %1572 = vmatpush1.msra.mxu0 0.0
  %1573 = vmatprep.subr.mxu0 0.0
  %1574 = vmatpush1.msra.mxu0 0.0
  %1575 = vmatprep.subr.mxu0 0.0
  %1576 = vmatpush1.msra.mxu0 0.0
  %1577 = vmatprep.subr.mxu0 0.0
  %1578 = vmatpush1.msra.mxu0 0.0
  %1579 = vmatprep.subr.mxu0 0.0
  %1580 = vmatpush1.msra.mxu0 0.0
  %1581 = vmatprep.subr.mxu0 0.0
  %1582 = vmatpush1.msra.mxu0 0.0
  %1583 = vmatprep.subr.mxu0 0.0
  %1584 = vmatpush1.msra.mxu0 0.0
  %1585 = vmatprep.subr.mxu0 0.0
  %1586 = vmatpush1.msra.mxu0 0.0
  %1587 = vmatprep.subr.mxu0 0.0
  %1588 = vmatpush1.msra.mxu0 0.0
  %1589 = vmatprep.subr.mxu0 0.0
  %1590 = vmatpush1.msra.mxu0 0.0
  %1591 = vmatprep.mubr.f32.mxu0 0.0
  %1592 = vmatmul.mubr.f32.gmra.mrb[0].mxu0 %v975
  %v1593 = vpop.f32.mrb[0].mxu0
  %v1594 = vadd.f32 0.0, %v1593
  %v1595 = vpop.f32.mrb[0].mxu0
  %1596 = vmatprep.mubr.f32.mxu0 0.0
  %1597 = vmatmul.mubr.f32.gmra.mrb[0].mxu0 %v976
  %v1598 = vpop.f32.mrb[0].mxu0
  %v1599 = vadd.f32 0.0, %v1598
  %v1600 = vpop.f32.mrb[0].mxu0
  %1601 = vmatprep.mubr.f32.mxu0 0.0
  %1602 = vmatmul.mubr.f32.gmra.mrb[0].mxu0 %v977
  %v1603 = vpop.f32.mrb[0].mxu0
  %v1604 = vadd.f32 0.0, %v1603
  %v1605 = vpop.f32.mrb[0].mxu0
  %1606 = vmatprep.mubr.f32.mxu0 0.0
  %1607 = vmatmul.mubr.f32.gmra.mrb[0].mxu0 %v978
  %v1608 = vpop.f32.mrb[0].mxu0
  %v1609 = vadd.f32 0.0, %v1608
  %v1610 = vpop.f32.mrb[0].mxu0
  %1611 = vmatprep.mubr.f32.mxu0 0.0
  %1612 = vmatmul.mubr.f32.gmra.mrb[0].mxu0 %v979
  %v1613 = vpop.f32.mrb[0].mxu0
  %v1614 = vadd.f32 0.0, %v1613
  %v1615 = vpop.f32.mrb[0].mxu0
  %1616 = vmatprep.mubr.f32.mxu0 0.0
  %1617 = vmatmul.mubr.f32.gmra.mrb[0].mxu0 %v980
  %v1618 = vpop.f32.mrb[0].mxu0
  %v1619 = vadd.f32 0.0, %v1618
  %v1620 = vpop.f32.mrb[0].mxu0
  %1621 = vmatprep.mubr.f32.mxu0 0.0
  %1622 = vmatmul.mubr.f32.gmra.mrb[0].mxu0 %v981
  %v1623 = vpop.f32.mrb[0].mxu0
  %v1624 = vadd.f32 0.0, %v1623
  %v1625 = vpop.f32.mrb[0].mxu0
  %1626 = vmatprep.mubr.f32.mxu0 0.0
  %1627 = vmatmul.mubr.f32.gmra.mrb[0].mxu0 %v982
  %v1628 = vpop.f32.mrb[0].mxu0
  %v1629 = vadd.f32 0.0, %v1628
  %v1630 = vpop.f32.mrb[0].mxu0
  %1631 = vmatprep.mubr.f32.mxu0 0.0
  %1632 = vmatmul.mubr.f32.gmra.mrb[0].mxu0 %v983
  %v1633 = vpop.f32.mrb[0].mxu0
  %v1634 = vadd.f32 0.0, %v1633
  %v1635 = vpop.f32.mrb[0].mxu0
  %1636 = vmatprep.mubr.f32.mxu0 0.0
  %1637 = vmatmul.mubr.f32.gmra.mrb[0].mxu0 %v984
  %v1638 = vpop.f32.mrb[0].mxu0
  %v1639 = vadd.f32 0.0, %v1638
  %v1640 = vpop.f32.mrb[0].mxu0
  %1641 = vmatprep.mubr.f32.mxu0 0.0
  %1642 = vmatmul.mubr.f32.gmra.mrb[0].mxu0 %v985
  %v1643 = vpop.f32.mrb[0].mxu0
  %v1644 = vadd.f32 0.0, %v1643
  %v1645 = vpop.f32.mrb[0].mxu0
  %1646 = vmatprep.mubr.f32.mxu0 0.0
  %1647 = vmatmul.mubr.f32.gmra.mrb[0].mxu0 %v986
  %v1648 = vpop.f32.mrb[0].mxu0
  %v1649 = vadd.f32 0.0, %v1648
  %v1650 = vpop.f32.mrb[0].mxu0
  %1651 = vmatprep.mubr.f32.mxu0 0.0
  %1652 = vmatmul.mubr.f32.gmra.mrb[0].mxu0 %v987
  %v1653 = vpop.f32.mrb[0].mxu0
  %v1654 = vadd.f32 0.0, %v1653
  %v1655 = vpop.f32.mrb[0].mxu0
  %1656 = vmatprep.mubr.f32.mxu0 0.0
  %1657 = vmatmul.mubr.f32.gmra.mrb[0].mxu0 %v988
  %v1658 = vpop.f32.mrb[0].mxu0
  %v1659 = vadd.f32 0.0, %v1658
  %v1660 = vpop.f32.mrb[0].mxu0
  %1661 = vmatprep.mubr.f32.mxu0 0.0
  %1662 = vmatmul.mubr.f32.gmra.mrb[0].mxu0 %v989
  %v1663 = vpop.f32.mrb[0].mxu0
  %v1664 = vadd.f32 0.0, %v1663
  %v1665 = vpop.f32.mrb[0].mxu0
  %1666 = vmatprep.mubr.f32.mxu0 0.0
  %1667 = vmatmul.mubr.f32.gmra.mrb[0].mxu0 %v990
  %v1668 = vpop.f32.mrb[0].mxu0
  %v1669 = vadd.f32 0.0, %v1668
  %v1670 = vpop.f32.mrb[0].mxu0
  %1671 = vmatprep.mubr.f32.mxu0 0.0
  %1672 = vmatmul.mubr.f32.gmra.mrb[0].mxu0 %v991
  %v1673 = vpop.f32.mrb[0].mxu0
  %v1674 = vadd.f32 0.0, %v1673
  %v1675 = vpop.f32.mrb[0].mxu0
  %1676 = vmatprep.mubr.f32.mxu0 0.0
  %1677 = vmatmul.mubr.f32.gmra.mrb[0].mxu0 %v992
  %v1678 = vpop.f32.mrb[0].mxu0
  %v1679 = vadd.f32 0.0, %v1678
  %v1680 = vpop.f32.mrb[0].mxu0
  %1681 = vmatprep.mubr.f32.mxu0 0.0
  %1682 = vmatmul.mubr.f32.gmra.mrb[0].mxu0 %v993
  %v1683 = vpop.f32.mrb[0].mxu0
  %v1684 = vadd.f32 0.0, %v1683
  %v1685 = vpop.f32.mrb[0].mxu0
  %1686 = vmatprep.mubr.f32.mxu0 0.0
  %1687 = vmatmul.mubr.f32.gmra.mrb[0].mxu0 %v994
  %v1688 = vpop.f32.mrb[0].mxu0
  %v1689 = vadd.f32 0.0, %v1688
  %v1690 = vpop.f32.mrb[0].mxu0
  %1691 = vmatprep.mubr.f32.mxu0 0.0
  %1692 = vmatmul.mubr.f32.gmra.mrb[0].mxu0 %v995
  %v1693 = vpop.f32.mrb[0].mxu0
  %v1694 = vadd.f32 0.0, %v1693
  %v1695 = vpop.f32.mrb[0].mxu0
  %1696 = vmatprep.mubr.f32.mxu0 0.0
  %1697 = vmatmul.mubr.f32.gmra.mrb[0].mxu0 %v996
  %v1698 = vpop.f32.mrb[0].mxu0
  %v1699 = vadd.f32 0.0, %v1698
  %v1700 = vpop.f32.mrb[0].mxu0
  %1701 = vmatprep.mubr.f32.mxu0 0.0
  %1702 = vmatmul.mubr.f32.gmra.mrb[0].mxu0 %v997
  %v1703 = vpop.f32.mrb[0].mxu0
  %v1704 = vadd.f32 0.0, %v1703
  %v1705 = vpop.f32.mrb[0].mxu0
  %1706 = vmatprep.mubr.f32.mxu0 0.0
  %1707 = vmatmul.mubr.f32.gmra.mrb[0].mxu0 %v998
  %v1708 = vpop.f32.mrb[0].mxu0
  %v1709 = vadd.f32 0.0, %v1708
  %v1710 = vpop.f32.mrb[0].mxu0
  %1711 = vmatprep.mubr.f32.mxu0 0.0
  %1712 = vmatmul.mubr.f32.gmra.mrb[0].mxu0 %v999
  %v1713 = vpop.f32.mrb[0].mxu0
  %v1714 = vadd.f32 0.0, %v1713
  %v1715 = vpop.f32.mrb[0].mxu0
  %1716 = vmatprep.mubr.f32.mxu0 0.0
  %1717 = vmatmul.mubr.f32.gmra.mrb[0].mxu0 %v1000
  %v1718 = vpop.f32.mrb[0].mxu0
  %v1719 = vadd.f32 0.0, %v1718
  %v1720 = vpop.f32.mrb[0].mxu0
  %1721 = vmatprep.mubr.f32.mxu0 0.0
  %1722 = vmatmul.mubr.f32.gmra.mrb[0].mxu0 %v1001
  %v1723 = vpop.f32.mrb[0].mxu0
  %v1724 = vadd.f32 0.0, %v1723
  %v1725 = vpop.f32.mrb[0].mxu0
  %1726 = vmatprep.mubr.f32.mxu0 0.0
  %1727 = vmatmul.mubr.f32.gmra.mrb[0].mxu0 %v1002
  %v1728 = vpop.f32.mrb[0].mxu0
  %v1729 = vadd.f32 0.0, %v1728
  %v1730 = vpop.f32.mrb[0].mxu0
  %1731 = vmatprep.mubr.f32.mxu0 0.0
  %1732 = vmatmul.mubr.f32.gmra.mrb[0].mxu0 %v1003
  %v1733 = vpop.f32.mrb[0].mxu0
  %v1734 = vadd.f32 0.0, %v1733
  %v1735 = vpop.f32.mrb[0].mxu0
  %1736 = vmatprep.mubr.f32.mxu0 0.0
  %1737 = vmatmul.mubr.f32.gmra.mrb[0].mxu0 %v1004
  %v1738 = vpop.f32.mrb[0].mxu0
  %v1739 = vadd.f32 0.0, %v1738
  %v1740 = vpop.f32.mrb[0].mxu0
  %1741 = vmatprep.mubr.f32.mxu0 0.0
  %1742 = vmatmul.mubr.f32.gmra.mrb[0].mxu0 %v1005
  %v1743 = vpop.f32.mrb[0].mxu0
  %v1744 = vadd.f32 0.0, %v1743
  %v1745 = vpop.f32.mrb[0].mxu0
  %1746 = vmatprep.mubr.f32.mxu0 0.0
  %1747 = vmatmul.mubr.f32.gmra.mrb[0].mxu0 %v1006
  %v1748 = vpop.f32.mrb[0].mxu0
  %v1749 = vadd.f32 0.0, %v1748
  %v1750 = vpop.f32.mrb[0].mxu0
  %1751 = vmatprep.mubr.f32.mxu0 0.0
  %1752 = vmatmul.mubr.f32.gmra.mrb[0].mxu0 %v1011
  %v1753 = vpop.f32.mrb[0].mxu0
  %v1754 = vadd.f32 0.0, %v1753
  %v1755 = vpop.f32.mrb[0].mxu0
  %1756 = vmatprep.mubr.f32.mxu0 0.0
  %1757 = vmatmul.mubr.f32.gmra.mrb[0].mxu0 %v1012
  %v1758 = vpop.f32.mrb[0].mxu0
  %v1759 = vadd.f32 0.0, %v1758
  %v1760 = vpop.f32.mrb[0].mxu0
  %1761 = vmatprep.mubr.f32.mxu0 0.0
  %1762 = vmatmul.mubr.f32.gmra.mrb[0].mxu0 %v1013
  %v1763 = vpop.f32.mrb[0].mxu0
  %v1764 = vadd.f32 0.0, %v1763
  %v1765 = vpop.f32.mrb[0].mxu0
  %1766 = vmatprep.mubr.f32.mxu0 0.0
  %1767 = vmatmul.mubr.f32.gmra.mrb[0].mxu0 %v1014
  %v1768 = vpop.f32.mrb[0].mxu0
  %v1769 = vadd.f32 0.0, %v1768
  %v1770 = vpop.f32.mrb[0].mxu0
  %1771 = vmatprep.mubr.f32.mxu0 0.0
  %1772 = vmatmul.mubr.f32.gmra.mrb[0].mxu0 %v1015
  %v1773 = vpop.f32.mrb[0].mxu0
  %v1774 = vadd.f32 0.0, %v1773
  %v1775 = vpop.f32.mrb[0].mxu0
  %1776 = vmatprep.mubr.f32.mxu0 0.0
  %1777 = vmatmul.mubr.f32.gmra.mrb[0].mxu0 %v1016
  %v1778 = vpop.f32.mrb[0].mxu0
  %v1779 = vadd.f32 0.0, %v1778
  %v1780 = vpop.f32.mrb[0].mxu0
  %1781 = vmatprep.mubr.f32.mxu0 0.0
  %1782 = vmatmul.mubr.f32.gmra.mrb[0].mxu0 %v1017
  %v1783 = vpop.f32.mrb[0].mxu0
  %v1784 = vadd.f32 0.0, %v1783
  %v1785 = vpop.f32.mrb[0].mxu0
  %1786 = vmatprep.mubr.f32.mxu0 0.0
  %1787 = vmatmul.mubr.f32.gmra.mrb[0].mxu0 %v1018
  %v1788 = vpop.f32.mrb[0].mxu0
  %v1789 = vadd.f32 0.0, %v1788
  %v1790 = vpop.f32.mrb[0].mxu0
  %1791 = vmatprep.mubr.f32.mxu0 0.0
  %1792 = vmatmul.mubr.f32.gmra.mrb[0].mxu0 %v1019
  %v1793 = vpop.f32.mrb[0].mxu0
  %v1794 = vadd.f32 0.0, %v1793
  %v1795 = vpop.f32.mrb[0].mxu0
  %1796 = vmatprep.mubr.f32.mxu0 0.0
  %1797 = vmatmul.mubr.f32.gmra.mrb[0].mxu0 %v1020
  %v1798 = vpop.f32.mrb[0].mxu0
  %v1799 = vadd.f32 0.0, %v1798
  %v1800 = vpop.f32.mrb[0].mxu0
  %1801 = vmatprep.mubr.f32.mxu0 0.0
  %1802 = vmatmul.mubr.f32.gmra.mrb[0].mxu0 %v1021
  %v1803 = vpop.f32.mrb[0].mxu0
  %v1804 = vadd.f32 0.0, %v1803
  %v1805 = vpop.f32.mrb[0].mxu0
  %1806 = vmatprep.mubr.f32.mxu0 0.0
  %1807 = vmatmul.mubr.f32.gmra.mrb[0].mxu0 %v1022
  %v1808 = vpop.f32.mrb[0].mxu0
  %v1809 = vadd.f32 0.0, %v1808
  %v1810 = vpop.f32.mrb[0].mxu0
  %1811 = vmatprep.mubr.f32.mxu0 0.0
  %1812 = vmatmul.mubr.f32.gmra.mrb[0].mxu0 %v1023
  %v1813 = vpop.f32.mrb[0].mxu0
  %v1814 = vadd.f32 0.0, %v1813
  %v1815 = vpop.f32.mrb[0].mxu0
  %1816 = vmatprep.mubr.f32.mxu0 0.0
  %1817 = vmatmul.mubr.f32.gmra.mrb[0].mxu0 %v1024
  %v1818 = vpop.f32.mrb[0].mxu0
  %v1819 = vadd.f32 0.0, %v1818
  %v1820 = vpop.f32.mrb[0].mxu0
  %1821 = vmatprep.mubr.f32.mxu0 0.0
  %1822 = vmatmul.mubr.f32.gmra.mrb[0].mxu0 %v1025
  %v1823 = vpop.f32.mrb[0].mxu0
  %v1824 = vadd.f32 0.0, %v1823
  %v1825 = vpop.f32.mrb[0].mxu0
  %1826 = vmatprep.mubr.f32.mxu0 0.0
  %1827 = vmatmul.mubr.f32.gmra.mrb[0].mxu0 %v1026
  %v1828 = vpop.f32.mrb[0].mxu0
  %v1829 = vadd.f32 0.0, %v1828
  %v1830 = vpop.f32.mrb[0].mxu0
  %1831 = vmatprep.mubr.f32.mxu0 0.0
  %1832 = vmatmul.mubr.f32.gmra.mrb[0].mxu0 %v1027
  %v1833 = vpop.f32.mrb[0].mxu0
  %v1834 = vadd.f32 0.0, %v1833
  %v1835 = vpop.f32.mrb[0].mxu0
  %1836 = vmatprep.mubr.f32.mxu0 0.0
  %1837 = vmatmul.mubr.f32.gmra.mrb[0].mxu0 %v1028
  %v1838 = vpop.f32.mrb[0].mxu0
  %v1839 = vadd.f32 0.0, %v1838
  %v1840 = vpop.f32.mrb[0].mxu0
  %1841 = vmatprep.mubr.f32.mxu0 0.0
  %1842 = vmatmul.mubr.f32.gmra.mrb[0].mxu0 %v1029
  %v1843 = vpop.f32.mrb[0].mxu0
  %v1844 = vadd.f32 0.0, %v1843
  %v1845 = vpop.f32.mrb[0].mxu0
  %1846 = vmatprep.mubr.f32.mxu0 0.0
  %1847 = vmatmul.mubr.f32.gmra.mrb[0].mxu0 %v1030
  %v1848 = vpop.f32.mrb[0].mxu0
  %v1849 = vadd.f32 0.0, %v1848
  %v1850 = vpop.f32.mrb[0].mxu0
  %1851 = vmatprep.mubr.f32.mxu0 0.0
  %1852 = vmatmul.mubr.f32.gmra.mrb[0].mxu0 %v1031
  %v1853 = vpop.f32.mrb[0].mxu0
  %v1854 = vadd.f32 0.0, %v1853
  %v1855 = vpop.f32.mrb[0].mxu0
  %1856 = vmatprep.mubr.f32.mxu0 0.0
  %1857 = vmatmul.mubr.f32.gmra.mrb[0].mxu0 %v1032
  %v1858 = vpop.f32.mrb[0].mxu0
  %v1859 = vadd.f32 0.0, %v1858
  %v1860 = vpop.f32.mrb[0].mxu0
  %1861 = vmatprep.mubr.f32.mxu0 0.0
  %1862 = vmatmul.mubr.f32.gmra.mrb[0].mxu0 %v1033
  %v1863 = vpop.f32.mrb[0].mxu0
  %v1864 = vadd.f32 0.0, %v1863
  %v1865 = vpop.f32.mrb[0].mxu0
  %1866 = vmatprep.mubr.f32.mxu0 0.0
  %1867 = vmatmul.mubr.f32.gmra.mrb[0].mxu0 %v1034
  %v1868 = vpop.f32.mrb[0].mxu0
  %v1869 = vadd.f32 0.0, %v1868
  %v1870 = vpop.f32.mrb[0].mxu0
  %1871 = vmatprep.mubr.f32.mxu0 0.0
  %1872 = vmatmul.mubr.f32.gmra.mrb[0].mxu0 %v1035
  %v1873 = vpop.f32.mrb[0].mxu0
  %v1874 = vadd.f32 0.0, %v1873
  %v1875 = vpop.f32.mrb[0].mxu0
  %1876 = vmatprep.mubr.f32.mxu0 0.0
  %1877 = vmatmul.mubr.f32.gmra.mrb[0].mxu0 %v1036
  %v1878 = vpop.f32.mrb[0].mxu0
  %v1879 = vadd.f32 0.0, %v1878
  %v1880 = vpop.f32.mrb[0].mxu0
  %1881 = vmatprep.mubr.f32.mxu0 0.0
  %1882 = vmatmul.mubr.f32.gmra.mrb[0].mxu0 %v1037
  %v1883 = vpop.f32.mrb[0].mxu0
  %v1884 = vadd.f32 0.0, %v1883
  %v1885 = vpop.f32.mrb[0].mxu0
  %1886 = vmatprep.mubr.f32.mxu0 0.0
  %1887 = vmatmul.mubr.f32.gmra.mrb[0].mxu0 %v1038
  %v1888 = vpop.f32.mrb[0].mxu0
  %v1889 = vadd.f32 0.0, %v1888
  %v1890 = vpop.f32.mrb[0].mxu0
  %1891 = vmatprep.mubr.f32.mxu0 0.0
  %1892 = vmatmul.mubr.f32.gmra.mrb[0].mxu0 %v1039
  %v1893 = vpop.f32.mrb[0].mxu0
  %v1894 = vadd.f32 0.0, %v1893
  %v1895 = vpop.f32.mrb[0].mxu0
  %1896 = vmatprep.mubr.f32.mxu0 0.0
  %1897 = vmatmul.mubr.f32.gmra.mrb[0].mxu0 %v1040
  %v1898 = vpop.f32.mrb[0].mxu0
  %v1899 = vadd.f32 0.0, %v1898
  %v1900 = vpop.f32.mrb[0].mxu0
  %1901 = vmatprep.mubr.f32.mxu0 0.0
  %1902 = vmatmul.mubr.f32.gmra.mrb[0].mxu0 %v1041
  %v1903 = vpop.f32.mrb[0].mxu0
  %v1904 = vadd.f32 0.0, %v1903
  %v1905 = vpop.f32.mrb[0].mxu0
  %1906 = vmatprep.mubr.f32.mxu0 0.0
  %1907 = vmatmul.mubr.f32.gmra.mrb[0].mxu0 %v1042
  %v1908 = vpop.f32.mrb[0].mxu0
  %v1909 = vadd.f32 0.0, %v1908
  %v1910 = vpop.f32.mrb[0].mxu0
  %1911 = vdwg.mxu0
  %v1912 = vadd.f32 %v1446, %v1594
  %v1913 = vadd.f32 %v1447, %v1599
  %v1914 = vadd.f32 %v1448, %v1604
  %v1915 = vadd.f32 %v1449, %v1609
  %v1916 = vadd.f32 %v1450, %v1614
  %v1917 = vadd.f32 %v1451, %v1619
  %v1918 = vadd.f32 %v1452, %v1624
  %v1919 = vadd.f32 %v1453, %v1629
  %v1920 = vadd.f32 %v1454, %v1634
  %v1921 = vadd.f32 %v1455, %v1639
  %v1922 = vadd.f32 %v1456, %v1644
  %v1923 = vadd.f32 %v1457, %v1649
  %v1924 = vadd.f32 %v1458, %v1654
  %v1925 = vadd.f32 %v1459, %v1659
  %v1926 = vadd.f32 %v1460, %v1664
  %v1927 = vadd.f32 %v1461, %v1669
  %v1928 = vadd.f32 %v1462, %v1674
  %v1929 = vadd.f32 %v1463, %v1679
  %v1930 = vadd.f32 %v1464, %v1684
  %v1931 = vadd.f32 %v1465, %v1689
  %v1932 = vadd.f32 %v1466, %v1694
  %v1933 = vadd.f32 %v1467, %v1699
  %v1934 = vadd.f32 %v1468, %v1704
  %v1935 = vadd.f32 %v1469, %v1709
  %v1936 = vadd.f32 %v1470, %v1714
  %v1937 = vadd.f32 %v1471, %v1719
  %v1938 = vadd.f32 %v1472, %v1724
  %v1939 = vadd.f32 %v1473, %v1729
  %v1940 = vadd.f32 %v1474, %v1734
  %v1941 = vadd.f32 %v1475, %v1739
  %v1942 = vadd.f32 %v1476, %v1744
  %v1943 = vadd.f32 %v1477, %v1749
  %v1944 = vadd.f32 %v1478, %v1754
  %v1945 = vadd.f32 %v1479, %v1759
  %v1946 = vadd.f32 %v1480, %v1764
  %v1947 = vadd.f32 %v1481, %v1769
  %v1948 = vadd.f32 %v1482, %v1774
  %v1949 = vadd.f32 %v1483, %v1779
  %v1950 = vadd.f32 %v1484, %v1784
  %v1951 = vadd.f32 %v1485, %v1789
  %v1952 = vadd.f32 %v1486, %v1794
  %v1953 = vadd.f32 %v1487, %v1799
  %v1954 = vadd.f32 %v1488, %v1804
  %v1955 = vadd.f32 %v1489, %v1809
  %v1956 = vadd.f32 %v1490, %v1814
  %v1957 = vadd.f32 %v1491, %v1819
  %v1958 = vadd.f32 %v1492, %v1824
  %v1959 = vadd.f32 %v1493, %v1829
  %v1960 = vadd.f32 %v1494, %v1834
  %v1961 = vadd.f32 %v1495, %v1839
  %v1962 = vadd.f32 %v1496, %v1844
  %v1963 = vadd.f32 %v1497, %v1849
  %v1964 = vadd.f32 %v1498, %v1854
  %v1965 = vadd.f32 %v1499, %v1859
  %v1966 = vadd.f32 %v1500, %v1864
  %v1967 = vadd.f32 %v1501, %v1869
  %v1968 = vadd.f32 %v1502, %v1874
  %v1969 = vadd.f32 %v1503, %v1879
  %v1970 = vadd.f32 %v1504, %v1884
  %v1971 = vadd.f32 %v1505, %v1889
  %v1972 = vadd.f32 %v1506, %v1894
  %v1973 = vadd.f32 %v1507, %v1899
  %v1974 = vadd.f32 %v1508, %v1904
  %v1975 = vadd.f32 %v1509, %v1909
  %s1976 = scalar_lea.vmem %s3, 768
  %v1977 = vld [vmem:[%s1976] sm:$0xff]
  %v1978 = vld [vmem:[%s1976 + $0x8] sm:$0xff]
  %v1979 = vld [vmem:[%s1976 + $0x10] sm:$0xff]
  %v1980 = vld [vmem:[%s1976 + $0x18] sm:$0xff]
  %v1981 = vld [vmem:[%s1976 + $0x20] sm:$0xff]
  %v1982 = vld [vmem:[%s1976 + $0x28] sm:$0xff]
  %v1983 = vld [vmem:[%s1976 + $0x30] sm:$0xff]
  %v1984 = vld [vmem:[%s1976 + $0x38] sm:$0xff]
  %v1985 = vld [vmem:[%s1976 + $0x40] sm:$0xff]
  %v1986 = vld [vmem:[%s1976 + $0x48] sm:$0xff]
  %v1987 = vld [vmem:[%s1976 + $0x50] sm:$0xff]
  %v1988 = vld [vmem:[%s1976 + $0x58] sm:$0xff]
  %v1989 = vld [vmem:[%s1976 + $0x60] sm:$0xff]
  %v1990 = vld [vmem:[%s1976 + $0x68] sm:$0xff]
  %v1991 = vld [vmem:[%s1976 + $0x70] sm:$0xff]
  %v1992 = vld [vmem:[%s1976 + $0x78] sm:$0xff]
  %1993 = vmatprep.subr.mxu0 0.0
  %1994 = vmatpush1.msra.mxu0 %v1977
  %1995 = vmatprep.subr.mxu0 0.0
  %1996 = vmatpush1.msra.mxu0 %v1978
  %1997 = vmatprep.subr.mxu0 0.0
  %1998 = vmatpush1.msra.mxu0 %v1979
  %1999 = vmatprep.subr.mxu0 0.0
  %2000 = vmatpush1.msra.mxu0 %v1980
  %2001 = vmatprep.subr.mxu0 0.0
  %2002 = vmatpush1.msra.mxu0 %v1981
  %2003 = vmatprep.subr.mxu0 0.0
  %2004 = vmatpush1.msra.mxu0 %v1982
  %2005 = vmatprep.subr.mxu0 0.0
  %2006 = vmatpush1.msra.mxu0 %v1983
  %2007 = vmatprep.subr.mxu0 0.0
  %2008 = vmatpush1.msra.mxu0 %v1984
  %2009 = vmatprep.subr.mxu0 0.0
  %2010 = vmatpush1.msra.mxu0 %v1985
  %2011 = vmatprep.subr.mxu0 0.0
  %2012 = vmatpush1.msra.mxu0 %v1986
  %2013 = vmatprep.subr.mxu0 0.0
  %2014 = vmatpush1.msra.mxu0 %v1987
  %2015 = vmatprep.subr.mxu0 0.0
  %2016 = vmatpush1.msra.mxu0 %v1988
  %2017 = vmatprep.subr.mxu0 0.0
  %2018 = vmatpush1.msra.mxu0 %v1989
  %2019 = vmatprep.subr.mxu0 0.0
  %2020 = vmatpush1.msra.mxu0 %v1990
  %2021 = vmatprep.subr.mxu0 0.0
  %2022 = vmatpush1.msra.mxu0 %v1991
  %2023 = vmatprep.subr.mxu0 0.0
  %2024 = vmatpush1.msra.mxu0 %v1992
  %2025 = vmatprep.subr.mxu0 0.0
  %2026 = vmatpush1.msra.mxu0 0.0
  %2027 = vmatprep.subr.mxu0 0.0
  %2028 = vmatpush1.msra.mxu0 0.0
  %2029 = vmatprep.subr.mxu0 0.0
  %2030 = vmatpush1.msra.mxu0 0.0
  %2031 = vmatprep.subr.mxu0 0.0
  %2032 = vmatpush1.msra.mxu0 0.0
  %2033 = vmatprep.subr.mxu0 0.0
  %2034 = vmatpush1.msra.mxu0 0.0
  %2035 = vmatprep.subr.mxu0 0.0
  %2036 = vmatpush1.msra.mxu0 0.0
  %2037 = vmatprep.subr.mxu0 0.0
  %2038 = vmatpush1.msra.mxu0 0.0
  %2039 = vmatprep.subr.mxu0 0.0
  %2040 = vmatpush1.msra.mxu0 0.0
  %2041 = vmatprep.subr.mxu0 0.0
  %2042 = vmatpush1.msra.mxu0 0.0
  %2043 = vmatprep.subr.mxu0 0.0
  %2044 = vmatpush1.msra.mxu0 0.0
  %2045 = vmatprep.subr.mxu0 0.0
  %2046 = vmatpush1.msra.mxu0 0.0
  %2047 = vmatprep.subr.mxu0 0.0
  %2048 = vmatpush1.msra.mxu0 0.0
  %2049 = vmatprep.subr.mxu0 0.0
  %2050 = vmatpush1.msra.mxu0 0.0
  %2051 = vmatprep.subr.mxu0 0.0
  %2052 = vmatpush1.msra.mxu0 0.0
  %2053 = vmatprep.subr.mxu0 0.0
  %2054 = vmatpush1.msra.mxu0 0.0
  %2055 = vmatprep.subr.mxu0 0.0
  %2056 = vmatpush1.msra.mxu0 0.0
  %2057 = vmatprep.mubr.f32.mxu0 0.0
  %2058 = vmatmul.mubr.f32.gmra.mrb[0].mxu0 %v977
  %v2059 = vpop.f32.mrb[0].mxu0
  %v2060 = vadd.f32 0.0, %v2059
  %v2061 = vpop.f32.mrb[0].mxu0
  %2062 = vmatprep.mubr.f32.mxu0 0.0
  %2063 = vmatmul.mubr.f32.gmra.mrb[0].mxu0 %v978
  %v2064 = vpop.f32.mrb[0].mxu0
  %v2065 = vadd.f32 0.0, %v2064
  %v2066 = vpop.f32.mrb[0].mxu0
  %2067 = vmatprep.mubr.f32.mxu0 0.0
  %2068 = vmatmul.mubr.f32.gmra.mrb[0].mxu0 %v979
  %v2069 = vpop.f32.mrb[0].mxu0
  %v2070 = vadd.f32 0.0, %v2069
  %v2071 = vpop.f32.mrb[0].mxu0
  %2072 = vmatprep.mubr.f32.mxu0 0.0
  %2073 = vmatmul.mubr.f32.gmra.mrb[0].mxu0 %v980
  %v2074 = vpop.f32.mrb[0].mxu0
  %v2075 = vadd.f32 0.0, %v2074
  %v2076 = vpop.f32.mrb[0].mxu0
  %2077 = vmatprep.mubr.f32.mxu0 0.0
  %2078 = vmatmul.mubr.f32.gmra.mrb[0].mxu0 %v981
  %v2079 = vpop.f32.mrb[0].mxu0
  %v2080 = vadd.f32 0.0, %v2079
  %v2081 = vpop.f32.mrb[0].mxu0
  %2082 = vmatprep.mubr.f32.mxu0 0.0
  %2083 = vmatmul.mubr.f32.gmra.mrb[0].mxu0 %v982
  %v2084 = vpop.f32.mrb[0].mxu0
  %v2085 = vadd.f32 0.0, %v2084
  %v2086 = vpop.f32.mrb[0].mxu0
  %2087 = vmatprep.mubr.f32.mxu0 0.0
  %2088 = vmatmul.mubr.f32.gmra.mrb[0].mxu0 %v983
  %v2089 = vpop.f32.mrb[0].mxu0
  %v2090 = vadd.f32 0.0, %v2089
  %v2091 = vpop.f32.mrb[0].mxu0
  %2092 = vmatprep.mubr.f32.mxu0 0.0
  %2093 = vmatmul.mubr.f32.gmra.mrb[0].mxu0 %v984
  %v2094 = vpop.f32.mrb[0].mxu0
  %v2095 = vadd.f32 0.0, %v2094
  %v2096 = vpop.f32.mrb[0].mxu0
  %2097 = vmatprep.mubr.f32.mxu0 0.0
  %2098 = vmatmul.mubr.f32.gmra.mrb[0].mxu0 %v985
  %v2099 = vpop.f32.mrb[0].mxu0
  %v2100 = vadd.f32 0.0, %v2099
  %v2101 = vpop.f32.mrb[0].mxu0
  %2102 = vmatprep.mubr.f32.mxu0 0.0
  %2103 = vmatmul.mubr.f32.gmra.mrb[0].mxu0 %v986
  %v2104 = vpop.f32.mrb[0].mxu0
  %v2105 = vadd.f32 0.0, %v2104
  %v2106 = vpop.f32.mrb[0].mxu0
  %2107 = vmatprep.mubr.f32.mxu0 0.0
  %2108 = vmatmul.mubr.f32.gmra.mrb[0].mxu0 %v987
  %v2109 = vpop.f32.mrb[0].mxu0
  %v2110 = vadd.f32 0.0, %v2109
  %v2111 = vpop.f32.mrb[0].mxu0
  %2112 = vmatprep.mubr.f32.mxu0 0.0
  %2113 = vmatmul.mubr.f32.gmra.mrb[0].mxu0 %v988
  %v2114 = vpop.f32.mrb[0].mxu0
  %v2115 = vadd.f32 0.0, %v2114
  %v2116 = vpop.f32.mrb[0].mxu0
  %2117 = vmatprep.mubr.f32.mxu0 0.0
  %2118 = vmatmul.mubr.f32.gmra.mrb[0].mxu0 %v989
  %v2119 = vpop.f32.mrb[0].mxu0
  %v2120 = vadd.f32 0.0, %v2119
  %v2121 = vpop.f32.mrb[0].mxu0
  %2122 = vmatprep.mubr.f32.mxu0 0.0
  %2123 = vmatmul.mubr.f32.gmra.mrb[0].mxu0 %v990
  %v2124 = vpop.f32.mrb[0].mxu0
  %v2125 = vadd.f32 0.0, %v2124
  %v2126 = vpop.f32.mrb[0].mxu0
  %2127 = vmatprep.mubr.f32.mxu0 0.0
  %2128 = vmatmul.mubr.f32.gmra.mrb[0].mxu0 %v991
  %v2129 = vpop.f32.mrb[0].mxu0
  %v2130 = vadd.f32 0.0, %v2129
  %v2131 = vpop.f32.mrb[0].mxu0
  %2132 = vmatprep.mubr.f32.mxu0 0.0
  %2133 = vmatmul.mubr.f32.gmra.mrb[0].mxu0 %v992
  %v2134 = vpop.f32.mrb[0].mxu0
  %v2135 = vadd.f32 0.0, %v2134
  %v2136 = vpop.f32.mrb[0].mxu0
  %2137 = vmatprep.mubr.f32.mxu0 0.0
  %2138 = vmatmul.mubr.f32.gmra.mrb[0].mxu0 %v993
  %v2139 = vpop.f32.mrb[0].mxu0
  %v2140 = vadd.f32 0.0, %v2139
  %v2141 = vpop.f32.mrb[0].mxu0
  %2142 = vmatprep.mubr.f32.mxu0 0.0
  %2143 = vmatmul.mubr.f32.gmra.mrb[0].mxu0 %v994
  %v2144 = vpop.f32.mrb[0].mxu0
  %v2145 = vadd.f32 0.0, %v2144
  %v2146 = vpop.f32.mrb[0].mxu0
  %2147 = vmatprep.mubr.f32.mxu0 0.0
  %2148 = vmatmul.mubr.f32.gmra.mrb[0].mxu0 %v995
  %v2149 = vpop.f32.mrb[0].mxu0
  %v2150 = vadd.f32 0.0, %v2149
  %v2151 = vpop.f32.mrb[0].mxu0
  %2152 = vmatprep.mubr.f32.mxu0 0.0
  %2153 = vmatmul.mubr.f32.gmra.mrb[0].mxu0 %v996
  %v2154 = vpop.f32.mrb[0].mxu0
  %v2155 = vadd.f32 0.0, %v2154
  %v2156 = vpop.f32.mrb[0].mxu0
  %2157 = vmatprep.mubr.f32.mxu0 0.0
  %2158 = vmatmul.mubr.f32.gmra.mrb[0].mxu0 %v997
  %v2159 = vpop.f32.mrb[0].mxu0
  %v2160 = vadd.f32 0.0, %v2159
  %v2161 = vpop.f32.mrb[0].mxu0
  %2162 = vmatprep.mubr.f32.mxu0 0.0
  %2163 = vmatmul.mubr.f32.gmra.mrb[0].mxu0 %v998
  %v2164 = vpop.f32.mrb[0].mxu0
  %v2165 = vadd.f32 0.0, %v2164
  %v2166 = vpop.f32.mrb[0].mxu0
  %2167 = vmatprep.mubr.f32.mxu0 0.0
  %2168 = vmatmul.mubr.f32.gmra.mrb[0].mxu0 %v999
  %v2169 = vpop.f32.mrb[0].mxu0
  %v2170 = vadd.f32 0.0, %v2169
  %v2171 = vpop.f32.mrb[0].mxu0
  %2172 = vmatprep.mubr.f32.mxu0 0.0
  %2173 = vmatmul.mubr.f32.gmra.mrb[0].mxu0 %v1000
  %v2174 = vpop.f32.mrb[0].mxu0
  %v2175 = vadd.f32 0.0, %v2174
  %v2176 = vpop.f32.mrb[0].mxu0
  %2177 = vmatprep.mubr.f32.mxu0 0.0
  %2178 = vmatmul.mubr.f32.gmra.mrb[0].mxu0 %v1001
  %v2179 = vpop.f32.mrb[0].mxu0
  %v2180 = vadd.f32 0.0, %v2179
  %v2181 = vpop.f32.mrb[0].mxu0
  %2182 = vmatprep.mubr.f32.mxu0 0.0
  %2183 = vmatmul.mubr.f32.gmra.mrb[0].mxu0 %v1002
  %v2184 = vpop.f32.mrb[0].mxu0
  %v2185 = vadd.f32 0.0, %v2184
  %v2186 = vpop.f32.mrb[0].mxu0
  %2187 = vmatprep.mubr.f32.mxu0 0.0
  %2188 = vmatmul.mubr.f32.gmra.mrb[0].mxu0 %v1003
  %v2189 = vpop.f32.mrb[0].mxu0
  %v2190 = vadd.f32 0.0, %v2189
  %v2191 = vpop.f32.mrb[0].mxu0
  %2192 = vmatprep.mubr.f32.mxu0 0.0
  %2193 = vmatmul.mubr.f32.gmra.mrb[0].mxu0 %v1004
  %v2194 = vpop.f32.mrb[0].mxu0
  %v2195 = vadd.f32 0.0, %v2194
  %v2196 = vpop.f32.mrb[0].mxu0
  %2197 = vmatprep.mubr.f32.mxu0 0.0
  %2198 = vmatmul.mubr.f32.gmra.mrb[0].mxu0 %v1005
  %v2199 = vpop.f32.mrb[0].mxu0
  %v2200 = vadd.f32 0.0, %v2199
  %v2201 = vpop.f32.mrb[0].mxu0
  %2202 = vmatprep.mubr.f32.mxu0 0.0
  %2203 = vmatmul.mubr.f32.gmra.mrb[0].mxu0 %v1006
  %v2204 = vpop.f32.mrb[0].mxu0
  %v2205 = vadd.f32 0.0, %v2204
  %v2206 = vpop.f32.mrb[0].mxu0
  %2207 = vmatprep.mubr.f32.mxu0 0.0
  %2208 = vmatmul.mubr.f32.gmra.mrb[0].mxu0 %v1007
  %v2209 = vpop.f32.mrb[0].mxu0
  %v2210 = vadd.f32 0.0, %v2209
  %v2211 = vpop.f32.mrb[0].mxu0
  %2212 = vmatprep.mubr.f32.mxu0 0.0
  %2213 = vmatmul.mubr.f32.gmra.mrb[0].mxu0 %v1008
  %v2214 = vpop.f32.mrb[0].mxu0
  %v2215 = vadd.f32 0.0, %v2214
  %v2216 = vpop.f32.mrb[0].mxu0
  %2217 = vmatprep.mubr.f32.mxu0 0.0
  %2218 = vmatmul.mubr.f32.gmra.mrb[0].mxu0 %v1013
  %v2219 = vpop.f32.mrb[0].mxu0
  %v2220 = vadd.f32 0.0, %v2219
  %v2221 = vpop.f32.mrb[0].mxu0
  %2222 = vmatprep.mubr.f32.mxu0 0.0
  %2223 = vmatmul.mubr.f32.gmra.mrb[0].mxu0 %v1014
  %v2224 = vpop.f32.mrb[0].mxu0
  %v2225 = vadd.f32 0.0, %v2224
  %v2226 = vpop.f32.mrb[0].mxu0
  %2227 = vmatprep.mubr.f32.mxu0 0.0
  %2228 = vmatmul.mubr.f32.gmra.mrb[0].mxu0 %v1015
  %v2229 = vpop.f32.mrb[0].mxu0
  %v2230 = vadd.f32 0.0, %v2229
  %v2231 = vpop.f32.mrb[0].mxu0
  %2232 = vmatprep.mubr.f32.mxu0 0.0
  %2233 = vmatmul.mubr.f32.gmra.mrb[0].mxu0 %v1016
  %v2234 = vpop.f32.mrb[0].mxu0
  %v2235 = vadd.f32 0.0, %v2234
  %v2236 = vpop.f32.mrb[0].mxu0
  %2237 = vmatprep.mubr.f32.mxu0 0.0
  %2238 = vmatmul.mubr.f32.gmra.mrb[0].mxu0 %v1017
  %v2239 = vpop.f32.mrb[0].mxu0
  %v2240 = vadd.f32 0.0, %v2239
  %v2241 = vpop.f32.mrb[0].mxu0
  %2242 = vmatprep.mubr.f32.mxu0 0.0
  %2243 = vmatmul.mubr.f32.gmra.mrb[0].mxu0 %v1018
  %v2244 = vpop.f32.mrb[0].mxu0
  %v2245 = vadd.f32 0.0, %v2244
  %v2246 = vpop.f32.mrb[0].mxu0
  %2247 = vmatprep.mubr.f32.mxu0 0.0
  %2248 = vmatmul.mubr.f32.gmra.mrb[0].mxu0 %v1019
  %v2249 = vpop.f32.mrb[0].mxu0
  %v2250 = vadd.f32 0.0, %v2249
  %v2251 = vpop.f32.mrb[0].mxu0
  %2252 = vmatprep.mubr.f32.mxu0 0.0
  %2253 = vmatmul.mubr.f32.gmra.mrb[0].mxu0 %v1020
  %v2254 = vpop.f32.mrb[0].mxu0
  %v2255 = vadd.f32 0.0, %v2254
  %v2256 = vpop.f32.mrb[0].mxu0
  %2257 = vmatprep.mubr.f32.mxu0 0.0
  %2258 = vmatmul.mubr.f32.gmra.mrb[0].mxu0 %v1021
  %v2259 = vpop.f32.mrb[0].mxu0
  %v2260 = vadd.f32 0.0, %v2259
  %v2261 = vpop.f32.mrb[0].mxu0
  %2262 = vmatprep.mubr.f32.mxu0 0.0
  %2263 = vmatmul.mubr.f32.gmra.mrb[0].mxu0 %v1022
  %v2264 = vpop.f32.mrb[0].mxu0
  %v2265 = vadd.f32 0.0, %v2264
  %v2266 = vpop.f32.mrb[0].mxu0
  %2267 = vmatprep.mubr.f32.mxu0 0.0
  %2268 = vmatmul.mubr.f32.gmra.mrb[0].mxu0 %v1023
  %v2269 = vpop.f32.mrb[0].mxu0
  %v2270 = vadd.f32 0.0, %v2269
  %v2271 = vpop.f32.mrb[0].mxu0
  %2272 = vmatprep.mubr.f32.mxu0 0.0
  %2273 = vmatmul.mubr.f32.gmra.mrb[0].mxu0 %v1024
  %v2274 = vpop.f32.mrb[0].mxu0
  %v2275 = vadd.f32 0.0, %v2274
  %v2276 = vpop.f32.mrb[0].mxu0
  %2277 = vmatprep.mubr.f32.mxu0 0.0
  %2278 = vmatmul.mubr.f32.gmra.mrb[0].mxu0 %v1025
  %v2279 = vpop.f32.mrb[0].mxu0
  %v2280 = vadd.f32 0.0, %v2279
  %v2281 = vpop.f32.mrb[0].mxu0
  %2282 = vmatprep.mubr.f32.mxu0 0.0
  %2283 = vmatmul.mubr.f32.gmra.mrb[0].mxu0 %v1026
  %v2284 = vpop.f32.mrb[0].mxu0
  %v2285 = vadd.f32 0.0, %v2284
  %v2286 = vpop.f32.mrb[0].mxu0
  %2287 = vmatprep.mubr.f32.mxu0 0.0
  %2288 = vmatmul.mubr.f32.gmra.mrb[0].mxu0 %v1027
  %v2289 = vpop.f32.mrb[0].mxu0
  %v2290 = vadd.f32 0.0, %v2289
  %v2291 = vpop.f32.mrb[0].mxu0
  %2292 = vmatprep.mubr.f32.mxu0 0.0
  %2293 = vmatmul.mubr.f32.gmra.mrb[0].mxu0 %v1028
  %v2294 = vpop.f32.mrb[0].mxu0
  %v2295 = vadd.f32 0.0, %v2294
  %v2296 = vpop.f32.mrb[0].mxu0
  %2297 = vmatprep.mubr.f32.mxu0 0.0
  %2298 = vmatmul.mubr.f32.gmra.mrb[0].mxu0 %v1029
  %v2299 = vpop.f32.mrb[0].mxu0
  %v2300 = vadd.f32 0.0, %v2299
  %v2301 = vpop.f32.mrb[0].mxu0
  %2302 = vmatprep.mubr.f32.mxu0 0.0
  %2303 = vmatmul.mubr.f32.gmra.mrb[0].mxu0 %v1030
  %v2304 = vpop.f32.mrb[0].mxu0
  %v2305 = vadd.f32 0.0, %v2304
  %v2306 = vpop.f32.mrb[0].mxu0
  %2307 = vmatprep.mubr.f32.mxu0 0.0
  %2308 = vmatmul.mubr.f32.gmra.mrb[0].mxu0 %v1031
  %v2309 = vpop.f32.mrb[0].mxu0
  %v2310 = vadd.f32 0.0, %v2309
  %v2311 = vpop.f32.mrb[0].mxu0
  %2312 = vmatprep.mubr.f32.mxu0 0.0
  %2313 = vmatmul.mubr.f32.gmra.mrb[0].mxu0 %v1032
  %v2314 = vpop.f32.mrb[0].mxu0
  %v2315 = vadd.f32 0.0, %v2314
  %v2316 = vpop.f32.mrb[0].mxu0
  %2317 = vmatprep.mubr.f32.mxu0 0.0
  %2318 = vmatmul.mubr.f32.gmra.mrb[0].mxu0 %v1033
  %v2319 = vpop.f32.mrb[0].mxu0
  %v2320 = vadd.f32 0.0, %v2319
  %v2321 = vpop.f32.mrb[0].mxu0
  %2322 = vmatprep.mubr.f32.mxu0 0.0
  %2323 = vmatmul.mubr.f32.gmra.mrb[0].mxu0 %v1034
  %v2324 = vpop.f32.mrb[0].mxu0
  %v2325 = vadd.f32 0.0, %v2324
  %v2326 = vpop.f32.mrb[0].mxu0
  %2327 = vmatprep.mubr.f32.mxu0 0.0
  %2328 = vmatmul.mubr.f32.gmra.mrb[0].mxu0 %v1035
  %v2329 = vpop.f32.mrb[0].mxu0
  %v2330 = vadd.f32 0.0, %v2329
  %v2331 = vpop.f32.mrb[0].mxu0
  %2332 = vmatprep.mubr.f32.mxu0 0.0
  %2333 = vmatmul.mubr.f32.gmra.mrb[0].mxu0 %v1036
  %v2334 = vpop.f32.mrb[0].mxu0
  %v2335 = vadd.f32 0.0, %v2334
  %v2336 = vpop.f32.mrb[0].mxu0
  %2337 = vmatprep.mubr.f32.mxu0 0.0
  %2338 = vmatmul.mubr.f32.gmra.mrb[0].mxu0 %v1037
  %v2339 = vpop.f32.mrb[0].mxu0
  %v2340 = vadd.f32 0.0, %v2339
  %v2341 = vpop.f32.mrb[0].mxu0
  %2342 = vmatprep.mubr.f32.mxu0 0.0
  %2343 = vmatmul.mubr.f32.gmra.mrb[0].mxu0 %v1038
  %v2344 = vpop.f32.mrb[0].mxu0
  %v2345 = vadd.f32 0.0, %v2344
  %v2346 = vpop.f32.mrb[0].mxu0
  %2347 = vmatprep.mubr.f32.mxu0 0.0
  %2348 = vmatmul.mubr.f32.gmra.mrb[0].mxu0 %v1039
  %v2349 = vpop.f32.mrb[0].mxu0
  %v2350 = vadd.f32 0.0, %v2349
  %v2351 = vpop.f32.mrb[0].mxu0
  %2352 = vmatprep.mubr.f32.mxu0 0.0
  %2353 = vmatmul.mubr.f32.gmra.mrb[0].mxu0 %v1040
  %v2354 = vpop.f32.mrb[0].mxu0
  %v2355 = vadd.f32 0.0, %v2354
  %v2356 = vpop.f32.mrb[0].mxu0
  %2357 = vmatprep.mubr.f32.mxu0 0.0
  %2358 = vmatmul.mubr.f32.gmra.mrb[0].mxu0 %v1041
  %v2359 = vpop.f32.mrb[0].mxu0
  %v2360 = vadd.f32 0.0, %v2359
  %v2361 = vpop.f32.mrb[0].mxu0
  %2362 = vmatprep.mubr.f32.mxu0 0.0
  %2363 = vmatmul.mubr.f32.gmra.mrb[0].mxu0 %v1042
  %v2364 = vpop.f32.mrb[0].mxu0
  %v2365 = vadd.f32 0.0, %v2364
  %v2366 = vpop.f32.mrb[0].mxu0
  %2367 = vmatprep.mubr.f32.mxu0 0.0
  %2368 = vmatmul.mubr.f32.gmra.mrb[0].mxu0 %v1043
  %v2369 = vpop.f32.mrb[0].mxu0
  %v2370 = vadd.f32 0.0, %v2369
  %v2371 = vpop.f32.mrb[0].mxu0
  %2372 = vmatprep.mubr.f32.mxu0 0.0
  %2373 = vmatmul.mubr.f32.gmra.mrb[0].mxu0 %v1044
  %v2374 = vpop.f32.mrb[0].mxu0
  %v2375 = vadd.f32 0.0, %v2374
  %v2376 = vpop.f32.mrb[0].mxu0
  %2377 = vdwg.mxu0
  %v2378 = vadd.f32 %v1912, %v2060
  %v2379 = vadd.f32 %v1913, %v2065
  %v2380 = vadd.f32 %v1914, %v2070
  %v2381 = vadd.f32 %v1915, %v2075
  %v2382 = vadd.f32 %v1916, %v2080
  %v2383 = vadd.f32 %v1917, %v2085
  %v2384 = vadd.f32 %v1918, %v2090
  %v2385 = vadd.f32 %v1919, %v2095
  %v2386 = vadd.f32 %v1920, %v2100
  %v2387 = vadd.f32 %v1921, %v2105
  %v2388 = vadd.f32 %v1922, %v2110
  %v2389 = vadd.f32 %v1923, %v2115
  %v2390 = vadd.f32 %v1924, %v2120
  %v2391 = vadd.f32 %v1925, %v2125
  %v2392 = vadd.f32 %v1926, %v2130
  %v2393 = vadd.f32 %v1927, %v2135
  %v2394 = vadd.f32 %v1928, %v2140
  %v2395 = vadd.f32 %v1929, %v2145
  %v2396 = vadd.f32 %v1930, %v2150
  %v2397 = vadd.f32 %v1931, %v2155
  %v2398 = vadd.f32 %v1932, %v2160
  %v2399 = vadd.f32 %v1933, %v2165
  %v2400 = vadd.f32 %v1934, %v2170
  %v2401 = vadd.f32 %v1935, %v2175
  %v2402 = vadd.f32 %v1936, %v2180
  %v2403 = vadd.f32 %v1937, %v2185
  %v2404 = vadd.f32 %v1938, %v2190
  %v2405 = vadd.f32 %v1939, %v2195
  %v2406 = vadd.f32 %v1940, %v2200
  %v2407 = vadd.f32 %v1941, %v2205
  %v2408 = vadd.f32 %v1942, %v2210
  %v2409 = vadd.f32 %v1943, %v2215
  %v2410 = vadd.f32 %v1944, %v2220
  %v2411 = vadd.f32 %v1945, %v2225
  %v2412 = vadd.f32 %v1946, %v2230
  %v2413 = vadd.f32 %v1947, %v2235
  %v2414 = vadd.f32 %v1948, %v2240
  %v2415 = vadd.f32 %v1949, %v2245
  %v2416 = vadd.f32 %v1950, %v2250
  %v2417 = vadd.f32 %v1951, %v2255
  %v2418 = vadd.f32 %v1952, %v2260
  %v2419 = vadd.f32 %v1953, %v2265
  %v2420 = vadd.f32 %v1954, %v2270
  %v2421 = vadd.f32 %v1955, %v2275
  %v2422 = vadd.f32 %v1956, %v2280
  %v2423 = vadd.f32 %v1957, %v2285
  %v2424 = vadd.f32 %v1958, %v2290
  %v2425 = vadd.f32 %v1959, %v2295
  %v2426 = vadd.f32 %v1960, %v2300
  %v2427 = vadd.f32 %v1961, %v2305
  %v2428 = vadd.f32 %v1962, %v2310
  %v2429 = vadd.f32 %v1963, %v2315
  %v2430 = vadd.f32 %v1964, %v2320
  %v2431 = vadd.f32 %v1965, %v2325
  %v2432 = vadd.f32 %v1966, %v2330
  %v2433 = vadd.f32 %v1967, %v2335
  %v2434 = vadd.f32 %v1968, %v2340
  %v2435 = vadd.f32 %v1969, %v2345
  %v2436 = vadd.f32 %v1970, %v2350
  %v2437 = vadd.f32 %v1971, %v2355
  %v2438 = vadd.f32 %v1972, %v2360
  %v2439 = vadd.f32 %v1973, %v2365
  %v2440 = vadd.f32 %v1974, %v2370
  %v2441 = vadd.f32 %v1975, %v2375
  %v2442 = vld [vmem:[#allocation2 + $0x1] sm:$0xff]
  %v2443 = vld [vmem:[#allocation2 + $0x9] sm:$0xff]
  %v2444 = vld [vmem:[#allocation2 + $0x19] sm:$0xff]
  %v2445 = vld [vmem:[#allocation2 + $0x21] sm:$0xff]
  %v2446 = vld [vmem:[#allocation2 + $0x31] sm:$0xff]
  %v2447 = vld [vmem:[#allocation2 + $0x39] sm:$0xff]
  %v2448 = vld [vmem:[#allocation2 + $0x49] sm:$0xff]
  %v2449 = vld [vmem:[#allocation2 + $0x51] sm:$0xff]
  %v2450 = vld [vmem:[#allocation2 + $0x61] sm:$0xff]
  %v2451 = vld [vmem:[#allocation2 + $0x69] sm:$0xff]
  %v2452 = vld [vmem:[#allocation2 + $0x79] sm:$0xff]
  %v2453 = vld [vmem:[#allocation2 + $0x81] sm:$0xff]
  %v2454 = vld [vmem:[#allocation2 + $0x91] sm:$0xff]
  %v2455 = vld [vmem:[#allocation2 + $0x99] sm:$0xff]
  %v2456 = vld [vmem:[#allocation2 + $0xa9] sm:$0xff]
  %v2457 = vld [vmem:[#allocation2 + $0xb1] sm:$0xff]
  %v2458 = vld [vmem:[#allocation2 + $0xc1] sm:$0xff]
  %v2459 = vld [vmem:[#allocation2 + $0xc9] sm:$0xff]
  %v2460 = vld [vmem:[#allocation2 + $0xd9] sm:$0xff]
  %v2461 = vld [vmem:[#allocation2 + $0xe1] sm:$0xff]
  %v2462 = vld [vmem:[#allocation2 + $0xf1] sm:$0xff]
  %v2463 = vld [vmem:[#allocation2 + $0xf9] sm:$0xff]
  %v2464 = vld [vmem:[#allocation2 + $0x109] sm:$0xff]
  %v2465 = vld [vmem:[#allocation2 + $0x111] sm:$0xff]
  %v2466 = vld [vmem:[#allocation2 + $0x121] sm:$0xff]
  %v2467 = vld [vmem:[#allocation2 + $0x129] sm:$0xff]
  %v2468 = vld [vmem:[#allocation2 + $0x139] sm:$0xff]
  %v2469 = vld [vmem:[#allocation2 + $0x141] sm:$0xff]
  %v2470 = vld [vmem:[#allocation2 + $0x151] sm:$0xff]
  %v2471 = vld [vmem:[#allocation2 + $0x159] sm:$0xff]
  %v2472 = vld [vmem:[#allocation2 + $0x169] sm:$0xff]
  %v2473 = vld [vmem:[#allocation2 + $0x171] sm:$0xff]
  %v2474 = vld [vmem:[#allocation2 + $0x181] sm:$0xff]
  %v2475 = vld [vmem:[#allocation2 + $0x189] sm:$0xff]
  %v2476 = vld [vmem:[#allocation2 + $0x199] sm:$0xff]
  %v2477 = vld [vmem:[#allocation2 + $0x1a1] sm:$0xff]
  %v2478 = vld [vmem:[#allocation2 + $0x1b1] sm:$0xff]
  %v2479 = vld [vmem:[#allocation2 + $0x1b9] sm:$0xff]
  %v2480 = vld [vmem:[#allocation2 + $0x1c9] sm:$0xff]
  %v2481 = vld [vmem:[#allocation2 + $0x1d1] sm:$0xff]
  %v2482 = vld [vmem:[#allocation2 + $0x1e1] sm:$0xff]
  %v2483 = vld [vmem:[#allocation2 + $0x1e9] sm:$0xff]
  %v2484 = vld [vmem:[#allocation2 + $0x1f9] sm:$0xff]
  %v2485 = vld [vmem:[#allocation2 + $0x201] sm:$0xff]
  %v2486 = vld [vmem:[#allocation2 + $0x211] sm:$0xff]
  %v2487 = vld [vmem:[#allocation2 + $0x219] sm:$0xff]
  %v2488 = vld [vmem:[#allocation2 + $0x229] sm:$0xff]
  %v2489 = vld [vmem:[#allocation2 + $0x231] sm:$0xff]
  %v2490 = vld [vmem:[#allocation2 + $0x241] sm:$0xff]
  %v2491 = vld [vmem:[#allocation2 + $0x249] sm:$0xff]
  %v2492 = vld [vmem:[#allocation2 + $0x259] sm:$0xff]
  %v2493 = vld [vmem:[#allocation2 + $0x261] sm:$0xff]
  %v2494 = vld [vmem:[#allocation2 + $0x271] sm:$0xff]
  %v2495 = vld [vmem:[#allocation2 + $0x279] sm:$0xff]
  %v2496 = vld [vmem:[#allocation2 + $0x289] sm:$0xff]
  %v2497 = vld [vmem:[#allocation2 + $0x291] sm:$0xff]
  %v2498 = vld [vmem:[#allocation2 + $0x2a1] sm:$0xff]
  %v2499 = vld [vmem:[#allocation2 + $0x2a9] sm:$0xff]
  %v2500 = vld [vmem:[#allocation2 + $0x2b9] sm:$0xff]
  %v2501 = vld [vmem:[#allocation2 + $0x2c1] sm:$0xff]
  %v2502 = vld [vmem:[#allocation2 + $0x2d1] sm:$0xff]
  %v2503 = vld [vmem:[#allocation2 + $0x2d9] sm:$0xff]
  %v2504 = vld [vmem:[#allocation2 + $0x2e9] sm:$0xff]
  %v2505 = vld [vmem:[#allocation2 + $0x2f1] sm:$0xff]
  %v2506 = vld [vmem:[#allocation2 + $0x301] sm:$0xff]
  %v2507 = vld [vmem:[#allocation2 + $0x309] sm:$0xff]
  %v2508 = vld [vmem:[#allocation2 + $0x319] sm:$0xff]
  %v2509 = vld [vmem:[#allocation2 + $0x321] sm:$0xff]
  %v2510 = vld [vmem:[#allocation2 + $0x331] sm:$0xff]
  %v2511 = vld [vmem:[#allocation2 + $0x339] sm:$0xff]
  %v2512 = vld [vmem:[#allocation2 + $0x349] sm:$0xff]
  %v2513 = vld [vmem:[#allocation2 + $0x351] sm:$0xff]
  %s2514 = scalar_lea.vmem %s3, 128
  %v2515 = vld [vmem:[%s2514] sm:$0xff]
  %v2516 = vld [vmem:[%s2514 + $0x8] sm:$0xff]
  %v2517 = vld [vmem:[%s2514 + $0x10] sm:$0xff]
  %v2518 = vld [vmem:[%s2514 + $0x18] sm:$0xff]
  %v2519 = vld [vmem:[%s2514 + $0x20] sm:$0xff]
  %v2520 = vld [vmem:[%s2514 + $0x28] sm:$0xff]
  %v2521 = vld [vmem:[%s2514 + $0x30] sm:$0xff]
  %v2522 = vld [vmem:[%s2514 + $0x38] sm:$0xff]
  %v2523 = vld [vmem:[%s2514 + $0x40] sm:$0xff]
  %v2524 = vld [vmem:[%s2514 + $0x48] sm:$0xff]
  %v2525 = vld [vmem:[%s2514 + $0x50] sm:$0xff]
  %v2526 = vld [vmem:[%s2514 + $0x58] sm:$0xff]
  %v2527 = vld [vmem:[%s2514 + $0x60] sm:$0xff]
  %v2528 = vld [vmem:[%s2514 + $0x68] sm:$0xff]
  %v2529 = vld [vmem:[%s2514 + $0x70] sm:$0xff]
  %v2530 = vld [vmem:[%s2514 + $0x78] sm:$0xff]
  %2531 = vmatprep.subr.mxu0 0.0
  %2532 = vmatpush1.msra.mxu0 %v2515
  %2533 = vmatprep.subr.mxu0 0.0
  %2534 = vmatpush1.msra.mxu0 %v2516
  %2535 = vmatprep.subr.mxu0 0.0
  %2536 = vmatpush1.msra.mxu0 %v2517
  %2537 = vmatprep.subr.mxu0 0.0
  %2538 = vmatpush1.msra.mxu0 %v2518
  %2539 = vmatprep.subr.mxu0 0.0
  %2540 = vmatpush1.msra.mxu0 %v2519
  %2541 = vmatprep.subr.mxu0 0.0
  %2542 = vmatpush1.msra.mxu0 %v2520
  %2543 = vmatprep.subr.mxu0 0.0
  %2544 = vmatpush1.msra.mxu0 %v2521
  %2545 = vmatprep.subr.mxu0 0.0
  %2546 = vmatpush1.msra.mxu0 %v2522
  %2547 = vmatprep.subr.mxu0 0.0
  %2548 = vmatpush1.msra.mxu0 %v2523
  %2549 = vmatprep.subr.mxu0 0.0
  %2550 = vmatpush1.msra.mxu0 %v2524
  %2551 = vmatprep.subr.mxu0 0.0
  %2552 = vmatpush1.msra.mxu0 %v2525
  %2553 = vmatprep.subr.mxu0 0.0
  %2554 = vmatpush1.msra.mxu0 %v2526
  %2555 = vmatprep.subr.mxu0 0.0
  %2556 = vmatpush1.msra.mxu0 %v2527
  %2557 = vmatprep.subr.mxu0 0.0
  %2558 = vmatpush1.msra.mxu0 %v2528
  %2559 = vmatprep.subr.mxu0 0.0
  %2560 = vmatpush1.msra.mxu0 %v2529
  %2561 = vmatprep.subr.mxu0 0.0
  %2562 = vmatpush1.msra.mxu0 %v2530
  %2563 = vmatprep.subr.mxu0 0.0
  %2564 = vmatpush1.msra.mxu0 0.0
  %2565 = vmatprep.subr.mxu0 0.0
  %2566 = vmatpush1.msra.mxu0 0.0
  %2567 = vmatprep.subr.mxu0 0.0
  %2568 = vmatpush1.msra.mxu0 0.0
  %2569 = vmatprep.subr.mxu0 0.0
  %2570 = vmatpush1.msra.mxu0 0.0
  %2571 = vmatprep.subr.mxu0 0.0
  %2572 = vmatpush1.msra.mxu0 0.0
  %2573 = vmatprep.subr.mxu0 0.0
  %2574 = vmatpush1.msra.mxu0 0.0
  %2575 = vmatprep.subr.mxu0 0.0
  %2576 = vmatpush1.msra.mxu0 0.0
  %2577 = vmatprep.subr.mxu0 0.0
  %2578 = vmatpush1.msra.mxu0 0.0
  %2579 = vmatprep.subr.mxu0 0.0
  %2580 = vmatpush1.msra.mxu0 0.0
  %2581 = vmatprep.subr.mxu0 0.0
  %2582 = vmatpush1.msra.mxu0 0.0
  %2583 = vmatprep.subr.mxu0 0.0
  %2584 = vmatpush1.msra.mxu0 0.0
  %2585 = vmatprep.subr.mxu0 0.0
  %2586 = vmatpush1.msra.mxu0 0.0
  %2587 = vmatprep.subr.mxu0 0.0
  %2588 = vmatpush1.msra.mxu0 0.0
  %2589 = vmatprep.subr.mxu0 0.0
  %2590 = vmatpush1.msra.mxu0 0.0
  %2591 = vmatprep.subr.mxu0 0.0
  %2592 = vmatpush1.msra.mxu0 0.0
  %2593 = vmatprep.subr.mxu0 0.0
  %2594 = vmatpush1.msra.mxu0 0.0
  %2595 = vmatprep.mubr.f32.mxu0 0.0
  %2596 = vmatmul.mubr.f32.gmra.mrb[0].mxu0 %v2442
  %v2597 = vpop.f32.mrb[0].mxu0
  %v2598 = vadd.f32 0.0, %v2597
  %v2599 = vpop.f32.mrb[0].mxu0
  %2600 = vmatprep.mubr.f32.mxu0 0.0
  %2601 = vmatmul.mubr.f32.gmra.mrb[0].mxu0 %v2443
  %v2602 = vpop.f32.mrb[0].mxu0
  %v2603 = vadd.f32 0.0, %v2602
  %v2604 = vpop.f32.mrb[0].mxu0
  %2605 = vmatprep.mubr.f32.mxu0 0.0
  %2606 = vmatmul.mubr.f32.gmra.mrb[0].mxu0 %v2444
  %v2607 = vpop.f32.mrb[0].mxu0
  %v2608 = vadd.f32 0.0, %v2607
  %v2609 = vpop.f32.mrb[0].mxu0
  %2610 = vmatprep.mubr.f32.mxu0 0.0
  %2611 = vmatmul.mubr.f32.gmra.mrb[0].mxu0 %v2445
  %v2612 = vpop.f32.mrb[0].mxu0
  %v2613 = vadd.f32 0.0, %v2612
  %v2614 = vpop.f32.mrb[0].mxu0
  %2615 = vmatprep.mubr.f32.mxu0 0.0
  %2616 = vmatmul.mubr.f32.gmra.mrb[0].mxu0 %v2446
  %v2617 = vpop.f32.mrb[0].mxu0
  %v2618 = vadd.f32 0.0, %v2617
  %v2619 = vpop.f32.mrb[0].mxu0
  %2620 = vmatprep.mubr.f32.mxu0 0.0
  %2621 = vmatmul.mubr.f32.gmra.mrb[0].mxu0 %v2447
  %v2622 = vpop.f32.mrb[0].mxu0
  %v2623 = vadd.f32 0.0, %v2622
  %v2624 = vpop.f32.mrb[0].mxu0
  %2625 = vmatprep.mubr.f32.mxu0 0.0
  %2626 = vmatmul.mubr.f32.gmra.mrb[0].mxu0 %v2448
  %v2627 = vpop.f32.mrb[0].mxu0
  %v2628 = vadd.f32 0.0, %v2627
  %v2629 = vpop.f32.mrb[0].mxu0
  %2630 = vmatprep.mubr.f32.mxu0 0.0
  %2631 = vmatmul.mubr.f32.gmra.mrb[0].mxu0 %v2449
  %v2632 = vpop.f32.mrb[0].mxu0
  %v2633 = vadd.f32 0.0, %v2632
  %v2634 = vpop.f32.mrb[0].mxu0
  %2635 = vmatprep.mubr.f32.mxu0 0.0
  %2636 = vmatmul.mubr.f32.gmra.mrb[0].mxu0 %v2450
  %v2637 = vpop.f32.mrb[0].mxu0
  %v2638 = vadd.f32 0.0, %v2637
  %v2639 = vpop.f32.mrb[0].mxu0
  %2640 = vmatprep.mubr.f32.mxu0 0.0
  %2641 = vmatmul.mubr.f32.gmra.mrb[0].mxu0 %v2451
  %v2642 = vpop.f32.mrb[0].mxu0
  %v2643 = vadd.f32 0.0, %v2642
  %v2644 = vpop.f32.mrb[0].mxu0
  %2645 = vmatprep.mubr.f32.mxu0 0.0
  %2646 = vmatmul.mubr.f32.gmra.mrb[0].mxu0 %v2452
  %v2647 = vpop.f32.mrb[0].mxu0
  %v2648 = vadd.f32 0.0, %v2647
  %v2649 = vpop.f32.mrb[0].mxu0
  %2650 = vmatprep.mubr.f32.mxu0 0.0
  %2651 = vmatmul.mubr.f32.gmra.mrb[0].mxu0 %v2453
  %v2652 = vpop.f32.mrb[0].mxu0
  %v2653 = vadd.f32 0.0, %v2652
  %v2654 = vpop.f32.mrb[0].mxu0
  %2655 = vmatprep.mubr.f32.mxu0 0.0
  %2656 = vmatmul.mubr.f32.gmra.mrb[0].mxu0 %v2454
  %v2657 = vpop.f32.mrb[0].mxu0
  %v2658 = vadd.f32 0.0, %v2657
  %v2659 = vpop.f32.mrb[0].mxu0
  %2660 = vmatprep.mubr.f32.mxu0 0.0
  %2661 = vmatmul.mubr.f32.gmra.mrb[0].mxu0 %v2455
  %v2662 = vpop.f32.mrb[0].mxu0
  %v2663 = vadd.f32 0.0, %v2662
  %v2664 = vpop.f32.mrb[0].mxu0
  %2665 = vmatprep.mubr.f32.mxu0 0.0
  %2666 = vmatmul.mubr.f32.gmra.mrb[0].mxu0 %v2456
  %v2667 = vpop.f32.mrb[0].mxu0
  %v2668 = vadd.f32 0.0, %v2667
  %v2669 = vpop.f32.mrb[0].mxu0
  %2670 = vmatprep.mubr.f32.mxu0 0.0
  %2671 = vmatmul.mubr.f32.gmra.mrb[0].mxu0 %v2457
  %v2672 = vpop.f32.mrb[0].mxu0
  %v2673 = vadd.f32 0.0, %v2672
  %v2674 = vpop.f32.mrb[0].mxu0
  %2675 = vmatprep.mubr.f32.mxu0 0.0
  %2676 = vmatmul.mubr.f32.gmra.mrb[0].mxu0 %v2458
  %v2677 = vpop.f32.mrb[0].mxu0
  %v2678 = vadd.f32 0.0, %v2677
  %v2679 = vpop.f32.mrb[0].mxu0
  %2680 = vmatprep.mubr.f32.mxu0 0.0
  %2681 = vmatmul.mubr.f32.gmra.mrb[0].mxu0 %v2459
  %v2682 = vpop.f32.mrb[0].mxu0
  %v2683 = vadd.f32 0.0, %v2682
  %v2684 = vpop.f32.mrb[0].mxu0
  %2685 = vmatprep.mubr.f32.mxu0 0.0
  %2686 = vmatmul.mubr.f32.gmra.mrb[0].mxu0 %v2460
  %v2687 = vpop.f32.mrb[0].mxu0
  %v2688 = vadd.f32 0.0, %v2687
  %v2689 = vpop.f32.mrb[0].mxu0
  %2690 = vmatprep.mubr.f32.mxu0 0.0
  %2691 = vmatmul.mubr.f32.gmra.mrb[0].mxu0 %v2461
  %v2692 = vpop.f32.mrb[0].mxu0
  %v2693 = vadd.f32 0.0, %v2692
  %v2694 = vpop.f32.mrb[0].mxu0
  %2695 = vmatprep.mubr.f32.mxu0 0.0
  %2696 = vmatmul.mubr.f32.gmra.mrb[0].mxu0 %v2462
  %v2697 = vpop.f32.mrb[0].mxu0
  %v2698 = vadd.f32 0.0, %v2697
  %v2699 = vpop.f32.mrb[0].mxu0
  %2700 = vmatprep.mubr.f32.mxu0 0.0
  %2701 = vmatmul.mubr.f32.gmra.mrb[0].mxu0 %v2463
  %v2702 = vpop.f32.mrb[0].mxu0
  %v2703 = vadd.f32 0.0, %v2702
  %v2704 = vpop.f32.mrb[0].mxu0
  %2705 = vmatprep.mubr.f32.mxu0 0.0
  %2706 = vmatmul.mubr.f32.gmra.mrb[0].mxu0 %v2464
  %v2707 = vpop.f32.mrb[0].mxu0
  %v2708 = vadd.f32 0.0, %v2707
  %v2709 = vpop.f32.mrb[0].mxu0
  %2710 = vmatprep.mubr.f32.mxu0 0.0
  %2711 = vmatmul.mubr.f32.gmra.mrb[0].mxu0 %v2465
  %v2712 = vpop.f32.mrb[0].mxu0
  %v2713 = vadd.f32 0.0, %v2712
  %v2714 = vpop.f32.mrb[0].mxu0
  %2715 = vmatprep.mubr.f32.mxu0 0.0
  %2716 = vmatmul.mubr.f32.gmra.mrb[0].mxu0 %v2466
  %v2717 = vpop.f32.mrb[0].mxu0
  %v2718 = vadd.f32 0.0, %v2717
  %v2719 = vpop.f32.mrb[0].mxu0
  %2720 = vmatprep.mubr.f32.mxu0 0.0
  %2721 = vmatmul.mubr.f32.gmra.mrb[0].mxu0 %v2467
  %v2722 = vpop.f32.mrb[0].mxu0
  %v2723 = vadd.f32 0.0, %v2722
  %v2724 = vpop.f32.mrb[0].mxu0
  %2725 = vmatprep.mubr.f32.mxu0 0.0
  %2726 = vmatmul.mubr.f32.gmra.mrb[0].mxu0 %v2468
  %v2727 = vpop.f32.mrb[0].mxu0
  %v2728 = vadd.f32 0.0, %v2727
  %v2729 = vpop.f32.mrb[0].mxu0
  %2730 = vmatprep.mubr.f32.mxu0 0.0
  %2731 = vmatmul.mubr.f32.gmra.mrb[0].mxu0 %v2469
  %v2732 = vpop.f32.mrb[0].mxu0
  %v2733 = vadd.f32 0.0, %v2732
  %v2734 = vpop.f32.mrb[0].mxu0
  %2735 = vmatprep.mubr.f32.mxu0 0.0
  %2736 = vmatmul.mubr.f32.gmra.mrb[0].mxu0 %v2470
  %v2737 = vpop.f32.mrb[0].mxu0
  %v2738 = vadd.f32 0.0, %v2737
  %v2739 = vpop.f32.mrb[0].mxu0
  %2740 = vmatprep.mubr.f32.mxu0 0.0
  %2741 = vmatmul.mubr.f32.gmra.mrb[0].mxu0 %v2471
  %v2742 = vpop.f32.mrb[0].mxu0
  %v2743 = vadd.f32 0.0, %v2742
  %v2744 = vpop.f32.mrb[0].mxu0
  %2745 = vmatprep.mubr.f32.mxu0 0.0
  %2746 = vmatmul.mubr.f32.gmra.mrb[0].mxu0 %v2472
  %v2747 = vpop.f32.mrb[0].mxu0
  %v2748 = vadd.f32 0.0, %v2747
  %v2749 = vpop.f32.mrb[0].mxu0
  %2750 = vmatprep.mubr.f32.mxu0 0.0
  %2751 = vmatmul.mubr.f32.gmra.mrb[0].mxu0 %v2473
  %v2752 = vpop.f32.mrb[0].mxu0
  %v2753 = vadd.f32 0.0, %v2752
  %v2754 = vpop.f32.mrb[0].mxu0
  %2755 = vmatprep.mubr.f32.mxu0 0.0
  %2756 = vmatmul.mubr.f32.gmra.mrb[0].mxu0 %v2478
  %v2757 = vpop.f32.mrb[0].mxu0
  %v2758 = vadd.f32 0.0, %v2757
  %v2759 = vpop.f32.mrb[0].mxu0
  %2760 = vmatprep.mubr.f32.mxu0 0.0
  %2761 = vmatmul.mubr.f32.gmra.mrb[0].mxu0 %v2479
  %v2762 = vpop.f32.mrb[0].mxu0
  %v2763 = vadd.f32 0.0, %v2762
  %v2764 = vpop.f32.mrb[0].mxu0
  %2765 = vmatprep.mubr.f32.mxu0 0.0
  %2766 = vmatmul.mubr.f32.gmra.mrb[0].mxu0 %v2480
  %v2767 = vpop.f32.mrb[0].mxu0
  %v2768 = vadd.f32 0.0, %v2767
  %v2769 = vpop.f32.mrb[0].mxu0
  %2770 = vmatprep.mubr.f32.mxu0 0.0
  %2771 = vmatmul.mubr.f32.gmra.mrb[0].mxu0 %v2481
  %v2772 = vpop.f32.mrb[0].mxu0
  %v2773 = vadd.f32 0.0, %v2772
  %v2774 = vpop.f32.mrb[0].mxu0
  %2775 = vmatprep.mubr.f32.mxu0 0.0
  %2776 = vmatmul.mubr.f32.gmra.mrb[0].mxu0 %v2482
  %v2777 = vpop.f32.mrb[0].mxu0
  %v2778 = vadd.f32 0.0, %v2777
  %v2779 = vpop.f32.mrb[0].mxu0
  %2780 = vmatprep.mubr.f32.mxu0 0.0
  %2781 = vmatmul.mubr.f32.gmra.mrb[0].mxu0 %v2483
  %v2782 = vpop.f32.mrb[0].mxu0
  %v2783 = vadd.f32 0.0, %v2782
  %v2784 = vpop.f32.mrb[0].mxu0
  %2785 = vmatprep.mubr.f32.mxu0 0.0
  %2786 = vmatmul.mubr.f32.gmra.mrb[0].mxu0 %v2484
  %v2787 = vpop.f32.mrb[0].mxu0
  %v2788 = vadd.f32 0.0, %v2787
  %v2789 = vpop.f32.mrb[0].mxu0
  %2790 = vmatprep.mubr.f32.mxu0 0.0
  %2791 = vmatmul.mubr.f32.gmra.mrb[0].mxu0 %v2485
  %v2792 = vpop.f32.mrb[0].mxu0
  %v2793 = vadd.f32 0.0, %v2792
  %v2794 = vpop.f32.mrb[0].mxu0
  %2795 = vmatprep.mubr.f32.mxu0 0.0
  %2796 = vmatmul.mubr.f32.gmra.mrb[0].mxu0 %v2486
  %v2797 = vpop.f32.mrb[0].mxu0
  %v2798 = vadd.f32 0.0, %v2797
  %v2799 = vpop.f32.mrb[0].mxu0
  %2800 = vmatprep.mubr.f32.mxu0 0.0
  %2801 = vmatmul.mubr.f32.gmra.mrb[0].mxu0 %v2487
  %v2802 = vpop.f32.mrb[0].mxu0
  %v2803 = vadd.f32 0.0, %v2802
  %v2804 = vpop.f32.mrb[0].mxu0
  %2805 = vmatprep.mubr.f32.mxu0 0.0
  %2806 = vmatmul.mubr.f32.gmra.mrb[0].mxu0 %v2488
  %v2807 = vpop.f32.mrb[0].mxu0
  %v2808 = vadd.f32 0.0, %v2807
  %v2809 = vpop.f32.mrb[0].mxu0
  %2810 = vmatprep.mubr.f32.mxu0 0.0
  %2811 = vmatmul.mubr.f32.gmra.mrb[0].mxu0 %v2489
  %v2812 = vpop.f32.mrb[0].mxu0
  %v2813 = vadd.f32 0.0, %v2812
  %v2814 = vpop.f32.mrb[0].mxu0
  %2815 = vmatprep.mubr.f32.mxu0 0.0
  %2816 = vmatmul.mubr.f32.gmra.mrb[0].mxu0 %v2490
  %v2817 = vpop.f32.mrb[0].mxu0
  %v2818 = vadd.f32 0.0, %v2817
  %v2819 = vpop.f32.mrb[0].mxu0
  %2820 = vmatprep.mubr.f32.mxu0 0.0
  %2821 = vmatmul.mubr.f32.gmra.mrb[0].mxu0 %v2491
  %v2822 = vpop.f32.mrb[0].mxu0
  %v2823 = vadd.f32 0.0, %v2822
  %v2824 = vpop.f32.mrb[0].mxu0
  %2825 = vmatprep.mubr.f32.mxu0 0.0
  %2826 = vmatmul.mubr.f32.gmra.mrb[0].mxu0 %v2492
  %v2827 = vpop.f32.mrb[0].mxu0
  %v2828 = vadd.f32 0.0, %v2827
  %v2829 = vpop.f32.mrb[0].mxu0
  %2830 = vmatprep.mubr.f32.mxu0 0.0
  %2831 = vmatmul.mubr.f32.gmra.mrb[0].mxu0 %v2493
  %v2832 = vpop.f32.mrb[0].mxu0
  %v2833 = vadd.f32 0.0, %v2832
  %v2834 = vpop.f32.mrb[0].mxu0
  %2835 = vmatprep.mubr.f32.mxu0 0.0
  %2836 = vmatmul.mubr.f32.gmra.mrb[0].mxu0 %v2494
  %v2837 = vpop.f32.mrb[0].mxu0
  %v2838 = vadd.f32 0.0, %v2837
  %v2839 = vpop.f32.mrb[0].mxu0
  %2840 = vmatprep.mubr.f32.mxu0 0.0
  %2841 = vmatmul.mubr.f32.gmra.mrb[0].mxu0 %v2495
  %v2842 = vpop.f32.mrb[0].mxu0
  %v2843 = vadd.f32 0.0, %v2842
  %v2844 = vpop.f32.mrb[0].mxu0
  %2845 = vmatprep.mubr.f32.mxu0 0.0
  %2846 = vmatmul.mubr.f32.gmra.mrb[0].mxu0 %v2496
  %v2847 = vpop.f32.mrb[0].mxu0
  %v2848 = vadd.f32 0.0, %v2847
  %v2849 = vpop.f32.mrb[0].mxu0
  %2850 = vmatprep.mubr.f32.mxu0 0.0
  %2851 = vmatmul.mubr.f32.gmra.mrb[0].mxu0 %v2497
  %v2852 = vpop.f32.mrb[0].mxu0
  %v2853 = vadd.f32 0.0, %v2852
  %v2854 = vpop.f32.mrb[0].mxu0
  %2855 = vmatprep.mubr.f32.mxu0 0.0
  %2856 = vmatmul.mubr.f32.gmra.mrb[0].mxu0 %v2498
  %v2857 = vpop.f32.mrb[0].mxu0
  %v2858 = vadd.f32 0.0, %v2857
  %v2859 = vpop.f32.mrb[0].mxu0
  %2860 = vmatprep.mubr.f32.mxu0 0.0
  %2861 = vmatmul.mubr.f32.gmra.mrb[0].mxu0 %v2499
  %v2862 = vpop.f32.mrb[0].mxu0
  %v2863 = vadd.f32 0.0, %v2862
  %v2864 = vpop.f32.mrb[0].mxu0
  %2865 = vmatprep.mubr.f32.mxu0 0.0
  %2866 = vmatmul.mubr.f32.gmra.mrb[0].mxu0 %v2500
  %v2867 = vpop.f32.mrb[0].mxu0
  %v2868 = vadd.f32 0.0, %v2867
  %v2869 = vpop.f32.mrb[0].mxu0
  %2870 = vmatprep.mubr.f32.mxu0 0.0
  %2871 = vmatmul.mubr.f32.gmra.mrb[0].mxu0 %v2501
  %v2872 = vpop.f32.mrb[0].mxu0
  %v2873 = vadd.f32 0.0, %v2872
  %v2874 = vpop.f32.mrb[0].mxu0
  %2875 = vmatprep.mubr.f32.mxu0 0.0
  %2876 = vmatmul.mubr.f32.gmra.mrb[0].mxu0 %v2502
  %v2877 = vpop.f32.mrb[0].mxu0
  %v2878 = vadd.f32 0.0, %v2877
  %v2879 = vpop.f32.mrb[0].mxu0
  %2880 = vmatprep.mubr.f32.mxu0 0.0
  %2881 = vmatmul.mubr.f32.gmra.mrb[0].mxu0 %v2503
  %v2882 = vpop.f32.mrb[0].mxu0
  %v2883 = vadd.f32 0.0, %v2882
  %v2884 = vpop.f32.mrb[0].mxu0
  %2885 = vmatprep.mubr.f32.mxu0 0.0
  %2886 = vmatmul.mubr.f32.gmra.mrb[0].mxu0 %v2504
  %v2887 = vpop.f32.mrb[0].mxu0
  %v2888 = vadd.f32 0.0, %v2887
  %v2889 = vpop.f32.mrb[0].mxu0
  %2890 = vmatprep.mubr.f32.mxu0 0.0
  %2891 = vmatmul.mubr.f32.gmra.mrb[0].mxu0 %v2505
  %v2892 = vpop.f32.mrb[0].mxu0
  %v2893 = vadd.f32 0.0, %v2892
  %v2894 = vpop.f32.mrb[0].mxu0
  %2895 = vmatprep.mubr.f32.mxu0 0.0
  %2896 = vmatmul.mubr.f32.gmra.mrb[0].mxu0 %v2506
  %v2897 = vpop.f32.mrb[0].mxu0
  %v2898 = vadd.f32 0.0, %v2897
  %v2899 = vpop.f32.mrb[0].mxu0
  %2900 = vmatprep.mubr.f32.mxu0 0.0
  %2901 = vmatmul.mubr.f32.gmra.mrb[0].mxu0 %v2507
  %v2902 = vpop.f32.mrb[0].mxu0
  %v2903 = vadd.f32 0.0, %v2902
  %v2904 = vpop.f32.mrb[0].mxu0
  %2905 = vmatprep.mubr.f32.mxu0 0.0
  %2906 = vmatmul.mubr.f32.gmra.mrb[0].mxu0 %v2508
  %v2907 = vpop.f32.mrb[0].mxu0
  %v2908 = vadd.f32 0.0, %v2907
  %v2909 = vpop.f32.mrb[0].mxu0
  %2910 = vmatprep.mubr.f32.mxu0 0.0
  %2911 = vmatmul.mubr.f32.gmra.mrb[0].mxu0 %v2509
  %v2912 = vpop.f32.mrb[0].mxu0
  %v2913 = vadd.f32 0.0, %v2912
  %v2914 = vpop.f32.mrb[0].mxu0
  %2915 = vdwg.mxu0
  %v2916 = vadd.f32 %v2378, %v2598
  %v2917 = vadd.f32 %v2379, %v2603
  %v2918 = vadd.f32 %v2380, %v2608
  %v2919 = vadd.f32 %v2381, %v2613
  %v2920 = vadd.f32 %v2382, %v2618
  %v2921 = vadd.f32 %v2383, %v2623
  %v2922 = vadd.f32 %v2384, %v2628
  %v2923 = vadd.f32 %v2385, %v2633
  %v2924 = vadd.f32 %v2386, %v2638
  %v2925 = vadd.f32 %v2387, %v2643
  %v2926 = vadd.f32 %v2388, %v2648
  %v2927 = vadd.f32 %v2389, %v2653
  %v2928 = vadd.f32 %v2390, %v2658
  %v2929 = vadd.f32 %v2391, %v2663
  %v2930 = vadd.f32 %v2392, %v2668
  %v2931 = vadd.f32 %v2393, %v2673
  %v2932 = vadd.f32 %v2394, %v2678
  %v2933 = vadd.f32 %v2395, %v2683
  %v2934 = vadd.f32 %v2396, %v2688
  %v2935 = vadd.f32 %v2397, %v2693
  %v2936 = vadd.f32 %v2398, %v2698
  %v2937 = vadd.f32 %v2399, %v2703
  %v2938 = vadd.f32 %v2400, %v2708
  %v2939 = vadd.f32 %v2401, %v2713
  %v2940 = vadd.f32 %v2402, %v2718
  %v2941 = vadd.f32 %v2403, %v2723
  %v2942 = vadd.f32 %v2404, %v2728
  %v2943 = vadd.f32 %v2405, %v2733
  %v2944 = vadd.f32 %v2406, %v2738
  %v2945 = vadd.f32 %v2407, %v2743
  %v2946 = vadd.f32 %v2408, %v2748
  %v2947 = vadd.f32 %v2409, %v2753
  %v2948 = vadd.f32 %v2410, %v2758
  %v2949 = vadd.f32 %v2411, %v2763
  %v2950 = vadd.f32 %v2412, %v2768
  %v2951 = vadd.f32 %v2413, %v2773
  %v2952 = vadd.f32 %v2414, %v2778
  %v2953 = vadd.f32 %v2415, %v2783
  %v2954 = vadd.f32 %v2416, %v2788
  %v2955 = vadd.f32 %v2417, %v2793
  %v2956 = vadd.f32 %v2418, %v2798
  %v2957 = vadd.f32 %v2419, %v2803
  %v2958 = vadd.f32 %v2420, %v2808
  %v2959 = vadd.f32 %v2421, %v2813
  %v2960 = vadd.f32 %v2422, %v2818
  %v2961 = vadd.f32 %v2423, %v2823
  %v2962 = vadd.f32 %v2424, %v2828
  %v2963 = vadd.f32 %v2425, %v2833
  %v2964 = vadd.f32 %v2426, %v2838
  %v2965 = vadd.f32 %v2427, %v2843
  %v2966 = vadd.f32 %v2428, %v2848
  %v2967 = vadd.f32 %v2429, %v2853
  %v2968 = vadd.f32 %v2430, %v2858
  %v2969 = vadd.f32 %v2431, %v2863
  %v2970 = vadd.f32 %v2432, %v2868
  %v2971 = vadd.f32 %v2433, %v2873
  %v2972 = vadd.f32 %v2434, %v2878
  %v2973 = vadd.f32 %v2435, %v2883
  %v2974 = vadd.f32 %v2436, %v2888
  %v2975 = vadd.f32 %v2437, %v2893
  %v2976 = vadd.f32 %v2438, %v2898
  %v2977 = vadd.f32 %v2439, %v2903
  %v2978 = vadd.f32 %v2440, %v2908
  %v2979 = vadd.f32 %v2441, %v2913
  %s2980 = scalar_lea.vmem %s3, 512
  %v2981 = vld [vmem:[%s2980] sm:$0xff]
  %v2982 = vld [vmem:[%s2980 + $0x8] sm:$0xff]
  %v2983 = vld [vmem:[%s2980 + $0x10] sm:$0xff]
  %v2984 = vld [vmem:[%s2980 + $0x18] sm:$0xff]
  %v2985 = vld [vmem:[%s2980 + $0x20] sm:$0xff]
  %v2986 = vld [vmem:[%s2980 + $0x28] sm:$0xff]
  %v2987 = vld [vmem:[%s2980 + $0x30] sm:$0xff]
  %v2988 = vld [vmem:[%s2980 + $0x38] sm:$0xff]
  %v2989 = vld [vmem:[%s2980 + $0x40] sm:$0xff]
  %v2990 = vld [vmem:[%s2980 + $0x48] sm:$0xff]
  %v2991 = vld [vmem:[%s2980 + $0x50] sm:$0xff]
  %v2992 = vld [vmem:[%s2980 + $0x58] sm:$0xff]
  %v2993 = vld [vmem:[%s2980 + $0x60] sm:$0xff]
  %v2994 = vld [vmem:[%s2980 + $0x68] sm:$0xff]
  %v2995 = vld [vmem:[%s2980 + $0x70] sm:$0xff]
  %v2996 = vld [vmem:[%s2980 + $0x78] sm:$0xff]
  %2997 = vmatprep.subr.mxu0 0.0
  %2998 = vmatpush1.msra.mxu0 %v2981
  %2999 = vmatprep.subr.mxu0 0.0
  %3000 = vmatpush1.msra.mxu0 %v2982
  %3001 = vmatprep.subr.mxu0 0.0
  %3002 = vmatpush1.msra.mxu0 %v2983
  %3003 = vmatprep.subr.mxu0 0.0
  %3004 = vmatpush1.msra.mxu0 %v2984
  %3005 = vmatprep.subr.mxu0 0.0
  %3006 = vmatpush1.msra.mxu0 %v2985
  %3007 = vmatprep.subr.mxu0 0.0
  %3008 = vmatpush1.msra.mxu0 %v2986
  %3009 = vmatprep.subr.mxu0 0.0
  %3010 = vmatpush1.msra.mxu0 %v2987
  %3011 = vmatprep.subr.mxu0 0.0
  %3012 = vmatpush1.msra.mxu0 %v2988
  %3013 = vmatprep.subr.mxu0 0.0
  %3014 = vmatpush1.msra.mxu0 %v2989
  %3015 = vmatprep.subr.mxu0 0.0
  %3016 = vmatpush1.msra.mxu0 %v2990
  %3017 = vmatprep.subr.mxu0 0.0
  %3018 = vmatpush1.msra.mxu0 %v2991
  %3019 = vmatprep.subr.mxu0 0.0
  %3020 = vmatpush1.msra.mxu0 %v2992
  %3021 = vmatprep.subr.mxu0 0.0
  %3022 = vmatpush1.msra.mxu0 %v2993
  %3023 = vmatprep.subr.mxu0 0.0
  %3024 = vmatpush1.msra.mxu0 %v2994
  %3025 = vmatprep.subr.mxu0 0.0
  %3026 = vmatpush1.msra.mxu0 %v2995
  %3027 = vmatprep.subr.mxu0 0.0
  %3028 = vmatpush1.msra.mxu0 %v2996
  %3029 = vmatprep.subr.mxu0 0.0
  %3030 = vmatpush1.msra.mxu0 0.0
  %3031 = vmatprep.subr.mxu0 0.0
  %3032 = vmatpush1.msra.mxu0 0.0
  %3033 = vmatprep.subr.mxu0 0.0
  %3034 = vmatpush1.msra.mxu0 0.0
  %3035 = vmatprep.subr.mxu0 0.0
  %3036 = vmatpush1.msra.mxu0 0.0
  %3037 = vmatprep.subr.mxu0 0.0
  %3038 = vmatpush1.msra.mxu0 0.0
  %3039 = vmatprep.subr.mxu0 0.0
  %3040 = vmatpush1.msra.mxu0 0.0
  %3041 = vmatprep.subr.mxu0 0.0
  %3042 = vmatpush1.msra.mxu0 0.0
  %3043 = vmatprep.subr.mxu0 0.0
  %3044 = vmatpush1.msra.mxu0 0.0
  %3045 = vmatprep.subr.mxu0 0.0
  %3046 = vmatpush1.msra.mxu0 0.0
  %3047 = vmatprep.subr.mxu0 0.0
  %3048 = vmatpush1.msra.mxu0 0.0
  %3049 = vmatprep.subr.mxu0 0.0
  %3050 = vmatpush1.msra.mxu0 0.0
  %3051 = vmatprep.subr.mxu0 0.0
  %3052 = vmatpush1.msra.mxu0 0.0
  %3053 = vmatprep.subr.mxu0 0.0
  %3054 = vmatpush1.msra.mxu0 0.0
  %3055 = vmatprep.subr.mxu0 0.0
  %3056 = vmatpush1.msra.mxu0 0.0
  %3057 = vmatprep.subr.mxu0 0.0
  %3058 = vmatpush1.msra.mxu0 0.0
  %3059 = vmatprep.subr.mxu0 0.0
  %3060 = vmatpush1.msra.mxu0 0.0
  %3061 = vmatprep.mubr.f32.mxu0 0.0
  %3062 = vmatmul.mubr.f32.gmra.mrb[0].mxu0 %v2444
  %v3063 = vpop.f32.mrb[0].mxu0
  %v3064 = vadd.f32 0.0, %v3063
  %v3065 = vpop.f32.mrb[0].mxu0
  %3066 = vmatprep.mubr.f32.mxu0 0.0
  %3067 = vmatmul.mubr.f32.gmra.mrb[0].mxu0 %v2445
  %v3068 = vpop.f32.mrb[0].mxu0
  %v3069 = vadd.f32 0.0, %v3068
  %v3070 = vpop.f32.mrb[0].mxu0
  %3071 = vmatprep.mubr.f32.mxu0 0.0
  %3072 = vmatmul.mubr.f32.gmra.mrb[0].mxu0 %v2446
  %v3073 = vpop.f32.mrb[0].mxu0
  %v3074 = vadd.f32 0.0, %v3073
  %v3075 = vpop.f32.mrb[0].mxu0
  %3076 = vmatprep.mubr.f32.mxu0 0.0
  %3077 = vmatmul.mubr.f32.gmra.mrb[0].mxu0 %v2447
  %v3078 = vpop.f32.mrb[0].mxu0
  %v3079 = vadd.f32 0.0, %v3078
  %v3080 = vpop.f32.mrb[0].mxu0
  %3081 = vmatprep.mubr.f32.mxu0 0.0
  %3082 = vmatmul.mubr.f32.gmra.mrb[0].mxu0 %v2448
  %v3083 = vpop.f32.mrb[0].mxu0
  %v3084 = vadd.f32 0.0, %v3083
  %v3085 = vpop.f32.mrb[0].mxu0
  %3086 = vmatprep.mubr.f32.mxu0 0.0
  %3087 = vmatmul.mubr.f32.gmra.mrb[0].mxu0 %v2449
  %v3088 = vpop.f32.mrb[0].mxu0
  %v3089 = vadd.f32 0.0, %v3088
  %v3090 = vpop.f32.mrb[0].mxu0
  %3091 = vmatprep.mubr.f32.mxu0 0.0
  %3092 = vmatmul.mubr.f32.gmra.mrb[0].mxu0 %v2450
  %v3093 = vpop.f32.mrb[0].mxu0
  %v3094 = vadd.f32 0.0, %v3093
  %v3095 = vpop.f32.mrb[0].mxu0
  %3096 = vmatprep.mubr.f32.mxu0 0.0
  %3097 = vmatmul.mubr.f32.gmra.mrb[0].mxu0 %v2451
  %v3098 = vpop.f32.mrb[0].mxu0
  %v3099 = vadd.f32 0.0, %v3098
  %v3100 = vpop.f32.mrb[0].mxu0
  %3101 = vmatprep.mubr.f32.mxu0 0.0
  %3102 = vmatmul.mubr.f32.gmra.mrb[0].mxu0 %v2452
  %v3103 = vpop.f32.mrb[0].mxu0
  %v3104 = vadd.f32 0.0, %v3103
  %v3105 = vpop.f32.mrb[0].mxu0
  %3106 = vmatprep.mubr.f32.mxu0 0.0
  %3107 = vmatmul.mubr.f32.gmra.mrb[0].mxu0 %v2453
  %v3108 = vpop.f32.mrb[0].mxu0
  %v3109 = vadd.f32 0.0, %v3108
  %v3110 = vpop.f32.mrb[0].mxu0
  %3111 = vmatprep.mubr.f32.mxu0 0.0
  %3112 = vmatmul.mubr.f32.gmra.mrb[0].mxu0 %v2454
  %v3113 = vpop.f32.mrb[0].mxu0
  %v3114 = vadd.f32 0.0, %v3113
  %v3115 = vpop.f32.mrb[0].mxu0
  %3116 = vmatprep.mubr.f32.mxu0 0.0
  %3117 = vmatmul.mubr.f32.gmra.mrb[0].mxu0 %v2455
  %v3118 = vpop.f32.mrb[0].mxu0
  %v3119 = vadd.f32 0.0, %v3118
  %v3120 = vpop.f32.mrb[0].mxu0
  %3121 = vmatprep.mubr.f32.mxu0 0.0
  %3122 = vmatmul.mubr.f32.gmra.mrb[0].mxu0 %v2456
  %v3123 = vpop.f32.mrb[0].mxu0
  %v3124 = vadd.f32 0.0, %v3123
  %v3125 = vpop.f32.mrb[0].mxu0
  %3126 = vmatprep.mubr.f32.mxu0 0.0
  %3127 = vmatmul.mubr.f32.gmra.mrb[0].mxu0 %v2457
  %v3128 = vpop.f32.mrb[0].mxu0
  %v3129 = vadd.f32 0.0, %v3128
  %v3130 = vpop.f32.mrb[0].mxu0
  %3131 = vmatprep.mubr.f32.mxu0 0.0
  %3132 = vmatmul.mubr.f32.gmra.mrb[0].mxu0 %v2458
  %v3133 = vpop.f32.mrb[0].mxu0
  %v3134 = vadd.f32 0.0, %v3133
  %v3135 = vpop.f32.mrb[0].mxu0
  %3136 = vmatprep.mubr.f32.mxu0 0.0
  %3137 = vmatmul.mubr.f32.gmra.mrb[0].mxu0 %v2459
  %v3138 = vpop.f32.mrb[0].mxu0
  %v3139 = vadd.f32 0.0, %v3138
  %v3140 = vpop.f32.mrb[0].mxu0
  %3141 = vmatprep.mubr.f32.mxu0 0.0
  %3142 = vmatmul.mubr.f32.gmra.mrb[0].mxu0 %v2460
  %v3143 = vpop.f32.mrb[0].mxu0
  %v3144 = vadd.f32 0.0, %v3143
  %v3145 = vpop.f32.mrb[0].mxu0
  %3146 = vmatprep.mubr.f32.mxu0 0.0
  %3147 = vmatmul.mubr.f32.gmra.mrb[0].mxu0 %v2461
  %v3148 = vpop.f32.mrb[0].mxu0
  %v3149 = vadd.f32 0.0, %v3148
  %v3150 = vpop.f32.mrb[0].mxu0
  %3151 = vmatprep.mubr.f32.mxu0 0.0
  %3152 = vmatmul.mubr.f32.gmra.mrb[0].mxu0 %v2462
  %v3153 = vpop.f32.mrb[0].mxu0
  %v3154 = vadd.f32 0.0, %v3153
  %v3155 = vpop.f32.mrb[0].mxu0
  %3156 = vmatprep.mubr.f32.mxu0 0.0
  %3157 = vmatmul.mubr.f32.gmra.mrb[0].mxu0 %v2463
  %v3158 = vpop.f32.mrb[0].mxu0
  %v3159 = vadd.f32 0.0, %v3158
  %v3160 = vpop.f32.mrb[0].mxu0
  %3161 = vmatprep.mubr.f32.mxu0 0.0
  %3162 = vmatmul.mubr.f32.gmra.mrb[0].mxu0 %v2464
  %v3163 = vpop.f32.mrb[0].mxu0
  %v3164 = vadd.f32 0.0, %v3163
  %v3165 = vpop.f32.mrb[0].mxu0
  %3166 = vmatprep.mubr.f32.mxu0 0.0
  %3167 = vmatmul.mubr.f32.gmra.mrb[0].mxu0 %v2465
  %v3168 = vpop.f32.mrb[0].mxu0
  %v3169 = vadd.f32 0.0, %v3168
  %v3170 = vpop.f32.mrb[0].mxu0
  %3171 = vmatprep.mubr.f32.mxu0 0.0
  %3172 = vmatmul.mubr.f32.gmra.mrb[0].mxu0 %v2466
  %v3173 = vpop.f32.mrb[0].mxu0
  %v3174 = vadd.f32 0.0, %v3173
  %v3175 = vpop.f32.mrb[0].mxu0
  %3176 = vmatprep.mubr.f32.mxu0 0.0
  %3177 = vmatmul.mubr.f32.gmra.mrb[0].mxu0 %v2467
  %v3178 = vpop.f32.mrb[0].mxu0
  %v3179 = vadd.f32 0.0, %v3178
  %v3180 = vpop.f32.mrb[0].mxu0
  %3181 = vmatprep.mubr.f32.mxu0 0.0
  %3182 = vmatmul.mubr.f32.gmra.mrb[0].mxu0 %v2468
  %v3183 = vpop.f32.mrb[0].mxu0
  %v3184 = vadd.f32 0.0, %v3183
  %v3185 = vpop.f32.mrb[0].mxu0
  %3186 = vmatprep.mubr.f32.mxu0 0.0
  %3187 = vmatmul.mubr.f32.gmra.mrb[0].mxu0 %v2469
  %v3188 = vpop.f32.mrb[0].mxu0
  %v3189 = vadd.f32 0.0, %v3188
  %v3190 = vpop.f32.mrb[0].mxu0
  %3191 = vmatprep.mubr.f32.mxu0 0.0
  %3192 = vmatmul.mubr.f32.gmra.mrb[0].mxu0 %v2470
  %v3193 = vpop.f32.mrb[0].mxu0
  %v3194 = vadd.f32 0.0, %v3193
  %v3195 = vpop.f32.mrb[0].mxu0
  %3196 = vmatprep.mubr.f32.mxu0 0.0
  %3197 = vmatmul.mubr.f32.gmra.mrb[0].mxu0 %v2471
  %v3198 = vpop.f32.mrb[0].mxu0
  %v3199 = vadd.f32 0.0, %v3198
  %v3200 = vpop.f32.mrb[0].mxu0
  %3201 = vmatprep.mubr.f32.mxu0 0.0
  %3202 = vmatmul.mubr.f32.gmra.mrb[0].mxu0 %v2472
  %v3203 = vpop.f32.mrb[0].mxu0
  %v3204 = vadd.f32 0.0, %v3203
  %v3205 = vpop.f32.mrb[0].mxu0
  %3206 = vmatprep.mubr.f32.mxu0 0.0
  %3207 = vmatmul.mubr.f32.gmra.mrb[0].mxu0 %v2473
  %v3208 = vpop.f32.mrb[0].mxu0
  %v3209 = vadd.f32 0.0, %v3208
  %v3210 = vpop.f32.mrb[0].mxu0
  %3211 = vmatprep.mubr.f32.mxu0 0.0
  %3212 = vmatmul.mubr.f32.gmra.mrb[0].mxu0 %v2474
  %v3213 = vpop.f32.mrb[0].mxu0
  %v3214 = vadd.f32 0.0, %v3213
  %v3215 = vpop.f32.mrb[0].mxu0
  %3216 = vmatprep.mubr.f32.mxu0 0.0
  %3217 = vmatmul.mubr.f32.gmra.mrb[0].mxu0 %v2475
  %v3218 = vpop.f32.mrb[0].mxu0
  %v3219 = vadd.f32 0.0, %v3218
  %v3220 = vpop.f32.mrb[0].mxu0
  %3221 = vmatprep.mubr.f32.mxu0 0.0
  %3222 = vmatmul.mubr.f32.gmra.mrb[0].mxu0 %v2480
  %v3223 = vpop.f32.mrb[0].mxu0
  %v3224 = vadd.f32 0.0, %v3223
  %v3225 = vpop.f32.mrb[0].mxu0
  %3226 = vmatprep.mubr.f32.mxu0 0.0
  %3227 = vmatmul.mubr.f32.gmra.mrb[0].mxu0 %v2481
  %v3228 = vpop.f32.mrb[0].mxu0
  %v3229 = vadd.f32 0.0, %v3228
  %v3230 = vpop.f32.mrb[0].mxu0
  %3231 = vmatprep.mubr.f32.mxu0 0.0
  %3232 = vmatmul.mubr.f32.gmra.mrb[0].mxu0 %v2482
  %v3233 = vpop.f32.mrb[0].mxu0
  %v3234 = vadd.f32 0.0, %v3233
  %v3235 = vpop.f32.mrb[0].mxu0
  %3236 = vmatprep.mubr.f32.mxu0 0.0
  %3237 = vmatmul.mubr.f32.gmra.mrb[0].mxu0 %v2483
  %v3238 = vpop.f32.mrb[0].mxu0
  %v3239 = vadd.f32 0.0, %v3238
  %v3240 = vpop.f32.mrb[0].mxu0
  %3241 = vmatprep.mubr.f32.mxu0 0.0
  %3242 = vmatmul.mubr.f32.gmra.mrb[0].mxu0 %v2484
  %v3243 = vpop.f32.mrb[0].mxu0
  %v3244 = vadd.f32 0.0, %v3243
  %v3245 = vpop.f32.mrb[0].mxu0
  %3246 = vmatprep.mubr.f32.mxu0 0.0
  %3247 = vmatmul.mubr.f32.gmra.mrb[0].mxu0 %v2485
  %v3248 = vpop.f32.mrb[0].mxu0
  %v3249 = vadd.f32 0.0, %v3248
  %v3250 = vpop.f32.mrb[0].mxu0
  %3251 = vmatprep.mubr.f32.mxu0 0.0
  %3252 = vmatmul.mubr.f32.gmra.mrb[0].mxu0 %v2486
  %v3253 = vpop.f32.mrb[0].mxu0
  %v3254 = vadd.f32 0.0, %v3253
  %v3255 = vpop.f32.mrb[0].mxu0
  %3256 = vmatprep.mubr.f32.mxu0 0.0
  %3257 = vmatmul.mubr.f32.gmra.mrb[0].mxu0 %v2487
  %v3258 = vpop.f32.mrb[0].mxu0
  %v3259 = vadd.f32 0.0, %v3258
  %v3260 = vpop.f32.mrb[0].mxu0
  %3261 = vmatprep.mubr.f32.mxu0 0.0
  %3262 = vmatmul.mubr.f32.gmra.mrb[0].mxu0 %v2488
  %v3263 = vpop.f32.mrb[0].mxu0
  %v3264 = vadd.f32 0.0, %v3263
  %v3265 = vpop.f32.mrb[0].mxu0
  %3266 = vmatprep.mubr.f32.mxu0 0.0
  %3267 = vmatmul.mubr.f32.gmra.mrb[0].mxu0 %v2489
  %v3268 = vpop.f32.mrb[0].mxu0
  %v3269 = vadd.f32 0.0, %v3268
  %v3270 = vpop.f32.mrb[0].mxu0
  %3271 = vmatprep.mubr.f32.mxu0 0.0
  %3272 = vmatmul.mubr.f32.gmra.mrb[0].mxu0 %v2490
  %v3273 = vpop.f32.mrb[0].mxu0
  %v3274 = vadd.f32 0.0, %v3273
  %v3275 = vpop.f32.mrb[0].mxu0
  %3276 = vmatprep.mubr.f32.mxu0 0.0
  %3277 = vmatmul.mubr.f32.gmra.mrb[0].mxu0 %v2491
  %v3278 = vpop.f32.mrb[0].mxu0
  %v3279 = vadd.f32 0.0, %v3278
  %v3280 = vpop.f32.mrb[0].mxu0
  %3281 = vmatprep.mubr.f32.mxu0 0.0
  %3282 = vmatmul.mubr.f32.gmra.mrb[0].mxu0 %v2492
  %v3283 = vpop.f32.mrb[0].mxu0
  %v3284 = vadd.f32 0.0, %v3283
  %v3285 = vpop.f32.mrb[0].mxu0
  %3286 = vmatprep.mubr.f32.mxu0 0.0
  %3287 = vmatmul.mubr.f32.gmra.mrb[0].mxu0 %v2493
  %v3288 = vpop.f32.mrb[0].mxu0
  %v3289 = vadd.f32 0.0, %v3288
  %v3290 = vpop.f32.mrb[0].mxu0
  %3291 = vmatprep.mubr.f32.mxu0 0.0
  %3292 = vmatmul.mubr.f32.gmra.mrb[0].mxu0 %v2494
  %v3293 = vpop.f32.mrb[0].mxu0
  %v3294 = vadd.f32 0.0, %v3293
  %v3295 = vpop.f32.mrb[0].mxu0
  %3296 = vmatprep.mubr.f32.mxu0 0.0
  %3297 = vmatmul.mubr.f32.gmra.mrb[0].mxu0 %v2495
  %v3298 = vpop.f32.mrb[0].mxu0
  %v3299 = vadd.f32 0.0, %v3298
  %v3300 = vpop.f32.mrb[0].mxu0
  %3301 = vmatprep.mubr.f32.mxu0 0.0
  %3302 = vmatmul.mubr.f32.gmra.mrb[0].mxu0 %v2496
  %v3303 = vpop.f32.mrb[0].mxu0
  %v3304 = vadd.f32 0.0, %v3303
  %v3305 = vpop.f32.mrb[0].mxu0
  %3306 = vmatprep.mubr.f32.mxu0 0.0
  %3307 = vmatmul.mubr.f32.gmra.mrb[0].mxu0 %v2497
  %v3308 = vpop.f32.mrb[0].mxu0
  %v3309 = vadd.f32 0.0, %v3308
  %v3310 = vpop.f32.mrb[0].mxu0
  %3311 = vmatprep.mubr.f32.mxu0 0.0
  %3312 = vmatmul.mubr.f32.gmra.mrb[0].mxu0 %v2498
  %v3313 = vpop.f32.mrb[0].mxu0
  %v3314 = vadd.f32 0.0, %v3313
  %v3315 = vpop.f32.mrb[0].mxu0
  %3316 = vmatprep.mubr.f32.mxu0 0.0
  %3317 = vmatmul.mubr.f32.gmra.mrb[0].mxu0 %v2499
  %v3318 = vpop.f32.mrb[0].mxu0
  %v3319 = vadd.f32 0.0, %v3318
  %v3320 = vpop.f32.mrb[0].mxu0
  %3321 = vmatprep.mubr.f32.mxu0 0.0
  %3322 = vmatmul.mubr.f32.gmra.mrb[0].mxu0 %v2500
  %v3323 = vpop.f32.mrb[0].mxu0
  %v3324 = vadd.f32 0.0, %v3323
  %v3325 = vpop.f32.mrb[0].mxu0
  %3326 = vmatprep.mubr.f32.mxu0 0.0
  %3327 = vmatmul.mubr.f32.gmra.mrb[0].mxu0 %v2501
  %v3328 = vpop.f32.mrb[0].mxu0
  %v3329 = vadd.f32 0.0, %v3328
  %v3330 = vpop.f32.mrb[0].mxu0
  %3331 = vmatprep.mubr.f32.mxu0 0.0
  %3332 = vmatmul.mubr.f32.gmra.mrb[0].mxu0 %v2502
  %v3333 = vpop.f32.mrb[0].mxu0
  %v3334 = vadd.f32 0.0, %v3333
  %v3335 = vpop.f32.mrb[0].mxu0
  %3336 = vmatprep.mubr.f32.mxu0 0.0
  %3337 = vmatmul.mubr.f32.gmra.mrb[0].mxu0 %v2503
  %v3338 = vpop.f32.mrb[0].mxu0
  %v3339 = vadd.f32 0.0, %v3338
  %v3340 = vpop.f32.mrb[0].mxu0
  %3341 = vmatprep.mubr.f32.mxu0 0.0
  %3342 = vmatmul.mubr.f32.gmra.mrb[0].mxu0 %v2504
  %v3343 = vpop.f32.mrb[0].mxu0
  %v3344 = vadd.f32 0.0, %v3343
  %v3345 = vpop.f32.mrb[0].mxu0
  %3346 = vmatprep.mubr.f32.mxu0 0.0
  %3347 = vmatmul.mubr.f32.gmra.mrb[0].mxu0 %v2505
  %v3348 = vpop.f32.mrb[0].mxu0
  %v3349 = vadd.f32 0.0, %v3348
  %v3350 = vpop.f32.mrb[0].mxu0
  %3351 = vmatprep.mubr.f32.mxu0 0.0
  %3352 = vmatmul.mubr.f32.gmra.mrb[0].mxu0 %v2506
  %v3353 = vpop.f32.mrb[0].mxu0
  %v3354 = vadd.f32 0.0, %v3353
  %v3355 = vpop.f32.mrb[0].mxu0
  %3356 = vmatprep.mubr.f32.mxu0 0.0
  %3357 = vmatmul.mubr.f32.gmra.mrb[0].mxu0 %v2507
  %v3358 = vpop.f32.mrb[0].mxu0
  %v3359 = vadd.f32 0.0, %v3358
  %v3360 = vpop.f32.mrb[0].mxu0
  %3361 = vmatprep.mubr.f32.mxu0 0.0
  %3362 = vmatmul.mubr.f32.gmra.mrb[0].mxu0 %v2508
  %v3363 = vpop.f32.mrb[0].mxu0
  %v3364 = vadd.f32 0.0, %v3363
  %v3365 = vpop.f32.mrb[0].mxu0
  %3366 = vmatprep.mubr.f32.mxu0 0.0
  %3367 = vmatmul.mubr.f32.gmra.mrb[0].mxu0 %v2509
  %v3368 = vpop.f32.mrb[0].mxu0
  %v3369 = vadd.f32 0.0, %v3368
  %v3370 = vpop.f32.mrb[0].mxu0
  %3371 = vmatprep.mubr.f32.mxu0 0.0
  %3372 = vmatmul.mubr.f32.gmra.mrb[0].mxu0 %v2510
  %v3373 = vpop.f32.mrb[0].mxu0
  %v3374 = vadd.f32 0.0, %v3373
  %v3375 = vpop.f32.mrb[0].mxu0
  %3376 = vmatprep.mubr.f32.mxu0 0.0
  %3377 = vmatmul.mubr.f32.gmra.mrb[0].mxu0 %v2511
  %v3378 = vpop.f32.mrb[0].mxu0
  %v3379 = vadd.f32 0.0, %v3378
  %v3380 = vpop.f32.mrb[0].mxu0
  %3381 = vdwg.mxu0
  %v3382 = vadd.f32 %v2916, %v3064
  %v3383 = vadd.f32 %v2917, %v3069
  %v3384 = vadd.f32 %v2918, %v3074
  %v3385 = vadd.f32 %v2919, %v3079
  %v3386 = vadd.f32 %v2920, %v3084
  %v3387 = vadd.f32 %v2921, %v3089
  %v3388 = vadd.f32 %v2922, %v3094
  %v3389 = vadd.f32 %v2923, %v3099
  %v3390 = vadd.f32 %v2924, %v3104
  %v3391 = vadd.f32 %v2925, %v3109
  %v3392 = vadd.f32 %v2926, %v3114
  %v3393 = vadd.f32 %v2927, %v3119
  %v3394 = vadd.f32 %v2928, %v3124
  %v3395 = vadd.f32 %v2929, %v3129
  %v3396 = vadd.f32 %v2930, %v3134
  %v3397 = vadd.f32 %v2931, %v3139
  %v3398 = vadd.f32 %v2932, %v3144
  %v3399 = vadd.f32 %v2933, %v3149
  %v3400 = vadd.f32 %v2934, %v3154
  %v3401 = vadd.f32 %v2935, %v3159
  %v3402 = vadd.f32 %v2936, %v3164
  %v3403 = vadd.f32 %v2937, %v3169
  %v3404 = vadd.f32 %v2938, %v3174
  %v3405 = vadd.f32 %v2939, %v3179
  %v3406 = vadd.f32 %v2940, %v3184
  %v3407 = vadd.f32 %v2941, %v3189
  %v3408 = vadd.f32 %v2942, %v3194
  %v3409 = vadd.f32 %v2943, %v3199
  %v3410 = vadd.f32 %v2944, %v3204
  %v3411 = vadd.f32 %v2945, %v3209
  %v3412 = vadd.f32 %v2946, %v3214
  %v3413 = vadd.f32 %v2947, %v3219
  %v3414 = vadd.f32 %v2948, %v3224
  %v3415 = vadd.f32 %v2949, %v3229
  %v3416 = vadd.f32 %v2950, %v3234
  %v3417 = vadd.f32 %v2951, %v3239
  %v3418 = vadd.f32 %v2952, %v3244
  %v3419 = vadd.f32 %v2953, %v3249
  %v3420 = vadd.f32 %v2954, %v3254
  %v3421 = vadd.f32 %v2955, %v3259
  %v3422 = vadd.f32 %v2956, %v3264
  %v3423 = vadd.f32 %v2957, %v3269
  %v3424 = vadd.f32 %v2958, %v3274
  %v3425 = vadd.f32 %v2959, %v3279
  %v3426 = vadd.f32 %v2960, %v3284
  %v3427 = vadd.f32 %v2961, %v3289
  %v3428 = vadd.f32 %v2962, %v3294
  %v3429 = vadd.f32 %v2963, %v3299
  %v3430 = vadd.f32 %v2964, %v3304
  %v3431 = vadd.f32 %v2965, %v3309
  %v3432 = vadd.f32 %v2966, %v3314
  %v3433 = vadd.f32 %v2967, %v3319
  %v3434 = vadd.f32 %v2968, %v3324
  %v3435 = vadd.f32 %v2969, %v3329
  %v3436 = vadd.f32 %v2970, %v3334
  %v3437 = vadd.f32 %v2971, %v3339
  %v3438 = vadd.f32 %v2972, %v3344
  %v3439 = vadd.f32 %v2973, %v3349
  %v3440 = vadd.f32 %v2974, %v3354
  %v3441 = vadd.f32 %v2975, %v3359
  %v3442 = vadd.f32 %v2976, %v3364
  %v3443 = vadd.f32 %v2977, %v3369
  %v3444 = vadd.f32 %v2978, %v3374
  %v3445 = vadd.f32 %v2979, %v3379
  %s3446 = scalar_lea.vmem %s3, 896
  %v3447 = vld [vmem:[%s3446] sm:$0xff]
  %v3448 = vld [vmem:[%s3446 + $0x8] sm:$0xff]
  %v3449 = vld [vmem:[%s3446 + $0x10] sm:$0xff]
  %v3450 = vld [vmem:[%s3446 + $0x18] sm:$0xff]
  %v3451 = vld [vmem:[%s3446 + $0x20] sm:$0xff]
  %v3452 = vld [vmem:[%s3446 + $0x28] sm:$0xff]
  %v3453 = vld [vmem:[%s3446 + $0x30] sm:$0xff]
  %v3454 = vld [vmem:[%s3446 + $0x38] sm:$0xff]
  %v3455 = vld [vmem:[%s3446 + $0x40] sm:$0xff]
  %v3456 = vld [vmem:[%s3446 + $0x48] sm:$0xff]
  %v3457 = vld [vmem:[%s3446 + $0x50] sm:$0xff]
  %v3458 = vld [vmem:[%s3446 + $0x58] sm:$0xff]
  %v3459 = vld [vmem:[%s3446 + $0x60] sm:$0xff]
  %v3460 = vld [vmem:[%s3446 + $0x68] sm:$0xff]
  %v3461 = vld [vmem:[%s3446 + $0x70] sm:$0xff]
  %v3462 = vld [vmem:[%s3446 + $0x78] sm:$0xff]
  %3463 = vmatprep.subr.mxu0 0.0
  %3464 = vmatpush1.msra.mxu0 %v3447
  %3465 = vmatprep.subr.mxu0 0.0
  %3466 = vmatpush1.msra.mxu0 %v3448
  %3467 = vmatprep.subr.mxu0 0.0
  %3468 = vmatpush1.msra.mxu0 %v3449
  %3469 = vmatprep.subr.mxu0 0.0
  %3470 = vmatpush1.msra.mxu0 %v3450
  %3471 = vmatprep.subr.mxu0 0.0
  %3472 = vmatpush1.msra.mxu0 %v3451
  %3473 = vmatprep.subr.mxu0 0.0
  %3474 = vmatpush1.msra.mxu0 %v3452
  %3475 = vmatprep.subr.mxu0 0.0
  %3476 = vmatpush1.msra.mxu0 %v3453
  %3477 = vmatprep.subr.mxu0 0.0
  %3478 = vmatpush1.msra.mxu0 %v3454
  %3479 = vmatprep.subr.mxu0 0.0
  %3480 = vmatpush1.msra.mxu0 %v3455
  %3481 = vmatprep.subr.mxu0 0.0
  %3482 = vmatpush1.msra.mxu0 %v3456
  %3483 = vmatprep.subr.mxu0 0.0
  %3484 = vmatpush1.msra.mxu0 %v3457
  %3485 = vmatprep.subr.mxu0 0.0
  %3486 = vmatpush1.msra.mxu0 %v3458
  %3487 = vmatprep.subr.mxu0 0.0
  %3488 = vmatpush1.msra.mxu0 %v3459
  %3489 = vmatprep.subr.mxu0 0.0
  %3490 = vmatpush1.msra.mxu0 %v3460
  %3491 = vmatprep.subr.mxu0 0.0
  %3492 = vmatpush1.msra.mxu0 %v3461
  %3493 = vmatprep.subr.mxu0 0.0
  %3494 = vmatpush1.msra.mxu0 %v3462
  %3495 = vmatprep.subr.mxu0 0.0
  %3496 = vmatpush1.msra.mxu0 0.0
  %3497 = vmatprep.subr.mxu0 0.0
  %3498 = vmatpush1.msra.mxu0 0.0
  %3499 = vmatprep.subr.mxu0 0.0
  %3500 = vmatpush1.msra.mxu0 0.0
  %3501 = vmatprep.subr.mxu0 0.0
  %3502 = vmatpush1.msra.mxu0 0.0
  %3503 = vmatprep.subr.mxu0 0.0
  %3504 = vmatpush1.msra.mxu0 0.0
  %3505 = vmatprep.subr.mxu0 0.0
  %3506 = vmatpush1.msra.mxu0 0.0
  %3507 = vmatprep.subr.mxu0 0.0
  %3508 = vmatpush1.msra.mxu0 0.0
  %3509 = vmatprep.subr.mxu0 0.0
  %3510 = vmatpush1.msra.mxu0 0.0
  %3511 = vmatprep.subr.mxu0 0.0
  %3512 = vmatpush1.msra.mxu0 0.0
  %3513 = vmatprep.subr.mxu0 0.0
  %3514 = vmatpush1.msra.mxu0 0.0
  %3515 = vmatprep.subr.mxu0 0.0
  %3516 = vmatpush1.msra.mxu0 0.0
  %3517 = vmatprep.subr.mxu0 0.0
  %3518 = vmatpush1.msra.mxu0 0.0
  %3519 = vmatprep.subr.mxu0 0.0
  %3520 = vmatpush1.msra.mxu0 0.0
  %3521 = vmatprep.subr.mxu0 0.0
  %3522 = vmatpush1.msra.mxu0 0.0
  %3523 = vmatprep.subr.mxu0 0.0
  %3524 = vmatpush1.msra.mxu0 0.0
  %3525 = vmatprep.subr.mxu0 0.0
  %3526 = vmatpush1.msra.mxu0 0.0
  %3527 = vmatprep.mubr.f32.mxu0 0.0
  %3528 = vmatmul.mubr.f32.gmra.mrb[0].mxu0 %v2446
  %v3529 = vpop.f32.mrb[0].mxu0
  %v3530 = vadd.f32 0.0, %v3529
  %v3531 = vpop.f32.mrb[0].mxu0
  %3532 = vmatprep.mubr.f32.mxu0 0.0
  %3533 = vmatmul.mubr.f32.gmra.mrb[0].mxu0 %v2447
  %v3534 = vpop.f32.mrb[0].mxu0
  %v3535 = vadd.f32 0.0, %v3534
  %v3536 = vpop.f32.mrb[0].mxu0
  %3537 = vmatprep.mubr.f32.mxu0 0.0
  %3538 = vmatmul.mubr.f32.gmra.mrb[0].mxu0 %v2448
  %v3539 = vpop.f32.mrb[0].mxu0
  %v3540 = vadd.f32 0.0, %v3539
  %v3541 = vpop.f32.mrb[0].mxu0
  %3542 = vmatprep.mubr.f32.mxu0 0.0
  %3543 = vmatmul.mubr.f32.gmra.mrb[0].mxu0 %v2449
  %v3544 = vpop.f32.mrb[0].mxu0
  %v3545 = vadd.f32 0.0, %v3544
  %v3546 = vpop.f32.mrb[0].mxu0
  %3547 = vmatprep.mubr.f32.mxu0 0.0
  %3548 = vmatmul.mubr.f32.gmra.mrb[0].mxu0 %v2450
  %v3549 = vpop.f32.mrb[0].mxu0
  %v3550 = vadd.f32 0.0, %v3549
  %v3551 = vpop.f32.mrb[0].mxu0
  %3552 = vmatprep.mubr.f32.mxu0 0.0
  %3553 = vmatmul.mubr.f32.gmra.mrb[0].mxu0 %v2451
  %v3554 = vpop.f32.mrb[0].mxu0
  %v3555 = vadd.f32 0.0, %v3554
  %v3556 = vpop.f32.mrb[0].mxu0
  %3557 = vmatprep.mubr.f32.mxu0 0.0
  %3558 = vmatmul.mubr.f32.gmra.mrb[0].mxu0 %v2452
  %v3559 = vpop.f32.mrb[0].mxu0
  %v3560 = vadd.f32 0.0, %v3559
  %v3561 = vpop.f32.mrb[0].mxu0
  %3562 = vmatprep.mubr.f32.mxu0 0.0
  %3563 = vmatmul.mubr.f32.gmra.mrb[0].mxu0 %v2453
  %v3564 = vpop.f32.mrb[0].mxu0
  %v3565 = vadd.f32 0.0, %v3564
  %v3566 = vpop.f32.mrb[0].mxu0
  %3567 = vmatprep.mubr.f32.mxu0 0.0
  %3568 = vmatmul.mubr.f32.gmra.mrb[0].mxu0 %v2454
  %v3569 = vpop.f32.mrb[0].mxu0
  %v3570 = vadd.f32 0.0, %v3569
  %v3571 = vpop.f32.mrb[0].mxu0
  %3572 = vmatprep.mubr.f32.mxu0 0.0
  %3573 = vmatmul.mubr.f32.gmra.mrb[0].mxu0 %v2455
  %v3574 = vpop.f32.mrb[0].mxu0
  %v3575 = vadd.f32 0.0, %v3574
  %v3576 = vpop.f32.mrb[0].mxu0
  %3577 = vmatprep.mubr.f32.mxu0 0.0
  %3578 = vmatmul.mubr.f32.gmra.mrb[0].mxu0 %v2456
  %v3579 = vpop.f32.mrb[0].mxu0
  %v3580 = vadd.f32 0.0, %v3579
  %v3581 = vpop.f32.mrb[0].mxu0
  %3582 = vmatprep.mubr.f32.mxu0 0.0
  %3583 = vmatmul.mubr.f32.gmra.mrb[0].mxu0 %v2457
  %v3584 = vpop.f32.mrb[0].mxu0
  %v3585 = vadd.f32 0.0, %v3584
  %v3586 = vpop.f32.mrb[0].mxu0
  %3587 = vmatprep.mubr.f32.mxu0 0.0
  %3588 = vmatmul.mubr.f32.gmra.mrb[0].mxu0 %v2458
  %v3589 = vpop.f32.mrb[0].mxu0
  %v3590 = vadd.f32 0.0, %v3589
  %v3591 = vpop.f32.mrb[0].mxu0
  %3592 = vmatprep.mubr.f32.mxu0 0.0
  %3593 = vmatmul.mubr.f32.gmra.mrb[0].mxu0 %v2459
  %v3594 = vpop.f32.mrb[0].mxu0
  %v3595 = vadd.f32 0.0, %v3594
  %v3596 = vpop.f32.mrb[0].mxu0
  %3597 = vmatprep.mubr.f32.mxu0 0.0
  %3598 = vmatmul.mubr.f32.gmra.mrb[0].mxu0 %v2460
  %v3599 = vpop.f32.mrb[0].mxu0
  %v3600 = vadd.f32 0.0, %v3599
  %v3601 = vpop.f32.mrb[0].mxu0
  %3602 = vmatprep.mubr.f32.mxu0 0.0
  %3603 = vmatmul.mubr.f32.gmra.mrb[0].mxu0 %v2461
  %v3604 = vpop.f32.mrb[0].mxu0
  %v3605 = vadd.f32 0.0, %v3604
  %v3606 = vpop.f32.mrb[0].mxu0
  %3607 = vmatprep.mubr.f32.mxu0 0.0
  %3608 = vmatmul.mubr.f32.gmra.mrb[0].mxu0 %v2462
  %v3609 = vpop.f32.mrb[0].mxu0
  %v3610 = vadd.f32 0.0, %v3609
  %v3611 = vpop.f32.mrb[0].mxu0
  %3612 = vmatprep.mubr.f32.mxu0 0.0
  %3613 = vmatmul.mubr.f32.gmra.mrb[0].mxu0 %v2463
  %v3614 = vpop.f32.mrb[0].mxu0
  %v3615 = vadd.f32 0.0, %v3614
  %v3616 = vpop.f32.mrb[0].mxu0
  %3617 = vmatprep.mubr.f32.mxu0 0.0
  %3618 = vmatmul.mubr.f32.gmra.mrb[0].mxu0 %v2464
  %v3619 = vpop.f32.mrb[0].mxu0
  %v3620 = vadd.f32 0.0, %v3619
  %v3621 = vpop.f32.mrb[0].mxu0
  %3622 = vmatprep.mubr.f32.mxu0 0.0
  %3623 = vmatmul.mubr.f32.gmra.mrb[0].mxu0 %v2465
  %v3624 = vpop.f32.mrb[0].mxu0
  %v3625 = vadd.f32 0.0, %v3624
  %v3626 = vpop.f32.mrb[0].mxu0
  %3627 = vmatprep.mubr.f32.mxu0 0.0
  %3628 = vmatmul.mubr.f32.gmra.mrb[0].mxu0 %v2466
  %v3629 = vpop.f32.mrb[0].mxu0
  %v3630 = vadd.f32 0.0, %v3629
  %v3631 = vpop.f32.mrb[0].mxu0
  %3632 = vmatprep.mubr.f32.mxu0 0.0
  %3633 = vmatmul.mubr.f32.gmra.mrb[0].mxu0 %v2467
  %v3634 = vpop.f32.mrb[0].mxu0
  %v3635 = vadd.f32 0.0, %v3634
  %v3636 = vpop.f32.mrb[0].mxu0
  %3637 = vmatprep.mubr.f32.mxu0 0.0
  %3638 = vmatmul.mubr.f32.gmra.mrb[0].mxu0 %v2468
  %v3639 = vpop.f32.mrb[0].mxu0
  %v3640 = vadd.f32 0.0, %v3639
  %v3641 = vpop.f32.mrb[0].mxu0
  %3642 = vmatprep.mubr.f32.mxu0 0.0
  %3643 = vmatmul.mubr.f32.gmra.mrb[0].mxu0 %v2469
  %v3644 = vpop.f32.mrb[0].mxu0
  %v3645 = vadd.f32 0.0, %v3644
  %v3646 = vpop.f32.mrb[0].mxu0
  %3647 = vmatprep.mubr.f32.mxu0 0.0
  %3648 = vmatmul.mubr.f32.gmra.mrb[0].mxu0 %v2470
  %v3649 = vpop.f32.mrb[0].mxu0
  %v3650 = vadd.f32 0.0, %v3649
  %v3651 = vpop.f32.mrb[0].mxu0
  %3652 = vmatprep.mubr.f32.mxu0 0.0
  %3653 = vmatmul.mubr.f32.gmra.mrb[0].mxu0 %v2471
  %v3654 = vpop.f32.mrb[0].mxu0
  %v3655 = vadd.f32 0.0, %v3654
  %v3656 = vpop.f32.mrb[0].mxu0
  %3657 = vmatprep.mubr.f32.mxu0 0.0
  %3658 = vmatmul.mubr.f32.gmra.mrb[0].mxu0 %v2472
  %v3659 = vpop.f32.mrb[0].mxu0
  %v3660 = vadd.f32 0.0, %v3659
  %v3661 = vpop.f32.mrb[0].mxu0
  %3662 = vmatprep.mubr.f32.mxu0 0.0
  %3663 = vmatmul.mubr.f32.gmra.mrb[0].mxu0 %v2473
  %v3664 = vpop.f32.mrb[0].mxu0
  %v3665 = vadd.f32 0.0, %v3664
  %v3666 = vpop.f32.mrb[0].mxu0
  %3667 = vmatprep.mubr.f32.mxu0 0.0
  %3668 = vmatmul.mubr.f32.gmra.mrb[0].mxu0 %v2474
  %v3669 = vpop.f32.mrb[0].mxu0
  %v3670 = vadd.f32 0.0, %v3669
  %v3671 = vpop.f32.mrb[0].mxu0
  %3672 = vmatprep.mubr.f32.mxu0 0.0
  %3673 = vmatmul.mubr.f32.gmra.mrb[0].mxu0 %v2475
  %v3674 = vpop.f32.mrb[0].mxu0
  %v3675 = vadd.f32 0.0, %v3674
  %v3676 = vpop.f32.mrb[0].mxu0
  %3677 = vmatprep.mubr.f32.mxu0 0.0
  %3678 = vmatmul.mubr.f32.gmra.mrb[0].mxu0 %v2476
  %v3679 = vpop.f32.mrb[0].mxu0
  %v3680 = vadd.f32 0.0, %v3679
  %v3681 = vpop.f32.mrb[0].mxu0
  %3682 = vmatprep.mubr.f32.mxu0 0.0
  %3683 = vmatmul.mubr.f32.gmra.mrb[0].mxu0 %v2477
  %v3684 = vpop.f32.mrb[0].mxu0
  %v3685 = vadd.f32 0.0, %v3684
  %v3686 = vpop.f32.mrb[0].mxu0
  %3687 = vmatprep.mubr.f32.mxu0 0.0
  %3688 = vmatmul.mubr.f32.gmra.mrb[0].mxu0 %v2482
  %v3689 = vpop.f32.mrb[0].mxu0
  %v3690 = vadd.f32 0.0, %v3689
  %v3691 = vpop.f32.mrb[0].mxu0
  %3692 = vmatprep.mubr.f32.mxu0 0.0
  %3693 = vmatmul.mubr.f32.gmra.mrb[0].mxu0 %v2483
  %v3694 = vpop.f32.mrb[0].mxu0
  %v3695 = vadd.f32 0.0, %v3694
  %v3696 = vpop.f32.mrb[0].mxu0
  %3697 = vmatprep.mubr.f32.mxu0 0.0
  %3698 = vmatmul.mubr.f32.gmra.mrb[0].mxu0 %v2484
  %v3699 = vpop.f32.mrb[0].mxu0
  %v3700 = vadd.f32 0.0, %v3699
  %v3701 = vpop.f32.mrb[0].mxu0
  %3702 = vmatprep.mubr.f32.mxu0 0.0
  %3703 = vmatmul.mubr.f32.gmra.mrb[0].mxu0 %v2485
  %v3704 = vpop.f32.mrb[0].mxu0
  %v3705 = vadd.f32 0.0, %v3704
  %v3706 = vpop.f32.mrb[0].mxu0
  %3707 = vmatprep.mubr.f32.mxu0 0.0
  %3708 = vmatmul.mubr.f32.gmra.mrb[0].mxu0 %v2486
  %v3709 = vpop.f32.mrb[0].mxu0
  %v3710 = vadd.f32 0.0, %v3709
  %v3711 = vpop.f32.mrb[0].mxu0
  %3712 = vmatprep.mubr.f32.mxu0 0.0
  %3713 = vmatmul.mubr.f32.gmra.mrb[0].mxu0 %v2487
  %v3714 = vpop.f32.mrb[0].mxu0
  %v3715 = vadd.f32 0.0, %v3714
  %v3716 = vpop.f32.mrb[0].mxu0
  %3717 = vmatprep.mubr.f32.mxu0 0.0
  %3718 = vmatmul.mubr.f32.gmra.mrb[0].mxu0 %v2488
  %v3719 = vpop.f32.mrb[0].mxu0
  %v3720 = vadd.f32 0.0, %v3719
  %v3721 = vpop.f32.mrb[0].mxu0
  %3722 = vmatprep.mubr.f32.mxu0 0.0
  %3723 = vmatmul.mubr.f32.gmra.mrb[0].mxu0 %v2489
  %v3724 = vpop.f32.mrb[0].mxu0
  %v3725 = vadd.f32 0.0, %v3724
  %v3726 = vpop.f32.mrb[0].mxu0
  %3727 = vmatprep.mubr.f32.mxu0 0.0
  %3728 = vmatmul.mubr.f32.gmra.mrb[0].mxu0 %v2490
  %v3729 = vpop.f32.mrb[0].mxu0
  %v3730 = vadd.f32 0.0, %v3729
  %v3731 = vpop.f32.mrb[0].mxu0
  %3732 = vmatprep.mubr.f32.mxu0 0.0
  %3733 = vmatmul.mubr.f32.gmra.mrb[0].mxu0 %v2491
  %v3734 = vpop.f32.mrb[0].mxu0
  %v3735 = vadd.f32 0.0, %v3734
  %v3736 = vpop.f32.mrb[0].mxu0
  %3737 = vmatprep.mubr.f32.mxu0 0.0
  %3738 = vmatmul.mubr.f32.gmra.mrb[0].mxu0 %v2492
  %v3739 = vpop.f32.mrb[0].mxu0
  %v3740 = vadd.f32 0.0, %v3739
  %v3741 = vpop.f32.mrb[0].mxu0
  %3742 = vmatprep.mubr.f32.mxu0 0.0
  %3743 = vmatmul.mubr.f32.gmra.mrb[0].mxu0 %v2493
  %v3744 = vpop.f32.mrb[0].mxu0
  %v3745 = vadd.f32 0.0, %v3744
  %v3746 = vpop.f32.mrb[0].mxu0
  %3747 = vmatprep.mubr.f32.mxu0 0.0
  %3748 = vmatmul.mubr.f32.gmra.mrb[0].mxu0 %v2494
  %v3749 = vpop.f32.mrb[0].mxu0
  %v3750 = vadd.f32 0.0, %v3749
  %v3751 = vpop.f32.mrb[0].mxu0
  %3752 = vmatprep.mubr.f32.mxu0 0.0
  %3753 = vmatmul.mubr.f32.gmra.mrb[0].mxu0 %v2495
  %v3754 = vpop.f32.mrb[0].mxu0
  %v3755 = vadd.f32 0.0, %v3754
  %v3756 = vpop.f32.mrb[0].mxu0
  %3757 = vmatprep.mubr.f32.mxu0 0.0
  %3758 = vmatmul.mubr.f32.gmra.mrb[0].mxu0 %v2496
  %v3759 = vpop.f32.mrb[0].mxu0
  %v3760 = vadd.f32 0.0, %v3759
  %v3761 = vpop.f32.mrb[0].mxu0
  %3762 = vmatprep.mubr.f32.mxu0 0.0
  %3763 = vmatmul.mubr.f32.gmra.mrb[0].mxu0 %v2497
  %v3764 = vpop.f32.mrb[0].mxu0
  %v3765 = vadd.f32 0.0, %v3764
  %v3766 = vpop.f32.mrb[0].mxu0
  %3767 = vmatprep.mubr.f32.mxu0 0.0
  %3768 = vmatmul.mubr.f32.gmra.mrb[0].mxu0 %v2498
  %v3769 = vpop.f32.mrb[0].mxu0
  %v3770 = vadd.f32 0.0, %v3769
  %v3771 = vpop.f32.mrb[0].mxu0
  %3772 = vmatprep.mubr.f32.mxu0 0.0
  %3773 = vmatmul.mubr.f32.gmra.mrb[0].mxu0 %v2499
  %v3774 = vpop.f32.mrb[0].mxu0
  %v3775 = vadd.f32 0.0, %v3774
  %v3776 = vpop.f32.mrb[0].mxu0
  %3777 = vmatprep.mubr.f32.mxu0 0.0
  %3778 = vmatmul.mubr.f32.gmra.mrb[0].mxu0 %v2500
  %v3779 = vpop.f32.mrb[0].mxu0
  %v3780 = vadd.f32 0.0, %v3779
  %v3781 = vpop.f32.mrb[0].mxu0
  %3782 = vmatprep.mubr.f32.mxu0 0.0
  %3783 = vmatmul.mubr.f32.gmra.mrb[0].mxu0 %v2501
  %v3784 = vpop.f32.mrb[0].mxu0
  %v3785 = vadd.f32 0.0, %v3784
  %v3786 = vpop.f32.mrb[0].mxu0
  %3787 = vmatprep.mubr.f32.mxu0 0.0
  %3788 = vmatmul.mubr.f32.gmra.mrb[0].mxu0 %v2502
  %v3789 = vpop.f32.mrb[0].mxu0
  %v3790 = vadd.f32 0.0, %v3789
  %v3791 = vpop.f32.mrb[0].mxu0
  %3792 = vmatprep.mubr.f32.mxu0 0.0
  %3793 = vmatmul.mubr.f32.gmra.mrb[0].mxu0 %v2503
  %v3794 = vpop.f32.mrb[0].mxu0
  %v3795 = vadd.f32 0.0, %v3794
  %v3796 = vpop.f32.mrb[0].mxu0
  %3797 = vmatprep.mubr.f32.mxu0 0.0
  %3798 = vmatmul.mubr.f32.gmra.mrb[0].mxu0 %v2504
  %v3799 = vpop.f32.mrb[0].mxu0
  %v3800 = vadd.f32 0.0, %v3799
  %v3801 = vpop.f32.mrb[0].mxu0
  %3802 = vmatprep.mubr.f32.mxu0 0.0
  %3803 = vmatmul.mubr.f32.gmra.mrb[0].mxu0 %v2505
  %v3804 = vpop.f32.mrb[0].mxu0
  %v3805 = vadd.f32 0.0, %v3804
  %v3806 = vpop.f32.mrb[0].mxu0
  %3807 = vmatprep.mubr.f32.mxu0 0.0
  %3808 = vmatmul.mubr.f32.gmra.mrb[0].mxu0 %v2506
  %v3809 = vpop.f32.mrb[0].mxu0
  %v3810 = vadd.f32 0.0, %v3809
  %v3811 = vpop.f32.mrb[0].mxu0
  %3812 = vmatprep.mubr.f32.mxu0 0.0
  %3813 = vmatmul.mubr.f32.gmra.mrb[0].mxu0 %v2507
  %v3814 = vpop.f32.mrb[0].mxu0
  %v3815 = vadd.f32 0.0, %v3814
  %v3816 = vpop.f32.mrb[0].mxu0
  %3817 = vmatprep.mubr.f32.mxu0 0.0
  %3818 = vmatmul.mubr.f32.gmra.mrb[0].mxu0 %v2508
  %v3819 = vpop.f32.mrb[0].mxu0
  %v3820 = vadd.f32 0.0, %v3819
  %v3821 = vpop.f32.mrb[0].mxu0
  %3822 = vmatprep.mubr.f32.mxu0 0.0
  %3823 = vmatmul.mubr.f32.gmra.mrb[0].mxu0 %v2509
  %v3824 = vpop.f32.mrb[0].mxu0
  %v3825 = vadd.f32 0.0, %v3824
  %v3826 = vpop.f32.mrb[0].mxu0
  %3827 = vmatprep.mubr.f32.mxu0 0.0
  %3828 = vmatmul.mubr.f32.gmra.mrb[0].mxu0 %v2510
  %v3829 = vpop.f32.mrb[0].mxu0
  %v3830 = vadd.f32 0.0, %v3829
  %v3831 = vpop.f32.mrb[0].mxu0
  %3832 = vmatprep.mubr.f32.mxu0 0.0
  %3833 = vmatmul.mubr.f32.gmra.mrb[0].mxu0 %v2511
  %v3834 = vpop.f32.mrb[0].mxu0
  %v3835 = vadd.f32 0.0, %v3834
  %v3836 = vpop.f32.mrb[0].mxu0
  %3837 = vmatprep.mubr.f32.mxu0 0.0
  %3838 = vmatmul.mubr.f32.gmra.mrb[0].mxu0 %v2512
  %v3839 = vpop.f32.mrb[0].mxu0
  %v3840 = vadd.f32 0.0, %v3839
  %v3841 = vpop.f32.mrb[0].mxu0
  %3842 = vmatprep.mubr.f32.mxu0 0.0
  %3843 = vmatmul.mubr.f32.gmra.mrb[0].mxu0 %v2513
  %v3844 = vpop.f32.mrb[0].mxu0
  %v3845 = vadd.f32 0.0, %v3844
  %v3846 = vpop.f32.mrb[0].mxu0
  %3847 = vdwg.mxu0
  %v3848 = vadd.f32 %v3382, %v3530
  %v3849 = vadd.f32 %v3383, %v3535
  %v3850 = vadd.f32 %v3384, %v3540
  %v3851 = vadd.f32 %v3385, %v3545
  %v3852 = vadd.f32 %v3386, %v3550
  %v3853 = vadd.f32 %v3387, %v3555
  %v3854 = vadd.f32 %v3388, %v3560
  %v3855 = vadd.f32 %v3389, %v3565
  %v3856 = vadd.f32 %v3390, %v3570
  %v3857 = vadd.f32 %v3391, %v3575
  %v3858 = vadd.f32 %v3392, %v3580
  %v3859 = vadd.f32 %v3393, %v3585
  %v3860 = vadd.f32 %v3394, %v3590
  %v3861 = vadd.f32 %v3395, %v3595
  %v3862 = vadd.f32 %v3396, %v3600
  %v3863 = vadd.f32 %v3397, %v3605
  %v3864 = vadd.f32 %v3398, %v3610
  %v3865 = vadd.f32 %v3399, %v3615
  %v3866 = vadd.f32 %v3400, %v3620
  %v3867 = vadd.f32 %v3401, %v3625
  %v3868 = vadd.f32 %v3402, %v3630
  %v3869 = vadd.f32 %v3403, %v3635
  %v3870 = vadd.f32 %v3404, %v3640
  %v3871 = vadd.f32 %v3405, %v3645
  %v3872 = vadd.f32 %v3406, %v3650
  %v3873 = vadd.f32 %v3407, %v3655
  %v3874 = vadd.f32 %v3408, %v3660
  %v3875 = vadd.f32 %v3409, %v3665
  %v3876 = vadd.f32 %v3410, %v3670
  %v3877 = vadd.f32 %v3411, %v3675
  %v3878 = vadd.f32 %v3412, %v3680
  %v3879 = vadd.f32 %v3413, %v3685
  %v3880 = vadd.f32 %v3414, %v3690
  %v3881 = vadd.f32 %v3415, %v3695
  %v3882 = vadd.f32 %v3416, %v3700
  %v3883 = vadd.f32 %v3417, %v3705
  %v3884 = vadd.f32 %v3418, %v3710
  %v3885 = vadd.f32 %v3419, %v3715
  %v3886 = vadd.f32 %v3420, %v3720
  %v3887 = vadd.f32 %v3421, %v3725
  %v3888 = vadd.f32 %v3422, %v3730
  %v3889 = vadd.f32 %v3423, %v3735
  %v3890 = vadd.f32 %v3424, %v3740
  %v3891 = vadd.f32 %v3425, %v3745
  %v3892 = vadd.f32 %v3426, %v3750
  %v3893 = vadd.f32 %v3427, %v3755
  %v3894 = vadd.f32 %v3428, %v3760
  %v3895 = vadd.f32 %v3429, %v3765
  %v3896 = vadd.f32 %v3430, %v3770
  %v3897 = vadd.f32 %v3431, %v3775
  %v3898 = vadd.f32 %v3432, %v3780
  %v3899 = vadd.f32 %v3433, %v3785
  %v3900 = vadd.f32 %v3434, %v3790
  %v3901 = vadd.f32 %v3435, %v3795
  %v3902 = vadd.f32 %v3436, %v3800
  %v3903 = vadd.f32 %v3437, %v3805
  %v3904 = vadd.f32 %v3438, %v3810
  %v3905 = vadd.f32 %v3439, %v3815
  %v3906 = vadd.f32 %v3440, %v3820
  %v3907 = vadd.f32 %v3441, %v3825
  %v3908 = vadd.f32 %v3442, %v3830
  %v3909 = vadd.f32 %v3443, %v3835
  %v3910 = vadd.f32 %v3444, %v3840
  %v3911 = vadd.f32 %v3445, %v3845
  %v3912 = vld [vmem:[#allocation2 + $0x2] sm:$0xff]
  %v3913 = vld [vmem:[#allocation2 + $0xa] sm:$0xff]
  %v3914 = vld [vmem:[#allocation2 + $0x1a] sm:$0xff]
  %v3915 = vld [vmem:[#allocation2 + $0x22] sm:$0xff]
  %v3916 = vld [vmem:[#allocation2 + $0x32] sm:$0xff]
  %v3917 = vld [vmem:[#allocation2 + $0x3a] sm:$0xff]
  %v3918 = vld [vmem:[#allocation2 + $0x4a] sm:$0xff]
  %v3919 = vld [vmem:[#allocation2 + $0x52] sm:$0xff]
  %v3920 = vld [vmem:[#allocation2 + $0x62] sm:$0xff]
  %v3921 = vld [vmem:[#allocation2 + $0x6a] sm:$0xff]
  %v3922 = vld [vmem:[#allocation2 + $0x7a] sm:$0xff]
  %v3923 = vld [vmem:[#allocation2 + $0x82] sm:$0xff]
  %v3924 = vld [vmem:[#allocation2 + $0x92] sm:$0xff]
  %v3925 = vld [vmem:[#allocation2 + $0x9a] sm:$0xff]
  %v3926 = vld [vmem:[#allocation2 + $0xaa] sm:$0xff]
  %v3927 = vld [vmem:[#allocation2 + $0xb2] sm:$0xff]
  %v3928 = vld [vmem:[#allocation2 + $0xc2] sm:$0xff]
  %v3929 = vld [vmem:[#allocation2 + $0xca] sm:$0xff]
  %v3930 = vld [vmem:[#allocation2 + $0xda] sm:$0xff]
  %v3931 = vld [vmem:[#allocation2 + $0xe2] sm:$0xff]
  %v3932 = vld [vmem:[#allocation2 + $0xf2] sm:$0xff]
  %v3933 = vld [vmem:[#allocation2 + $0xfa] sm:$0xff]
  %v3934 = vld [vmem:[#allocation2 + $0x10a] sm:$0xff]
  %v3935 = vld [vmem:[#allocation2 + $0x112] sm:$0xff]
  %v3936 = vld [vmem:[#allocation2 + $0x122] sm:$0xff]
  %v3937 = vld [vmem:[#allocation2 + $0x12a] sm:$0xff]
  %v3938 = vld [vmem:[#allocation2 + $0x13a] sm:$0xff]
  %v3939 = vld [vmem:[#allocation2 + $0x142] sm:$0xff]
  %v3940 = vld [vmem:[#allocation2 + $0x152] sm:$0xff]
  %v3941 = vld [vmem:[#allocation2 + $0x15a] sm:$0xff]
  %v3942 = vld [vmem:[#allocation2 + $0x16a] sm:$0xff]
  %v3943 = vld [vmem:[#allocation2 + $0x172] sm:$0xff]
  %v3944 = vld [vmem:[#allocation2 + $0x182] sm:$0xff]
  %v3945 = vld [vmem:[#allocation2 + $0x18a] sm:$0xff]
  %v3946 = vld [vmem:[#allocation2 + $0x19a] sm:$0xff]
  %v3947 = vld [vmem:[#allocation2 + $0x1a2] sm:$0xff]
  %v3948 = vld [vmem:[#allocation2 + $0x1b2] sm:$0xff]
  %v3949 = vld [vmem:[#allocation2 + $0x1ba] sm:$0xff]
  %v3950 = vld [vmem:[#allocation2 + $0x1ca] sm:$0xff]
  %v3951 = vld [vmem:[#allocation2 + $0x1d2] sm:$0xff]
  %v3952 = vld [vmem:[#allocation2 + $0x1e2] sm:$0xff]
  %v3953 = vld [vmem:[#allocation2 + $0x1ea] sm:$0xff]
  %v3954 = vld [vmem:[#allocation2 + $0x1fa] sm:$0xff]
  %v3955 = vld [vmem:[#allocation2 + $0x202] sm:$0xff]
  %v3956 = vld [vmem:[#allocation2 + $0x212] sm:$0xff]
  %v3957 = vld [vmem:[#allocation2 + $0x21a] sm:$0xff]
  %v3958 = vld [vmem:[#allocation2 + $0x22a] sm:$0xff]
  %v3959 = vld [vmem:[#allocation2 + $0x232] sm:$0xff]
  %v3960 = vld [vmem:[#allocation2 + $0x242] sm:$0xff]
  %v3961 = vld [vmem:[#allocation2 + $0x24a] sm:$0xff]
  %v3962 = vld [vmem:[#allocation2 + $0x25a] sm:$0xff]
  %v3963 = vld [vmem:[#allocation2 + $0x262] sm:$0xff]
  %v3964 = vld [vmem:[#allocation2 + $0x272] sm:$0xff]
  %v3965 = vld [vmem:[#allocation2 + $0x27a] sm:$0xff]
  %v3966 = vld [vmem:[#allocation2 + $0x28a] sm:$0xff]
  %v3967 = vld [vmem:[#allocation2 + $0x292] sm:$0xff]
  %v3968 = vld [vmem:[#allocation2 + $0x2a2] sm:$0xff]
  %v3969 = vld [vmem:[#allocation2 + $0x2aa] sm:$0xff]
  %v3970 = vld [vmem:[#allocation2 + $0x2ba] sm:$0xff]
  %v3971 = vld [vmem:[#allocation2 + $0x2c2] sm:$0xff]
  %v3972 = vld [vmem:[#allocation2 + $0x2d2] sm:$0xff]
  %v3973 = vld [vmem:[#allocation2 + $0x2da] sm:$0xff]
  %v3974 = vld [vmem:[#allocation2 + $0x2ea] sm:$0xff]
  %v3975 = vld [vmem:[#allocation2 + $0x2f2] sm:$0xff]
  %v3976 = vld [vmem:[#allocation2 + $0x302] sm:$0xff]
  %v3977 = vld [vmem:[#allocation2 + $0x30a] sm:$0xff]
  %v3978 = vld [vmem:[#allocation2 + $0x31a] sm:$0xff]
  %v3979 = vld [vmem:[#allocation2 + $0x322] sm:$0xff]
  %v3980 = vld [vmem:[#allocation2 + $0x332] sm:$0xff]
  %v3981 = vld [vmem:[#allocation2 + $0x33a] sm:$0xff]
  %v3982 = vld [vmem:[#allocation2 + $0x34a] sm:$0xff]
  %v3983 = vld [vmem:[#allocation2 + $0x352] sm:$0xff]
  %s3984 = scalar_lea.vmem %s3, 256
  %v3985 = vld [vmem:[%s3984] sm:$0xff]
  %v3986 = vld [vmem:[%s3984 + $0x8] sm:$0xff]
  %v3987 = vld [vmem:[%s3984 + $0x10] sm:$0xff]
  %v3988 = vld [vmem:[%s3984 + $0x18] sm:$0xff]
  %v3989 = vld [vmem:[%s3984 + $0x20] sm:$0xff]
  %v3990 = vld [vmem:[%s3984 + $0x28] sm:$0xff]
  %v3991 = vld [vmem:[%s3984 + $0x30] sm:$0xff]
  %v3992 = vld [vmem:[%s3984 + $0x38] sm:$0xff]
  %v3993 = vld [vmem:[%s3984 + $0x40] sm:$0xff]
  %v3994 = vld [vmem:[%s3984 + $0x48] sm:$0xff]
  %v3995 = vld [vmem:[%s3984 + $0x50] sm:$0xff]
  %v3996 = vld [vmem:[%s3984 + $0x58] sm:$0xff]
  %v3997 = vld [vmem:[%s3984 + $0x60] sm:$0xff]
  %v3998 = vld [vmem:[%s3984 + $0x68] sm:$0xff]
  %v3999 = vld [vmem:[%s3984 + $0x70] sm:$0xff]
  %v4000 = vld [vmem:[%s3984 + $0x78] sm:$0xff]
  %4001 = vmatprep.subr.mxu0 0.0
  %4002 = vmatpush1.msra.mxu0 %v3985
  %4003 = vmatprep.subr.mxu0 0.0
  %4004 = vmatpush1.msra.mxu0 %v3986
  %4005 = vmatprep.subr.mxu0 0.0
  %4006 = vmatpush1.msra.mxu0 %v3987
  %4007 = vmatprep.subr.mxu0 0.0
  %4008 = vmatpush1.msra.mxu0 %v3988
  %4009 = vmatprep.subr.mxu0 0.0
  %4010 = vmatpush1.msra.mxu0 %v3989
  %4011 = vmatprep.subr.mxu0 0.0
  %4012 = vmatpush1.msra.mxu0 %v3990
  %4013 = vmatprep.subr.mxu0 0.0
  %4014 = vmatpush1.msra.mxu0 %v3991
  %4015 = vmatprep.subr.mxu0 0.0
  %4016 = vmatpush1.msra.mxu0 %v3992
  %4017 = vmatprep.subr.mxu0 0.0
  %4018 = vmatpush1.msra.mxu0 %v3993
  %4019 = vmatprep.subr.mxu0 0.0
  %4020 = vmatpush1.msra.mxu0 %v3994
  %4021 = vmatprep.subr.mxu0 0.0
  %4022 = vmatpush1.msra.mxu0 %v3995
  %4023 = vmatprep.subr.mxu0 0.0
  %4024 = vmatpush1.msra.mxu0 %v3996
  %4025 = vmatprep.subr.mxu0 0.0
  %4026 = vmatpush1.msra.mxu0 %v3997
  %4027 = vmatprep.subr.mxu0 0.0
  %4028 = vmatpush1.msra.mxu0 %v3998
  %4029 = vmatprep.subr.mxu0 0.0
  %4030 = vmatpush1.msra.mxu0 %v3999
  %4031 = vmatprep.subr.mxu0 0.0
  %4032 = vmatpush1.msra.mxu0 %v4000
  %4033 = vmatprep.subr.mxu0 0.0
  %4034 = vmatpush1.msra.mxu0 0.0
  %4035 = vmatprep.subr.mxu0 0.0
  %4036 = vmatpush1.msra.mxu0 0.0
  %4037 = vmatprep.subr.mxu0 0.0
  %4038 = vmatpush1.msra.mxu0 0.0
  %4039 = vmatprep.subr.mxu0 0.0
  %4040 = vmatpush1.msra.mxu0 0.0
  %4041 = vmatprep.subr.mxu0 0.0
  %4042 = vmatpush1.msra.mxu0 0.0
  %4043 = vmatprep.subr.mxu0 0.0
  %4044 = vmatpush1.msra.mxu0 0.0
  %4045 = vmatprep.subr.mxu0 0.0
  %4046 = vmatpush1.msra.mxu0 0.0
  %4047 = vmatprep.subr.mxu0 0.0
  %4048 = vmatpush1.msra.mxu0 0.0
  %4049 = vmatprep.subr.mxu0 0.0
  %4050 = vmatpush1.msra.mxu0 0.0
  %4051 = vmatprep.subr.mxu0 0.0
  %4052 = vmatpush1.msra.mxu0 0.0
  %4053 = vmatprep.subr.mxu0 0.0
  %4054 = vmatpush1.msra.mxu0 0.0
  %4055 = vmatprep.subr.mxu0 0.0
  %4056 = vmatpush1.msra.mxu0 0.0
  %4057 = vmatprep.subr.mxu0 0.0
  %4058 = vmatpush1.msra.mxu0 0.0
  %4059 = vmatprep.subr.mxu0 0.0
  %4060 = vmatpush1.msra.mxu0 0.0
  %4061 = vmatprep.subr.mxu0 0.0
  %4062 = vmatpush1.msra.mxu0 0.0
  %4063 = vmatprep.subr.mxu0 0.0
  %4064 = vmatpush1.msra.mxu0 0.0
  %4065 = vmatprep.mubr.f32.mxu0 0.0
  %4066 = vmatmul.mubr.f32.gmra.mrb[0].mxu0 %v3912
  %v4067 = vpop.f32.mrb[0].mxu0
  %v4068 = vadd.f32 0.0, %v4067
  %v4069 = vpop.f32.mrb[0].mxu0
  %4070 = vmatprep.mubr.f32.mxu0 0.0
  %4071 = vmatmul.mubr.f32.gmra.mrb[0].mxu0 %v3913
  %v4072 = vpop.f32.mrb[0].mxu0
  %v4073 = vadd.f32 0.0, %v4072
  %v4074 = vpop.f32.mrb[0].mxu0
  %4075 = vmatprep.mubr.f32.mxu0 0.0
  %4076 = vmatmul.mubr.f32.gmra.mrb[0].mxu0 %v3914
  %v4077 = vpop.f32.mrb[0].mxu0
  %v4078 = vadd.f32 0.0, %v4077
  %v4079 = vpop.f32.mrb[0].mxu0
  %4080 = vmatprep.mubr.f32.mxu0 0.0
  %4081 = vmatmul.mubr.f32.gmra.mrb[0].mxu0 %v3915
  %v4082 = vpop.f32.mrb[0].mxu0
  %v4083 = vadd.f32 0.0, %v4082
  %v4084 = vpop.f32.mrb[0].mxu0
  %4085 = vmatprep.mubr.f32.mxu0 0.0
  %4086 = vmatmul.mubr.f32.gmra.mrb[0].mxu0 %v3916
  %v4087 = vpop.f32.mrb[0].mxu0
  %v4088 = vadd.f32 0.0, %v4087
  %v4089 = vpop.f32.mrb[0].mxu0
  %4090 = vmatprep.mubr.f32.mxu0 0.0
  %4091 = vmatmul.mubr.f32.gmra.mrb[0].mxu0 %v3917
  %v4092 = vpop.f32.mrb[0].mxu0
  %v4093 = vadd.f32 0.0, %v4092
  %v4094 = vpop.f32.mrb[0].mxu0
  %4095 = vmatprep.mubr.f32.mxu0 0.0
  %4096 = vmatmul.mubr.f32.gmra.mrb[0].mxu0 %v3918
  %v4097 = vpop.f32.mrb[0].mxu0
  %v4098 = vadd.f32 0.0, %v4097
  %v4099 = vpop.f32.mrb[0].mxu0
  %4100 = vmatprep.mubr.f32.mxu0 0.0
  %4101 = vmatmul.mubr.f32.gmra.mrb[0].mxu0 %v3919
  %v4102 = vpop.f32.mrb[0].mxu0
  %v4103 = vadd.f32 0.0, %v4102
  %v4104 = vpop.f32.mrb[0].mxu0
  %4105 = vmatprep.mubr.f32.mxu0 0.0
  %4106 = vmatmul.mubr.f32.gmra.mrb[0].mxu0 %v3920
  %v4107 = vpop.f32.mrb[0].mxu0
  %v4108 = vadd.f32 0.0, %v4107
  %v4109 = vpop.f32.mrb[0].mxu0
  %4110 = vmatprep.mubr.f32.mxu0 0.0
  %4111 = vmatmul.mubr.f32.gmra.mrb[0].mxu0 %v3921
  %v4112 = vpop.f32.mrb[0].mxu0
  %v4113 = vadd.f32 0.0, %v4112
  %v4114 = vpop.f32.mrb[0].mxu0
  %4115 = vmatprep.mubr.f32.mxu0 0.0
  %4116 = vmatmul.mubr.f32.gmra.mrb[0].mxu0 %v3922
  %v4117 = vpop.f32.mrb[0].mxu0
  %v4118 = vadd.f32 0.0, %v4117
  %v4119 = vpop.f32.mrb[0].mxu0
  %4120 = vmatprep.mubr.f32.mxu0 0.0
  %4121 = vmatmul.mubr.f32.gmra.mrb[0].mxu0 %v3923
  %v4122 = vpop.f32.mrb[0].mxu0
  %v4123 = vadd.f32 0.0, %v4122
  %v4124 = vpop.f32.mrb[0].mxu0
  %4125 = vmatprep.mubr.f32.mxu0 0.0
  %4126 = vmatmul.mubr.f32.gmra.mrb[0].mxu0 %v3924
  %v4127 = vpop.f32.mrb[0].mxu0
  %v4128 = vadd.f32 0.0, %v4127
  %v4129 = vpop.f32.mrb[0].mxu0
  %4130 = vmatprep.mubr.f32.mxu0 0.0
  %4131 = vmatmul.mubr.f32.gmra.mrb[0].mxu0 %v3925
  %v4132 = vpop.f32.mrb[0].mxu0
  %v4133 = vadd.f32 0.0, %v4132
  %v4134 = vpop.f32.mrb[0].mxu0
  %4135 = vmatprep.mubr.f32.mxu0 0.0
  %4136 = vmatmul.mubr.f32.gmra.mrb[0].mxu0 %v3926
  %v4137 = vpop.f32.mrb[0].mxu0
  %v4138 = vadd.f32 0.0, %v4137
  %v4139 = vpop.f32.mrb[0].mxu0
  %4140 = vmatprep.mubr.f32.mxu0 0.0
  %4141 = vmatmul.mubr.f32.gmra.mrb[0].mxu0 %v3927
  %v4142 = vpop.f32.mrb[0].mxu0
  %v4143 = vadd.f32 0.0, %v4142
  %v4144 = vpop.f32.mrb[0].mxu0
  %4145 = vmatprep.mubr.f32.mxu0 0.0
  %4146 = vmatmul.mubr.f32.gmra.mrb[0].mxu0 %v3928
  %v4147 = vpop.f32.mrb[0].mxu0
  %v4148 = vadd.f32 0.0, %v4147
  %v4149 = vpop.f32.mrb[0].mxu0
  %4150 = vmatprep.mubr.f32.mxu0 0.0
  %4151 = vmatmul.mubr.f32.gmra.mrb[0].mxu0 %v3929
  %v4152 = vpop.f32.mrb[0].mxu0
  %v4153 = vadd.f32 0.0, %v4152
  %v4154 = vpop.f32.mrb[0].mxu0
  %4155 = vmatprep.mubr.f32.mxu0 0.0
  %4156 = vmatmul.mubr.f32.gmra.mrb[0].mxu0 %v3930
  %v4157 = vpop.f32.mrb[0].mxu0
  %v4158 = vadd.f32 0.0, %v4157
  %v4159 = vpop.f32.mrb[0].mxu0
  %4160 = vmatprep.mubr.f32.mxu0 0.0
  %4161 = vmatmul.mubr.f32.gmra.mrb[0].mxu0 %v3931
  %v4162 = vpop.f32.mrb[0].mxu0
  %v4163 = vadd.f32 0.0, %v4162
  %v4164 = vpop.f32.mrb[0].mxu0
  %4165 = vmatprep.mubr.f32.mxu0 0.0
  %4166 = vmatmul.mubr.f32.gmra.mrb[0].mxu0 %v3932
  %v4167 = vpop.f32.mrb[0].mxu0
  %v4168 = vadd.f32 0.0, %v4167
  %v4169 = vpop.f32.mrb[0].mxu0
  %4170 = vmatprep.mubr.f32.mxu0 0.0
  %4171 = vmatmul.mubr.f32.gmra.mrb[0].mxu0 %v3933
  %v4172 = vpop.f32.mrb[0].mxu0
  %v4173 = vadd.f32 0.0, %v4172
  %v4174 = vpop.f32.mrb[0].mxu0
  %4175 = vmatprep.mubr.f32.mxu0 0.0
  %4176 = vmatmul.mubr.f32.gmra.mrb[0].mxu0 %v3934
  %v4177 = vpop.f32.mrb[0].mxu0
  %v4178 = vadd.f32 0.0, %v4177
  %v4179 = vpop.f32.mrb[0].mxu0
  %4180 = vmatprep.mubr.f32.mxu0 0.0
  %4181 = vmatmul.mubr.f32.gmra.mrb[0].mxu0 %v3935
  %v4182 = vpop.f32.mrb[0].mxu0
  %v4183 = vadd.f32 0.0, %v4182
  %v4184 = vpop.f32.mrb[0].mxu0
  %4185 = vmatprep.mubr.f32.mxu0 0.0
  %4186 = vmatmul.mubr.f32.gmra.mrb[0].mxu0 %v3936
  %v4187 = vpop.f32.mrb[0].mxu0
  %v4188 = vadd.f32 0.0, %v4187
  %v4189 = vpop.f32.mrb[0].mxu0
  %4190 = vmatprep.mubr.f32.mxu0 0.0
  %4191 = vmatmul.mubr.f32.gmra.mrb[0].mxu0 %v3937
  %v4192 = vpop.f32.mrb[0].mxu0
  %v4193 = vadd.f32 0.0, %v4192
  %v4194 = vpop.f32.mrb[0].mxu0
  %4195 = vmatprep.mubr.f32.mxu0 0.0
  %4196 = vmatmul.mubr.f32.gmra.mrb[0].mxu0 %v3938
  %v4197 = vpop.f32.mrb[0].mxu0
  %v4198 = vadd.f32 0.0, %v4197
  %v4199 = vpop.f32.mrb[0].mxu0
  %4200 = vmatprep.mubr.f32.mxu0 0.0
  %4201 = vmatmul.mubr.f32.gmra.mrb[0].mxu0 %v3939
  %v4202 = vpop.f32.mrb[0].mxu0
  %v4203 = vadd.f32 0.0, %v4202
  %v4204 = vpop.f32.mrb[0].mxu0
  %4205 = vmatprep.mubr.f32.mxu0 0.0
  %4206 = vmatmul.mubr.f32.gmra.mrb[0].mxu0 %v3940
  %v4207 = vpop.f32.mrb[0].mxu0
  %v4208 = vadd.f32 0.0, %v4207
  %v4209 = vpop.f32.mrb[0].mxu0
  %4210 = vmatprep.mubr.f32.mxu0 0.0
  %4211 = vmatmul.mubr.f32.gmra.mrb[0].mxu0 %v3941
  %v4212 = vpop.f32.mrb[0].mxu0
  %v4213 = vadd.f32 0.0, %v4212
  %v4214 = vpop.f32.mrb[0].mxu0
  %4215 = vmatprep.mubr.f32.mxu0 0.0
  %4216 = vmatmul.mubr.f32.gmra.mrb[0].mxu0 %v3942
  %v4217 = vpop.f32.mrb[0].mxu0
  %v4218 = vadd.f32 0.0, %v4217
  %v4219 = vpop.f32.mrb[0].mxu0
  %4220 = vmatprep.mubr.f32.mxu0 0.0
  %4221 = vmatmul.mubr.f32.gmra.mrb[0].mxu0 %v3943
  %v4222 = vpop.f32.mrb[0].mxu0
  %v4223 = vadd.f32 0.0, %v4222
  %v4224 = vpop.f32.mrb[0].mxu0
  %4225 = vmatprep.mubr.f32.mxu0 0.0
  %4226 = vmatmul.mubr.f32.gmra.mrb[0].mxu0 %v3948
  %v4227 = vpop.f32.mrb[0].mxu0
  %v4228 = vadd.f32 0.0, %v4227
  %v4229 = vpop.f32.mrb[0].mxu0
  %4230 = vmatprep.mubr.f32.mxu0 0.0
  %4231 = vmatmul.mubr.f32.gmra.mrb[0].mxu0 %v3949
  %v4232 = vpop.f32.mrb[0].mxu0
  %v4233 = vadd.f32 0.0, %v4232
  %v4234 = vpop.f32.mrb[0].mxu0
  %4235 = vmatprep.mubr.f32.mxu0 0.0
  %4236 = vmatmul.mubr.f32.gmra.mrb[0].mxu0 %v3950
  %v4237 = vpop.f32.mrb[0].mxu0
  %v4238 = vadd.f32 0.0, %v4237
  %v4239 = vpop.f32.mrb[0].mxu0
  %4240 = vmatprep.mubr.f32.mxu0 0.0
  %4241 = vmatmul.mubr.f32.gmra.mrb[0].mxu0 %v3951
  %v4242 = vpop.f32.mrb[0].mxu0
  %v4243 = vadd.f32 0.0, %v4242
  %v4244 = vpop.f32.mrb[0].mxu0
  %4245 = vmatprep.mubr.f32.mxu0 0.0
  %4246 = vmatmul.mubr.f32.gmra.mrb[0].mxu0 %v3952
  %v4247 = vpop.f32.mrb[0].mxu0
  %v4248 = vadd.f32 0.0, %v4247
  %v4249 = vpop.f32.mrb[0].mxu0
  %4250 = vmatprep.mubr.f32.mxu0 0.0
  %4251 = vmatmul.mubr.f32.gmra.mrb[0].mxu0 %v3953
  %v4252 = vpop.f32.mrb[0].mxu0
  %v4253 = vadd.f32 0.0, %v4252
  %v4254 = vpop.f32.mrb[0].mxu0
  %4255 = vmatprep.mubr.f32.mxu0 0.0
  %4256 = vmatmul.mubr.f32.gmra.mrb[0].mxu0 %v3954
  %v4257 = vpop.f32.mrb[0].mxu0
  %v4258 = vadd.f32 0.0, %v4257
  %v4259 = vpop.f32.mrb[0].mxu0
  %4260 = vmatprep.mubr.f32.mxu0 0.0
  %4261 = vmatmul.mubr.f32.gmra.mrb[0].mxu0 %v3955
  %v4262 = vpop.f32.mrb[0].mxu0
  %v4263 = vadd.f32 0.0, %v4262
  %v4264 = vpop.f32.mrb[0].mxu0
  %4265 = vmatprep.mubr.f32.mxu0 0.0
  %4266 = vmatmul.mubr.f32.gmra.mrb[0].mxu0 %v3956
  %v4267 = vpop.f32.mrb[0].mxu0
  %v4268 = vadd.f32 0.0, %v4267
  %v4269 = vpop.f32.mrb[0].mxu0
  %4270 = vmatprep.mubr.f32.mxu0 0.0
  %4271 = vmatmul.mubr.f32.gmra.mrb[0].mxu0 %v3957
  %v4272 = vpop.f32.mrb[0].mxu0
  %v4273 = vadd.f32 0.0, %v4272
  %v4274 = vpop.f32.mrb[0].mxu0
  %4275 = vmatprep.mubr.f32.mxu0 0.0
  %4276 = vmatmul.mubr.f32.gmra.mrb[0].mxu0 %v3958
  %v4277 = vpop.f32.mrb[0].mxu0
  %v4278 = vadd.f32 0.0, %v4277
  %v4279 = vpop.f32.mrb[0].mxu0
  %4280 = vmatprep.mubr.f32.mxu0 0.0
  %4281 = vmatmul.mubr.f32.gmra.mrb[0].mxu0 %v3959
  %v4282 = vpop.f32.mrb[0].mxu0
  %v4283 = vadd.f32 0.0, %v4282
  %v4284 = vpop.f32.mrb[0].mxu0
  %4285 = vmatprep.mubr.f32.mxu0 0.0
  %4286 = vmatmul.mubr.f32.gmra.mrb[0].mxu0 %v3960
  %v4287 = vpop.f32.mrb[0].mxu0
  %v4288 = vadd.f32 0.0, %v4287
  %v4289 = vpop.f32.mrb[0].mxu0
  %4290 = vmatprep.mubr.f32.mxu0 0.0
  %4291 = vmatmul.mubr.f32.gmra.mrb[0].mxu0 %v3961
  %v4292 = vpop.f32.mrb[0].mxu0
  %v4293 = vadd.f32 0.0, %v4292
  %v4294 = vpop.f32.mrb[0].mxu0
  %4295 = vmatprep.mubr.f32.mxu0 0.0
  %4296 = vmatmul.mubr.f32.gmra.mrb[0].mxu0 %v3962
  %v4297 = vpop.f32.mrb[0].mxu0
  %v4298 = vadd.f32 0.0, %v4297
  %v4299 = vpop.f32.mrb[0].mxu0
  %4300 = vmatprep.mubr.f32.mxu0 0.0
  %4301 = vmatmul.mubr.f32.gmra.mrb[0].mxu0 %v3963
  %v4302 = vpop.f32.mrb[0].mxu0
  %v4303 = vadd.f32 0.0, %v4302
  %v4304 = vpop.f32.mrb[0].mxu0
  %4305 = vmatprep.mubr.f32.mxu0 0.0
  %4306 = vmatmul.mubr.f32.gmra.mrb[0].mxu0 %v3964
  %v4307 = vpop.f32.mrb[0].mxu0
  %v4308 = vadd.f32 0.0, %v4307
  %v4309 = vpop.f32.mrb[0].mxu0
  %4310 = vmatprep.mubr.f32.mxu0 0.0
  %4311 = vmatmul.mubr.f32.gmra.mrb[0].mxu0 %v3965
  %v4312 = vpop.f32.mrb[0].mxu0
  %v4313 = vadd.f32 0.0, %v4312
  %v4314 = vpop.f32.mrb[0].mxu0
  %4315 = vmatprep.mubr.f32.mxu0 0.0
  %4316 = vmatmul.mubr.f32.gmra.mrb[0].mxu0 %v3966
  %v4317 = vpop.f32.mrb[0].mxu0
  %v4318 = vadd.f32 0.0, %v4317
  %v4319 = vpop.f32.mrb[0].mxu0
  %4320 = vmatprep.mubr.f32.mxu0 0.0
  %4321 = vmatmul.mubr.f32.gmra.mrb[0].mxu0 %v3967
  %v4322 = vpop.f32.mrb[0].mxu0
  %v4323 = vadd.f32 0.0, %v4322
  %v4324 = vpop.f32.mrb[0].mxu0
  %4325 = vmatprep.mubr.f32.mxu0 0.0
  %4326 = vmatmul.mubr.f32.gmra.mrb[0].mxu0 %v3968
  %v4327 = vpop.f32.mrb[0].mxu0
  %v4328 = vadd.f32 0.0, %v4327
  %v4329 = vpop.f32.mrb[0].mxu0
  %4330 = vmatprep.mubr.f32.mxu0 0.0
  %4331 = vmatmul.mubr.f32.gmra.mrb[0].mxu0 %v3969
  %v4332 = vpop.f32.mrb[0].mxu0
  %v4333 = vadd.f32 0.0, %v4332
  %v4334 = vpop.f32.mrb[0].mxu0
  %4335 = vmatprep.mubr.f32.mxu0 0.0
  %4336 = vmatmul.mubr.f32.gmra.mrb[0].mxu0 %v3970
  %v4337 = vpop.f32.mrb[0].mxu0
  %v4338 = vadd.f32 0.0, %v4337
  %v4339 = vpop.f32.mrb[0].mxu0
  %4340 = vmatprep.mubr.f32.mxu0 0.0
  %4341 = vmatmul.mubr.f32.gmra.mrb[0].mxu0 %v3971
  %v4342 = vpop.f32.mrb[0].mxu0
  %v4343 = vadd.f32 0.0, %v4342
  %v4344 = vpop.f32.mrb[0].mxu0
  %4345 = vmatprep.mubr.f32.mxu0 0.0
  %4346 = vmatmul.mubr.f32.gmra.mrb[0].mxu0 %v3972
  %v4347 = vpop.f32.mrb[0].mxu0
  %v4348 = vadd.f32 0.0, %v4347
  %v4349 = vpop.f32.mrb[0].mxu0
  %4350 = vmatprep.mubr.f32.mxu0 0.0
  %4351 = vmatmul.mubr.f32.gmra.mrb[0].mxu0 %v3973
  %v4352 = vpop.f32.mrb[0].mxu0
  %v4353 = vadd.f32 0.0, %v4352
  %v4354 = vpop.f32.mrb[0].mxu0
  %4355 = vmatprep.mubr.f32.mxu0 0.0
  %4356 = vmatmul.mubr.f32.gmra.mrb[0].mxu0 %v3974
  %v4357 = vpop.f32.mrb[0].mxu0
  %v4358 = vadd.f32 0.0, %v4357
  %v4359 = vpop.f32.mrb[0].mxu0
  %4360 = vmatprep.mubr.f32.mxu0 0.0
  %4361 = vmatmul.mubr.f32.gmra.mrb[0].mxu0 %v3975
  %v4362 = vpop.f32.mrb[0].mxu0
  %v4363 = vadd.f32 0.0, %v4362
  %v4364 = vpop.f32.mrb[0].mxu0
  %4365 = vmatprep.mubr.f32.mxu0 0.0
  %4366 = vmatmul.mubr.f32.gmra.mrb[0].mxu0 %v3976
  %v4367 = vpop.f32.mrb[0].mxu0
  %v4368 = vadd.f32 0.0, %v4367
  %v4369 = vpop.f32.mrb[0].mxu0
  %4370 = vmatprep.mubr.f32.mxu0 0.0
  %4371 = vmatmul.mubr.f32.gmra.mrb[0].mxu0 %v3977
  %v4372 = vpop.f32.mrb[0].mxu0
  %v4373 = vadd.f32 0.0, %v4372
  %v4374 = vpop.f32.mrb[0].mxu0
  %4375 = vmatprep.mubr.f32.mxu0 0.0
  %4376 = vmatmul.mubr.f32.gmra.mrb[0].mxu0 %v3978
  %v4377 = vpop.f32.mrb[0].mxu0
  %v4378 = vadd.f32 0.0, %v4377
  %v4379 = vpop.f32.mrb[0].mxu0
  %4380 = vmatprep.mubr.f32.mxu0 0.0
  %4381 = vmatmul.mubr.f32.gmra.mrb[0].mxu0 %v3979
  %v4382 = vpop.f32.mrb[0].mxu0
  %v4383 = vadd.f32 0.0, %v4382
  %v4384 = vpop.f32.mrb[0].mxu0
  %4385 = vdwg.mxu0
  %v4386 = vadd.f32 %v3848, %v4068
  %v4387 = vadd.f32 %v3849, %v4073
  %v4388 = vadd.f32 %v3850, %v4078
  %v4389 = vadd.f32 %v3851, %v4083
  %v4390 = vadd.f32 %v3852, %v4088
  %v4391 = vadd.f32 %v3853, %v4093
  %v4392 = vadd.f32 %v3854, %v4098
  %v4393 = vadd.f32 %v3855, %v4103
  %v4394 = vadd.f32 %v3856, %v4108
  %v4395 = vadd.f32 %v3857, %v4113
  %v4396 = vadd.f32 %v3858, %v4118
  %v4397 = vadd.f32 %v3859, %v4123
  %v4398 = vadd.f32 %v3860, %v4128
  %v4399 = vadd.f32 %v3861, %v4133
  %v4400 = vadd.f32 %v3862, %v4138
  %v4401 = vadd.f32 %v3863, %v4143
  %v4402 = vadd.f32 %v3864, %v4148
  %v4403 = vadd.f32 %v3865, %v4153
  %v4404 = vadd.f32 %v3866, %v4158
  %v4405 = vadd.f32 %v3867, %v4163
  %v4406 = vadd.f32 %v3868, %v4168
  %v4407 = vadd.f32 %v3869, %v4173
  %v4408 = vadd.f32 %v3870, %v4178
  %v4409 = vadd.f32 %v3871, %v4183
  %v4410 = vadd.f32 %v3872, %v4188
  %v4411 = vadd.f32 %v3873, %v4193
  %v4412 = vadd.f32 %v3874, %v4198
  %v4413 = vadd.f32 %v3875, %v4203
  %v4414 = vadd.f32 %v3876, %v4208
  %v4415 = vadd.f32 %v3877, %v4213
  %v4416 = vadd.f32 %v3878, %v4218
  %v4417 = vadd.f32 %v3879, %v4223
  %v4418 = vadd.f32 %v3880, %v4228
  %v4419 = vadd.f32 %v3881, %v4233
  %v4420 = vadd.f32 %v3882, %v4238
  %v4421 = vadd.f32 %v3883, %v4243
  %v4422 = vadd.f32 %v3884, %v4248
  %v4423 = vadd.f32 %v3885, %v4253
  %v4424 = vadd.f32 %v3886, %v4258
  %v4425 = vadd.f32 %v3887, %v4263
  %v4426 = vadd.f32 %v3888, %v4268
  %v4427 = vadd.f32 %v3889, %v4273
  %v4428 = vadd.f32 %v3890, %v4278
  %v4429 = vadd.f32 %v3891, %v4283
  %v4430 = vadd.f32 %v3892, %v4288
  %v4431 = vadd.f32 %v3893, %v4293
  %v4432 = vadd.f32 %v3894, %v4298
  %v4433 = vadd.f32 %v3895, %v4303
  %v4434 = vadd.f32 %v3896, %v4308
  %v4435 = vadd.f32 %v3897, %v4313
  %v4436 = vadd.f32 %v3898, %v4318
  %v4437 = vadd.f32 %v3899, %v4323
  %v4438 = vadd.f32 %v3900, %v4328
  %v4439 = vadd.f32 %v3901, %v4333
  %v4440 = vadd.f32 %v3902, %v4338
  %v4441 = vadd.f32 %v3903, %v4343
  %v4442 = vadd.f32 %v3904, %v4348
  %v4443 = vadd.f32 %v3905, %v4353
  %v4444 = vadd.f32 %v3906, %v4358
  %v4445 = vadd.f32 %v3907, %v4363
  %v4446 = vadd.f32 %v3908, %v4368
  %v4447 = vadd.f32 %v3909, %v4373
  %v4448 = vadd.f32 %v3910, %v4378
  %v4449 = vadd.f32 %v3911, %v4383
  %s4450 = scalar_lea.vmem %s3, 640
  %v4451 = vld [vmem:[%s4450] sm:$0xff]
  %v4452 = vld [vmem:[%s4450 + $0x8] sm:$0xff]
  %v4453 = vld [vmem:[%s4450 + $0x10] sm:$0xff]
  %v4454 = vld [vmem:[%s4450 + $0x18] sm:$0xff]
  %v4455 = vld [vmem:[%s4450 + $0x20] sm:$0xff]
  %v4456 = vld [vmem:[%s4450 + $0x28] sm:$0xff]
  %v4457 = vld [vmem:[%s4450 + $0x30] sm:$0xff]
  %v4458 = vld [vmem:[%s4450 + $0x38] sm:$0xff]
  %v4459 = vld [vmem:[%s4450 + $0x40] sm:$0xff]
  %v4460 = vld [vmem:[%s4450 + $0x48] sm:$0xff]
  %v4461 = vld [vmem:[%s4450 + $0x50] sm:$0xff]
  %v4462 = vld [vmem:[%s4450 + $0x58] sm:$0xff]
  %v4463 = vld [vmem:[%s4450 + $0x60] sm:$0xff]
  %v4464 = vld [vmem:[%s4450 + $0x68] sm:$0xff]
  %v4465 = vld [vmem:[%s4450 + $0x70] sm:$0xff]
  %v4466 = vld [vmem:[%s4450 + $0x78] sm:$0xff]
  %4467 = vmatprep.subr.mxu0 0.0
  %4468 = vmatpush1.msra.mxu0 %v4451
  %4469 = vmatprep.subr.mxu0 0.0
  %4470 = vmatpush1.msra.mxu0 %v4452
  %4471 = vmatprep.subr.mxu0 0.0
  %4472 = vmatpush1.msra.mxu0 %v4453
  %4473 = vmatprep.subr.mxu0 0.0
  %4474 = vmatpush1.msra.mxu0 %v4454
  %4475 = vmatprep.subr.mxu0 0.0
  %4476 = vmatpush1.msra.mxu0 %v4455
  %4477 = vmatprep.subr.mxu0 0.0
  %4478 = vmatpush1.msra.mxu0 %v4456
  %4479 = vmatprep.subr.mxu0 0.0
  %4480 = vmatpush1.msra.mxu0 %v4457
  %4481 = vmatprep.subr.mxu0 0.0
  %4482 = vmatpush1.msra.mxu0 %v4458
  %4483 = vmatprep.subr.mxu0 0.0
  %4484 = vmatpush1.msra.mxu0 %v4459
  %4485 = vmatprep.subr.mxu0 0.0
  %4486 = vmatpush1.msra.mxu0 %v4460
  %4487 = vmatprep.subr.mxu0 0.0
  %4488 = vmatpush1.msra.mxu0 %v4461
  %4489 = vmatprep.subr.mxu0 0.0
  %4490 = vmatpush1.msra.mxu0 %v4462
  %4491 = vmatprep.subr.mxu0 0.0
  %4492 = vmatpush1.msra.mxu0 %v4463
  %4493 = vmatprep.subr.mxu0 0.0
  %4494 = vmatpush1.msra.mxu0 %v4464
  %4495 = vmatprep.subr.mxu0 0.0
  %4496 = vmatpush1.msra.mxu0 %v4465
  %4497 = vmatprep.subr.mxu0 0.0
  %4498 = vmatpush1.msra.mxu0 %v4466
  %4499 = vmatprep.subr.mxu0 0.0
  %4500 = vmatpush1.msra.mxu0 0.0
  %4501 = vmatprep.subr.mxu0 0.0
  %4502 = vmatpush1.msra.mxu0 0.0
  %4503 = vmatprep.subr.mxu0 0.0
  %4504 = vmatpush1.msra.mxu0 0.0
  %4505 = vmatprep.subr.mxu0 0.0
  %4506 = vmatpush1.msra.mxu0 0.0
  %4507 = vmatprep.subr.mxu0 0.0
  %4508 = vmatpush1.msra.mxu0 0.0
  %4509 = vmatprep.subr.mxu0 0.0
  %4510 = vmatpush1.msra.mxu0 0.0
  %4511 = vmatprep.subr.mxu0 0.0
  %4512 = vmatpush1.msra.mxu0 0.0
  %4513 = vmatprep.subr.mxu0 0.0
  %4514 = vmatpush1.msra.mxu0 0.0
  %4515 = vmatprep.subr.mxu0 0.0
  %4516 = vmatpush1.msra.mxu0 0.0
  %4517 = vmatprep.subr.mxu0 0.0
  %4518 = vmatpush1.msra.mxu0 0.0
  %4519 = vmatprep.subr.mxu0 0.0
  %4520 = vmatpush1.msra.mxu0 0.0
  %4521 = vmatprep.subr.mxu0 0.0
  %4522 = vmatpush1.msra.mxu0 0.0
  %4523 = vmatprep.subr.mxu0 0.0
  %4524 = vmatpush1.msra.mxu0 0.0
  %4525 = vmatprep.subr.mxu0 0.0
  %4526 = vmatpush1.msra.mxu0 0.0
  %4527 = vmatprep.subr.mxu0 0.0
  %4528 = vmatpush1.msra.mxu0 0.0
  %4529 = vmatprep.subr.mxu0 0.0
  %4530 = vmatpush1.msra.mxu0 0.0
  %4531 = vmatprep.mubr.f32.mxu0 0.0
  %4532 = vmatmul.mubr.f32.gmra.mrb[0].mxu0 %v3914
  %v4533 = vpop.f32.mrb[0].mxu0
  %v4534 = vadd.f32 0.0, %v4533
  %v4535 = vpop.f32.mrb[0].mxu0
  %4536 = vmatprep.mubr.f32.mxu0 0.0
  %4537 = vmatmul.mubr.f32.gmra.mrb[0].mxu0 %v3915
  %v4538 = vpop.f32.mrb[0].mxu0
  %v4539 = vadd.f32 0.0, %v4538
  %v4540 = vpop.f32.mrb[0].mxu0
  %4541 = vmatprep.mubr.f32.mxu0 0.0
  %4542 = vmatmul.mubr.f32.gmra.mrb[0].mxu0 %v3916
  %v4543 = vpop.f32.mrb[0].mxu0
  %v4544 = vadd.f32 0.0, %v4543
  %v4545 = vpop.f32.mrb[0].mxu0
  %4546 = vmatprep.mubr.f32.mxu0 0.0
  %4547 = vmatmul.mubr.f32.gmra.mrb[0].mxu0 %v3917
  %v4548 = vpop.f32.mrb[0].mxu0
  %v4549 = vadd.f32 0.0, %v4548
  %v4550 = vpop.f32.mrb[0].mxu0
  %4551 = vmatprep.mubr.f32.mxu0 0.0
  %4552 = vmatmul.mubr.f32.gmra.mrb[0].mxu0 %v3918
  %v4553 = vpop.f32.mrb[0].mxu0
  %v4554 = vadd.f32 0.0, %v4553
  %v4555 = vpop.f32.mrb[0].mxu0
  %4556 = vmatprep.mubr.f32.mxu0 0.0
  %4557 = vmatmul.mubr.f32.gmra.mrb[0].mxu0 %v3919
  %v4558 = vpop.f32.mrb[0].mxu0
  %v4559 = vadd.f32 0.0, %v4558
  %v4560 = vpop.f32.mrb[0].mxu0
  %4561 = vmatprep.mubr.f32.mxu0 0.0
  %4562 = vmatmul.mubr.f32.gmra.mrb[0].mxu0 %v3920
  %v4563 = vpop.f32.mrb[0].mxu0
  %v4564 = vadd.f32 0.0, %v4563
  %v4565 = vpop.f32.mrb[0].mxu0
  %4566 = vmatprep.mubr.f32.mxu0 0.0
  %4567 = vmatmul.mubr.f32.gmra.mrb[0].mxu0 %v3921
  %v4568 = vpop.f32.mrb[0].mxu0
  %v4569 = vadd.f32 0.0, %v4568
  %v4570 = vpop.f32.mrb[0].mxu0
  %4571 = vmatprep.mubr.f32.mxu0 0.0
  %4572 = vmatmul.mubr.f32.gmra.mrb[0].mxu0 %v3922
  %v4573 = vpop.f32.mrb[0].mxu0
  %v4574 = vadd.f32 0.0, %v4573
  %v4575 = vpop.f32.mrb[0].mxu0
  %4576 = vmatprep.mubr.f32.mxu0 0.0
  %4577 = vmatmul.mubr.f32.gmra.mrb[0].mxu0 %v3923
  %v4578 = vpop.f32.mrb[0].mxu0
  %v4579 = vadd.f32 0.0, %v4578
  %v4580 = vpop.f32.mrb[0].mxu0
  %4581 = vmatprep.mubr.f32.mxu0 0.0
  %4582 = vmatmul.mubr.f32.gmra.mrb[0].mxu0 %v3924
  %v4583 = vpop.f32.mrb[0].mxu0
  %v4584 = vadd.f32 0.0, %v4583
  %v4585 = vpop.f32.mrb[0].mxu0
  %4586 = vmatprep.mubr.f32.mxu0 0.0
  %4587 = vmatmul.mubr.f32.gmra.mrb[0].mxu0 %v3925
  %v4588 = vpop.f32.mrb[0].mxu0
  %v4589 = vadd.f32 0.0, %v4588
  %v4590 = vpop.f32.mrb[0].mxu0
  %4591 = vmatprep.mubr.f32.mxu0 0.0
  %4592 = vmatmul.mubr.f32.gmra.mrb[0].mxu0 %v3926
  %v4593 = vpop.f32.mrb[0].mxu0
  %v4594 = vadd.f32 0.0, %v4593
  %v4595 = vpop.f32.mrb[0].mxu0
  %4596 = vmatprep.mubr.f32.mxu0 0.0
  %4597 = vmatmul.mubr.f32.gmra.mrb[0].mxu0 %v3927
  %v4598 = vpop.f32.mrb[0].mxu0
  %v4599 = vadd.f32 0.0, %v4598
  %v4600 = vpop.f32.mrb[0].mxu0
  %4601 = vmatprep.mubr.f32.mxu0 0.0
  %4602 = vmatmul.mubr.f32.gmra.mrb[0].mxu0 %v3928
  %v4603 = vpop.f32.mrb[0].mxu0
  %v4604 = vadd.f32 0.0, %v4603
  %v4605 = vpop.f32.mrb[0].mxu0
  %4606 = vmatprep.mubr.f32.mxu0 0.0
  %4607 = vmatmul.mubr.f32.gmra.mrb[0].mxu0 %v3929
  %v4608 = vpop.f32.mrb[0].mxu0
  %v4609 = vadd.f32 0.0, %v4608
  %v4610 = vpop.f32.mrb[0].mxu0
  %4611 = vmatprep.mubr.f32.mxu0 0.0
  %4612 = vmatmul.mubr.f32.gmra.mrb[0].mxu0 %v3930
  %v4613 = vpop.f32.mrb[0].mxu0
  %v4614 = vadd.f32 0.0, %v4613
  %v4615 = vpop.f32.mrb[0].mxu0
  %4616 = vmatprep.mubr.f32.mxu0 0.0
  %4617 = vmatmul.mubr.f32.gmra.mrb[0].mxu0 %v3931
  %v4618 = vpop.f32.mrb[0].mxu0
  %v4619 = vadd.f32 0.0, %v4618
  %v4620 = vpop.f32.mrb[0].mxu0
  %4621 = vmatprep.mubr.f32.mxu0 0.0
  %4622 = vmatmul.mubr.f32.gmra.mrb[0].mxu0 %v3932
  %v4623 = vpop.f32.mrb[0].mxu0
  %v4624 = vadd.f32 0.0, %v4623
  %v4625 = vpop.f32.mrb[0].mxu0
  %4626 = vmatprep.mubr.f32.mxu0 0.0
  %4627 = vmatmul.mubr.f32.gmra.mrb[0].mxu0 %v3933
  %v4628 = vpop.f32.mrb[0].mxu0
  %v4629 = vadd.f32 0.0, %v4628
  %v4630 = vpop.f32.mrb[0].mxu0
  %4631 = vmatprep.mubr.f32.mxu0 0.0
  %4632 = vmatmul.mubr.f32.gmra.mrb[0].mxu0 %v3934
  %v4633 = vpop.f32.mrb[0].mxu0
  %v4634 = vadd.f32 0.0, %v4633
  %v4635 = vpop.f32.mrb[0].mxu0
  %4636 = vmatprep.mubr.f32.mxu0 0.0
  %4637 = vmatmul.mubr.f32.gmra.mrb[0].mxu0 %v3935
  %v4638 = vpop.f32.mrb[0].mxu0
  %v4639 = vadd.f32 0.0, %v4638
  %v4640 = vpop.f32.mrb[0].mxu0
  %4641 = vmatprep.mubr.f32.mxu0 0.0
  %4642 = vmatmul.mubr.f32.gmra.mrb[0].mxu0 %v3936
  %v4643 = vpop.f32.mrb[0].mxu0
  %v4644 = vadd.f32 0.0, %v4643
  %v4645 = vpop.f32.mrb[0].mxu0
  %4646 = vmatprep.mubr.f32.mxu0 0.0
  %4647 = vmatmul.mubr.f32.gmra.mrb[0].mxu0 %v3937
  %v4648 = vpop.f32.mrb[0].mxu0
  %v4649 = vadd.f32 0.0, %v4648
  %v4650 = vpop.f32.mrb[0].mxu0
  %4651 = vmatprep.mubr.f32.mxu0 0.0
  %4652 = vmatmul.mubr.f32.gmra.mrb[0].mxu0 %v3938
  %v4653 = vpop.f32.mrb[0].mxu0
  %v4654 = vadd.f32 0.0, %v4653
  %v4655 = vpop.f32.mrb[0].mxu0
  %4656 = vmatprep.mubr.f32.mxu0 0.0
  %4657 = vmatmul.mubr.f32.gmra.mrb[0].mxu0 %v3939
  %v4658 = vpop.f32.mrb[0].mxu0
  %v4659 = vadd.f32 0.0, %v4658
  %v4660 = vpop.f32.mrb[0].mxu0
  %4661 = vmatprep.mubr.f32.mxu0 0.0
  %4662 = vmatmul.mubr.f32.gmra.mrb[0].mxu0 %v3940
  %v4663 = vpop.f32.mrb[0].mxu0
  %v4664 = vadd.f32 0.0, %v4663
  %v4665 = vpop.f32.mrb[0].mxu0
  %4666 = vmatprep.mubr.f32.mxu0 0.0
  %4667 = vmatmul.mubr.f32.gmra.mrb[0].mxu0 %v3941
  %v4668 = vpop.f32.mrb[0].mxu0
  %v4669 = vadd.f32 0.0, %v4668
  %v4670 = vpop.f32.mrb[0].mxu0
  %4671 = vmatprep.mubr.f32.mxu0 0.0
  %4672 = vmatmul.mubr.f32.gmra.mrb[0].mxu0 %v3942
  %v4673 = vpop.f32.mrb[0].mxu0
  %v4674 = vadd.f32 0.0, %v4673
  %v4675 = vpop.f32.mrb[0].mxu0
  %4676 = vmatprep.mubr.f32.mxu0 0.0
  %4677 = vmatmul.mubr.f32.gmra.mrb[0].mxu0 %v3943
  %v4678 = vpop.f32.mrb[0].mxu0
  %v4679 = vadd.f32 0.0, %v4678
  %v4680 = vpop.f32.mrb[0].mxu0
  %4681 = vmatprep.mubr.f32.mxu0 0.0
  %4682 = vmatmul.mubr.f32.gmra.mrb[0].mxu0 %v3944
  %v4683 = vpop.f32.mrb[0].mxu0
  %v4684 = vadd.f32 0.0, %v4683
  %v4685 = vpop.f32.mrb[0].mxu0
  %4686 = vmatprep.mubr.f32.mxu0 0.0
  %4687 = vmatmul.mubr.f32.gmra.mrb[0].mxu0 %v3945
  %v4688 = vpop.f32.mrb[0].mxu0
  %v4689 = vadd.f32 0.0, %v4688
  %v4690 = vpop.f32.mrb[0].mxu0
  %4691 = vmatprep.mubr.f32.mxu0 0.0
  %4692 = vmatmul.mubr.f32.gmra.mrb[0].mxu0 %v3950
  %v4693 = vpop.f32.mrb[0].mxu0
  %v4694 = vadd.f32 0.0, %v4693
  %v4695 = vpop.f32.mrb[0].mxu0
  %4696 = vmatprep.mubr.f32.mxu0 0.0
  %4697 = vmatmul.mubr.f32.gmra.mrb[0].mxu0 %v3951
  %v4698 = vpop.f32.mrb[0].mxu0
  %v4699 = vadd.f32 0.0, %v4698
  %v4700 = vpop.f32.mrb[0].mxu0
  %4701 = vmatprep.mubr.f32.mxu0 0.0
  %4702 = vmatmul.mubr.f32.gmra.mrb[0].mxu0 %v3952
  %v4703 = vpop.f32.mrb[0].mxu0
  %v4704 = vadd.f32 0.0, %v4703
  %v4705 = vpop.f32.mrb[0].mxu0
  %4706 = vmatprep.mubr.f32.mxu0 0.0
  %4707 = vmatmul.mubr.f32.gmra.mrb[0].mxu0 %v3953
  %v4708 = vpop.f32.mrb[0].mxu0
  %v4709 = vadd.f32 0.0, %v4708
  %v4710 = vpop.f32.mrb[0].mxu0
  %4711 = vmatprep.mubr.f32.mxu0 0.0
  %4712 = vmatmul.mubr.f32.gmra.mrb[0].mxu0 %v3954
  %v4713 = vpop.f32.mrb[0].mxu0
  %v4714 = vadd.f32 0.0, %v4713
  %v4715 = vpop.f32.mrb[0].mxu0
  %4716 = vmatprep.mubr.f32.mxu0 0.0
  %4717 = vmatmul.mubr.f32.gmra.mrb[0].mxu0 %v3955
  %v4718 = vpop.f32.mrb[0].mxu0
  %v4719 = vadd.f32 0.0, %v4718
  %v4720 = vpop.f32.mrb[0].mxu0
  %4721 = vmatprep.mubr.f32.mxu0 0.0
  %4722 = vmatmul.mubr.f32.gmra.mrb[0].mxu0 %v3956
  %v4723 = vpop.f32.mrb[0].mxu0
  %v4724 = vadd.f32 0.0, %v4723
  %v4725 = vpop.f32.mrb[0].mxu0
  %4726 = vmatprep.mubr.f32.mxu0 0.0
  %4727 = vmatmul.mubr.f32.gmra.mrb[0].mxu0 %v3957
  %v4728 = vpop.f32.mrb[0].mxu0
  %v4729 = vadd.f32 0.0, %v4728
  %v4730 = vpop.f32.mrb[0].mxu0
  %4731 = vmatprep.mubr.f32.mxu0 0.0
  %4732 = vmatmul.mubr.f32.gmra.mrb[0].mxu0 %v3958
  %v4733 = vpop.f32.mrb[0].mxu0
  %v4734 = vadd.f32 0.0, %v4733
  %v4735 = vpop.f32.mrb[0].mxu0
  %4736 = vmatprep.mubr.f32.mxu0 0.0
  %4737 = vmatmul.mubr.f32.gmra.mrb[0].mxu0 %v3959
  %v4738 = vpop.f32.mrb[0].mxu0
  %v4739 = vadd.f32 0.0, %v4738
  %v4740 = vpop.f32.mrb[0].mxu0
  %4741 = vmatprep.mubr.f32.mxu0 0.0
  %4742 = vmatmul.mubr.f32.gmra.mrb[0].mxu0 %v3960
  %v4743 = vpop.f32.mrb[0].mxu0
  %v4744 = vadd.f32 0.0, %v4743
  %v4745 = vpop.f32.mrb[0].mxu0
  %4746 = vmatprep.mubr.f32.mxu0 0.0
  %4747 = vmatmul.mubr.f32.gmra.mrb[0].mxu0 %v3961
  %v4748 = vpop.f32.mrb[0].mxu0
  %v4749 = vadd.f32 0.0, %v4748
  %v4750 = vpop.f32.mrb[0].mxu0
  %4751 = vmatprep.mubr.f32.mxu0 0.0
  %4752 = vmatmul.mubr.f32.gmra.mrb[0].mxu0 %v3962
  %v4753 = vpop.f32.mrb[0].mxu0
  %v4754 = vadd.f32 0.0, %v4753
  %v4755 = vpop.f32.mrb[0].mxu0
  %4756 = vmatprep.mubr.f32.mxu0 0.0
  %4757 = vmatmul.mubr.f32.gmra.mrb[0].mxu0 %v3963
  %v4758 = vpop.f32.mrb[0].mxu0
  %v4759 = vadd.f32 0.0, %v4758
  %v4760 = vpop.f32.mrb[0].mxu0
  %4761 = vmatprep.mubr.f32.mxu0 0.0
  %4762 = vmatmul.mubr.f32.gmra.mrb[0].mxu0 %v3964
  %v4763 = vpop.f32.mrb[0].mxu0
  %v4764 = vadd.f32 0.0, %v4763
  %v4765 = vpop.f32.mrb[0].mxu0
  %4766 = vmatprep.mubr.f32.mxu0 0.0
  %4767 = vmatmul.mubr.f32.gmra.mrb[0].mxu0 %v3965
  %v4768 = vpop.f32.mrb[0].mxu0
  %v4769 = vadd.f32 0.0, %v4768
  %v4770 = vpop.f32.mrb[0].mxu0
  %4771 = vmatprep.mubr.f32.mxu0 0.0
  %4772 = vmatmul.mubr.f32.gmra.mrb[0].mxu0 %v3966
  %v4773 = vpop.f32.mrb[0].mxu0
  %v4774 = vadd.f32 0.0, %v4773
  %v4775 = vpop.f32.mrb[0].mxu0
  %4776 = vmatprep.mubr.f32.mxu0 0.0
  %4777 = vmatmul.mubr.f32.gmra.mrb[0].mxu0 %v3967
  %v4778 = vpop.f32.mrb[0].mxu0
  %v4779 = vadd.f32 0.0, %v4778
  %v4780 = vpop.f32.mrb[0].mxu0
  %4781 = vmatprep.mubr.f32.mxu0 0.0
  %4782 = vmatmul.mubr.f32.gmra.mrb[0].mxu0 %v3968
  %v4783 = vpop.f32.mrb[0].mxu0
  %v4784 = vadd.f32 0.0, %v4783
  %v4785 = vpop.f32.mrb[0].mxu0
  %4786 = vmatprep.mubr.f32.mxu0 0.0
  %4787 = vmatmul.mubr.f32.gmra.mrb[0].mxu0 %v3969
  %v4788 = vpop.f32.mrb[0].mxu0
  %v4789 = vadd.f32 0.0, %v4788
  %v4790 = vpop.f32.mrb[0].mxu0
  %4791 = vmatprep.mubr.f32.mxu0 0.0
  %4792 = vmatmul.mubr.f32.gmra.mrb[0].mxu0 %v3970
  %v4793 = vpop.f32.mrb[0].mxu0
  %v4794 = vadd.f32 0.0, %v4793
  %v4795 = vpop.f32.mrb[0].mxu0
  %4796 = vmatprep.mubr.f32.mxu0 0.0
  %4797 = vmatmul.mubr.f32.gmra.mrb[0].mxu0 %v3971
  %v4798 = vpop.f32.mrb[0].mxu0
  %v4799 = vadd.f32 0.0, %v4798
  %v4800 = vpop.f32.mrb[0].mxu0
  %4801 = vmatprep.mubr.f32.mxu0 0.0
  %4802 = vmatmul.mubr.f32.gmra.mrb[0].mxu0 %v3972
  %v4803 = vpop.f32.mrb[0].mxu0
  %v4804 = vadd.f32 0.0, %v4803
  %v4805 = vpop.f32.mrb[0].mxu0
  %4806 = vmatprep.mubr.f32.mxu0 0.0
  %4807 = vmatmul.mubr.f32.gmra.mrb[0].mxu0 %v3973
  %v4808 = vpop.f32.mrb[0].mxu0
  %v4809 = vadd.f32 0.0, %v4808
  %v4810 = vpop.f32.mrb[0].mxu0
  %4811 = vmatprep.mubr.f32.mxu0 0.0
  %4812 = vmatmul.mubr.f32.gmra.mrb[0].mxu0 %v3974
  %v4813 = vpop.f32.mrb[0].mxu0
  %v4814 = vadd.f32 0.0, %v4813
  %v4815 = vpop.f32.mrb[0].mxu0
  %4816 = vmatprep.mubr.f32.mxu0 0.0
  %4817 = vmatmul.mubr.f32.gmra.mrb[0].mxu0 %v3975
  %v4818 = vpop.f32.mrb[0].mxu0
  %v4819 = vadd.f32 0.0, %v4818
  %v4820 = vpop.f32.mrb[0].mxu0
  %4821 = vmatprep.mubr.f32.mxu0 0.0
  %4822 = vmatmul.mubr.f32.gmra.mrb[0].mxu0 %v3976
  %v4823 = vpop.f32.mrb[0].mxu0
  %v4824 = vadd.f32 0.0, %v4823
  %v4825 = vpop.f32.mrb[0].mxu0
  %4826 = vmatprep.mubr.f32.mxu0 0.0
  %4827 = vmatmul.mubr.f32.gmra.mrb[0].mxu0 %v3977
  %v4828 = vpop.f32.mrb[0].mxu0
  %v4829 = vadd.f32 0.0, %v4828
  %v4830 = vpop.f32.mrb[0].mxu0
  %4831 = vmatprep.mubr.f32.mxu0 0.0
  %4832 = vmatmul.mubr.f32.gmra.mrb[0].mxu0 %v3978
  %v4833 = vpop.f32.mrb[0].mxu0
  %v4834 = vadd.f32 0.0, %v4833
  %v4835 = vpop.f32.mrb[0].mxu0
  %4836 = vmatprep.mubr.f32.mxu0 0.0
  %4837 = vmatmul.mubr.f32.gmra.mrb[0].mxu0 %v3979
  %v4838 = vpop.f32.mrb[0].mxu0
  %v4839 = vadd.f32 0.0, %v4838
  %v4840 = vpop.f32.mrb[0].mxu0
  %4841 = vmatprep.mubr.f32.mxu0 0.0
  %4842 = vmatmul.mubr.f32.gmra.mrb[0].mxu0 %v3980
  %v4843 = vpop.f32.mrb[0].mxu0
  %v4844 = vadd.f32 0.0, %v4843
  %v4845 = vpop.f32.mrb[0].mxu0
  %4846 = vmatprep.mubr.f32.mxu0 0.0
  %4847 = vmatmul.mubr.f32.gmra.mrb[0].mxu0 %v3981
  %v4848 = vpop.f32.mrb[0].mxu0
  %v4849 = vadd.f32 0.0, %v4848
  %v4850 = vpop.f32.mrb[0].mxu0
  %4851 = vdwg.mxu0
  %v4852 = vadd.f32 %v4386, %v4534
  %v4853 = vadd.f32 %v4387, %v4539
  %v4854 = vadd.f32 %v4388, %v4544
  %v4855 = vadd.f32 %v4389, %v4549
  %v4856 = vadd.f32 %v4390, %v4554
  %v4857 = vadd.f32 %v4391, %v4559
  %v4858 = vadd.f32 %v4392, %v4564
  %v4859 = vadd.f32 %v4393, %v4569
  %v4860 = vadd.f32 %v4394, %v4574
  %v4861 = vadd.f32 %v4395, %v4579
  %v4862 = vadd.f32 %v4396, %v4584
  %v4863 = vadd.f32 %v4397, %v4589
  %v4864 = vadd.f32 %v4398, %v4594
  %v4865 = vadd.f32 %v4399, %v4599
  %v4866 = vadd.f32 %v4400, %v4604
  %v4867 = vadd.f32 %v4401, %v4609
  %v4868 = vadd.f32 %v4402, %v4614
  %v4869 = vadd.f32 %v4403, %v4619
  %v4870 = vadd.f32 %v4404, %v4624
  %v4871 = vadd.f32 %v4405, %v4629
  %v4872 = vadd.f32 %v4406, %v4634
  %v4873 = vadd.f32 %v4407, %v4639
  %v4874 = vadd.f32 %v4408, %v4644
  %v4875 = vadd.f32 %v4409, %v4649
  %v4876 = vadd.f32 %v4410, %v4654
  %v4877 = vadd.f32 %v4411, %v4659
  %v4878 = vadd.f32 %v4412, %v4664
  %v4879 = vadd.f32 %v4413, %v4669
  %v4880 = vadd.f32 %v4414, %v4674
  %v4881 = vadd.f32 %v4415, %v4679
  %v4882 = vadd.f32 %v4416, %v4684
  %v4883 = vadd.f32 %v4417, %v4689
  %v4884 = vadd.f32 %v4418, %v4694
  %v4885 = vadd.f32 %v4419, %v4699
  %v4886 = vadd.f32 %v4420, %v4704
  %v4887 = vadd.f32 %v4421, %v4709
  %v4888 = vadd.f32 %v4422, %v4714
  %v4889 = vadd.f32 %v4423, %v4719
  %v4890 = vadd.f32 %v4424, %v4724
  %v4891 = vadd.f32 %v4425, %v4729
  %v4892 = vadd.f32 %v4426, %v4734
  %v4893 = vadd.f32 %v4427, %v4739
  %v4894 = vadd.f32 %v4428, %v4744
  %v4895 = vadd.f32 %v4429, %v4749
  %v4896 = vadd.f32 %v4430, %v4754
  %v4897 = vadd.f32 %v4431, %v4759
  %v4898 = vadd.f32 %v4432, %v4764
  %v4899 = vadd.f32 %v4433, %v4769
  %v4900 = vadd.f32 %v4434, %v4774
  %v4901 = vadd.f32 %v4435, %v4779
  %v4902 = vadd.f32 %v4436, %v4784
  %v4903 = vadd.f32 %v4437, %v4789
  %v4904 = vadd.f32 %v4438, %v4794
  %v4905 = vadd.f32 %v4439, %v4799
  %v4906 = vadd.f32 %v4440, %v4804
  %v4907 = vadd.f32 %v4441, %v4809
  %v4908 = vadd.f32 %v4442, %v4814
  %v4909 = vadd.f32 %v4443, %v4819
  %v4910 = vadd.f32 %v4444, %v4824
  %v4911 = vadd.f32 %v4445, %v4829
  %v4912 = vadd.f32 %v4446, %v4834
  %v4913 = vadd.f32 %v4447, %v4839
  %v4914 = vadd.f32 %v4448, %v4844
  %v4915 = vadd.f32 %v4449, %v4849
  %s4916 = scalar_lea.vmem %s3, 1024
  %v4917 = vld [vmem:[%s4916] sm:$0xff]
  %v4918 = vld [vmem:[%s4916 + $0x8] sm:$0xff]
  %v4919 = vld [vmem:[%s4916 + $0x10] sm:$0xff]
  %v4920 = vld [vmem:[%s4916 + $0x18] sm:$0xff]
  %v4921 = vld [vmem:[%s4916 + $0x20] sm:$0xff]
  %v4922 = vld [vmem:[%s4916 + $0x28] sm:$0xff]
  %v4923 = vld [vmem:[%s4916 + $0x30] sm:$0xff]
  %v4924 = vld [vmem:[%s4916 + $0x38] sm:$0xff]
  %v4925 = vld [vmem:[%s4916 + $0x40] sm:$0xff]
  %v4926 = vld [vmem:[%s4916 + $0x48] sm:$0xff]
  %v4927 = vld [vmem:[%s4916 + $0x50] sm:$0xff]
  %v4928 = vld [vmem:[%s4916 + $0x58] sm:$0xff]
  %v4929 = vld [vmem:[%s4916 + $0x60] sm:$0xff]
  %v4930 = vld [vmem:[%s4916 + $0x68] sm:$0xff]
  %v4931 = vld [vmem:[%s4916 + $0x70] sm:$0xff]
  %v4932 = vld [vmem:[%s4916 + $0x78] sm:$0xff]
  %4933 = vmatprep.subr.mxu0 0.0
  %4934 = vmatpush1.msra.mxu0 %v4917
  %4935 = vmatprep.subr.mxu0 0.0
  %4936 = vmatpush1.msra.mxu0 %v4918
  %4937 = vmatprep.subr.mxu0 0.0
  %4938 = vmatpush1.msra.mxu0 %v4919
  %4939 = vmatprep.subr.mxu0 0.0
  %4940 = vmatpush1.msra.mxu0 %v4920
  %4941 = vmatprep.subr.mxu0 0.0
  %4942 = vmatpush1.msra.mxu0 %v4921
  %4943 = vmatprep.subr.mxu0 0.0
  %4944 = vmatpush1.msra.mxu0 %v4922
  %4945 = vmatprep.subr.mxu0 0.0
  %4946 = vmatpush1.msra.mxu0 %v4923
  %4947 = vmatprep.subr.mxu0 0.0
  %4948 = vmatpush1.msra.mxu0 %v4924
  %4949 = vmatprep.subr.mxu0 0.0
  %4950 = vmatpush1.msra.mxu0 %v4925
  %4951 = vmatprep.subr.mxu0 0.0
  %4952 = vmatpush1.msra.mxu0 %v4926
  %4953 = vmatprep.subr.mxu0 0.0
  %4954 = vmatpush1.msra.mxu0 %v4927
  %4955 = vmatprep.subr.mxu0 0.0
  %4956 = vmatpush1.msra.mxu0 %v4928
  %4957 = vmatprep.subr.mxu0 0.0
  %4958 = vmatpush1.msra.mxu0 %v4929
  %4959 = vmatprep.subr.mxu0 0.0
  %4960 = vmatpush1.msra.mxu0 %v4930
  %4961 = vmatprep.subr.mxu0 0.0
  %4962 = vmatpush1.msra.mxu0 %v4931
  %4963 = vmatprep.subr.mxu0 0.0
  %4964 = vmatpush1.msra.mxu0 %v4932
  %4965 = vmatprep.subr.mxu0 0.0
  %4966 = vmatpush1.msra.mxu0 0.0
  %4967 = vmatprep.subr.mxu0 0.0
  %4968 = vmatpush1.msra.mxu0 0.0
  %4969 = vmatprep.subr.mxu0 0.0
  %4970 = vmatpush1.msra.mxu0 0.0
  %4971 = vmatprep.subr.mxu0 0.0
  %4972 = vmatpush1.msra.mxu0 0.0
  %4973 = vmatprep.subr.mxu0 0.0
  %4974 = vmatpush1.msra.mxu0 0.0
  %4975 = vmatprep.subr.mxu0 0.0
  %4976 = vmatpush1.msra.mxu0 0.0
  %4977 = vmatprep.subr.mxu0 0.0
  %4978 = vmatpush1.msra.mxu0 0.0
  %4979 = vmatprep.subr.mxu0 0.0
  %4980 = vmatpush1.msra.mxu0 0.0
  %4981 = vmatprep.subr.mxu0 0.0
  %4982 = vmatpush1.msra.mxu0 0.0
  %4983 = vmatprep.subr.mxu0 0.0
  %4984 = vmatpush1.msra.mxu0 0.0
  %4985 = vmatprep.subr.mxu0 0.0
  %4986 = vmatpush1.msra.mxu0 0.0
  %4987 = vmatprep.subr.mxu0 0.0
  %4988 = vmatpush1.msra.mxu0 0.0
  %4989 = vmatprep.subr.mxu0 0.0
  %4990 = vmatpush1.msra.mxu0 0.0
  %4991 = vmatprep.subr.mxu0 0.0
  %4992 = vmatpush1.msra.mxu0 0.0
  %4993 = vmatprep.subr.mxu0 0.0
  %4994 = vmatpush1.msra.mxu0 0.0
  %4995 = vmatprep.subr.mxu0 0.0
  %4996 = vmatpush1.msra.mxu0 0.0
  %4997 = vmatprep.mubr.f32.mxu0 0.0
  %4998 = vmatmul.mubr.f32.gmra.mrb[0].mxu0 %v3916
  %v4999 = vpop.f32.mrb[0].mxu0
  %v5000 = vadd.f32 0.0, %v4999
  %v5001 = vpop.f32.mrb[0].mxu0
  %5002 = vmatprep.mubr.f32.mxu0 0.0
  %5003 = vmatmul.mubr.f32.gmra.mrb[0].mxu0 %v3917
  %v5004 = vpop.f32.mrb[0].mxu0
  %v5005 = vadd.f32 0.0, %v5004
  %v5006 = vpop.f32.mrb[0].mxu0
  %5007 = vmatprep.mubr.f32.mxu0 0.0
  %5008 = vmatmul.mubr.f32.gmra.mrb[0].mxu0 %v3918
  %v5009 = vpop.f32.mrb[0].mxu0
  %v5010 = vadd.f32 0.0, %v5009
  %v5011 = vpop.f32.mrb[0].mxu0
  %5012 = vmatprep.mubr.f32.mxu0 0.0
  %5013 = vmatmul.mubr.f32.gmra.mrb[0].mxu0 %v3919
  %v5014 = vpop.f32.mrb[0].mxu0
  %v5015 = vadd.f32 0.0, %v5014
  %v5016 = vpop.f32.mrb[0].mxu0
  %5017 = vmatprep.mubr.f32.mxu0 0.0
  %5018 = vmatmul.mubr.f32.gmra.mrb[0].mxu0 %v3920
  %v5019 = vpop.f32.mrb[0].mxu0
  %v5020 = vadd.f32 0.0, %v5019
  %v5021 = vpop.f32.mrb[0].mxu0
  %5022 = vmatprep.mubr.f32.mxu0 0.0
  %5023 = vmatmul.mubr.f32.gmra.mrb[0].mxu0 %v3921
  %v5024 = vpop.f32.mrb[0].mxu0
  %v5025 = vadd.f32 0.0, %v5024
  %v5026 = vpop.f32.mrb[0].mxu0
  %5027 = vmatprep.mubr.f32.mxu0 0.0
  %5028 = vmatmul.mubr.f32.gmra.mrb[0].mxu0 %v3922
  %v5029 = vpop.f32.mrb[0].mxu0
  %v5030 = vadd.f32 0.0, %v5029
  %v5031 = vpop.f32.mrb[0].mxu0
  %5032 = vmatprep.mubr.f32.mxu0 0.0
  %5033 = vmatmul.mubr.f32.gmra.mrb[0].mxu0 %v3923
  %v5034 = vpop.f32.mrb[0].mxu0
  %v5035 = vadd.f32 0.0, %v5034
  %v5036 = vpop.f32.mrb[0].mxu0
  %5037 = vmatprep.mubr.f32.mxu0 0.0
  %5038 = vmatmul.mubr.f32.gmra.mrb[0].mxu0 %v3924
  %v5039 = vpop.f32.mrb[0].mxu0
  %v5040 = vadd.f32 0.0, %v5039
  %v5041 = vpop.f32.mrb[0].mxu0
  %5042 = vmatprep.mubr.f32.mxu0 0.0
  %5043 = vmatmul.mubr.f32.gmra.mrb[0].mxu0 %v3925
  %v5044 = vpop.f32.mrb[0].mxu0
  %v5045 = vadd.f32 0.0, %v5044
  %v5046 = vpop.f32.mrb[0].mxu0
  %5047 = vmatprep.mubr.f32.mxu0 0.0
  %5048 = vmatmul.mubr.f32.gmra.mrb[0].mxu0 %v3926
  %v5049 = vpop.f32.mrb[0].mxu0
  %v5050 = vadd.f32 0.0, %v5049
  %v5051 = vpop.f32.mrb[0].mxu0
  %5052 = vmatprep.mubr.f32.mxu0 0.0
  %5053 = vmatmul.mubr.f32.gmra.mrb[0].mxu0 %v3927
  %v5054 = vpop.f32.mrb[0].mxu0
  %v5055 = vadd.f32 0.0, %v5054
  %v5056 = vpop.f32.mrb[0].mxu0
  %5057 = vmatprep.mubr.f32.mxu0 0.0
  %5058 = vmatmul.mubr.f32.gmra.mrb[0].mxu0 %v3928
  %v5059 = vpop.f32.mrb[0].mxu0
  %v5060 = vadd.f32 0.0, %v5059
  %v5061 = vpop.f32.mrb[0].mxu0
  %5062 = vmatprep.mubr.f32.mxu0 0.0
  %5063 = vmatmul.mubr.f32.gmra.mrb[0].mxu0 %v3929
  %v5064 = vpop.f32.mrb[0].mxu0
  %v5065 = vadd.f32 0.0, %v5064
  %v5066 = vpop.f32.mrb[0].mxu0
  %5067 = vmatprep.mubr.f32.mxu0 0.0
  %5068 = vmatmul.mubr.f32.gmra.mrb[0].mxu0 %v3930
  %v5069 = vpop.f32.mrb[0].mxu0
  %v5070 = vadd.f32 0.0, %v5069
  %v5071 = vpop.f32.mrb[0].mxu0
  %5072 = vmatprep.mubr.f32.mxu0 0.0
  %5073 = vmatmul.mubr.f32.gmra.mrb[0].mxu0 %v3931
  %v5074 = vpop.f32.mrb[0].mxu0
  %v5075 = vadd.f32 0.0, %v5074
  %v5076 = vpop.f32.mrb[0].mxu0
  %5077 = vmatprep.mubr.f32.mxu0 0.0
  %5078 = vmatmul.mubr.f32.gmra.mrb[0].mxu0 %v3932
  %v5079 = vpop.f32.mrb[0].mxu0
  %v5080 = vadd.f32 0.0, %v5079
  %v5081 = vpop.f32.mrb[0].mxu0
  %5082 = vmatprep.mubr.f32.mxu0 0.0
  %5083 = vmatmul.mubr.f32.gmra.mrb[0].mxu0 %v3933
  %v5084 = vpop.f32.mrb[0].mxu0
  %v5085 = vadd.f32 0.0, %v5084
  %v5086 = vpop.f32.mrb[0].mxu0
  %5087 = vmatprep.mubr.f32.mxu0 0.0
  %5088 = vmatmul.mubr.f32.gmra.mrb[0].mxu0 %v3934
  %v5089 = vpop.f32.mrb[0].mxu0
  %v5090 = vadd.f32 0.0, %v5089
  %v5091 = vpop.f32.mrb[0].mxu0
  %5092 = vmatprep.mubr.f32.mxu0 0.0
  %5093 = vmatmul.mubr.f32.gmra.mrb[0].mxu0 %v3935
  %v5094 = vpop.f32.mrb[0].mxu0
  %v5095 = vadd.f32 0.0, %v5094
  %v5096 = vpop.f32.mrb[0].mxu0
  %5097 = vmatprep.mubr.f32.mxu0 0.0
  %5098 = vmatmul.mubr.f32.gmra.mrb[0].mxu0 %v3936
  %v5099 = vpop.f32.mrb[0].mxu0
  %v5100 = vadd.f32 0.0, %v5099
  %v5101 = vpop.f32.mrb[0].mxu0
  %5102 = vmatprep.mubr.f32.mxu0 0.0
  %5103 = vmatmul.mubr.f32.gmra.mrb[0].mxu0 %v3937
  %v5104 = vpop.f32.mrb[0].mxu0
  %v5105 = vadd.f32 0.0, %v5104
  %v5106 = vpop.f32.mrb[0].mxu0
  %5107 = vmatprep.mubr.f32.mxu0 0.0
  %5108 = vmatmul.mubr.f32.gmra.mrb[0].mxu0 %v3938
  %v5109 = vpop.f32.mrb[0].mxu0
  %v5110 = vadd.f32 0.0, %v5109
  %v5111 = vpop.f32.mrb[0].mxu0
  %5112 = vmatprep.mubr.f32.mxu0 0.0
  %5113 = vmatmul.mubr.f32.gmra.mrb[0].mxu0 %v3939
  %v5114 = vpop.f32.mrb[0].mxu0
  %v5115 = vadd.f32 0.0, %v5114
  %v5116 = vpop.f32.mrb[0].mxu0
  %5117 = vmatprep.mubr.f32.mxu0 0.0
  %5118 = vmatmul.mubr.f32.gmra.mrb[0].mxu0 %v3940
  %v5119 = vpop.f32.mrb[0].mxu0
  %v5120 = vadd.f32 0.0, %v5119
  %v5121 = vpop.f32.mrb[0].mxu0
  %5122 = vmatprep.mubr.f32.mxu0 0.0
  %5123 = vmatmul.mubr.f32.gmra.mrb[0].mxu0 %v3941
  %v5124 = vpop.f32.mrb[0].mxu0
  %v5125 = vadd.f32 0.0, %v5124
  %v5126 = vpop.f32.mrb[0].mxu0
  %5127 = vmatprep.mubr.f32.mxu0 0.0
  %5128 = vmatmul.mubr.f32.gmra.mrb[0].mxu0 %v3942
  %v5129 = vpop.f32.mrb[0].mxu0
  %v5130 = vadd.f32 0.0, %v5129
  %v5131 = vpop.f32.mrb[0].mxu0
  %5132 = vmatprep.mubr.f32.mxu0 0.0
  %5133 = vmatmul.mubr.f32.gmra.mrb[0].mxu0 %v3943
  %v5134 = vpop.f32.mrb[0].mxu0
  %v5135 = vadd.f32 0.0, %v5134
  %v5136 = vpop.f32.mrb[0].mxu0
  %5137 = vmatprep.mubr.f32.mxu0 0.0
  %5138 = vmatmul.mubr.f32.gmra.mrb[0].mxu0 %v3944
  %v5139 = vpop.f32.mrb[0].mxu0
  %v5140 = vadd.f32 0.0, %v5139
  %v5141 = vpop.f32.mrb[0].mxu0
  %5142 = vmatprep.mubr.f32.mxu0 0.0
  %5143 = vmatmul.mubr.f32.gmra.mrb[0].mxu0 %v3945
  %v5144 = vpop.f32.mrb[0].mxu0
  %v5145 = vadd.f32 0.0, %v5144
  %v5146 = vpop.f32.mrb[0].mxu0
  %5147 = vmatprep.mubr.f32.mxu0 0.0
  %5148 = vmatmul.mubr.f32.gmra.mrb[0].mxu0 %v3946
  %v5149 = vpop.f32.mrb[0].mxu0
  %v5150 = vadd.f32 0.0, %v5149
  %v5151 = vpop.f32.mrb[0].mxu0
  %5152 = vmatprep.mubr.f32.mxu0 0.0
  %5153 = vmatmul.mubr.f32.gmra.mrb[0].mxu0 %v3947
  %v5154 = vpop.f32.mrb[0].mxu0
  %v5155 = vadd.f32 0.0, %v5154
  %v5156 = vpop.f32.mrb[0].mxu0
  %5157 = vmatprep.mubr.f32.mxu0 0.0
  %5158 = vmatmul.mubr.f32.gmra.mrb[0].mxu0 %v3952
  %v5159 = vpop.f32.mrb[0].mxu0
  %v5160 = vadd.f32 0.0, %v5159
  %v5161 = vpop.f32.mrb[0].mxu0
  %5162 = vmatprep.mubr.f32.mxu0 0.0
  %5163 = vmatmul.mubr.f32.gmra.mrb[0].mxu0 %v3953
  %v5164 = vpop.f32.mrb[0].mxu0
  %v5165 = vadd.f32 0.0, %v5164
  %v5166 = vpop.f32.mrb[0].mxu0
  %5167 = vmatprep.mubr.f32.mxu0 0.0
  %5168 = vmatmul.mubr.f32.gmra.mrb[0].mxu0 %v3954
  %v5169 = vpop.f32.mrb[0].mxu0
  %v5170 = vadd.f32 0.0, %v5169
  %v5171 = vpop.f32.mrb[0].mxu0
  %5172 = vmatprep.mubr.f32.mxu0 0.0
  %5173 = vmatmul.mubr.f32.gmra.mrb[0].mxu0 %v3955
  %v5174 = vpop.f32.mrb[0].mxu0
  %v5175 = vadd.f32 0.0, %v5174
  %v5176 = vpop.f32.mrb[0].mxu0
  %5177 = vmatprep.mubr.f32.mxu0 0.0
  %5178 = vmatmul.mubr.f32.gmra.mrb[0].mxu0 %v3956
  %v5179 = vpop.f32.mrb[0].mxu0
  %v5180 = vadd.f32 0.0, %v5179
  %v5181 = vpop.f32.mrb[0].mxu0
  %5182 = vmatprep.mubr.f32.mxu0 0.0
  %5183 = vmatmul.mubr.f32.gmra.mrb[0].mxu0 %v3957
  %v5184 = vpop.f32.mrb[0].mxu0
  %v5185 = vadd.f32 0.0, %v5184
  %v5186 = vpop.f32.mrb[0].mxu0
  %5187 = vmatprep.mubr.f32.mxu0 0.0
  %5188 = vmatmul.mubr.f32.gmra.mrb[0].mxu0 %v3958
  %v5189 = vpop.f32.mrb[0].mxu0
  %v5190 = vadd.f32 0.0, %v5189
  %v5191 = vpop.f32.mrb[0].mxu0
  %5192 = vmatprep.mubr.f32.mxu0 0.0
  %5193 = vmatmul.mubr.f32.gmra.mrb[0].mxu0 %v3959
  %v5194 = vpop.f32.mrb[0].mxu0
  %v5195 = vadd.f32 0.0, %v5194
  %v5196 = vpop.f32.mrb[0].mxu0
  %5197 = vmatprep.mubr.f32.mxu0 0.0
  %5198 = vmatmul.mubr.f32.gmra.mrb[0].mxu0 %v3960
  %v5199 = vpop.f32.mrb[0].mxu0
  %v5200 = vadd.f32 0.0, %v5199
  %v5201 = vpop.f32.mrb[0].mxu0
  %5202 = vmatprep.mubr.f32.mxu0 0.0
  %5203 = vmatmul.mubr.f32.gmra.mrb[0].mxu0 %v3961
  %v5204 = vpop.f32.mrb[0].mxu0
  %v5205 = vadd.f32 0.0, %v5204
  %v5206 = vpop.f32.mrb[0].mxu0
  %5207 = vmatprep.mubr.f32.mxu0 0.0
  %5208 = vmatmul.mubr.f32.gmra.mrb[0].mxu0 %v3962
  %v5209 = vpop.f32.mrb[0].mxu0
  %v5210 = vadd.f32 0.0, %v5209
  %v5211 = vpop.f32.mrb[0].mxu0
  %5212 = vmatprep.mubr.f32.mxu0 0.0
  %5213 = vmatmul.mubr.f32.gmra.mrb[0].mxu0 %v3963
  %v5214 = vpop.f32.mrb[0].mxu0
  %v5215 = vadd.f32 0.0, %v5214
  %v5216 = vpop.f32.mrb[0].mxu0
  %5217 = vmatprep.mubr.f32.mxu0 0.0
  %5218 = vmatmul.mubr.f32.gmra.mrb[0].mxu0 %v3964
  %v5219 = vpop.f32.mrb[0].mxu0
  %v5220 = vadd.f32 0.0, %v5219
  %v5221 = vpop.f32.mrb[0].mxu0
  %5222 = vmatprep.mubr.f32.mxu0 0.0
  %5223 = vmatmul.mubr.f32.gmra.mrb[0].mxu0 %v3965
  %v5224 = vpop.f32.mrb[0].mxu0
  %v5225 = vadd.f32 0.0, %v5224
  %v5226 = vpop.f32.mrb[0].mxu0
  %5227 = vmatprep.mubr.f32.mxu0 0.0
  %5228 = vmatmul.mubr.f32.gmra.mrb[0].mxu0 %v3966
  %v5229 = vpop.f32.mrb[0].mxu0
  %v5230 = vadd.f32 0.0, %v5229
  %v5231 = vpop.f32.mrb[0].mxu0
  %5232 = vmatprep.mubr.f32.mxu0 0.0
  %5233 = vmatmul.mubr.f32.gmra.mrb[0].mxu0 %v3967
  %v5234 = vpop.f32.mrb[0].mxu0
  %v5235 = vadd.f32 0.0, %v5234
  %v5236 = vpop.f32.mrb[0].mxu0
  %5237 = vmatprep.mubr.f32.mxu0 0.0
  %5238 = vmatmul.mubr.f32.gmra.mrb[0].mxu0 %v3968
  %v5239 = vpop.f32.mrb[0].mxu0
  %v5240 = vadd.f32 0.0, %v5239
  %v5241 = vpop.f32.mrb[0].mxu0
  %5242 = vmatprep.mubr.f32.mxu0 0.0
  %5243 = vmatmul.mubr.f32.gmra.mrb[0].mxu0 %v3969
  %v5244 = vpop.f32.mrb[0].mxu0
  %v5245 = vadd.f32 0.0, %v5244
  %v5246 = vpop.f32.mrb[0].mxu0
  %5247 = vmatprep.mubr.f32.mxu0 0.0
  %5248 = vmatmul.mubr.f32.gmra.mrb[0].mxu0 %v3970
  %v5249 = vpop.f32.mrb[0].mxu0
  %v5250 = vadd.f32 0.0, %v5249
  %v5251 = vpop.f32.mrb[0].mxu0
  %5252 = vmatprep.mubr.f32.mxu0 0.0
  %5253 = vmatmul.mubr.f32.gmra.mrb[0].mxu0 %v3971
  %v5254 = vpop.f32.mrb[0].mxu0
  %v5255 = vadd.f32 0.0, %v5254
  %v5256 = vpop.f32.mrb[0].mxu0
  %5257 = vmatprep.mubr.f32.mxu0 0.0
  %5258 = vmatmul.mubr.f32.gmra.mrb[0].mxu0 %v3972
  %v5259 = vpop.f32.mrb[0].mxu0
  %v5260 = vadd.f32 0.0, %v5259
  %v5261 = vpop.f32.mrb[0].mxu0
  %5262 = vmatprep.mubr.f32.mxu0 0.0
  %5263 = vmatmul.mubr.f32.gmra.mrb[0].mxu0 %v3973
  %v5264 = vpop.f32.mrb[0].mxu0
  %v5265 = vadd.f32 0.0, %v5264
  %v5266 = vpop.f32.mrb[0].mxu0
  %5267 = vmatprep.mubr.f32.mxu0 0.0
  %5268 = vmatmul.mubr.f32.gmra.mrb[0].mxu0 %v3974
  %v5269 = vpop.f32.mrb[0].mxu0
  %v5270 = vadd.f32 0.0, %v5269
  %v5271 = vpop.f32.mrb[0].mxu0
  %5272 = vmatprep.mubr.f32.mxu0 0.0
  %5273 = vmatmul.mubr.f32.gmra.mrb[0].mxu0 %v3975
  %v5274 = vpop.f32.mrb[0].mxu0
  %v5275 = vadd.f32 0.0, %v5274
  %v5276 = vpop.f32.mrb[0].mxu0
  %5277 = vmatprep.mubr.f32.mxu0 0.0
  %5278 = vmatmul.mubr.f32.gmra.mrb[0].mxu0 %v3976
  %v5279 = vpop.f32.mrb[0].mxu0
  %v5280 = vadd.f32 0.0, %v5279
  %v5281 = vpop.f32.mrb[0].mxu0
  %5282 = vmatprep.mubr.f32.mxu0 0.0
  %5283 = vmatmul.mubr.f32.gmra.mrb[0].mxu0 %v3977
  %v5284 = vpop.f32.mrb[0].mxu0
  %v5285 = vadd.f32 0.0, %v5284
  %v5286 = vpop.f32.mrb[0].mxu0
  %5287 = vmatprep.mubr.f32.mxu0 0.0
  %5288 = vmatmul.mubr.f32.gmra.mrb[0].mxu0 %v3978
  %v5289 = vpop.f32.mrb[0].mxu0
  %v5290 = vadd.f32 0.0, %v5289
  %v5291 = vpop.f32.mrb[0].mxu0
  %5292 = vmatprep.mubr.f32.mxu0 0.0
  %5293 = vmatmul.mubr.f32.gmra.mrb[0].mxu0 %v3979
  %v5294 = vpop.f32.mrb[0].mxu0
  %v5295 = vadd.f32 0.0, %v5294
  %v5296 = vpop.f32.mrb[0].mxu0
  %5297 = vmatprep.mubr.f32.mxu0 0.0
  %5298 = vmatmul.mubr.f32.gmra.mrb[0].mxu0 %v3980
  %v5299 = vpop.f32.mrb[0].mxu0
  %v5300 = vadd.f32 0.0, %v5299
  %v5301 = vpop.f32.mrb[0].mxu0
  %5302 = vmatprep.mubr.f32.mxu0 0.0
  %5303 = vmatmul.mubr.f32.gmra.mrb[0].mxu0 %v3981
  %v5304 = vpop.f32.mrb[0].mxu0
  %v5305 = vadd.f32 0.0, %v5304
  %v5306 = vpop.f32.mrb[0].mxu0
  %5307 = vmatprep.mubr.f32.mxu0 0.0
  %5308 = vmatmul.mubr.f32.gmra.mrb[0].mxu0 %v3982
  %v5309 = vpop.f32.mrb[0].mxu0
  %v5310 = vadd.f32 0.0, %v5309
  %v5311 = vpop.f32.mrb[0].mxu0
  %5312 = vmatprep.mubr.f32.mxu0 0.0
  %5313 = vmatmul.mubr.f32.gmra.mrb[0].mxu0 %v3983
  %v5314 = vpop.f32.mrb[0].mxu0
  %v5315 = vadd.f32 0.0, %v5314
  %v5316 = vpop.f32.mrb[0].mxu0
  %5317 = vdwg.mxu0
  %v5318 = vadd.f32 %v4852, %v5000
  %v5319 = vadd.f32 %v4853, %v5005
  %v5320 = vadd.f32 %v4854, %v5010
  %v5321 = vadd.f32 %v4855, %v5015
  %v5322 = vadd.f32 %v4856, %v5020
  %v5323 = vadd.f32 %v4857, %v5025
  %v5324 = vadd.f32 %v4858, %v5030
  %v5325 = vadd.f32 %v4859, %v5035
  %v5326 = vadd.f32 %v4860, %v5040
  %v5327 = vadd.f32 %v4861, %v5045
  %v5328 = vadd.f32 %v4862, %v5050
  %v5329 = vadd.f32 %v4863, %v5055
  %v5330 = vadd.f32 %v4864, %v5060
  %v5331 = vadd.f32 %v4865, %v5065
  %v5332 = vadd.f32 %v4866, %v5070
  %v5333 = vadd.f32 %v4867, %v5075
  %v5334 = vadd.f32 %v4868, %v5080
  %v5335 = vadd.f32 %v4869, %v5085
  %v5336 = vadd.f32 %v4870, %v5090
  %v5337 = vadd.f32 %v4871, %v5095
  %v5338 = vadd.f32 %v4872, %v5100
  %v5339 = vadd.f32 %v4873, %v5105
  %v5340 = vadd.f32 %v4874, %v5110
  %v5341 = vadd.f32 %v4875, %v5115
  %v5342 = vadd.f32 %v4876, %v5120
  %v5343 = vadd.f32 %v4877, %v5125
  %v5344 = vadd.f32 %v4878, %v5130
  %v5345 = vadd.f32 %v4879, %v5135
  %v5346 = vadd.f32 %v4880, %v5140
  %v5347 = vadd.f32 %v4881, %v5145
  %v5348 = vadd.f32 %v4882, %v5150
  %v5349 = vadd.f32 %v4883, %v5155
  %v5350 = vadd.f32 %v4884, %v5160
  %v5351 = vadd.f32 %v4885, %v5165
  %v5352 = vadd.f32 %v4886, %v5170
  %v5353 = vadd.f32 %v4887, %v5175
  %v5354 = vadd.f32 %v4888, %v5180
  %v5355 = vadd.f32 %v4889, %v5185
  %v5356 = vadd.f32 %v4890, %v5190
  %v5357 = vadd.f32 %v4891, %v5195
  %v5358 = vadd.f32 %v4892, %v5200
  %v5359 = vadd.f32 %v4893, %v5205
  %v5360 = vadd.f32 %v4894, %v5210
  %v5361 = vadd.f32 %v4895, %v5215
  %v5362 = vadd.f32 %v4896, %v5220
  %v5363 = vadd.f32 %v4897, %v5225
  %v5364 = vadd.f32 %v4898, %v5230
  %v5365 = vadd.f32 %v4899, %v5235
  %v5366 = vadd.f32 %v4900, %v5240
  %v5367 = vadd.f32 %v4901, %v5245
  %v5368 = vadd.f32 %v4902, %v5250
  %v5369 = vadd.f32 %v4903, %v5255
  %v5370 = vadd.f32 %v4904, %v5260
  %v5371 = vadd.f32 %v4905, %v5265
  %v5372 = vadd.f32 %v4906, %v5270
  %v5373 = vadd.f32 %v4907, %v5275
  %v5374 = vadd.f32 %v4908, %v5280
  %v5375 = vadd.f32 %v4909, %v5285
  %v5376 = vadd.f32 %v4910, %v5290
  %v5377 = vadd.f32 %v4911, %v5295
  %v5378 = vadd.f32 %v4912, %v5300
  %v5379 = vadd.f32 %v4913, %v5305
  %v5380 = vadd.f32 %v4914, %v5310
  %v5381 = vadd.f32 %v4915, %v5315
  %v5382 = vmax.f32 %v5318, 0.0
  %v5383 = vmax.f32 %v5319, 0.0
  %v5384 = vmax.f32 %v5320, 0.0
  %v5385 = vmax.f32 %v5321, 0.0
  %v5386 = vmax.f32 %v5322, 0.0
  %v5387 = vmax.f32 %v5323, 0.0
  %v5388 = vmax.f32 %v5324, 0.0
  %v5389 = vmax.f32 %v5325, 0.0
  %v5390 = vmax.f32 %v5326, 0.0
  %v5391 = vmax.f32 %v5327, 0.0
  %v5392 = vmax.f32 %v5328, 0.0
  %v5393 = vmax.f32 %v5329, 0.0
  %v5394 = vmax.f32 %v5330, 0.0
  %v5395 = vmax.f32 %v5331, 0.0
  %v5396 = vmax.f32 %v5332, 0.0
  %v5397 = vmax.f32 %v5333, 0.0
  %v5398 = vmax.f32 %v5334, 0.0
  %v5399 = vmax.f32 %v5335, 0.0
  %v5400 = vmax.f32 %v5336, 0.0
  %v5401 = vmax.f32 %v5337, 0.0
  %v5402 = vmax.f32 %v5338, 0.0
  %v5403 = vmax.f32 %v5339, 0.0
  %v5404 = vmax.f32 %v5340, 0.0
  %v5405 = vmax.f32 %v5341, 0.0
  %v5406 = vmax.f32 %v5342, 0.0
  %v5407 = vmax.f32 %v5343, 0.0
  %v5408 = vmax.f32 %v5344, 0.0
  %v5409 = vmax.f32 %v5345, 0.0
  %v5410 = vmax.f32 %v5346, 0.0
  %v5411 = vmax.f32 %v5347, 0.0
  %v5412 = vmax.f32 %v5348, 0.0
  %v5413 = vmax.f32 %v5349, 0.0
  %v5414 = vmax.f32 %v5350, 0.0
  %v5415 = vmax.f32 %v5351, 0.0
  %v5416 = vmax.f32 %v5352, 0.0
  %v5417 = vmax.f32 %v5353, 0.0
  %v5418 = vmax.f32 %v5354, 0.0
  %v5419 = vmax.f32 %v5355, 0.0
  %v5420 = vmax.f32 %v5356, 0.0
  %v5421 = vmax.f32 %v5357, 0.0
  %v5422 = vmax.f32 %v5358, 0.0
  %v5423 = vmax.f32 %v5359, 0.0
  %v5424 = vmax.f32 %v5360, 0.0
  %v5425 = vmax.f32 %v5361, 0.0
  %v5426 = vmax.f32 %v5362, 0.0
  %v5427 = vmax.f32 %v5363, 0.0
  %v5428 = vmax.f32 %v5364, 0.0
  %v5429 = vmax.f32 %v5365, 0.0
  %v5430 = vmax.f32 %v5366, 0.0
  %v5431 = vmax.f32 %v5367, 0.0
  %v5432 = vmax.f32 %v5368, 0.0
  %v5433 = vmax.f32 %v5369, 0.0
  %v5434 = vmax.f32 %v5370, 0.0
  %v5435 = vmax.f32 %v5371, 0.0
  %v5436 = vmax.f32 %v5372, 0.0
  %v5437 = vmax.f32 %v5373, 0.0
  %v5438 = vmax.f32 %v5374, 0.0
  %v5439 = vmax.f32 %v5375, 0.0
  %v5440 = vmax.f32 %v5376, 0.0
  %v5441 = vmax.f32 %v5377, 0.0
  %v5442 = vmax.f32 %v5378, 0.0
  %v5443 = vmax.f32 %v5379, 0.0
  %v5444 = vmax.f32 %v5380, 0.0
  %v5445 = vmax.f32 %v5381, 0.0
  %s5446 = scalar_lea.vmem [#allocation3], 24
  %vm5447 = vcmask 523264
  %5448 = vst.msk [vmem:[%s5446 + $0x1] sm:$0xff] %vm5447, %v5382
  %5449 = vst.msk [vmem:[%s5446 + $0x9] sm:$0xff] %vm5447, %v5383
  %5450 = vst.msk [vmem:[%s5446 + $0x19] sm:$0xff] %vm5447, %v5384
  %5451 = vst.msk [vmem:[%s5446 + $0x21] sm:$0xff] %vm5447, %v5385
  %5452 = vst.msk [vmem:[%s5446 + $0x31] sm:$0xff] %vm5447, %v5386
  %5453 = vst.msk [vmem:[%s5446 + $0x39] sm:$0xff] %vm5447, %v5387
  %5454 = vst.msk [vmem:[%s5446 + $0x49] sm:$0xff] %vm5447, %v5388
  %5455 = vst.msk [vmem:[%s5446 + $0x51] sm:$0xff] %vm5447, %v5389
  %5456 = vst.msk [vmem:[%s5446 + $0x61] sm:$0xff] %vm5447, %v5390
  %5457 = vst.msk [vmem:[%s5446 + $0x69] sm:$0xff] %vm5447, %v5391
  %5458 = vst.msk [vmem:[%s5446 + $0x79] sm:$0xff] %vm5447, %v5392
  %5459 = vst.msk [vmem:[%s5446 + $0x81] sm:$0xff] %vm5447, %v5393
  %5460 = vst.msk [vmem:[%s5446 + $0x91] sm:$0xff] %vm5447, %v5394
  %5461 = vst.msk [vmem:[%s5446 + $0x99] sm:$0xff] %vm5447, %v5395
  %5462 = vst.msk [vmem:[%s5446 + $0xa9] sm:$0xff] %vm5447, %v5396
  %5463 = vst.msk [vmem:[%s5446 + $0xb1] sm:$0xff] %vm5447, %v5397
  %5464 = vst.msk [vmem:[%s5446 + $0xc1] sm:$0xff] %vm5447, %v5398
  %5465 = vst.msk [vmem:[%s5446 + $0xc9] sm:$0xff] %vm5447, %v5399
  %5466 = vst.msk [vmem:[%s5446 + $0xd9] sm:$0xff] %vm5447, %v5400
  %5467 = vst.msk [vmem:[%s5446 + $0xe1] sm:$0xff] %vm5447, %v5401
  %5468 = vst.msk [vmem:[%s5446 + $0xf1] sm:$0xff] %vm5447, %v5402
  %5469 = vst.msk [vmem:[%s5446 + $0xf9] sm:$0xff] %vm5447, %v5403
  %5470 = vst.msk [vmem:[%s5446 + $0x109] sm:$0xff] %vm5447, %v5404
  %5471 = vst.msk [vmem:[%s5446 + $0x111] sm:$0xff] %vm5447, %v5405
  %5472 = vst.msk [vmem:[%s5446 + $0x121] sm:$0xff] %vm5447, %v5406
  %5473 = vst.msk [vmem:[%s5446 + $0x129] sm:$0xff] %vm5447, %v5407
  %5474 = vst.msk [vmem:[%s5446 + $0x139] sm:$0xff] %vm5447, %v5408
  %5475 = vst.msk [vmem:[%s5446 + $0x141] sm:$0xff] %vm5447, %v5409
  %5476 = vst.msk [vmem:[%s5446 + $0x151] sm:$0xff] %vm5447, %v5410
  %5477 = vst.msk [vmem:[%s5446 + $0x159] sm:$0xff] %vm5447, %v5411
  %5478 = vst.msk [vmem:[%s5446 + $0x169] sm:$0xff] %vm5447, %v5412
  %5479 = vst.msk [vmem:[%s5446 + $0x171] sm:$0xff] %vm5447, %v5413
  %5480 = vst.msk [vmem:[%s5446 + $0x1b1] sm:$0xff] %vm5447, %v5414
  %5481 = vst.msk [vmem:[%s5446 + $0x1b9] sm:$0xff] %vm5447, %v5415
  %5482 = vst.msk [vmem:[%s5446 + $0x1c9] sm:$0xff] %vm5447, %v5416
  %5483 = vst.msk [vmem:[%s5446 + $0x1d1] sm:$0xff] %vm5447, %v5417
  %5484 = vst.msk [vmem:[%s5446 + $0x1e1] sm:$0xff] %vm5447, %v5418
  %5485 = vst.msk [vmem:[%s5446 + $0x1e9] sm:$0xff] %vm5447, %v5419
  %5486 = vst.msk [vmem:[%s5446 + $0x1f9] sm:$0xff] %vm5447, %v5420
  %5487 = vst.msk [vmem:[%s5446 + $0x201] sm:$0xff] %vm5447, %v5421
  %5488 = vst.msk [vmem:[%s5446 + $0x211] sm:$0xff] %vm5447, %v5422
  %5489 = vst.msk [vmem:[%s5446 + $0x219] sm:$0xff] %vm5447, %v5423
  %5490 = vst.msk [vmem:[%s5446 + $0x229] sm:$0xff] %vm5447, %v5424
  %5491 = vst.msk [vmem:[%s5446 + $0x231] sm:$0xff] %vm5447, %v5425
  %5492 = vst.msk [vmem:[%s5446 + $0x241] sm:$0xff] %vm5447, %v5426
  %5493 = vst.msk [vmem:[%s5446 + $0x249] sm:$0xff] %vm5447, %v5427
  %5494 = vst.msk [vmem:[%s5446 + $0x259] sm:$0xff] %vm5447, %v5428
  %5495 = vst.msk [vmem:[%s5446 + $0x261] sm:$0xff] %vm5447, %v5429
  %5496 = vst.msk [vmem:[%s5446 + $0x271] sm:$0xff] %vm5447, %v5430
  %5497 = vst.msk [vmem:[%s5446 + $0x279] sm:$0xff] %vm5447, %v5431
  %5498 = vst.msk [vmem:[%s5446 + $0x289] sm:$0xff] %vm5447, %v5432
  %5499 = vst.msk [vmem:[%s5446 + $0x291] sm:$0xff] %vm5447, %v5433
  %5500 = vst.msk [vmem:[%s5446 + $0x2a1] sm:$0xff] %vm5447, %v5434
  %5501 = vst.msk [vmem:[%s5446 + $0x2a9] sm:$0xff] %vm5447, %v5435
  %5502 = vst.msk [vmem:[%s5446 + $0x2b9] sm:$0xff] %vm5447, %v5436
  %5503 = vst.msk [vmem:[%s5446 + $0x2c1] sm:$0xff] %vm5447, %v5437
  %5504 = vst.msk [vmem:[%s5446 + $0x2d1] sm:$0xff] %vm5447, %v5438
  %5505 = vst.msk [vmem:[%s5446 + $0x2d9] sm:$0xff] %vm5447, %v5439
  %5506 = vst.msk [vmem:[%s5446 + $0x2e9] sm:$0xff] %vm5447, %v5440
  %5507 = vst.msk [vmem:[%s5446 + $0x2f1] sm:$0xff] %vm5447, %v5441
  %5508 = vst.msk [vmem:[%s5446 + $0x301] sm:$0xff] %vm5447, %v5442
  %5509 = vst.msk [vmem:[%s5446 + $0x309] sm:$0xff] %vm5447, %v5443
  %5510 = vst.msk [vmem:[%s5446 + $0x319] sm:$0xff] %vm5447, %v5444
  %5511 = vst.msk [vmem:[%s5446 + $0x321] sm:$0xff] %vm5447, %v5445
  %5512 = vst.msk [vmem:[#allocation3 + $0x1] sm:$0xff] %vm5447, %v5412
  %5513 = vst.msk [vmem:[#allocation3 + $0x9] sm:$0xff] %vm5447, %v5413
  %5514 = vst.msk [vmem:[#allocation3 + $0x1b1] sm:$0xff] %vm5447, %v5444
  %5515 = vst.msk [vmem:[#allocation3 + $0x1b9] sm:$0xff] %vm5447, %v5445
  %s5516 = scalar_lea.vmem [#allocation3], 408
  %5517 = vst.msk [vmem:[%s5516 + $0x1] sm:$0xff] %vm5447, %v5382
  %5518 = vst.msk [vmem:[%s5516 + $0x9] sm:$0xff] %vm5447, %v5383
  %5519 = vst.msk [vmem:[%s5516 + $0x1b1] sm:$0xff] %vm5447, %v5414
  %5520 = vst.msk [vmem:[%s5516 + $0x1b9] sm:$0xff] %vm5447, %v5415
  %v5521 = vld [vmem:[#allocation3 + $0x10] sm:$0x1]
  %v5522 = vld [vmem:[#allocation3 + $0x28] sm:$0x1]
  %v5523 = vld [vmem:[#allocation3 + $0x40] sm:$0x1]
  %v5524 = vld [vmem:[#allocation3 + $0x58] sm:$0x1]
  %v5525 = vld [vmem:[#allocation3 + $0x70] sm:$0x1]
  %v5526 = vld [vmem:[#allocation3 + $0x88] sm:$0x1]
  %v5527 = vld [vmem:[#allocation3 + $0xa0] sm:$0x1]
  %v5528 = vld [vmem:[#allocation3 + $0xb8] sm:$0x1]
  %v5529 = vld [vmem:[#allocation3 + $0xd0] sm:$0x1]
  %v5530 = vld [vmem:[#allocation3 + $0xe8] sm:$0x1]
  %v5531 = vld [vmem:[#allocation3 + $0x100] sm:$0x1]
  %v5532 = vld [vmem:[#allocation3 + $0x118] sm:$0x1]
  %v5533 = vld [vmem:[#allocation3 + $0x130] sm:$0x1]
  %v5534 = vld [vmem:[#allocation3 + $0x148] sm:$0x1]
  %v5535 = vld [vmem:[#allocation3 + $0x160] sm:$0x1]
  %v5536 = vld [vmem:[#allocation3 + $0x178] sm:$0x1]
  %v5537 = vld [vmem:[#allocation3 + $0x190] sm:$0x1]
  %v5538 = vld [vmem:[#allocation3 + $0x1a8] sm:$0x1]
  %v5539 = vld [vmem:[#allocation3 + $0x1c0] sm:$0x1]
  %v5540 = vld [vmem:[#allocation3 + $0x1d8] sm:$0x1]
  %v5541 = vld [vmem:[#allocation3 + $0x1f0] sm:$0x1]
  %v5542 = vld [vmem:[#allocation3 + $0x208] sm:$0x1]
  %v5543 = vld [vmem:[#allocation3 + $0x220] sm:$0x1]
  %v5544 = vld [vmem:[#allocation3 + $0x238] sm:$0x1]
  %v5545 = vld [vmem:[#allocation3 + $0x250] sm:$0x1]
  %v5546 = vld [vmem:[#allocation3 + $0x268] sm:$0x1]
  %v5547 = vld [vmem:[#allocation3 + $0x280] sm:$0x1]
  %v5548 = vld [vmem:[#allocation3 + $0x298] sm:$0x1]
  %v5549 = vld [vmem:[#allocation3 + $0x2b0] sm:$0x1]
  %v5550 = vld [vmem:[#allocation3 + $0x2c8] sm:$0x1]
  %v5551 = vld [vmem:[#allocation3 + $0x2e0] sm:$0x1]
  %v5552 = vld [vmem:[#allocation3 + $0x2f8] sm:$0x1]
  %v5553 = vld [vmem:[#allocation3 + $0x310] sm:$0x1]
  %v5554 = vld [vmem:[#allocation3 + $0x328] sm:$0x1]
  %v5555 = vld [vmem:[#allocation3 + $0x340] sm:$0x1]
  %v5556 = vld [vmem:[#allocation3 + $0x358] sm:$0x1]
  %vm5557 = vcmask 516096
  %5558 = vst.msk [vmem:[#allocation3] sm:$0x1] %vm5557, %v5521
  %5559 = vst.msk [vmem:[#allocation3 + $0x18] sm:$0x1] %vm5557, %v5522
  %5560 = vst.msk [vmem:[#allocation3 + $0x30] sm:$0x1] %vm5557, %v5523
  %5561 = vst.msk [vmem:[#allocation3 + $0x48] sm:$0x1] %vm5557, %v5524
  %5562 = vst.msk [vmem:[#allocation3 + $0x60] sm:$0x1] %vm5557, %v5525
  %5563 = vst.msk [vmem:[#allocation3 + $0x78] sm:$0x1] %vm5557, %v5526
  %5564 = vst.msk [vmem:[#allocation3 + $0x90] sm:$0x1] %vm5557, %v5527
  %5565 = vst.msk [vmem:[#allocation3 + $0xa8] sm:$0x1] %vm5557, %v5528
  %5566 = vst.msk [vmem:[#allocation3 + $0xc0] sm:$0x1] %vm5557, %v5529
  %5567 = vst.msk [vmem:[#allocation3 + $0xd8] sm:$0x1] %vm5557, %v5530
  %5568 = vst.msk [vmem:[#allocation3 + $0xf0] sm:$0x1] %vm5557, %v5531
  %5569 = vst.msk [vmem:[#allocation3 + $0x108] sm:$0x1] %vm5557, %v5532
  %5570 = vst.msk [vmem:[#allocation3 + $0x120] sm:$0x1] %vm5557, %v5533
  %5571 = vst.msk [vmem:[#allocation3 + $0x138] sm:$0x1] %vm5557, %v5534
  %5572 = vst.msk [vmem:[#allocation3 + $0x150] sm:$0x1] %vm5557, %v5535
  %5573 = vst.msk [vmem:[#allocation3 + $0x168] sm:$0x1] %vm5557, %v5536
  %5574 = vst.msk [vmem:[#allocation3 + $0x180] sm:$0x1] %vm5557, %v5537
  %5575 = vst.msk [vmem:[#allocation3 + $0x198] sm:$0x1] %vm5557, %v5538
  %5576 = vst.msk [vmem:[#allocation3 + $0x1b0] sm:$0x1] %vm5557, %v5539
  %5577 = vst.msk [vmem:[#allocation3 + $0x1c8] sm:$0x1] %vm5557, %v5540
  %5578 = vst.msk [vmem:[#allocation3 + $0x1e0] sm:$0x1] %vm5557, %v5541
  %5579 = vst.msk [vmem:[#allocation3 + $0x1f8] sm:$0x1] %vm5557, %v5542
  %5580 = vst.msk [vmem:[#allocation3 + $0x210] sm:$0x1] %vm5557, %v5543
  %5581 = vst.msk [vmem:[#allocation3 + $0x228] sm:$0x1] %vm5557, %v5544
  %5582 = vst.msk [vmem:[#allocation3 + $0x240] sm:$0x1] %vm5557, %v5545
  %5583 = vst.msk [vmem:[#allocation3 + $0x258] sm:$0x1] %vm5557, %v5546
  %5584 = vst.msk [vmem:[#allocation3 + $0x270] sm:$0x1] %vm5557, %v5547
  %5585 = vst.msk [vmem:[#allocation3 + $0x288] sm:$0x1] %vm5557, %v5548
  %5586 = vst.msk [vmem:[#allocation3 + $0x2a0] sm:$0x1] %vm5557, %v5549
  %5587 = vst.msk [vmem:[#allocation3 + $0x2b8] sm:$0x1] %vm5557, %v5550
  %5588 = vst.msk [vmem:[#allocation3 + $0x2d0] sm:$0x1] %vm5557, %v5551
  %5589 = vst.msk [vmem:[#allocation3 + $0x2e8] sm:$0x1] %vm5557, %v5552
  %5590 = vst.msk [vmem:[#allocation3 + $0x300] sm:$0x1] %vm5557, %v5553
  %5591 = vst.msk [vmem:[#allocation3 + $0x318] sm:$0x1] %vm5557, %v5554
  %5592 = vst.msk [vmem:[#allocation3 + $0x330] sm:$0x1] %vm5557, %v5555
  %5593 = vst.msk [vmem:[#allocation3 + $0x348] sm:$0x1] %vm5557, %v5556
  %v5594 = vld [vmem:[#allocation3 + $0x1] sm:$0x1]
  %v5595 = vld [vmem:[#allocation3 + $0x19] sm:$0x1]
  %v5596 = vld [vmem:[#allocation3 + $0x31] sm:$0x1]
  %v5597 = vld [vmem:[#allocation3 + $0x49] sm:$0x1]
  %v5598 = vld [vmem:[#allocation3 + $0x61] sm:$0x1]
  %v5599 = vld [vmem:[#allocation3 + $0x79] sm:$0x1]
  %v5600 = vld [vmem:[#allocation3 + $0x91] sm:$0x1]
  %v5601 = vld [vmem:[#allocation3 + $0xa9] sm:$0x1]
  %v5602 = vld [vmem:[#allocation3 + $0xc1] sm:$0x1]
  %v5603 = vld [vmem:[#allocation3 + $0xd9] sm:$0x1]
  %v5604 = vld [vmem:[#allocation3 + $0xf1] sm:$0x1]
  %v5605 = vld [vmem:[#allocation3 + $0x109] sm:$0x1]
  %v5606 = vld [vmem:[#allocation3 + $0x121] sm:$0x1]
  %v5607 = vld [vmem:[#allocation3 + $0x139] sm:$0x1]
  %v5608 = vld [vmem:[#allocation3 + $0x151] sm:$0x1]
  %v5609 = vld [vmem:[#allocation3 + $0x169] sm:$0x1]
  %v5610 = vld [vmem:[#allocation3 + $0x181] sm:$0x1]
  %v5611 = vld [vmem:[#allocation3 + $0x199] sm:$0x1]
  %v5612 = vld [vmem:[#allocation3 + $0x1b1] sm:$0x1]
  %v5613 = vld [vmem:[#allocation3 + $0x1c9] sm:$0x1]
  %v5614 = vld [vmem:[#allocation3 + $0x1e1] sm:$0x1]
  %v5615 = vld [vmem:[#allocation3 + $0x1f9] sm:$0x1]
  %v5616 = vld [vmem:[#allocation3 + $0x211] sm:$0x1]
  %v5617 = vld [vmem:[#allocation3 + $0x229] sm:$0x1]
  %v5618 = vld [vmem:[#allocation3 + $0x241] sm:$0x1]
  %v5619 = vld [vmem:[#allocation3 + $0x259] sm:$0x1]
  %v5620 = vld [vmem:[#allocation3 + $0x271] sm:$0x1]
  %v5621 = vld [vmem:[#allocation3 + $0x289] sm:$0x1]
  %v5622 = vld [vmem:[#allocation3 + $0x2a1] sm:$0x1]
  %v5623 = vld [vmem:[#allocation3 + $0x2b9] sm:$0x1]
  %v5624 = vld [vmem:[#allocation3 + $0x2d1] sm:$0x1]
  %v5625 = vld [vmem:[#allocation3 + $0x2e9] sm:$0x1]
  %v5626 = vld [vmem:[#allocation3 + $0x301] sm:$0x1]
  %v5627 = vld [vmem:[#allocation3 + $0x319] sm:$0x1]
  %v5628 = vld [vmem:[#allocation3 + $0x331] sm:$0x1]
  %v5629 = vld [vmem:[#allocation3 + $0x349] sm:$0x1]
  %5630 = vst.msk [vmem:[#allocation3 + $0x11] sm:$0x1] %vm5557, %v5594
  %5631 = vst.msk [vmem:[#allocation3 + $0x29] sm:$0x1] %vm5557, %v5595
  %5632 = vst.msk [vmem:[#allocation3 + $0x41] sm:$0x1] %vm5557, %v5596
  %5633 = vst.msk [vmem:[#allocation3 + $0x59] sm:$0x1] %vm5557, %v5597
  %5634 = vst.msk [vmem:[#allocation3 + $0x71] sm:$0x1] %vm5557, %v5598
  %5635 = vst.msk [vmem:[#allocation3 + $0x89] sm:$0x1] %vm5557, %v5599
  %5636 = vst.msk [vmem:[#allocation3 + $0xa1] sm:$0x1] %vm5557, %v5600
  %5637 = vst.msk [vmem:[#allocation3 + $0xb9] sm:$0x1] %vm5557, %v5601
  %5638 = vst.msk [vmem:[#allocation3 + $0xd1] sm:$0x1] %vm5557, %v5602
  %5639 = vst.msk [vmem:[#allocation3 + $0xe9] sm:$0x1] %vm5557, %v5603
  %5640 = vst.msk [vmem:[#allocation3 + $0x101] sm:$0x1] %vm5557, %v5604
  %5641 = vst.msk [vmem:[#allocation3 + $0x119] sm:$0x1] %vm5557, %v5605
  %5642 = vst.msk [vmem:[#allocation3 + $0x131] sm:$0x1] %vm5557, %v5606
  %5643 = vst.msk [vmem:[#allocation3 + $0x149] sm:$0x1] %vm5557, %v5607
  %5644 = vst.msk [vmem:[#allocation3 + $0x161] sm:$0x1] %vm5557, %v5608
  %5645 = vst.msk [vmem:[#allocation3 + $0x179] sm:$0x1] %vm5557, %v5609
  %5646 = vst.msk [vmem:[#allocation3 + $0x191] sm:$0x1] %vm5557, %v5610
  %5647 = vst.msk [vmem:[#allocation3 + $0x1a9] sm:$0x1] %vm5557, %v5611
  %5648 = vst.msk [vmem:[#allocation3 + $0x1c1] sm:$0x1] %vm5557, %v5612
  %5649 = vst.msk [vmem:[#allocation3 + $0x1d9] sm:$0x1] %vm5557, %v5613
  %5650 = vst.msk [vmem:[#allocation3 + $0x1f1] sm:$0x1] %vm5557, %v5614
  %5651 = vst.msk [vmem:[#allocation3 + $0x209] sm:$0x1] %vm5557, %v5615
  %5652 = vst.msk [vmem:[#allocation3 + $0x221] sm:$0x1] %vm5557, %v5616
  %5653 = vst.msk [vmem:[#allocation3 + $0x239] sm:$0x1] %vm5557, %v5617
  %5654 = vst.msk [vmem:[#allocation3 + $0x251] sm:$0x1] %vm5557, %v5618
  %5655 = vst.msk [vmem:[#allocation3 + $0x269] sm:$0x1] %vm5557, %v5619
  %5656 = vst.msk [vmem:[#allocation3 + $0x281] sm:$0x1] %vm5557, %v5620
  %5657 = vst.msk [vmem:[#allocation3 + $0x299] sm:$0x1] %vm5557, %v5621
  %5658 = vst.msk [vmem:[#allocation3 + $0x2b1] sm:$0x1] %vm5557, %v5622
  %5659 = vst.msk [vmem:[#allocation3 + $0x2c9] sm:$0x1] %vm5557, %v5623
  %5660 = vst.msk [vmem:[#allocation3 + $0x2e1] sm:$0x1] %vm5557, %v5624
  %5661 = vst.msk [vmem:[#allocation3 + $0x2f9] sm:$0x1] %vm5557, %v5625
  %5662 = vst.msk [vmem:[#allocation3 + $0x311] sm:$0x1] %vm5557, %v5626
  %5663 = vst.msk [vmem:[#allocation3 + $0x329] sm:$0x1] %vm5557, %v5627
  %5664 = vst.msk [vmem:[#allocation3 + $0x341] sm:$0x1] %vm5557, %v5628
  %5665 = vst.msk [vmem:[#allocation3 + $0x359] sm:$0x1] %vm5557, %v5629
  %v5666 = vld [vmem:[#allocation3] sm:$0xff]
  %v5667 = vld [vmem:[#allocation3 + $0x8] sm:$0xff]
  %v5668 = vld [vmem:[#allocation3 + $0x18] sm:$0xff]
  %v5669 = vld [vmem:[#allocation3 + $0x20] sm:$0xff]
  %v5670 = vld [vmem:[#allocation3 + $0x30] sm:$0xff]
  %v5671 = vld [vmem:[#allocation3 + $0x38] sm:$0xff]
  %v5672 = vld [vmem:[#allocation3 + $0x48] sm:$0xff]
  %v5673 = vld [vmem:[#allocation3 + $0x50] sm:$0xff]
  %v5674 = vld [vmem:[#allocation3 + $0x60] sm:$0xff]
  %v5675 = vld [vmem:[#allocation3 + $0x68] sm:$0xff]
  %v5676 = vld [vmem:[#allocation3 + $0x78] sm:$0xff]
  %v5677 = vld [vmem:[#allocation3 + $0x80] sm:$0xff]
  %v5678 = vld [vmem:[#allocation3 + $0x90] sm:$0xff]
  %v5679 = vld [vmem:[#allocation3 + $0x98] sm:$0xff]
  %v5680 = vld [vmem:[#allocation3 + $0xa8] sm:$0xff]
  %v5681 = vld [vmem:[#allocation3 + $0xb0] sm:$0xff]
  %v5682 = vld [vmem:[#allocation3 + $0xc0] sm:$0xff]
  %v5683 = vld [vmem:[#allocation3 + $0xc8] sm:$0xff]
  %v5684 = vld [vmem:[#allocation3 + $0xd8] sm:$0xff]
  %v5685 = vld [vmem:[#allocation3 + $0xe0] sm:$0xff]
  %v5686 = vld [vmem:[#allocation3 + $0xf0] sm:$0xff]
  %v5687 = vld [vmem:[#allocation3 + $0xf8] sm:$0xff]
  %v5688 = vld [vmem:[#allocation3 + $0x108] sm:$0xff]
  %v5689 = vld [vmem:[#allocation3 + $0x110] sm:$0xff]
  %v5690 = vld [vmem:[#allocation3 + $0x120] sm:$0xff]
  %v5691 = vld [vmem:[#allocation3 + $0x128] sm:$0xff]
  %v5692 = vld [vmem:[#allocation3 + $0x138] sm:$0xff]
  %v5693 = vld [vmem:[#allocation3 + $0x140] sm:$0xff]
  %v5694 = vld [vmem:[#allocation3 + $0x150] sm:$0xff]
  %v5695 = vld [vmem:[#allocation3 + $0x158] sm:$0xff]
  %v5696 = vld [vmem:[#allocation3 + $0x168] sm:$0xff]
  %v5697 = vld [vmem:[#allocation3 + $0x170] sm:$0xff]
  %v5698 = vld [vmem:[#allocation3 + $0x180] sm:$0xff]
  %v5699 = vld [vmem:[#allocation3 + $0x188] sm:$0xff]
  %v5700 = vld [vmem:[#allocation3 + $0x198] sm:$0xff]
  %v5701 = vld [vmem:[#allocation3 + $0x1a0] sm:$0xff]
  %v5702 = vld [vmem:[#allocation3 + $0x1b0] sm:$0xff]
  %v5703 = vld [vmem:[#allocation3 + $0x1b8] sm:$0xff]
  %v5704 = vld [vmem:[#allocation3 + $0x1c8] sm:$0xff]
  %v5705 = vld [vmem:[#allocation3 + $0x1d0] sm:$0xff]
  %v5706 = vld [vmem:[#allocation3 + $0x1e0] sm:$0xff]
  %v5707 = vld [vmem:[#allocation3 + $0x1e8] sm:$0xff]
  %v5708 = vld [vmem:[#allocation3 + $0x1f8] sm:$0xff]
  %v5709 = vld [vmem:[#allocation3 + $0x200] sm:$0xff]
  %v5710 = vld [vmem:[#allocation3 + $0x210] sm:$0xff]
  %v5711 = vld [vmem:[#allocation3 + $0x218] sm:$0xff]
  %v5712 = vld [vmem:[#allocation3 + $0x228] sm:$0xff]
  %v5713 = vld [vmem:[#allocation3 + $0x230] sm:$0xff]
  %v5714 = vld [vmem:[#allocation3 + $0x240] sm:$0xff]
  %v5715 = vld [vmem:[#allocation3 + $0x248] sm:$0xff]
  %v5716 = vld [vmem:[#allocation3 + $0x258] sm:$0xff]
  %v5717 = vld [vmem:[#allocation3 + $0x260] sm:$0xff]
  %v5718 = vld [vmem:[#allocation3 + $0x270] sm:$0xff]
  %v5719 = vld [vmem:[#allocation3 + $0x278] sm:$0xff]
  %v5720 = vld [vmem:[#allocation3 + $0x288] sm:$0xff]
  %v5721 = vld [vmem:[#allocation3 + $0x290] sm:$0xff]
  %v5722 = vld [vmem:[#allocation3 + $0x2a0] sm:$0xff]
  %v5723 = vld [vmem:[#allocation3 + $0x2a8] sm:$0xff]
  %v5724 = vld [vmem:[#allocation3 + $0x2b8] sm:$0xff]
  %v5725 = vld [vmem:[#allocation3 + $0x2c0] sm:$0xff]
  %v5726 = vld [vmem:[#allocation3 + $0x2d0] sm:$0xff]
  %v5727 = vld [vmem:[#allocation3 + $0x2d8] sm:$0xff]
  %v5728 = vld [vmem:[#allocation3 + $0x2e8] sm:$0xff]
  %v5729 = vld [vmem:[#allocation3 + $0x2f0] sm:$0xff]
  %v5730 = vld [vmem:[#allocation3 + $0x300] sm:$0xff]
  %v5731 = vld [vmem:[#allocation3 + $0x308] sm:$0xff]
  %v5732 = vld [vmem:[#allocation3 + $0x318] sm:$0xff]
  %v5733 = vld [vmem:[#allocation3 + $0x320] sm:$0xff]
  %v5734 = vld [vmem:[#allocation3 + $0x330] sm:$0xff]
  %v5735 = vld [vmem:[#allocation3 + $0x338] sm:$0xff]
  %v5736 = vld [vmem:[#allocation3 + $0x348] sm:$0xff]
  %v5737 = vld [vmem:[#allocation3 + $0x350] sm:$0xff]
  %v5738 = vld [vmem:[#allocation3 + $0x1] sm:$0xff]
  %v5739 = vld [vmem:[#allocation3 + $0x9] sm:$0xff]
  %v5740 = vld [vmem:[#allocation3 + $0x19] sm:$0xff]
  %v5741 = vld [vmem:[#allocation3 + $0x21] sm:$0xff]
  %v5742 = vld [vmem:[#allocation3 + $0x31] sm:$0xff]
  %v5743 = vld [vmem:[#allocation3 + $0x39] sm:$0xff]
  %v5744 = vld [vmem:[#allocation3 + $0x49] sm:$0xff]
  %v5745 = vld [vmem:[#allocation3 + $0x51] sm:$0xff]
  %v5746 = vld [vmem:[#allocation3 + $0x61] sm:$0xff]
  %v5747 = vld [vmem:[#allocation3 + $0x69] sm:$0xff]
  %v5748 = vld [vmem:[#allocation3 + $0x79] sm:$0xff]
  %v5749 = vld [vmem:[#allocation3 + $0x81] sm:$0xff]
  %v5750 = vld [vmem:[#allocation3 + $0x91] sm:$0xff]
  %v5751 = vld [vmem:[#allocation3 + $0x99] sm:$0xff]
  %v5752 = vld [vmem:[#allocation3 + $0xa9] sm:$0xff]
  %v5753 = vld [vmem:[#allocation3 + $0xb1] sm:$0xff]
  %v5754 = vld [vmem:[#allocation3 + $0xc1] sm:$0xff]
  %v5755 = vld [vmem:[#allocation3 + $0xc9] sm:$0xff]
  %v5756 = vld [vmem:[#allocation3 + $0xd9] sm:$0xff]
  %v5757 = vld [vmem:[#allocation3 + $0xe1] sm:$0xff]
  %v5758 = vld [vmem:[#allocation3 + $0xf1] sm:$0xff]
  %v5759 = vld [vmem:[#allocation3 + $0xf9] sm:$0xff]
  %v5760 = vld [vmem:[#allocation3 + $0x109] sm:$0xff]
  %v5761 = vld [vmem:[#allocation3 + $0x111] sm:$0xff]
  %v5762 = vld [vmem:[#allocation3 + $0x121] sm:$0xff]
  %v5763 = vld [vmem:[#allocation3 + $0x129] sm:$0xff]
  %v5764 = vld [vmem:[#allocation3 + $0x139] sm:$0xff]
  %v5765 = vld [vmem:[#allocation3 + $0x141] sm:$0xff]
  %v5766 = vld [vmem:[#allocation3 + $0x151] sm:$0xff]
  %v5767 = vld [vmem:[#allocation3 + $0x159] sm:$0xff]
  %v5768 = vld [vmem:[#allocation3 + $0x169] sm:$0xff]
  %v5769 = vld [vmem:[#allocation3 + $0x171] sm:$0xff]
  %v5770 = vld [vmem:[#allocation3 + $0x181] sm:$0xff]
  %v5771 = vld [vmem:[#allocation3 + $0x189] sm:$0xff]
  %v5772 = vld [vmem:[#allocation3 + $0x199] sm:$0xff]
  %v5773 = vld [vmem:[#allocation3 + $0x1a1] sm:$0xff]
  %v5774 = vld [vmem:[#allocation3 + $0x1b1] sm:$0xff]
  %v5775 = vld [vmem:[#allocation3 + $0x1b9] sm:$0xff]
  %v5776 = vld [vmem:[#allocation3 + $0x1c9] sm:$0xff]
  %v5777 = vld [vmem:[#allocation3 + $0x1d1] sm:$0xff]
  %v5778 = vld [vmem:[#allocation3 + $0x1e1] sm:$0xff]
  %v5779 = vld [vmem:[#allocation3 + $0x1e9] sm:$0xff]
  %v5780 = vld [vmem:[#allocation3 + $0x1f9] sm:$0xff]
  %v5781 = vld [vmem:[#allocation3 + $0x201] sm:$0xff]
  %v5782 = vld [vmem:[#allocation3 + $0x211] sm:$0xff]
  %v5783 = vld [vmem:[#allocation3 + $0x219] sm:$0xff]
  %v5784 = vld [vmem:[#allocation3 + $0x229] sm:$0xff]
  %v5785 = vld [vmem:[#allocation3 + $0x231] sm:$0xff]
  %v5786 = vld [vmem:[#allocation3 + $0x241] sm:$0xff]
  %v5787 = vld [vmem:[#allocation3 + $0x249] sm:$0xff]
  %v5788 = vld [vmem:[#allocation3 + $0x259] sm:$0xff]
  %v5789 = vld [vmem:[#allocation3 + $0x261] sm:$0xff]
  %v5790 = vld [vmem:[#allocation3 + $0x271] sm:$0xff]
  %v5791 = vld [vmem:[#allocation3 + $0x279] sm:$0xff]
  %v5792 = vld [vmem:[#allocation3 + $0x289] sm:$0xff]
  %v5793 = vld [vmem:[#allocation3 + $0x291] sm:$0xff]
  %v5794 = vld [vmem:[#allocation3 + $0x2a1] sm:$0xff]
  %v5795 = vld [vmem:[#allocation3 + $0x2a9] sm:$0xff]
  %v5796 = vld [vmem:[#allocation3 + $0x2b9] sm:$0xff]
  %v5797 = vld [vmem:[#allocation3 + $0x2c1] sm:$0xff]
  %v5798 = vld [vmem:[#allocation3 + $0x2d1] sm:$0xff]
  %v5799 = vld [vmem:[#allocation3 + $0x2d9] sm:$0xff]
  %v5800 = vld [vmem:[#allocation3 + $0x2e9] sm:$0xff]
  %v5801 = vld [vmem:[#allocation3 + $0x2f1] sm:$0xff]
  %v5802 = vld [vmem:[#allocation3 + $0x301] sm:$0xff]
  %v5803 = vld [vmem:[#allocation3 + $0x309] sm:$0xff]
  %v5804 = vld [vmem:[#allocation3 + $0x319] sm:$0xff]
  %v5805 = vld [vmem:[#allocation3 + $0x321] sm:$0xff]
  %v5806 = vld [vmem:[#allocation3 + $0x331] sm:$0xff]
  %v5807 = vld [vmem:[#allocation3 + $0x339] sm:$0xff]
  %v5808 = vld [vmem:[#allocation3 + $0x349] sm:$0xff]
  %v5809 = vld [vmem:[#allocation3 + $0x351] sm:$0xff]
  %v5810 = vld [vmem:[#allocation3 + $0x2] sm:$0xff]
  %v5811 = vld [vmem:[#allocation3 + $0xa] sm:$0xff]
  %v5812 = vld [vmem:[#allocation3 + $0x1a] sm:$0xff]
  %v5813 = vld [vmem:[#allocation3 + $0x22] sm:$0xff]
  %v5814 = vld [vmem:[#allocation3 + $0x32] sm:$0xff]
  %v5815 = vld [vmem:[#allocation3 + $0x3a] sm:$0xff]
  %v5816 = vld [vmem:[#allocation3 + $0x4a] sm:$0xff]
  %v5817 = vld [vmem:[#allocation3 + $0x52] sm:$0xff]
  %v5818 = vld [vmem:[#allocation3 + $0x62] sm:$0xff]
  %v5819 = vld [vmem:[#allocation3 + $0x6a] sm:$0xff]
  %v5820 = vld [vmem:[#allocation3 + $0x7a] sm:$0xff]
  %v5821 = vld [vmem:[#allocation3 + $0x82] sm:$0xff]
  %v5822 = vld [vmem:[#allocation3 + $0x92] sm:$0xff]
  %v5823 = vld [vmem:[#allocation3 + $0x9a] sm:$0xff]
  %v5824 = vld [vmem:[#allocation3 + $0xaa] sm:$0xff]
  %v5825 = vld [vmem:[#allocation3 + $0xb2] sm:$0xff]
  %v5826 = vld [vmem:[#allocation3 + $0xc2] sm:$0xff]
  %v5827 = vld [vmem:[#allocation3 + $0xca] sm:$0xff]
  %v5828 = vld [vmem:[#allocation3 + $0xda] sm:$0xff]
  %v5829 = vld [vmem:[#allocation3 + $0xe2] sm:$0xff]
  %v5830 = vld [vmem:[#allocation3 + $0xf2] sm:$0xff]
  %v5831 = vld [vmem:[#allocation3 + $0xfa] sm:$0xff]
  %v5832 = vld [vmem:[#allocation3 + $0x10a] sm:$0xff]
  %v5833 = vld [vmem:[#allocation3 + $0x112] sm:$0xff]
  %v5834 = vld [vmem:[#allocation3 + $0x122] sm:$0xff]
  %v5835 = vld [vmem:[#allocation3 + $0x12a] sm:$0xff]
  %v5836 = vld [vmem:[#allocation3 + $0x13a] sm:$0xff]
  %v5837 = vld [vmem:[#allocation3 + $0x142] sm:$0xff]
  %v5838 = vld [vmem:[#allocation3 + $0x152] sm:$0xff]
  %v5839 = vld [vmem:[#allocation3 + $0x15a] sm:$0xff]
  %v5840 = vld [vmem:[#allocation3 + $0x16a] sm:$0xff]
  %v5841 = vld [vmem:[#allocation3 + $0x172] sm:$0xff]
  %v5842 = vld [vmem:[#allocation3 + $0x182] sm:$0xff]
  %v5843 = vld [vmem:[#allocation3 + $0x18a] sm:$0xff]
  %v5844 = vld [vmem:[#allocation3 + $0x19a] sm:$0xff]
  %v5845 = vld [vmem:[#allocation3 + $0x1a2] sm:$0xff]
  %v5846 = vld [vmem:[#allocation3 + $0x1b2] sm:$0xff]
  %v5847 = vld [vmem:[#allocation3 + $0x1ba] sm:$0xff]
  %v5848 = vld [vmem:[#allocation3 + $0x1ca] sm:$0xff]
  %v5849 = vld [vmem:[#allocation3 + $0x1d2] sm:$0xff]
  %v5850 = vld [vmem:[#allocation3 + $0x1e2] sm:$0xff]
  %v5851 = vld [vmem:[#allocation3 + $0x1ea] sm:$0xff]
  %v5852 = vld [vmem:[#allocation3 + $0x1fa] sm:$0xff]
  %v5853 = vld [vmem:[#allocation3 + $0x202] sm:$0xff]
  %v5854 = vld [vmem:[#allocation3 + $0x212] sm:$0xff]
  %v5855 = vld [vmem:[#allocation3 + $0x21a] sm:$0xff]
  %v5856 = vld [vmem:[#allocation3 + $0x22a] sm:$0xff]
  %v5857 = vld [vmem:[#allocation3 + $0x232] sm:$0xff]
  %v5858 = vld [vmem:[#allocation3 + $0x242] sm:$0xff]
  %v5859 = vld [vmem:[#allocation3 + $0x24a] sm:$0xff]
  %v5860 = vld [vmem:[#allocation3 + $0x25a] sm:$0xff]
  %v5861 = vld [vmem:[#allocation3 + $0x262] sm:$0xff]
  %v5862 = vld [vmem:[#allocation3 + $0x272] sm:$0xff]
  %v5863 = vld [vmem:[#allocation3 + $0x27a] sm:$0xff]
  %v5864 = vld [vmem:[#allocation3 + $0x28a] sm:$0xff]
  %v5865 = vld [vmem:[#allocation3 + $0x292] sm:$0xff]
  %v5866 = vld [vmem:[#allocation3 + $0x2a2] sm:$0xff]
  %v5867 = vld [vmem:[#allocation3 + $0x2aa] sm:$0xff]
  %v5868 = vld [vmem:[#allocation3 + $0x2ba] sm:$0xff]
  %v5869 = vld [vmem:[#allocation3 + $0x2c2] sm:$0xff]
  %v5870 = vld [vmem:[#allocation3 + $0x2d2] sm:$0xff]
  %v5871 = vld [vmem:[#allocation3 + $0x2da] sm:$0xff]
  %v5872 = vld [vmem:[#allocation3 + $0x2ea] sm:$0xff]
  %v5873 = vld [vmem:[#allocation3 + $0x2f2] sm:$0xff]
  %v5874 = vld [vmem:[#allocation3 + $0x302] sm:$0xff]
  %v5875 = vld [vmem:[#allocation3 + $0x30a] sm:$0xff]
  %v5876 = vld [vmem:[#allocation3 + $0x31a] sm:$0xff]
  %v5877 = vld [vmem:[#allocation3 + $0x322] sm:$0xff]
  %v5878 = vld [vmem:[#allocation3 + $0x332] sm:$0xff]
  %v5879 = vld [vmem:[#allocation3 + $0x33a] sm:$0xff]
  %v5880 = vld [vmem:[#allocation3 + $0x34a] sm:$0xff]
  %v5881 = vld [vmem:[#allocation3 + $0x352] sm:$0xff]
  %5946 = vrot.lane.b32.xlu0 %v5668, 64
  %v5947 = vpop.permute.xlu0 %5946
  %5948 = vrot.lane.b32.xlu0 %v5669, 64
  %v5949 = vpop.permute.xlu0 %5948
  %5950 = vrot.lane.b32.xlu0 %v5670, 64
  %v5951 = vpop.permute.xlu0 %5950
  %5952 = vrot.lane.b32.xlu0 %v5671, 64
  %v5953 = vpop.permute.xlu0 %5952
  %5954 = vrot.lane.b32.xlu0 %v5672, 64
  %v5955 = vpop.permute.xlu0 %5954
  %5956 = vrot.lane.b32.xlu0 %v5673, 64
  %v5957 = vpop.permute.xlu0 %5956
  %5958 = vrot.lane.b32.xlu0 %v5674, 64
  %v5959 = vpop.permute.xlu0 %5958
  %5960 = vrot.lane.b32.xlu0 %v5675, 64
  %v5961 = vpop.permute.xlu0 %5960
  %5962 = vrot.lane.b32.xlu0 %v5676, 64
  %v5963 = vpop.permute.xlu0 %5962
  %5964 = vrot.lane.b32.xlu0 %v5677, 64
  %v5965 = vpop.permute.xlu0 %5964
  %5966 = vrot.lane.b32.xlu0 %v5678, 64
  %v5967 = vpop.permute.xlu0 %5966
  %5968 = vrot.lane.b32.xlu0 %v5679, 64
  %v5969 = vpop.permute.xlu0 %5968
  %5970 = vrot.lane.b32.xlu0 %v5680, 64
  %v5971 = vpop.permute.xlu0 %5970
  %5972 = vrot.lane.b32.xlu0 %v5681, 64
  %v5973 = vpop.permute.xlu0 %5972
  %5974 = vrot.lane.b32.xlu0 %v5682, 64
  %v5975 = vpop.permute.xlu0 %5974
  %5976 = vrot.lane.b32.xlu0 %v5683, 64
  %v5977 = vpop.permute.xlu0 %5976
  %5978 = vrot.lane.b32.xlu0 %v5684, 64
  %v5979 = vpop.permute.xlu0 %5978
  %5980 = vrot.lane.b32.xlu0 %v5685, 64
  %v5981 = vpop.permute.xlu0 %5980
  %5982 = vrot.lane.b32.xlu0 %v5686, 64
  %v5983 = vpop.permute.xlu0 %5982
  %5984 = vrot.lane.b32.xlu0 %v5687, 64
  %v5985 = vpop.permute.xlu0 %5984
  %5986 = vrot.lane.b32.xlu0 %v5688, 64
  %v5987 = vpop.permute.xlu0 %5986
  %5988 = vrot.lane.b32.xlu0 %v5689, 64
  %v5989 = vpop.permute.xlu0 %5988
  %5990 = vrot.lane.b32.xlu0 %v5690, 64
  %v5991 = vpop.permute.xlu0 %5990
  %5992 = vrot.lane.b32.xlu0 %v5691, 64
  %v5993 = vpop.permute.xlu0 %5992
  %5994 = vrot.lane.b32.xlu0 %v5692, 64
  %v5995 = vpop.permute.xlu0 %5994
  %5996 = vrot.lane.b32.xlu0 %v5693, 64
  %v5997 = vpop.permute.xlu0 %5996
  %5998 = vrot.lane.b32.xlu0 %v5694, 64
  %v5999 = vpop.permute.xlu0 %5998
  %6000 = vrot.lane.b32.xlu0 %v5695, 64
  %v6001 = vpop.permute.xlu0 %6000
  %6002 = vrot.lane.b32.xlu0 %v5696, 64
  %v6003 = vpop.permute.xlu0 %6002
  %6004 = vrot.lane.b32.xlu0 %v5697, 64
  %v6005 = vpop.permute.xlu0 %6004
  %6006 = vrot.lane.b32.xlu0 %v5698, 64
  %v6007 = vpop.permute.xlu0 %6006
  %6008 = vrot.lane.b32.xlu0 %v5699, 64
  %v6009 = vpop.permute.xlu0 %6008
  %6010 = vrot.lane.b32.xlu0 %v5704, 64
  %v6011 = vpop.permute.xlu0 %6010
  %6012 = vrot.lane.b32.xlu0 %v5705, 64
  %v6013 = vpop.permute.xlu0 %6012
  %6014 = vrot.lane.b32.xlu0 %v5706, 64
  %v6015 = vpop.permute.xlu0 %6014
  %6016 = vrot.lane.b32.xlu0 %v5707, 64
  %v6017 = vpop.permute.xlu0 %6016
  %6018 = vrot.lane.b32.xlu0 %v5708, 64
  %v6019 = vpop.permute.xlu0 %6018
  %6020 = vrot.lane.b32.xlu0 %v5709, 64
  %v6021 = vpop.permute.xlu0 %6020
  %6022 = vrot.lane.b32.xlu0 %v5710, 64
  %v6023 = vpop.permute.xlu0 %6022
  %6024 = vrot.lane.b32.xlu0 %v5711, 64
  %v6025 = vpop.permute.xlu0 %6024
  %6026 = vrot.lane.b32.xlu0 %v5712, 64
  %v6027 = vpop.permute.xlu0 %6026
  %6028 = vrot.lane.b32.xlu0 %v5713, 64
  %v6029 = vpop.permute.xlu0 %6028
  %6030 = vrot.lane.b32.xlu0 %v5714, 64
  %v6031 = vpop.permute.xlu0 %6030
  %6032 = vrot.lane.b32.xlu0 %v5715, 64
  %v6033 = vpop.permute.xlu0 %6032
  %6034 = vrot.lane.b32.xlu0 %v5716, 64
  %v6035 = vpop.permute.xlu0 %6034
  %6036 = vrot.lane.b32.xlu0 %v5717, 64
  %v6037 = vpop.permute.xlu0 %6036
  %6038 = vrot.lane.b32.xlu0 %v5718, 64
  %v6039 = vpop.permute.xlu0 %6038
  %6040 = vrot.lane.b32.xlu0 %v5719, 64
  %v6041 = vpop.permute.xlu0 %6040
  %6042 = vrot.lane.b32.xlu0 %v5720, 64
  %v6043 = vpop.permute.xlu0 %6042
  %6044 = vrot.lane.b32.xlu0 %v5721, 64
  %v6045 = vpop.permute.xlu0 %6044
  %6046 = vrot.lane.b32.xlu0 %v5722, 64
  %v6047 = vpop.permute.xlu0 %6046
  %6048 = vrot.lane.b32.xlu0 %v5723, 64
  %v6049 = vpop.permute.xlu0 %6048
  %6050 = vrot.lane.b32.xlu0 %v5724, 64
  %v6051 = vpop.permute.xlu0 %6050
  %6052 = vrot.lane.b32.xlu0 %v5725, 64
  %v6053 = vpop.permute.xlu0 %6052
  %6054 = vrot.lane.b32.xlu0 %v5726, 64
  %v6055 = vpop.permute.xlu0 %6054
  %6056 = vrot.lane.b32.xlu0 %v5727, 64
  %v6057 = vpop.permute.xlu0 %6056
  %6058 = vrot.lane.b32.xlu0 %v5728, 64
  %v6059 = vpop.permute.xlu0 %6058
  %6060 = vrot.lane.b32.xlu0 %v5729, 64
  %v6061 = vpop.permute.xlu0 %6060
  %6062 = vrot.lane.b32.xlu0 %v5730, 64
  %v6063 = vpop.permute.xlu0 %6062
  %6064 = vrot.lane.b32.xlu0 %v5731, 64
  %v6065 = vpop.permute.xlu0 %6064
  %6066 = vrot.lane.b32.xlu0 %v5732, 64
  %v6067 = vpop.permute.xlu0 %6066
  %6068 = vrot.lane.b32.xlu0 %v5733, 64
  %v6069 = vpop.permute.xlu0 %6068
  %6070 = vrot.lane.b32.xlu0 %v5734, 64
  %v6071 = vpop.permute.xlu0 %6070
  %6072 = vrot.lane.b32.xlu0 %v5735, 64
  %v6073 = vpop.permute.xlu0 %6072
  %6202 = vrot.lane.b32.xlu0 %v5738, 64
  %v6203 = vpop.permute.xlu0 %6202
  %6204 = vrot.lane.b32.xlu0 %v5739, 64
  %v6205 = vpop.permute.xlu0 %6204
  %6206 = vrot.lane.b32.xlu0 %v5740, 64
  %v6207 = vpop.permute.xlu0 %6206
  %6208 = vrot.lane.b32.xlu0 %v5741, 64
  %v6209 = vpop.permute.xlu0 %6208
  %6210 = vrot.lane.b32.xlu0 %v5742, 64
  %v6211 = vpop.permute.xlu0 %6210
  %6212 = vrot.lane.b32.xlu0 %v5743, 64
  %v6213 = vpop.permute.xlu0 %6212
  %6214 = vrot.lane.b32.xlu0 %v5744, 64
  %v6215 = vpop.permute.xlu0 %6214
  %6216 = vrot.lane.b32.xlu0 %v5745, 64
  %v6217 = vpop.permute.xlu0 %6216
  %6218 = vrot.lane.b32.xlu0 %v5746, 64
  %v6219 = vpop.permute.xlu0 %6218
  %6220 = vrot.lane.b32.xlu0 %v5747, 64
  %v6221 = vpop.permute.xlu0 %6220
  %6222 = vrot.lane.b32.xlu0 %v5748, 64
  %v6223 = vpop.permute.xlu0 %6222
  %6224 = vrot.lane.b32.xlu0 %v5749, 64
  %v6225 = vpop.permute.xlu0 %6224
  %6226 = vrot.lane.b32.xlu0 %v5750, 64
  %v6227 = vpop.permute.xlu0 %6226
  %6228 = vrot.lane.b32.xlu0 %v5751, 64
  %v6229 = vpop.permute.xlu0 %6228
  %6230 = vrot.lane.b32.xlu0 %v5752, 64
  %v6231 = vpop.permute.xlu0 %6230
  %6232 = vrot.lane.b32.xlu0 %v5753, 64
  %v6233 = vpop.permute.xlu0 %6232
  %6234 = vrot.lane.b32.xlu0 %v5754, 64
  %v6235 = vpop.permute.xlu0 %6234
  %6236 = vrot.lane.b32.xlu0 %v5755, 64
  %v6237 = vpop.permute.xlu0 %6236
  %6238 = vrot.lane.b32.xlu0 %v5756, 64
  %v6239 = vpop.permute.xlu0 %6238
  %6240 = vrot.lane.b32.xlu0 %v5757, 64
  %v6241 = vpop.permute.xlu0 %6240
  %6242 = vrot.lane.b32.xlu0 %v5758, 64
  %v6243 = vpop.permute.xlu0 %6242
  %6244 = vrot.lane.b32.xlu0 %v5759, 64
  %v6245 = vpop.permute.xlu0 %6244
  %6246 = vrot.lane.b32.xlu0 %v5760, 64
  %v6247 = vpop.permute.xlu0 %6246
  %6248 = vrot.lane.b32.xlu0 %v5761, 64
  %v6249 = vpop.permute.xlu0 %6248
  %6250 = vrot.lane.b32.xlu0 %v5762, 64
  %v6251 = vpop.permute.xlu0 %6250
  %6252 = vrot.lane.b32.xlu0 %v5763, 64
  %v6253 = vpop.permute.xlu0 %6252
  %6254 = vrot.lane.b32.xlu0 %v5764, 64
  %v6255 = vpop.permute.xlu0 %6254
  %6256 = vrot.lane.b32.xlu0 %v5765, 64
  %v6257 = vpop.permute.xlu0 %6256
  %6258 = vrot.lane.b32.xlu0 %v5766, 64
  %v6259 = vpop.permute.xlu0 %6258
  %6260 = vrot.lane.b32.xlu0 %v5767, 64
  %v6261 = vpop.permute.xlu0 %6260
  %6262 = vrot.lane.b32.xlu0 %v5768, 64
  %v6263 = vpop.permute.xlu0 %6262
  %6264 = vrot.lane.b32.xlu0 %v5769, 64
  %v6265 = vpop.permute.xlu0 %6264
  %6266 = vrot.lane.b32.xlu0 %v5774, 64
  %v6267 = vpop.permute.xlu0 %6266
  %6268 = vrot.lane.b32.xlu0 %v5775, 64
  %v6269 = vpop.permute.xlu0 %6268
  %6270 = vrot.lane.b32.xlu0 %v5776, 64
  %v6271 = vpop.permute.xlu0 %6270
  %6272 = vrot.lane.b32.xlu0 %v5777, 64
  %v6273 = vpop.permute.xlu0 %6272
  %6274 = vrot.lane.b32.xlu0 %v5778, 64
  %v6275 = vpop.permute.xlu0 %6274
  %6276 = vrot.lane.b32.xlu0 %v5779, 64
  %v6277 = vpop.permute.xlu0 %6276
  %6278 = vrot.lane.b32.xlu0 %v5780, 64
  %v6279 = vpop.permute.xlu0 %6278
  %6280 = vrot.lane.b32.xlu0 %v5781, 64
  %v6281 = vpop.permute.xlu0 %6280
  %6282 = vrot.lane.b32.xlu0 %v5782, 64
  %v6283 = vpop.permute.xlu0 %6282
  %6284 = vrot.lane.b32.xlu0 %v5783, 64
  %v6285 = vpop.permute.xlu0 %6284
  %6286 = vrot.lane.b32.xlu0 %v5784, 64
  %v6287 = vpop.permute.xlu0 %6286
  %6288 = vrot.lane.b32.xlu0 %v5785, 64
  %v6289 = vpop.permute.xlu0 %6288
  %6290 = vrot.lane.b32.xlu0 %v5786, 64
  %v6291 = vpop.permute.xlu0 %6290
  %6292 = vrot.lane.b32.xlu0 %v5787, 64
  %v6293 = vpop.permute.xlu0 %6292
  %6294 = vrot.lane.b32.xlu0 %v5788, 64
  %v6295 = vpop.permute.xlu0 %6294
  %6296 = vrot.lane.b32.xlu0 %v5789, 64
  %v6297 = vpop.permute.xlu0 %6296
  %6298 = vrot.lane.b32.xlu0 %v5790, 64
  %v6299 = vpop.permute.xlu0 %6298
  %6300 = vrot.lane.b32.xlu0 %v5791, 64
  %v6301 = vpop.permute.xlu0 %6300
  %6302 = vrot.lane.b32.xlu0 %v5792, 64
  %v6303 = vpop.permute.xlu0 %6302
  %6304 = vrot.lane.b32.xlu0 %v5793, 64
  %v6305 = vpop.permute.xlu0 %6304
  %6306 = vrot.lane.b32.xlu0 %v5794, 64
  %v6307 = vpop.permute.xlu0 %6306
  %6308 = vrot.lane.b32.xlu0 %v5795, 64
  %v6309 = vpop.permute.xlu0 %6308
  %6310 = vrot.lane.b32.xlu0 %v5796, 64
  %v6311 = vpop.permute.xlu0 %6310
  %6312 = vrot.lane.b32.xlu0 %v5797, 64
  %v6313 = vpop.permute.xlu0 %6312
  %6314 = vrot.lane.b32.xlu0 %v5798, 64
  %v6315 = vpop.permute.xlu0 %6314
  %6316 = vrot.lane.b32.xlu0 %v5799, 64
  %v6317 = vpop.permute.xlu0 %6316
  %6318 = vrot.lane.b32.xlu0 %v5800, 64
  %v6319 = vpop.permute.xlu0 %6318
  %6320 = vrot.lane.b32.xlu0 %v5801, 64
  %v6321 = vpop.permute.xlu0 %6320
  %6322 = vrot.lane.b32.xlu0 %v5802, 64
  %v6323 = vpop.permute.xlu0 %6322
  %6324 = vrot.lane.b32.xlu0 %v5803, 64
  %v6325 = vpop.permute.xlu0 %6324
  %6326 = vrot.lane.b32.xlu0 %v5804, 64
  %v6327 = vpop.permute.xlu0 %6326
  %6328 = vrot.lane.b32.xlu0 %v5805, 64
  %v6329 = vpop.permute.xlu0 %6328
  %6402 = vrot.lane.b32.xlu0 %v5770, 64
  %v6403 = vpop.permute.xlu0 %6402
  %6404 = vrot.lane.b32.xlu0 %v5771, 64
  %v6405 = vpop.permute.xlu0 %6404
  %6406 = vrot.lane.b32.xlu0 %v5772, 64
  %v6407 = vpop.permute.xlu0 %6406
  %6408 = vrot.lane.b32.xlu0 %v5773, 64
  %v6409 = vpop.permute.xlu0 %6408
  %6410 = vrot.lane.b32.xlu0 %v5806, 64
  %v6411 = vpop.permute.xlu0 %6410
  %6412 = vrot.lane.b32.xlu0 %v5807, 64
  %v6413 = vpop.permute.xlu0 %6412
  %6414 = vrot.lane.b32.xlu0 %v5808, 64
  %v6415 = vpop.permute.xlu0 %6414
  %6416 = vrot.lane.b32.xlu0 %v5809, 64
  %v6417 = vpop.permute.xlu0 %6416
  %6490 = vrot.lane.b32.xlu0 %v5812, 64
  %v6491 = vpop.permute.xlu0 %6490
  %6492 = vrot.lane.b32.xlu0 %v5813, 64
  %v6493 = vpop.permute.xlu0 %6492
  %6494 = vrot.lane.b32.xlu0 %v5814, 64
  %v6495 = vpop.permute.xlu0 %6494
  %6496 = vrot.lane.b32.xlu0 %v5815, 64
  %v6497 = vpop.permute.xlu0 %6496
  %6498 = vrot.lane.b32.xlu0 %v5816, 64
  %v6499 = vpop.permute.xlu0 %6498
  %6500 = vrot.lane.b32.xlu0 %v5817, 64
  %v6501 = vpop.permute.xlu0 %6500
  %6502 = vrot.lane.b32.xlu0 %v5818, 64
  %v6503 = vpop.permute.xlu0 %6502
  %6504 = vrot.lane.b32.xlu0 %v5819, 64
  %v6505 = vpop.permute.xlu0 %6504
  %6506 = vrot.lane.b32.xlu0 %v5820, 64
  %v6507 = vpop.permute.xlu0 %6506
  %6508 = vrot.lane.b32.xlu0 %v5821, 64
  %v6509 = vpop.permute.xlu0 %6508
  %6510 = vrot.lane.b32.xlu0 %v5822, 64
  %v6511 = vpop.permute.xlu0 %6510
  %6512 = vrot.lane.b32.xlu0 %v5823, 64
  %v6513 = vpop.permute.xlu0 %6512
  %6514 = vrot.lane.b32.xlu0 %v5824, 64
  %v6515 = vpop.permute.xlu0 %6514
  %6516 = vrot.lane.b32.xlu0 %v5825, 64
  %v6517 = vpop.permute.xlu0 %6516
  %6518 = vrot.lane.b32.xlu0 %v5826, 64
  %v6519 = vpop.permute.xlu0 %6518
  %6520 = vrot.lane.b32.xlu0 %v5827, 64
  %v6521 = vpop.permute.xlu0 %6520
  %6522 = vrot.lane.b32.xlu0 %v5828, 64
  %v6523 = vpop.permute.xlu0 %6522
  %6524 = vrot.lane.b32.xlu0 %v5829, 64
  %v6525 = vpop.permute.xlu0 %6524
  %6526 = vrot.lane.b32.xlu0 %v5830, 64
  %v6527 = vpop.permute.xlu0 %6526
  %6528 = vrot.lane.b32.xlu0 %v5831, 64
  %v6529 = vpop.permute.xlu0 %6528
  %6530 = vrot.lane.b32.xlu0 %v5832, 64
  %v6531 = vpop.permute.xlu0 %6530
  %6532 = vrot.lane.b32.xlu0 %v5833, 64
  %v6533 = vpop.permute.xlu0 %6532
  %6534 = vrot.lane.b32.xlu0 %v5834, 64
  %v6535 = vpop.permute.xlu0 %6534
  %6536 = vrot.lane.b32.xlu0 %v5835, 64
  %v6537 = vpop.permute.xlu0 %6536
  %6538 = vrot.lane.b32.xlu0 %v5836, 64
  %v6539 = vpop.permute.xlu0 %6538
  %6540 = vrot.lane.b32.xlu0 %v5837, 64
  %v6541 = vpop.permute.xlu0 %6540
  %6542 = vrot.lane.b32.xlu0 %v5838, 64
  %v6543 = vpop.permute.xlu0 %6542
  %6544 = vrot.lane.b32.xlu0 %v5839, 64
  %v6545 = vpop.permute.xlu0 %6544
  %6546 = vrot.lane.b32.xlu0 %v5840, 64
  %v6547 = vpop.permute.xlu0 %6546
  %6548 = vrot.lane.b32.xlu0 %v5841, 64
  %v6549 = vpop.permute.xlu0 %6548
  %6550 = vrot.lane.b32.xlu0 %v5842, 64
  %v6551 = vpop.permute.xlu0 %6550
  %6552 = vrot.lane.b32.xlu0 %v5843, 64
  %v6553 = vpop.permute.xlu0 %6552
  %6554 = vrot.lane.b32.xlu0 %v5848, 64
  %v6555 = vpop.permute.xlu0 %6554
  %6556 = vrot.lane.b32.xlu0 %v5849, 64
  %v6557 = vpop.permute.xlu0 %6556
  %6558 = vrot.lane.b32.xlu0 %v5850, 64
  %v6559 = vpop.permute.xlu0 %6558
  %6560 = vrot.lane.b32.xlu0 %v5851, 64
  %v6561 = vpop.permute.xlu0 %6560
  %6562 = vrot.lane.b32.xlu0 %v5852, 64
  %v6563 = vpop.permute.xlu0 %6562
  %6564 = vrot.lane.b32.xlu0 %v5853, 64
  %v6565 = vpop.permute.xlu0 %6564
  %6566 = vrot.lane.b32.xlu0 %v5854, 64
  %v6567 = vpop.permute.xlu0 %6566
  %6568 = vrot.lane.b32.xlu0 %v5855, 64
  %v6569 = vpop.permute.xlu0 %6568
  %6570 = vrot.lane.b32.xlu0 %v5856, 64
  %v6571 = vpop.permute.xlu0 %6570
  %6572 = vrot.lane.b32.xlu0 %v5857, 64
  %v6573 = vpop.permute.xlu0 %6572
  %6574 = vrot.lane.b32.xlu0 %v5858, 64
  %v6575 = vpop.permute.xlu0 %6574
  %6576 = vrot.lane.b32.xlu0 %v5859, 64
  %v6577 = vpop.permute.xlu0 %6576
  %6578 = vrot.lane.b32.xlu0 %v5860, 64
  %v6579 = vpop.permute.xlu0 %6578
  %6580 = vrot.lane.b32.xlu0 %v5861, 64
  %v6581 = vpop.permute.xlu0 %6580
  %6582 = vrot.lane.b32.xlu0 %v5862, 64
  %v6583 = vpop.permute.xlu0 %6582
  %6584 = vrot.lane.b32.xlu0 %v5863, 64
  %v6585 = vpop.permute.xlu0 %6584
  %6586 = vrot.lane.b32.xlu0 %v5864, 64
  %v6587 = vpop.permute.xlu0 %6586
  %6588 = vrot.lane.b32.xlu0 %v5865, 64
  %v6589 = vpop.permute.xlu0 %6588
  %6590 = vrot.lane.b32.xlu0 %v5866, 64
  %v6591 = vpop.permute.xlu0 %6590
  %6592 = vrot.lane.b32.xlu0 %v5867, 64
  %v6593 = vpop.permute.xlu0 %6592
  %6594 = vrot.lane.b32.xlu0 %v5868, 64
  %v6595 = vpop.permute.xlu0 %6594
  %6596 = vrot.lane.b32.xlu0 %v5869, 64
  %v6597 = vpop.permute.xlu0 %6596
  %6598 = vrot.lane.b32.xlu0 %v5870, 64
  %v6599 = vpop.permute.xlu0 %6598
  %6600 = vrot.lane.b32.xlu0 %v5871, 64
  %v6601 = vpop.permute.xlu0 %6600
  %6602 = vrot.lane.b32.xlu0 %v5872, 64
  %v6603 = vpop.permute.xlu0 %6602
  %6604 = vrot.lane.b32.xlu0 %v5873, 64
  %v6605 = vpop.permute.xlu0 %6604
  %6606 = vrot.lane.b32.xlu0 %v5874, 64
  %v6607 = vpop.permute.xlu0 %6606
  %6608 = vrot.lane.b32.xlu0 %v5875, 64
  %v6609 = vpop.permute.xlu0 %6608
  %6610 = vrot.lane.b32.xlu0 %v5876, 64
  %v6611 = vpop.permute.xlu0 %6610
  %6612 = vrot.lane.b32.xlu0 %v5877, 64
  %v6613 = vpop.permute.xlu0 %6612
  %6614 = vrot.lane.b32.xlu0 %v5878, 64
  %v6615 = vpop.permute.xlu0 %6614
  %6616 = vrot.lane.b32.xlu0 %v5879, 64
  %v6617 = vpop.permute.xlu0 %6616
  %v6682 = vsel %vm5447, %v5666, %v5947
  %v6683 = vsel %vm5447, %v5667, %v5949
  %v6684 = vsel %vm5447, %v5668, %v5951
  %v6685 = vsel %vm5447, %v5669, %v5953
  %v6686 = vsel %vm5447, %v5670, %v5955
  %v6687 = vsel %vm5447, %v5671, %v5957
  %v6688 = vsel %vm5447, %v5672, %v5959
  %v6689 = vsel %vm5447, %v5673, %v5961
  %v6690 = vsel %vm5447, %v5674, %v5963
  %v6691 = vsel %vm5447, %v5675, %v5965
  %v6692 = vsel %vm5447, %v5676, %v5967
  %v6693 = vsel %vm5447, %v5677, %v5969
  %v6694 = vsel %vm5447, %v5678, %v5971
  %v6695 = vsel %vm5447, %v5679, %v5973
  %v6696 = vsel %vm5447, %v5680, %v5975
  %v6697 = vsel %vm5447, %v5681, %v5977
  %v6698 = vsel %vm5447, %v5682, %v5979
  %v6699 = vsel %vm5447, %v5683, %v5981
  %v6700 = vsel %vm5447, %v5684, %v5983
  %v6701 = vsel %vm5447, %v5685, %v5985
  %v6702 = vsel %vm5447, %v5686, %v5987
  %v6703 = vsel %vm5447, %v5687, %v5989
  %v6704 = vsel %vm5447, %v5688, %v5991
  %v6705 = vsel %vm5447, %v5689, %v5993
  %v6706 = vsel %vm5447, %v5690, %v5995
  %v6707 = vsel %vm5447, %v5691, %v5997
  %v6708 = vsel %vm5447, %v5692, %v5999
  %v6709 = vsel %vm5447, %v5693, %v6001
  %v6710 = vsel %vm5447, %v5694, %v6003
  %v6711 = vsel %vm5447, %v5695, %v6005
  %v6712 = vsel %vm5447, %v5696, %v6007
  %v6713 = vsel %vm5447, %v5697, %v6009
  %v6714 = vsel %vm5447, %v5702, %v6011
  %v6715 = vsel %vm5447, %v5703, %v6013
  %v6716 = vsel %vm5447, %v5704, %v6015
  %v6717 = vsel %vm5447, %v5705, %v6017
  %v6718 = vsel %vm5447, %v5706, %v6019
  %v6719 = vsel %vm5447, %v5707, %v6021
  %v6720 = vsel %vm5447, %v5708, %v6023
  %v6721 = vsel %vm5447, %v5709, %v6025
  %v6722 = vsel %vm5447, %v5710, %v6027
  %v6723 = vsel %vm5447, %v5711, %v6029
  %v6724 = vsel %vm5447, %v5712, %v6031
  %v6725 = vsel %vm5447, %v5713, %v6033
  %v6726 = vsel %vm5447, %v5714, %v6035
  %v6727 = vsel %vm5447, %v5715, %v6037
  %v6728 = vsel %vm5447, %v5716, %v6039
  %v6729 = vsel %vm5447, %v5717, %v6041
  %v6730 = vsel %vm5447, %v5718, %v6043
  %v6731 = vsel %vm5447, %v5719, %v6045
  %v6732 = vsel %vm5447, %v5720, %v6047
  %v6733 = vsel %vm5447, %v5721, %v6049
  %v6734 = vsel %vm5447, %v5722, %v6051
  %v6735 = vsel %vm5447, %v5723, %v6053
  %v6736 = vsel %vm5447, %v5724, %v6055
  %v6737 = vsel %vm5447, %v5725, %v6057
  %v6738 = vsel %vm5447, %v5726, %v6059
  %v6739 = vsel %vm5447, %v5727, %v6061
  %v6740 = vsel %vm5447, %v5728, %v6063
  %v6741 = vsel %vm5447, %v5729, %v6065
  %v6742 = vsel %vm5447, %v5730, %v6067
  %v6743 = vsel %vm5447, %v5731, %v6069
  %v6744 = vsel %vm5447, %v5732, %v6071
  %v6745 = vsel %vm5447, %v5733, %v6073
  %v6746 = vsel %vm5447, %v5670, %v6203
  %v6747 = vsel %vm5447, %v5671, %v6205
  %v6748 = vsel %vm5447, %v5672, %v6207
  %v6749 = vsel %vm5447, %v5673, %v6209
  %v6750 = vsel %vm5447, %v5674, %v6211
  %v6751 = vsel %vm5447, %v5675, %v6213
  %v6752 = vsel %vm5447, %v5676, %v6215
  %v6753 = vsel %vm5447, %v5677, %v6217
  %v6754 = vsel %vm5447, %v5678, %v6219
  %v6755 = vsel %vm5447, %v5679, %v6221
  %v6756 = vsel %vm5447, %v5680, %v6223
  %v6757 = vsel %vm5447, %v5681, %v6225
  %v6758 = vsel %vm5447, %v5682, %v6227
  %v6759 = vsel %vm5447, %v5683, %v6229
  %v6760 = vsel %vm5447, %v5684, %v6231
  %v6761 = vsel %vm5447, %v5685, %v6233
  %v6762 = vsel %vm5447, %v5686, %v6235
  %v6763 = vsel %vm5447, %v5687, %v6237
  %v6764 = vsel %vm5447, %v5688, %v6239
  %v6765 = vsel %vm5447, %v5689, %v6241
  %v6766 = vsel %vm5447, %v5690, %v6243
  %v6767 = vsel %vm5447, %v5691, %v6245
  %v6768 = vsel %vm5447, %v5692, %v6247
  %v6769 = vsel %vm5447, %v5693, %v6249
  %v6770 = vsel %vm5447, %v5694, %v6251
  %v6771 = vsel %vm5447, %v5695, %v6253
  %v6772 = vsel %vm5447, %v5696, %v6255
  %v6773 = vsel %vm5447, %v5697, %v6257
  %v6774 = vsel %vm5447, %v5698, %v6259
  %v6775 = vsel %vm5447, %v5699, %v6261
  %v6776 = vsel %vm5447, %v5700, %v6263
  %v6777 = vsel %vm5447, %v5701, %v6265
  %v6778 = vsel %vm5447, %v5706, %v6267
  %v6779 = vsel %vm5447, %v5707, %v6269
  %v6780 = vsel %vm5447, %v5708, %v6271
  %v6781 = vsel %vm5447, %v5709, %v6273
  %v6782 = vsel %vm5447, %v5710, %v6275
  %v6783 = vsel %vm5447, %v5711, %v6277
  %v6784 = vsel %vm5447, %v5712, %v6279
  %v6785 = vsel %vm5447, %v5713, %v6281
  %v6786 = vsel %vm5447, %v5714, %v6283
  %v6787 = vsel %vm5447, %v5715, %v6285
  %v6788 = vsel %vm5447, %v5716, %v6287
  %v6789 = vsel %vm5447, %v5717, %v6289
  %v6790 = vsel %vm5447, %v5718, %v6291
  %v6791 = vsel %vm5447, %v5719, %v6293
  %v6792 = vsel %vm5447, %v5720, %v6295
  %v6793 = vsel %vm5447, %v5721, %v6297
  %v6794 = vsel %vm5447, %v5722, %v6299
  %v6795 = vsel %vm5447, %v5723, %v6301
  %v6796 = vsel %vm5447, %v5724, %v6303
  %v6797 = vsel %vm5447, %v5725, %v6305
  %v6798 = vsel %vm5447, %v5726, %v6307
  %v6799 = vsel %vm5447, %v5727, %v6309
  %v6800 = vsel %vm5447, %v5728, %v6311
  %v6801 = vsel %vm5447, %v5729, %v6313
  %v6802 = vsel %vm5447, %v5730, %v6315
  %v6803 = vsel %vm5447, %v5731, %v6317
  %v6804 = vsel %vm5447, %v5732, %v6319
  %v6805 = vsel %vm5447, %v5733, %v6321
  %v6806 = vsel %vm5447, %v5734, %v6323
  %v6807 = vsel %vm5447, %v5735, %v6325
  %v6808 = vsel %vm5447, %v5736, %v6327
  %v6809 = vsel %vm5447, %v5737, %v6329
  %v6810 = vsel %vm5447, %v5740, %v6211
  %v6811 = vsel %vm5447, %v5741, %v6213
  %v6812 = vsel %vm5447, %v5742, %v6215
  %v6813 = vsel %vm5447, %v5743, %v6217
  %v6814 = vsel %vm5447, %v5744, %v6219
  %v6815 = vsel %vm5447, %v5745, %v6221
  %v6816 = vsel %vm5447, %v5746, %v6223
  %v6817 = vsel %vm5447, %v5747, %v6225
  %v6818 = vsel %vm5447, %v5748, %v6227
  %v6819 = vsel %vm5447, %v5749, %v6229
  %v6820 = vsel %vm5447, %v5750, %v6231
  %v6821 = vsel %vm5447, %v5751, %v6233
  %v6822 = vsel %vm5447, %v5752, %v6235
  %v6823 = vsel %vm5447, %v5753, %v6237
  %v6824 = vsel %vm5447, %v5754, %v6239
  %v6825 = vsel %vm5447, %v5755, %v6241
  %v6826 = vsel %vm5447, %v5756, %v6243
  %v6827 = vsel %vm5447, %v5757, %v6245
  %v6828 = vsel %vm5447, %v5758, %v6247
  %v6829 = vsel %vm5447, %v5759, %v6249
  %v6830 = vsel %vm5447, %v5760, %v6251
  %v6831 = vsel %vm5447, %v5761, %v6253
  %v6832 = vsel %vm5447, %v5762, %v6255
  %v6833 = vsel %vm5447, %v5763, %v6257
  %v6834 = vsel %vm5447, %v5764, %v6259
  %v6835 = vsel %vm5447, %v5765, %v6261
  %v6836 = vsel %vm5447, %v5766, %v6263
  %v6837 = vsel %vm5447, %v5767, %v6265
  %v6838 = vsel %vm5447, %v5768, %v6403
  %v6839 = vsel %vm5447, %v5769, %v6405
  %v6840 = vsel %vm5447, %v5770, %v6407
  %v6841 = vsel %vm5447, %v5771, %v6409
  %v6842 = vsel %vm5447, %v5776, %v6275
  %v6843 = vsel %vm5447, %v5777, %v6277
  %v6844 = vsel %vm5447, %v5778, %v6279
  %v6845 = vsel %vm5447, %v5779, %v6281
  %v6846 = vsel %vm5447, %v5780, %v6283
  %v6847 = vsel %vm5447, %v5781, %v6285
  %v6848 = vsel %vm5447, %v5782, %v6287
  %v6849 = vsel %vm5447, %v5783, %v6289
  %v6850 = vsel %vm5447, %v5784, %v6291
  %v6851 = vsel %vm5447, %v5785, %v6293
  %v6852 = vsel %vm5447, %v5786, %v6295
  %v6853 = vsel %vm5447, %v5787, %v6297
  %v6854 = vsel %vm5447, %v5788, %v6299
  %v6855 = vsel %vm5447, %v5789, %v6301
  %v6856 = vsel %vm5447, %v5790, %v6303
  %v6857 = vsel %vm5447, %v5791, %v6305
  %v6858 = vsel %vm5447, %v5792, %v6307
  %v6859 = vsel %vm5447, %v5793, %v6309
  %v6860 = vsel %vm5447, %v5794, %v6311
  %v6861 = vsel %vm5447, %v5795, %v6313
  %v6862 = vsel %vm5447, %v5796, %v6315
  %v6863 = vsel %vm5447, %v5797, %v6317
  %v6864 = vsel %vm5447, %v5798, %v6319
  %v6865 = vsel %vm5447, %v5799, %v6321
  %v6866 = vsel %vm5447, %v5800, %v6323
  %v6867 = vsel %vm5447, %v5801, %v6325
  %v6868 = vsel %vm5447, %v5802, %v6327
  %v6869 = vsel %vm5447, %v5803, %v6329
  %v6870 = vsel %vm5447, %v5804, %v6411
  %v6871 = vsel %vm5447, %v5805, %v6413
  %v6872 = vsel %vm5447, %v5806, %v6415
  %v6873 = vsel %vm5447, %v5807, %v6417
  %v6874 = vsel %vm5447, %v5810, %v6491
  %v6875 = vsel %vm5447, %v5811, %v6493
  %v6876 = vsel %vm5447, %v5812, %v6495
  %v6877 = vsel %vm5447, %v5813, %v6497
  %v6878 = vsel %vm5447, %v5814, %v6499
  %v6879 = vsel %vm5447, %v5815, %v6501
  %v6880 = vsel %vm5447, %v5816, %v6503
  %v6881 = vsel %vm5447, %v5817, %v6505
  %v6882 = vsel %vm5447, %v5818, %v6507
  %v6883 = vsel %vm5447, %v5819, %v6509
  %v6884 = vsel %vm5447, %v5820, %v6511
  %v6885 = vsel %vm5447, %v5821, %v6513
  %v6886 = vsel %vm5447, %v5822, %v6515
  %v6887 = vsel %vm5447, %v5823, %v6517
  %v6888 = vsel %vm5447, %v5824, %v6519
  %v6889 = vsel %vm5447, %v5825, %v6521
  %v6890 = vsel %vm5447, %v5826, %v6523
  %v6891 = vsel %vm5447, %v5827, %v6525
  %v6892 = vsel %vm5447, %v5828, %v6527
  %v6893 = vsel %vm5447, %v5829, %v6529
  %v6894 = vsel %vm5447, %v5830, %v6531
  %v6895 = vsel %vm5447, %v5831, %v6533
  %v6896 = vsel %vm5447, %v5832, %v6535
  %v6897 = vsel %vm5447, %v5833, %v6537
  %v6898 = vsel %vm5447, %v5834, %v6539
  %v6899 = vsel %vm5447, %v5835, %v6541
  %v6900 = vsel %vm5447, %v5836, %v6543
  %v6901 = vsel %vm5447, %v5837, %v6545
  %v6902 = vsel %vm5447, %v5838, %v6547
  %v6903 = vsel %vm5447, %v5839, %v6549
  %v6904 = vsel %vm5447, %v5840, %v6551
  %v6905 = vsel %vm5447, %v5841, %v6553
  %v6906 = vsel %vm5447, %v5846, %v6555
  %v6907 = vsel %vm5447, %v5847, %v6557
  %v6908 = vsel %vm5447, %v5848, %v6559
  %v6909 = vsel %vm5447, %v5849, %v6561
  %v6910 = vsel %vm5447, %v5850, %v6563
  %v6911 = vsel %vm5447, %v5851, %v6565
  %v6912 = vsel %vm5447, %v5852, %v6567
  %v6913 = vsel %vm5447, %v5853, %v6569
  %v6914 = vsel %vm5447, %v5854, %v6571
  %v6915 = vsel %vm5447, %v5855, %v6573
  %v6916 = vsel %vm5447, %v5856, %v6575
  %v6917 = vsel %vm5447, %v5857, %v6577
  %v6918 = vsel %vm5447, %v5858, %v6579
  %v6919 = vsel %vm5447, %v5859, %v6581
  %v6920 = vsel %vm5447, %v5860, %v6583
  %v6921 = vsel %vm5447, %v5861, %v6585
  %v6922 = vsel %vm5447, %v5862, %v6587
  %v6923 = vsel %vm5447, %v5863, %v6589
  %v6924 = vsel %vm5447, %v5864, %v6591
  %v6925 = vsel %vm5447, %v5865, %v6593
  %v6926 = vsel %vm5447, %v5866, %v6595
  %v6927 = vsel %vm5447, %v5867, %v6597
  %v6928 = vsel %vm5447, %v5868, %v6599
  %v6929 = vsel %vm5447, %v5869, %v6601
  %v6930 = vsel %vm5447, %v5870, %v6603
  %v6931 = vsel %vm5447, %v5871, %v6605
  %v6932 = vsel %vm5447, %v5872, %v6607
  %v6933 = vsel %vm5447, %v5873, %v6609
  %v6934 = vsel %vm5447, %v5874, %v6611
  %v6935 = vsel %vm5447, %v5875, %v6613
  %v6936 = vsel %vm5447, %v5876, %v6615
  %v6937 = vsel %vm5447, %v5877, %v6617
  %v6938 = vld [vmem:[%s5] sm:$0xff]
  %v6939 = vld [vmem:[%s5 + $0x8] sm:$0xff]
  %v6940 = vld [vmem:[%s5 + $0x10] sm:$0xf]
  %v6941 = vld [vmem:[%s6] sm:$0xf]
  %6943 = vset.pattern.permute.xlu0 0
  %6944 = vperm.xlu0 %6943, %v6941
  %v6945 = vpop.permute.xlu0 %6944
  %v6950 = vcombine.high %v6938, %v6938
  %v6951 = vcombine.high %v6939, %v6939
  %v6954 = vsel %vm5447, %v6940, 0
  %v6956 = vsel %vm5447, %v5814, 0
  %v6958 = vsel %vm5447, %v5815, 0
  %v6960 = vsel %vm5447, %v5816, 0
  %v6962 = vsel %vm5447, %v5817, 0
  %v6964 = vsel %vm5447, %v5818, 0
  %v6966 = vsel %vm5447, %v5819, 0
  %v6968 = vsel %vm5447, %v5820, 0
  %v6970 = vsel %vm5447, %v5821, 0
  %v6972 = vsel %vm5447, %v5822, 0
  %v6974 = vsel %vm5447, %v5823, 0
  %v6976 = vsel %vm5447, %v5824, 0
  %v6978 = vsel %vm5447, %v5825, 0
  %v6980 = vsel %vm5447, %v5826, 0
  %v6982 = vsel %vm5447, %v5827, 0
  %v6984 = vsel %vm5447, %v5828, 0
  %v6986 = vsel %vm5447, %v5829, 0
  %v6988 = vsel %vm5447, %v5830, 0
  %v6990 = vsel %vm5447, %v5831, 0
  %v6992 = vsel %vm5447, %v5832, 0
  %v6994 = vsel %vm5447, %v5833, 0
  %v6996 = vsel %vm5447, %v5834, 0
  %v6998 = vsel %vm5447, %v5835, 0
  %v7000 = vsel %vm5447, %v5836, 0
  %v7002 = vsel %vm5447, %v5837, 0
  %v7004 = vsel %vm5447, %v5838, 0
  %v7006 = vsel %vm5447, %v5839, 0
  %v7008 = vsel %vm5447, %v5840, 0
  %v7010 = vsel %vm5447, %v5841, 0
  %v7012 = vsel %vm5447, %v5842, 0
  %v7014 = vsel %vm5447, %v5843, 0
  %v7017 = vsel %vm5447, %v5844, 0
  %v7020 = vsel %vm5447, %v5845, 0
  %v7022 = vsel %vm5447, %v5850, 0
  %v7024 = vsel %vm5447, %v5851, 0
  %v7026 = vsel %vm5447, %v5852, 0
  %v7028 = vsel %vm5447, %v5853, 0
  %v7030 = vsel %vm5447, %v5854, 0
  %v7032 = vsel %vm5447, %v5855, 0
  %v7034 = vsel %vm5447, %v5856, 0
  %v7036 = vsel %vm5447, %v5857, 0
  %v7038 = vsel %vm5447, %v5858, 0
  %v7040 = vsel %vm5447, %v5859, 0
  %v7042 = vsel %vm5447, %v5860, 0
  %v7044 = vsel %vm5447, %v5861, 0
  %v7046 = vsel %vm5447, %v5862, 0
  %v7048 = vsel %vm5447, %v5863, 0
  %v7050 = vsel %vm5447, %v5864, 0
  %v7052 = vsel %vm5447, %v5865, 0
  %v7054 = vsel %vm5447, %v5866, 0
  %v7056 = vsel %vm5447, %v5867, 0
  %v7058 = vsel %vm5447, %v5868, 0
  %v7060 = vsel %vm5447, %v5869, 0
  %v7062 = vsel %vm5447, %v5870, 0
  %v7064 = vsel %vm5447, %v5871, 0
  %v7066 = vsel %vm5447, %v5872, 0
  %v7068 = vsel %vm5447, %v5873, 0
  %v7070 = vsel %vm5447, %v5874, 0
  %v7072 = vsel %vm5447, %v5875, 0
  %v7074 = vsel %vm5447, %v5876, 0
  %v7076 = vsel %vm5447, %v5877, 0
  %v7078 = vsel %vm5447, %v5878, 0
  %v7080 = vsel %vm5447, %v5879, 0
  %v7083 = vsel %vm5447, %v5880, 0
  %v7086 = vsel %vm5447, %v5881, 0
  %7088 = vmatprep.subr.mxu0 %v6746
  %7089 = vmatpush1.xpose.msra.mxu0 %v6682
  %7090 = vmatprep.subr.mxu0 %v6747
  %7091 = vmatpush1.xpose.msra.mxu0 %v6683
  %7092 = vmatprep.subr.mxu0 %v6748
  %7093 = vmatpush1.xpose.msra.mxu0 %v6684
  %7094 = vmatprep.subr.mxu0 %v6749
  %7095 = vmatpush1.xpose.msra.mxu0 %v6685
  %7096 = vmatprep.subr.mxu0 %v6750
  %7097 = vmatpush1.xpose.msra.mxu0 %v6686
  %7098 = vmatprep.subr.mxu0 %v6751
  %7099 = vmatpush1.xpose.msra.mxu0 %v6687
  %7100 = vmatprep.subr.mxu0 %v6752
  %7101 = vmatpush1.xpose.msra.mxu0 %v6688
  %7102 = vmatprep.subr.mxu0 %v6753
  %7103 = vmatpush1.xpose.msra.mxu0 %v6689
  %7104 = vmatprep.subr.mxu0 %v6754
  %7105 = vmatpush1.xpose.msra.mxu0 %v6690
  %7106 = vmatprep.subr.mxu0 %v6755
  %7107 = vmatpush1.xpose.msra.mxu0 %v6691
  %7108 = vmatprep.subr.mxu0 %v6756
  %7109 = vmatpush1.xpose.msra.mxu0 %v6692
  %7110 = vmatprep.subr.mxu0 %v6757
  %7111 = vmatpush1.xpose.msra.mxu0 %v6693
  %7112 = vmatprep.subr.mxu0 %v6758
  %7113 = vmatpush1.xpose.msra.mxu0 %v6694
  %7114 = vmatprep.subr.mxu0 %v6759
  %7115 = vmatpush1.xpose.msra.mxu0 %v6695
  %7116 = vmatprep.subr.mxu0 %v6760
  %7117 = vmatpush1.xpose.msra.mxu0 %v6696
  %7118 = vmatprep.subr.mxu0 %v6761
  %7119 = vmatpush1.xpose.msra.mxu0 %v6697
  %7120 = vmatprep.subr.mxu0 %v6762
  %7121 = vmatpush1.xpose.msra.mxu0 %v6698
  %7122 = vmatprep.subr.mxu0 %v6763
  %7123 = vmatpush1.xpose.msra.mxu0 %v6699
  %7124 = vmatprep.subr.mxu0 %v6764
  %7125 = vmatpush1.xpose.msra.mxu0 %v6700
  %7126 = vmatprep.subr.mxu0 %v6765
  %7127 = vmatpush1.xpose.msra.mxu0 %v6701
  %7128 = vmatprep.subr.mxu0 %v6766
  %7129 = vmatpush1.xpose.msra.mxu0 %v6702
  %7130 = vmatprep.subr.mxu0 %v6767
  %7131 = vmatpush1.xpose.msra.mxu0 %v6703
  %7132 = vmatprep.subr.mxu0 %v6768
  %7133 = vmatpush1.xpose.msra.mxu0 %v6704
  %7134 = vmatprep.subr.mxu0 %v6769
  %7135 = vmatpush1.xpose.msra.mxu0 %v6705
  %7136 = vmatprep.subr.mxu0 %v6770
  %7137 = vmatpush1.xpose.msra.mxu0 %v6706
  %7138 = vmatprep.subr.mxu0 %v6771
  %7139 = vmatpush1.xpose.msra.mxu0 %v6707
  %7140 = vmatprep.subr.mxu0 %v6772
  %7141 = vmatpush1.xpose.msra.mxu0 %v6708
  %7142 = vmatprep.subr.mxu0 %v6773
  %7143 = vmatpush1.xpose.msra.mxu0 %v6709
  %7144 = vmatprep.subr.mxu0 %v6774
  %7145 = vmatpush1.xpose.msra.mxu0 %v6710
  %7146 = vmatprep.subr.mxu0 %v6775
  %7147 = vmatpush1.xpose.msra.mxu0 %v6711
  %7148 = vmatprep.subr.mxu0 %v6776
  %7149 = vmatpush1.xpose.msra.mxu0 %v6712
  %7150 = vmatprep.subr.mxu0 %v6777
  %7151 = vmatpush1.xpose.msra.mxu0 %v6713
  %7152 = vmatprep.mubr.f32.mxu0 %v6950
  %7153 = vmatmul.mubr.f32.gmra.mrb[0].mxu0 %v6938
  %v7154 = vpop.f32.mrb[0].mxu0
  %v7155 = vadd.f32 %v6945, %v7154
  %v7156 = vpop.f32.mrb[0].mxu0
  %v7157 = vadd.f32 %v6945, %v7156
  %7158 = vdwg.mxu0
  %7159 = vmatprep.subr.mxu0 %v6874
  %7160 = vmatpush1.xpose.msra.mxu0 %v6810
  %7161 = vmatprep.subr.mxu0 %v6875
  %7162 = vmatpush1.xpose.msra.mxu0 %v6811
  %7163 = vmatprep.subr.mxu0 %v6876
  %7164 = vmatpush1.xpose.msra.mxu0 %v6812
  %7165 = vmatprep.subr.mxu0 %v6877
  %7166 = vmatpush1.xpose.msra.mxu0 %v6813
  %7167 = vmatprep.subr.mxu0 %v6878
  %7168 = vmatpush1.xpose.msra.mxu0 %v6814
  %7169 = vmatprep.subr.mxu0 %v6879
  %7170 = vmatpush1.xpose.msra.mxu0 %v6815
  %7171 = vmatprep.subr.mxu0 %v6880
  %7172 = vmatpush1.xpose.msra.mxu0 %v6816
  %7173 = vmatprep.subr.mxu0 %v6881
  %7174 = vmatpush1.xpose.msra.mxu0 %v6817
  %7175 = vmatprep.subr.mxu0 %v6882
  %7176 = vmatpush1.xpose.msra.mxu0 %v6818
  %7177 = vmatprep.subr.mxu0 %v6883
  %7178 = vmatpush1.xpose.msra.mxu0 %v6819
  %7179 = vmatprep.subr.mxu0 %v6884
  %7180 = vmatpush1.xpose.msra.mxu0 %v6820
  %7181 = vmatprep.subr.mxu0 %v6885
  %7182 = vmatpush1.xpose.msra.mxu0 %v6821
  %7183 = vmatprep.subr.mxu0 %v6886
  %7184 = vmatpush1.xpose.msra.mxu0 %v6822
  %7185 = vmatprep.subr.mxu0 %v6887
  %7186 = vmatpush1.xpose.msra.mxu0 %v6823
  %7187 = vmatprep.subr.mxu0 %v6888
  %7188 = vmatpush1.xpose.msra.mxu0 %v6824
  %7189 = vmatprep.subr.mxu0 %v6889
  %7190 = vmatpush1.xpose.msra.mxu0 %v6825
  %7191 = vmatprep.subr.mxu0 %v6890
  %7192 = vmatpush1.xpose.msra.mxu0 %v6826
  %7193 = vmatprep.subr.mxu0 %v6891
  %7194 = vmatpush1.xpose.msra.mxu0 %v6827
  %7195 = vmatprep.subr.mxu0 %v6892
  %7196 = vmatpush1.xpose.msra.mxu0 %v6828
  %7197 = vmatprep.subr.mxu0 %v6893
  %7198 = vmatpush1.xpose.msra.mxu0 %v6829
  %7199 = vmatprep.subr.mxu0 %v6894
  %7200 = vmatpush1.xpose.msra.mxu0 %v6830
  %7201 = vmatprep.subr.mxu0 %v6895
  %7202 = vmatpush1.xpose.msra.mxu0 %v6831
  %7203 = vmatprep.subr.mxu0 %v6896
  %7204 = vmatpush1.xpose.msra.mxu0 %v6832
  %7205 = vmatprep.subr.mxu0 %v6897
  %7206 = vmatpush1.xpose.msra.mxu0 %v6833
  %7207 = vmatprep.subr.mxu0 %v6898
  %7208 = vmatpush1.xpose.msra.mxu0 %v6834
  %7209 = vmatprep.subr.mxu0 %v6899
  %7210 = vmatpush1.xpose.msra.mxu0 %v6835
  %7211 = vmatprep.subr.mxu0 %v6900
  %7212 = vmatpush1.xpose.msra.mxu0 %v6836
  %7213 = vmatprep.subr.mxu0 %v6901
  %7214 = vmatpush1.xpose.msra.mxu0 %v6837
  %7215 = vmatprep.subr.mxu0 %v6902
  %7216 = vmatpush1.xpose.msra.mxu0 %v6838
  %7217 = vmatprep.subr.mxu0 %v6903
  %7218 = vmatpush1.xpose.msra.mxu0 %v6839
  %7219 = vmatprep.subr.mxu0 %v6904
  %7220 = vmatpush1.xpose.msra.mxu0 %v6840
  %7221 = vmatprep.subr.mxu0 %v6905
  %7222 = vmatpush1.xpose.msra.mxu0 %v6841
  %7223 = vmatprep.mubr.f32.mxu0 %v6951
  %7224 = vmatmul.mubr.f32.gmra.mrb[0].mxu0 %v6939
  %v7225 = vpop.f32.mrb[0].mxu0
  %v7226 = vadd.f32 %v7155, %v7225
  %v7227 = vpop.f32.mrb[0].mxu0
  %v7228 = vadd.f32 %v7157, %v7227
  %7229 = vdwg.mxu0
  %7230 = vmatprep.subr.mxu0 0.0
  %7231 = vmatpush1.xpose.msra.mxu0 %v6956
  %7232 = vmatprep.subr.mxu0 0.0
  %7233 = vmatpush1.xpose.msra.mxu0 %v6958
  %7234 = vmatprep.subr.mxu0 0.0
  %7235 = vmatpush1.xpose.msra.mxu0 %v6960
  %7236 = vmatprep.subr.mxu0 0.0
  %7237 = vmatpush1.xpose.msra.mxu0 %v6962
  %7238 = vmatprep.subr.mxu0 0.0
  %7239 = vmatpush1.xpose.msra.mxu0 %v6964
  %7240 = vmatprep.subr.mxu0 0.0
  %7241 = vmatpush1.xpose.msra.mxu0 %v6966
  %7242 = vmatprep.subr.mxu0 0.0
  %7243 = vmatpush1.xpose.msra.mxu0 %v6968
  %7244 = vmatprep.subr.mxu0 0.0
  %7245 = vmatpush1.xpose.msra.mxu0 %v6970
  %7246 = vmatprep.subr.mxu0 0.0
  %7247 = vmatpush1.xpose.msra.mxu0 %v6972
  %7248 = vmatprep.subr.mxu0 0.0
  %7249 = vmatpush1.xpose.msra.mxu0 %v6974
  %7250 = vmatprep.subr.mxu0 0.0
  %7251 = vmatpush1.xpose.msra.mxu0 %v6976
  %7252 = vmatprep.subr.mxu0 0.0
  %7253 = vmatpush1.xpose.msra.mxu0 %v6978
  %7254 = vmatprep.subr.mxu0 0.0
  %7255 = vmatpush1.xpose.msra.mxu0 %v6980
  %7256 = vmatprep.subr.mxu0 0.0
  %7257 = vmatpush1.xpose.msra.mxu0 %v6982
  %7258 = vmatprep.subr.mxu0 0.0
  %7259 = vmatpush1.xpose.msra.mxu0 %v6984
  %7260 = vmatprep.subr.mxu0 0.0
  %7261 = vmatpush1.xpose.msra.mxu0 %v6986
  %7262 = vmatprep.subr.mxu0 0.0
  %7263 = vmatpush1.xpose.msra.mxu0 %v6988
  %7264 = vmatprep.subr.mxu0 0.0
  %7265 = vmatpush1.xpose.msra.mxu0 %v6990
  %7266 = vmatprep.subr.mxu0 0.0
  %7267 = vmatpush1.xpose.msra.mxu0 %v6992
  %7268 = vmatprep.subr.mxu0 0.0
  %7269 = vmatpush1.xpose.msra.mxu0 %v6994
  %7270 = vmatprep.subr.mxu0 0.0
  %7271 = vmatpush1.xpose.msra.mxu0 %v6996
  %7272 = vmatprep.subr.mxu0 0.0
  %7273 = vmatpush1.xpose.msra.mxu0 %v6998
  %7274 = vmatprep.subr.mxu0 0.0
  %7275 = vmatpush1.xpose.msra.mxu0 %v7000
  %7276 = vmatprep.subr.mxu0 0.0
  %7277 = vmatpush1.xpose.msra.mxu0 %v7002
  %7278 = vmatprep.subr.mxu0 0.0
  %7279 = vmatpush1.xpose.msra.mxu0 %v7004
  %7280 = vmatprep.subr.mxu0 0.0
  %7281 = vmatpush1.xpose.msra.mxu0 %v7006
  %7282 = vmatprep.subr.mxu0 0.0
  %7283 = vmatpush1.xpose.msra.mxu0 %v7008
  %7284 = vmatprep.subr.mxu0 0.0
  %7285 = vmatpush1.xpose.msra.mxu0 %v7010
  %7286 = vmatprep.subr.mxu0 0.0
  %7287 = vmatpush1.xpose.msra.mxu0 %v7012
  %7288 = vmatprep.subr.mxu0 0.0
  %7289 = vmatpush1.xpose.msra.mxu0 %v7014
  %7290 = vmatprep.subr.mxu0 0.0
  %7291 = vmatpush1.xpose.msra.mxu0 %v7017
  %7292 = vmatprep.subr.mxu0 0.0
  %7293 = vmatpush1.xpose.msra.mxu0 %v7020
  %7294 = vmatprep.mubr.f32.mxu0 0.0
  %7295 = vmatmul.mubr.f32.gmra.mrb[0].mxu0 %v6954
  %v7296 = vpop.f32.mrb[0].mxu0
  %v7297 = vadd.f32 %v7226, %v7296
  %v7298 = vpop.f32.mrb[0].mxu0
  %v7299 = vadd.f32 %v7228, %v7298
  %7300 = vdwg.mxu0
  %7301 = vmatprep.subr.mxu0 %v6778
  %7302 = vmatpush1.xpose.msra.mxu0 %v6714
  %7303 = vmatprep.subr.mxu0 %v6779
  %7304 = vmatpush1.xpose.msra.mxu0 %v6715
  %7305 = vmatprep.subr.mxu0 %v6780
  %7306 = vmatpush1.xpose.msra.mxu0 %v6716
  %7307 = vmatprep.subr.mxu0 %v6781
  %7308 = vmatpush1.xpose.msra.mxu0 %v6717
  %7309 = vmatprep.subr.mxu0 %v6782
  %7310 = vmatpush1.xpose.msra.mxu0 %v6718
  %7311 = vmatprep.subr.mxu0 %v6783
  %7312 = vmatpush1.xpose.msra.mxu0 %v6719
  %7313 = vmatprep.subr.mxu0 %v6784
  %7314 = vmatpush1.xpose.msra.mxu0 %v6720
  %7315 = vmatprep.subr.mxu0 %v6785
  %7316 = vmatpush1.xpose.msra.mxu0 %v6721
  %7317 = vmatprep.subr.mxu0 %v6786
  %7318 = vmatpush1.xpose.msra.mxu0 %v6722
  %7319 = vmatprep.subr.mxu0 %v6787
  %7320 = vmatpush1.xpose.msra.mxu0 %v6723
  %7321 = vmatprep.subr.mxu0 %v6788
  %7322 = vmatpush1.xpose.msra.mxu0 %v6724
  %7323 = vmatprep.subr.mxu0 %v6789
  %7324 = vmatpush1.xpose.msra.mxu0 %v6725
  %7325 = vmatprep.subr.mxu0 %v6790
  %7326 = vmatpush1.xpose.msra.mxu0 %v6726
  %7327 = vmatprep.subr.mxu0 %v6791
  %7328 = vmatpush1.xpose.msra.mxu0 %v6727
  %7329 = vmatprep.subr.mxu0 %v6792
  %7330 = vmatpush1.xpose.msra.mxu0 %v6728
  %7331 = vmatprep.subr.mxu0 %v6793
  %7332 = vmatpush1.xpose.msra.mxu0 %v6729
  %7333 = vmatprep.subr.mxu0 %v6794
  %7334 = vmatpush1.xpose.msra.mxu0 %v6730
  %7335 = vmatprep.subr.mxu0 %v6795
  %7336 = vmatpush1.xpose.msra.mxu0 %v6731
  %7337 = vmatprep.subr.mxu0 %v6796
  %7338 = vmatpush1.xpose.msra.mxu0 %v6732
  %7339 = vmatprep.subr.mxu0 %v6797
  %7340 = vmatpush1.xpose.msra.mxu0 %v6733
  %7341 = vmatprep.subr.mxu0 %v6798
  %7342 = vmatpush1.xpose.msra.mxu0 %v6734
  %7343 = vmatprep.subr.mxu0 %v6799
  %7344 = vmatpush1.xpose.msra.mxu0 %v6735
  %7345 = vmatprep.subr.mxu0 %v6800
  %7346 = vmatpush1.xpose.msra.mxu0 %v6736
  %7347 = vmatprep.subr.mxu0 %v6801
  %7348 = vmatpush1.xpose.msra.mxu0 %v6737
  %7349 = vmatprep.subr.mxu0 %v6802
  %7350 = vmatpush1.xpose.msra.mxu0 %v6738
  %7351 = vmatprep.subr.mxu0 %v6803
  %7352 = vmatpush1.xpose.msra.mxu0 %v6739
  %7353 = vmatprep.subr.mxu0 %v6804
  %7354 = vmatpush1.xpose.msra.mxu0 %v6740
  %7355 = vmatprep.subr.mxu0 %v6805
  %7356 = vmatpush1.xpose.msra.mxu0 %v6741
  %7357 = vmatprep.subr.mxu0 %v6806
  %7358 = vmatpush1.xpose.msra.mxu0 %v6742
  %7359 = vmatprep.subr.mxu0 %v6807
  %7360 = vmatpush1.xpose.msra.mxu0 %v6743
  %7361 = vmatprep.subr.mxu0 %v6808
  %7362 = vmatpush1.xpose.msra.mxu0 %v6744
  %7363 = vmatprep.subr.mxu0 %v6809
  %7364 = vmatpush1.xpose.msra.mxu0 %v6745
  %7365 = vmatprep.mubr.f32.mxu0 %v6950
  %7366 = vmatmul.mubr.f32.gmra.mrb[0].mxu0 %v6938
  %v7367 = vpop.f32.mrb[0].mxu0
  %v7368 = vadd.f32 %v6945, %v7367
  %v7369 = vpop.f32.mrb[0].mxu0
  %v7370 = vadd.f32 %v6945, %v7369
  %7371 = vdwg.mxu0
  %7372 = vmatprep.subr.mxu0 %v6906
  %7373 = vmatpush1.xpose.msra.mxu0 %v6842
  %7374 = vmatprep.subr.mxu0 %v6907
  %7375 = vmatpush1.xpose.msra.mxu0 %v6843
  %7376 = vmatprep.subr.mxu0 %v6908
  %7377 = vmatpush1.xpose.msra.mxu0 %v6844
  %7378 = vmatprep.subr.mxu0 %v6909
  %7379 = vmatpush1.xpose.msra.mxu0 %v6845
  %7380 = vmatprep.subr.mxu0 %v6910
  %7381 = vmatpush1.xpose.msra.mxu0 %v6846
  %7382 = vmatprep.subr.mxu0 %v6911
  %7383 = vmatpush1.xpose.msra.mxu0 %v6847
  %7384 = vmatprep.subr.mxu0 %v6912
  %7385 = vmatpush1.xpose.msra.mxu0 %v6848
  %7386 = vmatprep.subr.mxu0 %v6913
  %7387 = vmatpush1.xpose.msra.mxu0 %v6849
  %7388 = vmatprep.subr.mxu0 %v6914
  %7389 = vmatpush1.xpose.msra.mxu0 %v6850
  %7390 = vmatprep.subr.mxu0 %v6915
  %7391 = vmatpush1.xpose.msra.mxu0 %v6851
  %7392 = vmatprep.subr.mxu0 %v6916
  %7393 = vmatpush1.xpose.msra.mxu0 %v6852
  %7394 = vmatprep.subr.mxu0 %v6917
  %7395 = vmatpush1.xpose.msra.mxu0 %v6853
  %7396 = vmatprep.subr.mxu0 %v6918
  %7397 = vmatpush1.xpose.msra.mxu0 %v6854
  %7398 = vmatprep.subr.mxu0 %v6919
  %7399 = vmatpush1.xpose.msra.mxu0 %v6855
  %7400 = vmatprep.subr.mxu0 %v6920
  %7401 = vmatpush1.xpose.msra.mxu0 %v6856
  %7402 = vmatprep.subr.mxu0 %v6921
  %7403 = vmatpush1.xpose.msra.mxu0 %v6857
  %7404 = vmatprep.subr.mxu0 %v6922
  %7405 = vmatpush1.xpose.msra.mxu0 %v6858
  %7406 = vmatprep.subr.mxu0 %v6923
  %7407 = vmatpush1.xpose.msra.mxu0 %v6859
  %7408 = vmatprep.subr.mxu0 %v6924
  %7409 = vmatpush1.xpose.msra.mxu0 %v6860
  %7410 = vmatprep.subr.mxu0 %v6925
  %7411 = vmatpush1.xpose.msra.mxu0 %v6861
  %7412 = vmatprep.subr.mxu0 %v6926
  %7413 = vmatpush1.xpose.msra.mxu0 %v6862
  %7414 = vmatprep.subr.mxu0 %v6927
  %7415 = vmatpush1.xpose.msra.mxu0 %v6863
  %7416 = vmatprep.subr.mxu0 %v6928
  %7417 = vmatpush1.xpose.msra.mxu0 %v6864
  %7418 = vmatprep.subr.mxu0 %v6929
  %7419 = vmatpush1.xpose.msra.mxu0 %v6865
  %7420 = vmatprep.subr.mxu0 %v6930
  %7421 = vmatpush1.xpose.msra.mxu0 %v6866
  %7422 = vmatprep.subr.mxu0 %v6931
  %7423 = vmatpush1.xpose.msra.mxu0 %v6867
  %7424 = vmatprep.subr.mxu0 %v6932
  %7425 = vmatpush1.xpose.msra.mxu0 %v6868
  %7426 = vmatprep.subr.mxu0 %v6933
  %7427 = vmatpush1.xpose.msra.mxu0 %v6869
  %7428 = vmatprep.subr.mxu0 %v6934
  %7429 = vmatpush1.xpose.msra.mxu0 %v6870
  %7430 = vmatprep.subr.mxu0 %v6935
  %7431 = vmatpush1.xpose.msra.mxu0 %v6871
  %7432 = vmatprep.subr.mxu0 %v6936
  %7433 = vmatpush1.xpose.msra.mxu0 %v6872
  %7434 = vmatprep.subr.mxu0 %v6937
  %7435 = vmatpush1.xpose.msra.mxu0 %v6873
  %7436 = vmatprep.mubr.f32.mxu0 %v6951
  %7437 = vmatmul.mubr.f32.gmra.mrb[0].mxu0 %v6939
  %v7438 = vpop.f32.mrb[0].mxu0
  %v7439 = vadd.f32 %v7368, %v7438
  %v7440 = vpop.f32.mrb[0].mxu0
  %v7441 = vadd.f32 %v7370, %v7440
  %7442 = vdwg.mxu0
  %7443 = vmatprep.subr.mxu0 0.0
  %7444 = vmatpush1.xpose.msra.mxu0 %v7022
  %7445 = vmatprep.subr.mxu0 0.0
  %7446 = vmatpush1.xpose.msra.mxu0 %v7024
  %7447 = vmatprep.subr.mxu0 0.0
  %7448 = vmatpush1.xpose.msra.mxu0 %v7026
  %7449 = vmatprep.subr.mxu0 0.0
  %7450 = vmatpush1.xpose.msra.mxu0 %v7028
  %7451 = vmatprep.subr.mxu0 0.0
  %7452 = vmatpush1.xpose.msra.mxu0 %v7030
  %7453 = vmatprep.subr.mxu0 0.0
  %7454 = vmatpush1.xpose.msra.mxu0 %v7032
  %7455 = vmatprep.subr.mxu0 0.0
  %7456 = vmatpush1.xpose.msra.mxu0 %v7034
  %7457 = vmatprep.subr.mxu0 0.0
  %7458 = vmatpush1.xpose.msra.mxu0 %v7036
  %7459 = vmatprep.subr.mxu0 0.0
  %7460 = vmatpush1.xpose.msra.mxu0 %v7038
  %7461 = vmatprep.subr.mxu0 0.0
  %7462 = vmatpush1.xpose.msra.mxu0 %v7040
  %7463 = vmatprep.subr.mxu0 0.0
  %7464 = vmatpush1.xpose.msra.mxu0 %v7042
  %7465 = vmatprep.subr.mxu0 0.0
  %7466 = vmatpush1.xpose.msra.mxu0 %v7044
  %7467 = vmatprep.subr.mxu0 0.0
  %7468 = vmatpush1.xpose.msra.mxu0 %v7046
  %7469 = vmatprep.subr.mxu0 0.0
  %7470 = vmatpush1.xpose.msra.mxu0 %v7048
  %7471 = vmatprep.subr.mxu0 0.0
  %7472 = vmatpush1.xpose.msra.mxu0 %v7050
  %7473 = vmatprep.subr.mxu0 0.0
  %7474 = vmatpush1.xpose.msra.mxu0 %v7052
  %7475 = vmatprep.subr.mxu0 0.0
  %7476 = vmatpush1.xpose.msra.mxu0 %v7054
  %7477 = vmatprep.subr.mxu0 0.0
  %7478 = vmatpush1.xpose.msra.mxu0 %v7056
  %7479 = vmatprep.subr.mxu0 0.0
  %7480 = vmatpush1.xpose.msra.mxu0 %v7058
  %7481 = vmatprep.subr.mxu0 0.0
  %7482 = vmatpush1.xpose.msra.mxu0 %v7060
  %7483 = vmatprep.subr.mxu0 0.0
  %7484 = vmatpush1.xpose.msra.mxu0 %v7062
  %7485 = vmatprep.subr.mxu0 0.0
  %7486 = vmatpush1.xpose.msra.mxu0 %v7064
  %7487 = vmatprep.subr.mxu0 0.0
  %7488 = vmatpush1.xpose.msra.mxu0 %v7066
  %7489 = vmatprep.subr.mxu0 0.0
  %7490 = vmatpush1.xpose.msra.mxu0 %v7068
  %7491 = vmatprep.subr.mxu0 0.0
  %7492 = vmatpush1.xpose.msra.mxu0 %v7070
  %7493 = vmatprep.subr.mxu0 0.0
  %7494 = vmatpush1.xpose.msra.mxu0 %v7072
  %7495 = vmatprep.subr.mxu0 0.0
  %7496 = vmatpush1.xpose.msra.mxu0 %v7074
  %7497 = vmatprep.subr.mxu0 0.0
  %7498 = vmatpush1.xpose.msra.mxu0 %v7076
  %7499 = vmatprep.subr.mxu0 0.0
  %7500 = vmatpush1.xpose.msra.mxu0 %v7078
  %7501 = vmatprep.subr.mxu0 0.0
  %7502 = vmatpush1.xpose.msra.mxu0 %v7080
  %7503 = vmatprep.subr.mxu0 0.0
  %7504 = vmatpush1.xpose.msra.mxu0 %v7083
  %7505 = vmatprep.subr.mxu0 0.0
  %7506 = vmatpush1.xpose.msra.mxu0 %v7086
  %7507 = vmatprep.mubr.f32.mxu0 0.0
  %7508 = vmatmul.mubr.f32.gmra.mrb[0].mxu0 %v6954
  %v7509 = vpop.f32.mrb[0].mxu0
  %v7510 = vadd.f32 %v7439, %v7509
  %v7511 = vpop.f32.mrb[0].mxu0
  %v7512 = vadd.f32 %v7441, %v7511
  %7513 = vdwg.mxu0
  %v7518 = vcombine.low %v7297, %v7299
  %v7519 = vcombine.low %v7510, %v7512
  %7522 = vst [vmem:[%s7] sm:$0xff] %v7518
  %7523 = vst [vmem:[%s7 + $0x8] sm:$0xff] %v7519
  // Predicated region
  $region30: #{srcnn_block_forward.1} parent=0 // pred_check
    _
  $region31: #{srcnn_block_forward.1} parent=0 // pred_check_branch
    %7525 = sbr.rel (0) target = $region33
  $region32: #{srcnn_block_forward.1} parent=0 // pred_region
    _
  $region33: #{srcnn_block_forward.1} parent=0 // pred_fallthru
    _
  // Predicated region
  $region34: #{srcnn_block_forward.1} parent=0 // pred_check
    _
  $region35: #{srcnn_block_forward.1} parent=0 // pred_check_branch
    %7527 = sbr.rel (0) target = $region37
  $region36: #{srcnn_block_forward.1} parent=0 // pred_region
    _
  $region37: #{srcnn_block_forward.1} parent=0 // pred_fallthru
    _

</llo_original>
